<compile_context>
chip_gen: v5e
topology: v5e:2x2
jax: 0.10.0
libtpu: 0.0.40
codegen_flags: <defaults>
</compile_context>

<pallas_src>
import functools

import numpy as np
import jax
import jax.numpy as jnp
from jax import lax
from jax.experimental import pallas as pl
from jax.experimental.pallas import tpu as pltpu

EPS = 1e-5    # PyTorch BatchNorm2d default eps
LANES = 128   # TPU lane width


def _round_up(x, m):
    return (x + m - 1) // m * m


def _vmem_cap_bytes():
    """Physical VMEM per core (generation dependent), with a safe fallback."""
    try:
        info = pltpu.get_tpu_info()
        cap = getattr(info, "vmem_capacity_bytes", None)
        if cap:
            return int(cap)
    except Exception:
        pass
    return 64 * 2**20        # conservative (v7x-sized) fallback


# ---------------------------------------------------------------------------
# Pass 1: conv1 (+ projection shortcut conv) and BN1 / BN_s batch statistics.
# ---------------------------------------------------------------------------
def _conv1_kernel(s, Ho, Wo, Bt, has_proj, *refs):
    if has_proj:
        (xph_ref, w1_ref, ws_ref, pvec_ref,
         h1_ref, hs_ref, stats_ref, stage_ref) = refs
    else:
        (xph_ref, w1_ref, pvec_ref, h1_ref, stats_ref, stage_ref) = refs
        ws_ref = hs_ref = None

    n = pl.program_id(0)
    Mo = Ho * Wo
    Mt = Bt * Mo
    Cin_p = xph_ref.shape[-1]

    @pl.when(n == 0)
    def _init():
        stats_ref[...] = jnp.zeros_like(stats_ref)

    cnt_t = float(Mt)

    def update_stats(row, h):
        # Streaming Chan combine of (mean, centered M2) across batch tiles.
        tile_mean = jnp.sum(h, axis=0, keepdims=True) * (1.0 / cnt_t)
        tile_m2 = jnp.sum((h - tile_mean) ** 2, axis=0, keepdims=True)
        cnt_r = n.astype(jnp.float32) * cnt_t
        tot = cnt_r + cnt_t
        run_mean = stats_ref[row:row + 1, :]
        delta = tile_mean - run_mean
        stats_ref[row:row + 1, :] = run_mean + delta * (cnt_t / tot)
        stats_ref[row + 1:row + 2, :] += tile_m2 + delta * delta * (cnt_r * (cnt_t / tot))

    # im2col the 9 conv1 taps (phase-decomposed, so stride-s taps are plain
    # static window slices) into one (Mt, 9*Cin_p) slab -> single MXU dot.
    for di in range(3):
        for dj in range(3):
            t = 3 * di + dj
            ph = (di % s) * s + (dj % s)
            oi, oj = di // s, dj // s
            win = xph_ref[ph, :, oi:oi + Ho, oj:oj + Wo, :].reshape(Mt, Cin_p)
            stage_ref[:, t * Cin_p:(t + 1) * Cin_p] = win

    h1 = jnp.dot(stage_ref[...], w1_ref[...],
                 preferred_element_type=jnp.float32) + pvec_ref[0:1, :]   # + b1
    h1_ref[...] = h1.astype(h1_ref.dtype)
    update_stats(0, h1)

    if has_proj:
        a, off = 1 % s, 1 // s
        xs = xph_ref[a * s + a, :, off:off + Ho, off:off + Wo, :].reshape(Mt, Cin_p)
        hs = jnp.dot(xs, ws_ref[...], preferred_element_type=jnp.float32)
        hs_ref[...] = hs.astype(hs_ref.dtype)
        update_stats(2, hs)


# ---------------------------------------------------------------------------
# Pass 2: BN1 (batch stats) + ReLU + conv2, and BN2 batch statistics.
# ---------------------------------------------------------------------------
def _conv2_kernel(Ho, Wo, Bt, Mtot, *refs):
    (h1_ref, stats1_ref, w2_ref, pvec_ref,
     h2_ref, stats2_ref, pad_ref, stage_ref) = refs

    n = pl.program_id(0)
    Mo = Ho * Wo
    Mt = Bt * Mo
    Cout_p = h2_ref.shape[-1]

    @pl.when(n == 0)
    def _init():
        stats2_ref[...] = jnp.zeros_like(stats2_ref)
        pad_ref[...] = jnp.zeros_like(pad_ref)   # border stays 0; interior rewritten

    # BN1 with the global batch statistics produced by pass 1, then ReLU.
    h1 = h1_ref[...].astype(jnp.float32)
    mean1 = stats1_ref[0:1, :]
    inv1 = lax.rsqrt(stats1_ref[1:2, :] * (1.0 / Mtot) + EPS)
    y1 = jnp.maximum((h1 - mean1) * (inv1 * pvec_ref[1:2, :]) + pvec_ref[2:3, :], 0.0)
    pad_ref[:, 1:Ho + 1, 1:Wo + 1, :] = (
        y1.reshape(Bt, Ho, Wo, Cout_p).astype(pad_ref.dtype))

    # im2col the 9 conv2 (stride 1) taps -> single MXU dot.
    for di in range(3):
        for dj in range(3):
            t = 3 * di + dj
            win = pad_ref[:, di:di + Ho, dj:dj + Wo, :].reshape(Mt, Cout_p)
            stage_ref[:, t * Cout_p:(t + 1) * Cout_p] = win

    h2 = jnp.dot(stage_ref[...], w2_ref[...],
                 preferred_element_type=jnp.float32) + pvec_ref[3:4, :]   # + b2
    h2_ref[...] = h2.astype(h2_ref.dtype)

    # BN2 statistics (Chan combine).
    cnt_t = float(Mt)
    tile_mean = jnp.sum(h2, axis=0, keepdims=True) * (1.0 / cnt_t)
    tile_m2 = jnp.sum((h2 - tile_mean) ** 2, axis=0, keepdims=True)
    cnt_r = n.astype(jnp.float32) * cnt_t
    tot = cnt_r + cnt_t
    run_mean = stats2_ref[0:1, :]
    delta = tile_mean - run_mean
    stats2_ref[0:1, :] = run_mean + delta * (cnt_t / tot)
    stats2_ref[1:2, :] += tile_m2 + delta * delta * (cnt_r * (cnt_t / tot))


# ---------------------------------------------------------------------------
# Pass 3: BN2 + shortcut (+ BN_s) + residual add + ReLU -> output.
# ---------------------------------------------------------------------------
def _emit_kernel(Ho, Wo, Bt, Mtot, has_proj, *refs):
    if has_proj:
        (h2_ref, hs_ref, stats1_ref, stats2_ref, pvec_ref, out_ref) = refs
        xph_ref = None
    else:
        (h2_ref, xph_ref, stats2_ref, pvec_ref, out_ref) = refs
        hs_ref = stats1_ref = None

    Mo = Ho * Wo
    Mt = Bt * Mo
    Cout_p = out_ref.shape[-1]

    h2 = h2_ref[...].astype(jnp.float32)
    mean2 = stats2_ref[0:1, :]
    inv2 = lax.rsqrt(stats2_ref[1:2, :] * (1.0 / Mtot) + EPS)
    y2 = (h2 - mean2) * (inv2 * pvec_ref[4:5, :]) + pvec_ref[5:6, :]

    if has_proj:
        hs = hs_ref[...].astype(jnp.float32)
        mean_s = stats1_ref[2:3, :]
        inv_s = lax.rsqrt(stats1_ref[3:4, :] * (1.0 / Mtot) + EPS)
        sc = (hs - mean_s) * (inv_s * pvec_ref[6:7, :]) + pvec_ref[7:8, :]
    else:
        # Identity shortcut: stride 1, so the phase operand is just padded x.
        sc = xph_ref[0, :, 1:1 + Ho, 1:1 + Wo, :].reshape(Mt, Cout_p).astype(jnp.float32)

    out_ref[...] = jnp.maximum(y2 + sc, 0.0).astype(out_ref.dtype)


# ---------------------------------------------------------------------------
# Builder: one-time parameter prep (hoisted), returns a jitted forward(x).
# ---------------------------------------------------------------------------
def make_residual_block(params, stride, mxu_dtype=jnp.bfloat16):
    w1 = params["w1"]                       # (3, 3, Cin, Cout) HWIO
    Cin, Cout = w1.shape[2], w1.shape[3]
    s = int(stride)
    Cin_p = _round_up(Cin, LANES)
    Cout_p = _round_up(Cout, LANES)
    has_proj = (s != 1) or (Cin != Cout)

    def pad_w(w, ci, co):
        z = jnp.zeros(w.shape[:-2] + (ci, co), jnp.float32)
        return z.at[..., :w.shape[-2], :w.shape[-1]].set(w.astype(jnp.float32))

    # Weights reshaped for the single im2col dot, padded to lane multiples.
    w1k = pad_w(w1, Cin_p, Cout_p).reshape(9 * Cin_p, Cout_p).astype(mxu_dtype)
    w2k = pad_w(params["w2"], Cout_p, Cout_p).reshape(9 * Cout_p, Cout_p).astype(mxu_dtype)
    wsk = (pad_w(params["ws"], Cin_p, Cout_p).reshape(Cin_p, Cout_p).astype(mxu_dtype)
           if has_proj else None)

    def pad_vec(name):
        v = params.get(name)
        if v is None:
            return jnp.zeros((Cout_p,), jnp.float32)
        return jnp.pad(v.astype(jnp.float32), (0, Cout_p - Cout))

    # Bias / BN params as one lane-dense (8, Cout_p) f32 slab:
    #   0:b1 1:g1 2:be1 3:b2 4:g2 5:be2 6:gs 7:bes
    pvec = jnp.stack([pad_vec("b1"), pad_vec("g1"), pad_vec("be1"),
                      pad_vec("b2"), pad_vec("g2"), pad_vec("be2"),
                      pad_vec("gs"), pad_vec("bes")], axis=0)

    stage_dtype = mxu_dtype
    xbytes = np.dtype(mxu_dtype).itemsize
    vmem_cap = _vmem_cap_bytes()

    @jax.jit
    def forward(x_nchw):
        N, Cin_x, H, W = x_nchw.shape
        assert Cin_x == Cin
        Ho = (H - 1) // s + 1
        Wo = (W - 1) // s + 1
        Mo = Ho * Wo
        Mtot = float(N * Mo)

        # ---- activation layout: NCHW -> NHWC, channel pad, spatial pad, phases.
        x = jnp.transpose(x_nchw, (0, 2, 3, 1))
        xpad = jnp.pad(x, ((0, 0), (1, 1), (1, 1), (0, Cin_p - Cin)))
        Hp, Wp = H + 2, W + 2
        Hq, Wq = -(-Hp // s), -(-Wp // s)
        if s == 1:
            xph = xpad.reshape(1, N, Hq, Wq, Cin_p)          # no transpose needed
        else:
            xpad = jnp.pad(xpad, ((0, 0), (0, Hq * s - Hp), (0, Wq * s - Wp), (0, 0)))
            xph = (xpad.reshape(N, Hq, s, Wq, s, Cin_p)
                       .transpose(2, 4, 0, 1, 3, 5)
                       .reshape(s * s, N, Hq, Wq, Cin_p))
        xph = xph.astype(mxu_dtype)      # bf16 staging halves the HBM stream

        # ---- batch-tile selection: biggest divisor of N that fits VMEM budget.
        def est(bt):
            mt = bt * Mo
            x_tile = s * s * bt * Hq * Wq * Cin_p * xbytes
            w_res = (9 * Cin_p + 9 * Cout_p + (Cin_p if has_proj else 0)) * Cout_p * xbytes
            h_tile = mt * Cout_p * xbytes
            c1 = (2 * x_tile + 2 * w_res + 2 * h_tile * (2 if has_proj else 1)
                  + mt * 9 * Cin_p * xbytes)
            c2 = (4 * h_tile + 2 * w_res
                  + bt * (Ho + 2) * (Wo + 2) * Cout_p * xbytes
                  + mt * 9 * Cout_p * xbytes)
            c3 = (2 * h_tile * (2 if has_proj else 1)
                  + (0 if has_proj else 2 * x_tile) + 2 * mt * Cout_p * 4)
            return max(c1, c2, c3) + 16 * 8 * Cout_p * 4

        budget = int(vmem_cap * 0.55)
        valid = [c for c in range(1, N + 1)
                 if N % c == 0 and ((c * Mo) % 8 == 0 or c == N)]
        fitting = [c for c in valid if est(c) <= budget]
        Bt = max(fitting) if fitting else min(valid)
        n_tiles = N // Bt
        Mt = Bt * Mo
        vmem_limit = int(min(vmem_cap * 0.85, max(32 * 2**20, 2 * est(Bt))))

        cp_red = pltpu.CompilerParams(dimension_semantics=("arbitrary",),
                                      vmem_limit_bytes=vmem_limit)
        cp_par = pltpu.CompilerParams(dimension_semantics=("parallel",),
                                      vmem_limit_bytes=vmem_limit)

        tile_spec = lambda: pl.BlockSpec((Mt, Cout_p), lambda n: (n, 0))
        const_spec = lambda r, c: pl.BlockSpec((r, c), lambda n: (0, 0))
        xph_spec = lambda: pl.BlockSpec((s * s, Bt, Hq, Wq, Cin_p),
                                        lambda n: (0, n, 0, 0, 0))

        # -------- pass 1: conv1 (+ shortcut conv), BN1 / BN_s statistics ------
        in_specs1 = [xph_spec(), const_spec(9 * Cin_p, Cout_p)]
        args1 = [xph, w1k]
        if has_proj:
            in_specs1.append(const_spec(Cin_p, Cout_p))
            args1.append(wsk)
        in_specs1.append(const_spec(8, Cout_p))
        args1.append(pvec)

        out_shapes1 = [jax.ShapeDtypeStruct((N * Mo, Cout_p), stage_dtype)]
        out_specs1 = [tile_spec()]
        if has_proj:
            out_shapes1.append(jax.ShapeDtypeStruct((N * Mo, Cout_p), stage_dtype))
            out_specs1.append(tile_spec())
        out_shapes1.append(jax.ShapeDtypeStruct((8, Cout_p), jnp.float32))
        out_specs1.append(const_spec(8, Cout_p))

        res1 = pl.pallas_call(
            functools.partial(_conv1_kernel, s, Ho, Wo, Bt, has_proj),
            out_shape=tuple(out_shapes1),
            grid_spec=pltpu.PrefetchScalarGridSpec(
                num_scalar_prefetch=0, grid=(n_tiles,),
                in_specs=in_specs1, out_specs=out_specs1,
                scratch_shapes=[pltpu.VMEM((Mt, 9 * Cin_p), mxu_dtype)]),
            compiler_params=cp_red,
        )(*args1)
        if has_proj:
            h1, hs, stats1 = res1
        else:
            h1, stats1 = res1
            hs = None

        # -------- pass 2: BN1 + ReLU + conv2, BN2 statistics ------------------
        h2, stats2 = pl.pallas_call(
            functools.partial(_conv2_kernel, Ho, Wo, Bt, Mtot),
            out_shape=(jax.ShapeDtypeStruct((N * Mo, Cout_p), stage_dtype),
                       jax.ShapeDtypeStruct((8, Cout_p), jnp.float32)),
            grid_spec=pltpu.PrefetchScalarGridSpec(
                num_scalar_prefetch=0, grid=(n_tiles,),
                in_specs=[tile_spec(), const_spec(8, Cout_p),
                          const_spec(9 * Cout_p, Cout_p), const_spec(8, Cout_p)],
                out_specs=[tile_spec(), const_spec(8, Cout_p)],
                scratch_shapes=[
                    pltpu.VMEM((Bt, Ho + 2, Wo + 2, Cout_p), mxu_dtype),
                    pltpu.VMEM((Mt, 9 * Cout_p), mxu_dtype)]),
            compiler_params=cp_red,
        )(h1, stats1, w2k, pvec)

        # -------- pass 3: BN2 + shortcut + add + ReLU --------------------------
        in_specs3 = [tile_spec()]
        args3 = [h2]
        if has_proj:
            in_specs3 += [tile_spec(), const_spec(8, Cout_p)]
            args3 += [hs, stats1]
        else:
            in_specs3 += [xph_spec()]
            args3 += [xph]
        in_specs3 += [const_spec(8, Cout_p), const_spec(8, Cout_p)]
        args3 += [stats2, pvec]

        out = pl.pallas_call(
            functools.partial(_emit_kernel, Ho, Wo, Bt, Mtot, has_proj),
            out_shape=jax.ShapeDtypeStruct((N * Mo, Cout_p), jnp.float32),
            grid_spec=pltpu.PrefetchScalarGridSpec(
                num_scalar_prefetch=0, grid=(n_tiles,),
                in_specs=in_specs3, out_specs=tile_spec()),
            compiler_params=cp_par,
        )(*args3)

        out = out.reshape(N, Ho, Wo, Cout_p)[..., :Cout]
        return jnp.transpose(out, (0, 3, 1, 2))             # back to NCHW

    return forward


# ---------------- pure-JAX reference (for correctness check) ----------------
def reference(x_nchw, params, stride):
    x = jnp.transpose(x_nchw, (0, 2, 3, 1)).astype(jnp.float32)

    def conv(v, w, s, pad):
        return lax.conv_general_dilated(v, w, (s, s), pad,
                                        dimension_numbers=("NHWC", "HWIO", "NHWC"))

    def bn(h, g, b):
        mu = jnp.mean(h, axis=(0, 1, 2), keepdims=True)
        var = jnp.mean((h - mu) ** 2, axis=(0, 1, 2), keepdims=True)
        return (h - mu) / jnp.sqrt(var + EPS) * g + b

    h1 = conv(x, params["w1"], stride, [(1, 1), (1, 1)]) + params["b1"]
    y1 = jax.nn.relu(bn(h1, params["g1"], params["be1"]))
    h2 = conv(y1, params["w2"], 1, [(1, 1), (1, 1)]) + params["b2"]
    y2 = bn(h2, params["g2"], params["be2"])
    if "ws" in params:
        sc = bn(conv(x, params["ws"], stride, [(0, 0), (0, 0)]),
                params["gs"], params["bes"])
    else:
        sc = x
    return jnp.transpose(jax.nn.relu(y2 + sc), (0, 3, 1, 2))


def make_params(key, Cin, Cout, stride):
    ks = jax.random.split(key, 12)
    p = dict(
        w1=0.2 * jax.random.normal(ks[0], (3, 3, Cin, Cout), jnp.float32),   # HWIO
        b1=0.1 * jax.random.normal(ks[1], (Cout,), jnp.float32),
        g1=1.0 + 0.1 * jax.random.normal(ks[2], (Cout,), jnp.float32),
        be1=0.1 * jax.random.normal(ks[3], (Cout,), jnp.float32),
        w2=0.2 * jax.random.normal(ks[4], (3, 3, Cout, Cout), jnp.float32),
        b2=0.1 * jax.random.normal(ks[5], (Cout,), jnp.float32),
        g2=1.0 + 0.1 * jax.random.normal(ks[6], (Cout,), jnp.float32),
        be2=0.1 * jax.random.normal(ks[7], (Cout,), jnp.float32),
    )
    if stride != 1 or Cin != Cout:
        p["ws"] = 0.3 * jax.random.normal(ks[8], (1, 1, Cin, Cout), jnp.float32)
        p["gs"] = 1.0 + 0.1 * jax.random.normal(ks[9], (Cout,), jnp.float32)
        p["bes"] = 0.1 * jax.random.normal(ks[10], (Cout,), jnp.float32)
    return p


if __name__ == "__main__":
    key = jax.random.PRNGKey(0)
    kx, kp1, kp2 = jax.random.split(key, 3)

    x = jax.random.normal(kx, (2, 4, 16, 16), jnp.float32)   # NCHW, like PyTorch

    cases = [("identity shortcut", make_params(kp1, 4, 4, 1), 1),
             ("projection shortcut", make_params(kp2, 4, 8, 2), 2)]

    for name, p, s in cases:
        ref = np.asarray(jax.block_until_ready(reference(x, p, s)))

        # Exact-math check: f32 MXU operands / f32 staging, tight tolerance.
        fwd32 = make_residual_block(p, s, mxu_dtype=jnp.float32)
        out32 = np.asarray(jax.block_until_ready(fwd32(x)))
        np.testing.assert_allclose(out32, ref, rtol=2e-3, atol=2e-3,
                                   err_msg=f"{name} (f32 MXU)")

        # Default fast path: bf16 MXU operands / bf16 staging, f32 BN math.
        fwdbf = make_residual_block(p, s, mxu_dtype=jnp.bfloat16)
        outbf = np.asarray(jax.block_until_ready(fwdbf(x)))
        np.testing.assert_allclose(outbf, ref, rtol=5e-2, atol=1e-1,
                                   err_msg=f"{name} (bf16 MXU)")

    print("KERNEL_OK")
</pallas_src>

<mosaic_0001>
module attributes {stable_mosaic.version = 11 : i64} {
  func.func @_conv1_kernel(%arg0: i32, %arg1: memref<1x2x18x18x128xf32, #tpu.memory_space<vmem>>, %arg2: memref<1152x128xf32, #tpu.memory_space<vmem>>, %arg3: memref<8x128xf32, #tpu.memory_space<vmem>>, %arg4: memref<512x128xf32, #tpu.memory_space<vmem>>, %arg5: memref<8x128xf32, #tpu.memory_space<vmem>>, %arg6: memref<512x1152xf32, #tpu.memory_space<vmem>>) attributes {dimension_semantics = [#tpu.dimension_semantics<arbitrary>], iteration_bounds = array<i64: 1>, scalar_prefetch = 0 : i64, scratch_operands = 1 : i64, tpu.core_type = #tpu.core_type<tc>, window_params = [{transform_indices = @transform_0, window_bounds = array<i64: 1, 2, 18, 18, 128>}, {pipeline_mode = #tpu.pipeline_mode<synchronous>, transform_indices = @transform_1, window_bounds = array<i64: 1152, 128>}, {pipeline_mode = #tpu.pipeline_mode<synchronous>, transform_indices = @transform_2, window_bounds = array<i64: 8, 128>}, {transform_indices = @transform_3, window_bounds = array<i64: 512, 128>}, {pipeline_mode = #tpu.pipeline_mode<synchronous>, transform_indices = @transform_4, window_bounds = array<i64: 8, 128>}]} {
    %c0_i32 = arith.constant 0 : i32
    %0 = arith.cmpi eq, %arg0, %c0_i32 : i32
    %1 = arith.extui %0 : i1 to i32
    %c0_i32_0 = arith.constant 0 : i32
    %2 = arith.cmpi ne, %1, %c0_i32_0 : i32
    scf.if %2 {
      %cst_76 = arith.constant 0.000000e+00 : f32
      %74 = vector.broadcast %cst_76 : f32 to vector<8x128xf32>
      %c0_77 = arith.constant 0 : index
      %c0_78 = arith.constant 0 : index
      %75 = vector.load %arg5[%c0_77, %c0_78] : memref<8x128xf32, #tpu.memory_space<vmem>>, vector<8x128xf32>
      tpu.vector_store %arg5[%c0_77, %c0_78], %74 {strides = array<i32>} : memref<8x128xf32, #tpu.memory_space<vmem>>, vector<8x128xf32>,
    } else {
    }
    %c0 = arith.constant 0 : index
    %c0_1 = arith.constant 0 : index
    %c0_2 = arith.constant 0 : index
    %c0_3 = arith.constant 0 : index
    %c0_4 = arith.constant 0 : index
    %3 = vector.load %arg1[%c0, %c0_1, %c0_2, %c0_3, %c0_4] : memref<1x2x18x18x128xf32, #tpu.memory_space<vmem>>, vector<1x2x16x16x128xf32>
    %4 = vector.shape_cast %3 : vector<1x2x16x16x128xf32> to vector<2x16x16x128xf32>
    %5 = vector.shape_cast %4 : vector<2x16x16x128xf32> to vector<512x128xf32>
    %c0_5 = arith.constant 0 : index
    %c0_6 = arith.constant 0 : index
    %6 = vector.load %arg6[%c0_5, %c0_6] : memref<512x1152xf32, #tpu.memory_space<vmem>>, vector<512x128xf32>
    tpu.vector_store %arg6[%c0_5, %c0_6], %5 {strides = array<i32>} : memref<512x1152xf32, #tpu.memory_space<vmem>>, vector<512x128xf32>,
    %c0_7 = arith.constant 0 : index
    %c0_8 = arith.constant 0 : index
    %c0_9 = arith.constant 0 : index
    %c1 = arith.constant 1 : index
    %c0_10 = arith.constant 0 : index
    %7 = vector.load %arg1[%c0_7, %c0_8, %c0_9, %c1, %c0_10] : memref<1x2x18x18x128xf32, #tpu.memory_space<vmem>>, vector<1x2x16x16x128xf32>
    %8 = vector.shape_cast %7 : vector<1x2x16x16x128xf32> to vector<2x16x16x128xf32>
    %9 = vector.shape_cast %8 : vector<2x16x16x128xf32> to vector<512x128xf32>
    %c0_11 = arith.constant 0 : index
    %c128 = arith.constant 128 : index
    %10 = vector.load %arg6[%c0_11, %c128] : memref<512x1152xf32, #tpu.memory_space<vmem>>, vector<512x128xf32>
    tpu.vector_store %arg6[%c0_11, %c128], %9 {strides = array<i32>} : memref<512x1152xf32, #tpu.memory_space<vmem>>, vector<512x128xf32>,
    %c0_12 = arith.constant 0 : index
    %c0_13 = arith.constant 0 : index
    %c0_14 = arith.constant 0 : index
    %c2 = arith.constant 2 : index
    %c0_15 = arith.constant 0 : index
    %11 = vector.load %arg1[%c0_12, %c0_13, %c0_14, %c2, %c0_15] : memref<1x2x18x18x128xf32, #tpu.memory_space<vmem>>, vector<1x2x16x16x128xf32>
    %12 = vector.shape_cast %11 : vector<1x2x16x16x128xf32> to vector<2x16x16x128xf32>
    %13 = vector.shape_cast %12 : vector<2x16x16x128xf32> to vector<512x128xf32>
    %c0_16 = arith.constant 0 : index
    %c256 = arith.constant 256 : index
    %14 = vector.load %arg6[%c0_16, %c256] : memref<512x1152xf32, #tpu.memory_space<vmem>>, vector<512x128xf32>
    tpu.vector_store %arg6[%c0_16, %c256], %13 {strides = array<i32>} : memref<512x1152xf32, #tpu.memory_space<vmem>>, vector<512x128xf32>,
    %c0_17 = arith.constant 0 : index
    %c0_18 = arith.constant 0 : index
    %c1_19 = arith.constant 1 : index
    %c0_20 = arith.constant 0 : index
    %c0_21 = arith.constant 0 : index
    %15 = vector.load %arg1[%c0_17, %c0_18, %c1_19, %c0_20, %c0_21] : memref<1x2x18x18x128xf32, #tpu.memory_space<vmem>>, vector<1x2x16x16x128xf32>
    %16 = vector.shape_cast %15 : vector<1x2x16x16x128xf32> to vector<2x16x16x128xf32>
    %17 = vector.shape_cast %16 : vector<2x16x16x128xf32> to vector<512x128xf32>
    %c0_22 = arith.constant 0 : index
    %c384 = arith.constant 384 : index
    %18 = vector.load %arg6[%c0_22, %c384] : memref<512x1152xf32, #tpu.memory_space<vmem>>, vector<512x128xf32>
    tpu.vector_store %arg6[%c0_22, %c384], %17 {strides = array<i32>} : memref<512x1152xf32, #tpu.memory_space<vmem>>, vector<512x128xf32>,
    %c0_23 = arith.constant 0 : index
    %c0_24 = arith.constant 0 : index
    %c1_25 = arith.constant 1 : index
    %c1_26 = arith.constant 1 : index
    %c0_27 = arith.constant 0 : index
    %19 = vector.load %arg1[%c0_23, %c0_24, %c1_25, %c1_26, %c0_27] : memref<1x2x18x18x128xf32, #tpu.memory_space<vmem>>, vector<1x2x16x16x128xf32>
    %20 = vector.shape_cast %19 : vector<1x2x16x16x128xf32> to vector<2x16x16x128xf32>
    %21 = vector.shape_cast %20 : vector<2x16x16x128xf32> to vector<512x128xf32>
    %c0_28 = arith.constant 0 : index
    %c512 = arith.constant 512 : index
    %22 = vector.load %arg6[%c0_28, %c512] : memref<512x1152xf32, #tpu.memory_space<vmem>>, vector<512x128xf32>
    tpu.vector_store %arg6[%c0_28, %c512], %21 {strides = array<i32>} : memref<512x1152xf32, #tpu.memory_space<vmem>>, vector<512x128xf32>,
    %c0_29 = arith.constant 0 : index
    %c0_30 = arith.constant 0 : index
    %c1_31 = arith.constant 1 : index
    %c2_32 = arith.constant 2 : index
    %c0_33 = arith.constant 0 : index
    %23 = vector.load %arg1[%c0_29, %c0_30, %c1_31, %c2_32, %c0_33] : memref<1x2x18x18x128xf32, #tpu.memory_space<vmem>>, vector<1x2x16x16x128xf32>
    %24 = vector.shape_cast %23 : vector<1x2x16x16x128xf32> to vector<2x16x16x128xf32>
    %25 = vector.shape_cast %24 : vector<2x16x16x128xf32> to vector<512x128xf32>
    %c0_34 = arith.constant 0 : index
    %c640 = arith.constant 640 : index
    %26 = vector.load %arg6[%c0_34, %c640] : memref<512x1152xf32, #tpu.memory_space<vmem>>, vector<512x128xf32>
    tpu.vector_store %arg6[%c0_34, %c640], %25 {strides = array<i32>} : memref<512x1152xf32, #tpu.memory_space<vmem>>, vector<512x128xf32>,
    %c0_35 = arith.constant 0 : index
    %c0_36 = arith.constant 0 : index
    %c2_37 = arith.constant 2 : index
    %c0_38 = arith.constant 0 : index
    %c0_39 = arith.constant 0 : index
    %27 = vector.load %arg1[%c0_35, %c0_36, %c2_37, %c0_38, %c0_39] : memref<1x2x18x18x128xf32, #tpu.memory_space<vmem>>, vector<1x2x16x16x128xf32>
    %28 = vector.shape_cast %27 : vector<1x2x16x16x128xf32> to vector<2x16x16x128xf32>
    %29 = vector.shape_cast %28 : vector<2x16x16x128xf32> to vector<512x128xf32>
    %c0_40 = arith.constant 0 : index
    %c768 = arith.constant 768 : index
    %30 = vector.load %arg6[%c0_40, %c768] : memref<512x1152xf32, #tpu.memory_space<vmem>>, vector<512x128xf32>
    tpu.vector_store %arg6[%c0_40, %c768], %29 {strides = array<i32>} : memref<512x1152xf32, #tpu.memory_space<vmem>>, vector<512x128xf32>,
    %c0_41 = arith.constant 0 : index
    %c0_42 = arith.constant 0 : index
    %c2_43 = arith.constant 2 : index
    %c1_44 = arith.constant 1 : index
    %c0_45 = arith.constant 0 : index
    %31 = vector.load %arg1[%c0_41, %c0_42, %c2_43, %c1_44, %c0_45] : memref<1x2x18x18x128xf32, #tpu.memory_space<vmem>>, vector<1x2x16x16x128xf32>
    %32 = vector.shape_cast %31 : vector<1x2x16x16x128xf32> to vector<2x16x16x128xf32>
    %33 = vector.shape_cast %32 : vector<2x16x16x128xf32> to vector<512x128xf32>
    %c0_46 = arith.constant 0 : index
    %c896 = arith.constant 896 : index
    %34 = vector.load %arg6[%c0_46, %c896] : memref<512x1152xf32, #tpu.memory_space<vmem>>, vector<512x128xf32>
    tpu.vector_store %arg6[%c0_46, %c896], %33 {strides = array<i32>} : memref<512x1152xf32, #tpu.memory_space<vmem>>, vector<512x128xf32>,
    %c0_47 = arith.constant 0 : index
    %c0_48 = arith.constant 0 : index
    %c2_49 = arith.constant 2 : index
    %c2_50 = arith.constant 2 : index
    %c0_51 = arith.constant 0 : index
    %35 = vector.load %arg1[%c0_47, %c0_48, %c2_49, %c2_50, %c0_51] : memref<1x2x18x18x128xf32, #tpu.memory_space<vmem>>, vector<1x2x16x16x128xf32>
    %36 = vector.shape_cast %35 : vector<1x2x16x16x128xf32> to vector<2x16x16x128xf32>
    %37 = vector.shape_cast %36 : vector<2x16x16x128xf32> to vector<512x128xf32>
    %c0_52 = arith.constant 0 : index
    %c1024 = arith.constant 1024 : index
    %38 = vector.load %arg6[%c0_52, %c1024] : memref<512x1152xf32, #tpu.memory_space<vmem>>, vector<512x128xf32>
    tpu.vector_store %arg6[%c0_52, %c1024], %37 {strides = array<i32>} : memref<512x1152xf32, #tpu.memory_space<vmem>>, vector<512x128xf32>,
    %c0_53 = arith.constant 0 : index
    %c0_54 = arith.constant 0 : index
    %39 = vector.load %arg6[%c0_53, %c0_54] : memref<512x1152xf32, #tpu.memory_space<vmem>>, vector<512x1152xf32>
    %c0_55 = arith.constant 0 : index
    %c0_56 = arith.constant 0 : index
    %40 = vector.load %arg2[%c0_55, %c0_56] : memref<1152x128xf32, #tpu.memory_space<vmem>>, vector<1152x128xf32>
    %cst = arith.constant dense<0.000000e+00> : vector<512x128xf32>
    %41 = tpu.matmul %39, %40, %cst {dimension_numbers = #tpu.dot_dimension_numbers<[1], [0], [0], [1], [0, 0, 1, 1], [], []>} : vector<512x1152xf32>, vector<1152x128xf32>, vector<512x128xf32> -> vector<512x128xf32>
    %c0_57 = arith.constant 0 : index
    %c0_58 = arith.constant 0 : index
    %42 = vector.load %arg3[%c0_57, %c0_58] : memref<8x128xf32, #tpu.memory_space<vmem>>, vector<1x128xf32>
    %43 = vector.broadcast %42 : vector<1x128xf32> to vector<512x128xf32>
    %44 = arith.addf %41, %43 : vector<512x128xf32>
    %c0_59 = arith.constant 0 : index
    %c0_60 = arith.constant 0 : index
    %45 = vector.load %arg4[%c0_59, %c0_60] : memref<512x128xf32, #tpu.memory_space<vmem>>, vector<512x128xf32>
    tpu.vector_store %arg4[%c0_59, %c0_60], %44 {strides = array<i32>} : memref<512x128xf32, #tpu.memory_space<vmem>>, vector<512x128xf32>,
    %cst_61 = arith.constant dense<0.000000e+00> : vector<128xf32>
    %46 = vector.multi_reduction <add>, %44, %cst_61 [0] : vector<512x128xf32> to vector<128xf32>
    %47 = vector.shape_cast %46 : vector<128xf32> to vector<1x128xf32>
    %cst_62 = arith.constant 0.001953125 : f32
    %48 = vector.broadcast %cst_62 : f32 to vector<1x128xf32>
    %49 = arith.mulf %47, %48 : vector<1x128xf32>
    %50 = vector.broadcast %49 : vector<1x128xf32> to vector<512x128xf32>
    %51 = arith.subf %44, %50 : vector<512x128xf32>
    %52 = arith.mulf %51, %51 : vector<512x128xf32>
    %cst_63 = arith.constant dense<0.000000e+00> : vector<128xf32>
    %53 = vector.multi_reduction <add>, %52, %cst_63 [0] : vector<512x128xf32> to vector<128xf32>
    %54 = vector.shape_cast %53 : vector<128xf32> to vector<1x128xf32>
    %55 = arith.sitofp %arg0 : i32 to f32
    %cst_64 = arith.constant 5.120000e+02 : f32
    %56 = arith.mulf %55, %cst_64 : f32
    %cst_65 = arith.constant 5.120000e+02 : f32
    %57 = arith.addf %56, %cst_65 : f32
    %c0_66 = arith.constant 0 : index
    %c0_67 = arith.constant 0 : index
    %58 = vector.load %arg5[%c0_66, %c0_67] : memref<8x128xf32, #tpu.memory_space<vmem>>, vector<1x128xf32>
    %59 = arith.subf %49, %58 : vector<1x128xf32>
    %cst_68 = arith.constant 5.120000e+02 : f32
    %60 = arith.divf %cst_68, %57 : f32
    %61 = vector.broadcast %60 : f32 to vector<1x128xf32>
    %62 = arith.mulf %59, %61 : vector<1x128xf32>
    %63 = arith.addf %58, %62 : vector<1x128xf32>
    %c0_69 = arith.constant 0 : index
    %c0_70 = arith.constant 0 : index
    %64 = vector.load %arg5[%c0_69, %c0_70] : memref<8x128xf32, #tpu.memory_space<vmem>>, vector<1x128xf32>
    tpu.vector_store %arg5[%c0_69, %c0_70], %63 {strides = array<i32>} : memref<8x128xf32, #tpu.memory_space<vmem>>, vector<1x128xf32>,
    %c1_71 = arith.constant 1 : index
    %c0_72 = arith.constant 0 : index
    %65 = vector.load %arg5[%c1_71, %c0_72] : memref<8x128xf32, #tpu.memory_space<vmem>>, vector<1x128xf32>
    %66 = arith.mulf %59, %59 : vector<1x128xf32>
    %cst_73 = arith.constant 5.120000e+02 : f32
    %67 = arith.divf %cst_73, %57 : f32
    %68 = arith.mulf %56, %67 : f32
    %69 = vector.broadcast %68 : f32 to vector<1x128xf32>
    %70 = arith.mulf %66, %69 : vector<1x128xf32>
    %71 = arith.addf %54, %70 : vector<1x128xf32>
    %72 = arith.addf %65, %71 : vector<1x128xf32>
    %c1_74 = arith.constant 1 : index
    %c0_75 = arith.constant 0 : index
    %73 = vector.load %arg5[%c1_74, %c0_75] : memref<8x128xf32, #tpu.memory_space<vmem>>, vector<1x128xf32>
    tpu.vector_store %arg5[%c1_74, %c0_75], %72 {strides = array<i32>} : memref<8x128xf32, #tpu.memory_space<vmem>>, vector<1x128xf32>,
    return
  }
  func.func @transform_0(%arg0: i32) -> (i32, i32, i32, i32, i32) {
    %c0_i32 = arith.constant 0 : i32
    %c0_i32_0 = arith.constant 0 : i32
    %c0_i32_1 = arith.constant 0 : i32
    %c0_i32_2 = arith.constant 0 : i32
    %c0_i32_3 = arith.constant 0 : i32
    return %c0_i32, %arg0, %c0_i32_0, %c0_i32_1, %c0_i32_2 : i32, i32, i32, i32, i32
  }
  func.func @transform_1(%arg0: i32) -> (i32, i32) {
    %c0_i32 = arith.constant 0 : i32
    %c0_i32_0 = arith.constant 0 : i32
    %c0_i32_1 = arith.constant 0 : i32
    return %c0_i32, %c0_i32_0 : i32, i32
  }
  func.func @transform_2(%arg0: i32) -> (i32, i32) {
    %c0_i32 = arith.constant 0 : i32
    %c0_i32_0 = arith.constant 0 : i32
    %c0_i32_1 = arith.constant 0 : i32
    return %c0_i32, %c0_i32_0 : i32, i32
  }
  func.func @transform_3(%arg0: i32) -> (i32, i32) {
    %c0_i32 = arith.constant 0 : i32
    %c0_i32_0 = arith.constant 0 : i32
    return %arg0, %c0_i32 : i32, i32
  }
  func.func @transform_4(%arg0: i32) -> (i32, i32) {
    %c0_i32 = arith.constant 0 : i32
    %c0_i32_0 = arith.constant 0 : i32
    %c0_i32_1 = arith.constant 0 : i32
    return %c0_i32, %c0_i32_0 : i32, i32
  }
}

module attributes {stable_mosaic.version = 11 : i64} {
  func.func @_conv2_kernel(%arg0: i32, %arg1: memref<512x128xf32, #tpu.memory_space<vmem>>, %arg2: memref<8x128xf32, #tpu.memory_space<vmem>>, %arg3: memref<1152x128xf32, #tpu.memory_space<vmem>>, %arg4: memref<8x128xf32, #tpu.memory_space<vmem>>, %arg5: memref<512x128xf32, #tpu.memory_space<vmem>>, %arg6: memref<8x128xf32, #tpu.memory_space<vmem>>, %arg7: memref<2x18x18x128xf32, #tpu.memory_space<vmem>>, %arg8: memref<512x1152xf32, #tpu.memory_space<vmem>>) attributes {dimension_semantics = [#tpu.dimension_semantics<arbitrary>], iteration_bounds = array<i64: 1>, scalar_prefetch = 0 : i64, scratch_operands = 2 : i64, tpu.core_type = #tpu.core_type<tc>, window_params = [{transform_indices = @transform_0, window_bounds = array<i64: 512, 128>}, {pipeline_mode = #tpu.pipeline_mode<synchronous>, transform_indices = @transform_1, window_bounds = array<i64: 8, 128>}, {pipeline_mode = #tpu.pipeline_mode<synchronous>, transform_indices = @transform_2, window_bounds = array<i64: 1152, 128>}, {pipeline_mode = #tpu.pipeline_mode<synchronous>, transform_indices = @transform_3, window_bounds = array<i64: 8, 128>}, {transform_indices = @transform_4, window_bounds = array<i64: 512, 128>}, {pipeline_mode = #tpu.pipeline_mode<synchronous>, transform_indices = @transform_5, window_bounds = array<i64: 8, 128>}]} {
    %c0_i32 = arith.constant 0 : i32
    %0 = arith.cmpi eq, %arg0, %c0_i32 : i32
    %1 = arith.extui %0 : i1 to i32
    %c0_i32_0 = arith.constant 0 : i32
    %2 = arith.cmpi ne, %1, %c0_i32_0 : i32
    scf.if %2 {
      %cst_83 = arith.constant 0.000000e+00 : f32
      %86 = vector.broadcast %cst_83 : f32 to vector<8x128xf32>
      %c0_84 = arith.constant 0 : index
      %c0_85 = arith.constant 0 : index
      %87 = vector.load %arg6[%c0_84, %c0_85] : memref<8x128xf32, #tpu.memory_space<vmem>>, vector<8x128xf32>
      tpu.vector_store %arg6[%c0_84, %c0_85], %86 {strides = array<i32>} : memref<8x128xf32, #tpu.memory_space<vmem>>, vector<8x128xf32>,
      %cst_86 = arith.constant 0.000000e+00 : f32
      %88 = vector.broadcast %cst_86 : f32 to vector<2x18x18x128xf32>
      %c0_87 = arith.constant 0 : index
      %c0_88 = arith.constant 0 : index
      %c0_89 = arith.constant 0 : index
      %c0_90 = arith.constant 0 : index
      %89 = vector.load %arg7[%c0_87, %c0_88, %c0_89, %c0_90] : memref<2x18x18x128xf32, #tpu.memory_space<vmem>>, vector<2x18x18x128xf32>
      tpu.vector_store %arg7[%c0_87, %c0_88, %c0_89, %c0_90], %88 {strides = array<i32>} : memref<2x18x18x128xf32, #tpu.memory_space<vmem>>, vector<2x18x18x128xf32>,
    } else {
    }
    %c0 = arith.constant 0 : index
    %c0_1 = arith.constant 0 : index
    %3 = vector.load %arg1[%c0, %c0_1] : memref<512x128xf32, #tpu.memory_space<vmem>>, vector<512x128xf32>
    %c0_2 = arith.constant 0 : index
    %c0_3 = arith.constant 0 : index
    %4 = vector.load %arg2[%c0_2, %c0_3] : memref<8x128xf32, #tpu.memory_space<vmem>>, vector<1x128xf32>
    %c1 = arith.constant 1 : index
    %c0_4 = arith.constant 0 : index
    %5 = vector.load %arg2[%c1, %c0_4] : memref<8x128xf32, #tpu.memory_space<vmem>>, vector<1x128xf32>
    %cst = arith.constant 0.001953125 : f32
    %6 = vector.broadcast %cst : f32 to vector<1x128xf32>
    %7 = arith.mulf %5, %6 : vector<1x128xf32>
    %cst_5 = arith.constant 9.99999974E-6 : f32
    %8 = vector.broadcast %cst_5 : f32 to vector<1x128xf32>
    %9 = arith.addf %7, %8 : vector<1x128xf32>
    %10 = math.rsqrt %9 : vector<1x128xf32>
    %11 = vector.broadcast %4 : vector<1x128xf32> to vector<512x128xf32>
    %12 = arith.subf %3, %11 : vector<512x128xf32>
    %c1_6 = arith.constant 1 : index
    %c0_7 = arith.constant 0 : index
    %13 = vector.load %arg4[%c1_6, %c0_7] : memref<8x128xf32, #tpu.memory_space<vmem>>, vector<1x128xf32>
    %14 = arith.mulf %10, %13 : vector<1x128xf32>
    %15 = vector.broadcast %14 : vector<1x128xf32> to vector<512x128xf32>
    %16 = arith.mulf %12, %15 : vector<512x128xf32>
    %c2 = arith.constant 2 : index
    %c0_8 = arith.constant 0 : index
    %17 = vector.load %arg4[%c2, %c0_8] : memref<8x128xf32, #tpu.memory_space<vmem>>, vector<1x128xf32>
    %18 = vector.broadcast %17 : vector<1x128xf32> to vector<512x128xf32>
    %19 = arith.addf %16, %18 : vector<512x128xf32>
    %cst_9 = arith.constant 0.000000e+00 : f32
    %20 = vector.broadcast %cst_9 : f32 to vector<512x128xf32>
    %21 = arith.maximumf %19, %20 : vector<512x128xf32>
    %22 = vector.shape_cast %21 : vector<512x128xf32> to vector<2x16x16x128xf32>
    %c0_10 = arith.constant 0 : index
    %c1_11 = arith.constant 1 : index
    %c1_12 = arith.constant 1 : index
    %c0_13 = arith.constant 0 : index
    %23 = vector.load %arg7[%c0_10, %c1_11, %c1_12, %c0_13] : memref<2x18x18x128xf32, #tpu.memory_space<vmem>>, vector<2x16x16x128xf32>
    tpu.vector_store %arg7[%c0_10, %c1_11, %c1_12, %c0_13], %22 {strides = array<i32>} : memref<2x18x18x128xf32, #tpu.memory_space<vmem>>, vector<2x16x16x128xf32>,
    %c0_14 = arith.constant 0 : index
    %c0_15 = arith.constant 0 : index
    %c0_16 = arith.constant 0 : index
    %c0_17 = arith.constant 0 : index
    %24 = vector.load %arg7[%c0_14, %c0_15, %c0_16, %c0_17] : memref<2x18x18x128xf32, #tpu.memory_space<vmem>>, vector<2x16x16x128xf32>
    %25 = vector.shape_cast %24 : vector<2x16x16x128xf32> to vector<512x128xf32>
    %c0_18 = arith.constant 0 : index
    %c0_19 = arith.constant 0 : index
    %26 = vector.load %arg8[%c0_18, %c0_19] : memref<512x1152xf32, #tpu.memory_space<vmem>>, vector<512x128xf32>
    tpu.vector_store %arg8[%c0_18, %c0_19], %25 {strides = array<i32>} : memref<512x1152xf32, #tpu.memory_space<vmem>>, vector<512x128xf32>,
    %c0_20 = arith.constant 0 : index
    %c0_21 = arith.constant 0 : index
    %c1_22 = arith.constant 1 : index
    %c0_23 = arith.constant 0 : index
    %27 = vector.load %arg7[%c0_20, %c0_21, %c1_22, %c0_23] : memref<2x18x18x128xf32, #tpu.memory_space<vmem>>, vector<2x16x16x128xf32>
    %28 = vector.shape_cast %27 : vector<2x16x16x128xf32> to vector<512x128xf32>
    %c0_24 = arith.constant 0 : index
    %c128 = arith.constant 128 : index
    %29 = vector.load %arg8[%c0_24, %c128] : memref<512x1152xf32, #tpu.memory_space<vmem>>, vector<512x128xf32>
    tpu.vector_store %arg8[%c0_24, %c128], %28 {strides = array<i32>} : memref<512x1152xf32, #tpu.memory_space<vmem>>, vector<512x128xf32>,
    %c0_25 = arith.constant 0 : index
    %c0_26 = arith.constant 0 : index
    %c2_27 = arith.constant 2 : index
    %c0_28 = arith.constant 0 : index
    %30 = vector.load %arg7[%c0_25, %c0_26, %c2_27, %c0_28] : memref<2x18x18x128xf32, #tpu.memory_space<vmem>>, vector<2x16x16x128xf32>
    %31 = vector.shape_cast %30 : vector<2x16x16x128xf32> to vector<512x128xf32>
    %c0_29 = arith.constant 0 : index
    %c256 = arith.constant 256 : index
    %32 = vector.load %arg8[%c0_29, %c256] : memref<512x1152xf32, #tpu.memory_space<vmem>>, vector<512x128xf32>
    tpu.vector_store %arg8[%c0_29, %c256], %31 {strides = array<i32>} : memref<512x1152xf32, #tpu.memory_space<vmem>>, vector<512x128xf32>,
    %c0_30 = arith.constant 0 : index
    %c1_31 = arith.constant 1 : index
    %c0_32 = arith.constant 0 : index
    %c0_33 = arith.constant 0 : index
    %33 = vector.load %arg7[%c0_30, %c1_31, %c0_32, %c0_33] : memref<2x18x18x128xf32, #tpu.memory_space<vmem>>, vector<2x16x16x128xf32>
    %34 = vector.shape_cast %33 : vector<2x16x16x128xf32> to vector<512x128xf32>
    %c0_34 = arith.constant 0 : index
    %c384 = arith.constant 384 : index
    %35 = vector.load %arg8[%c0_34, %c384] : memref<512x1152xf32, #tpu.memory_space<vmem>>, vector<512x128xf32>
    tpu.vector_store %arg8[%c0_34, %c384], %34 {strides = array<i32>} : memref<512x1152xf32, #tpu.memory_space<vmem>>, vector<512x128xf32>,
    %c0_35 = arith.constant 0 : index
    %c1_36 = arith.constant 1 : index
    %c1_37 = arith.constant 1 : index
    %c0_38 = arith.constant 0 : index
    %36 = vector.load %arg7[%c0_35, %c1_36, %c1_37, %c0_38] : memref<2x18x18x128xf32, #tpu.memory_space<vmem>>, vector<2x16x16x128xf32>
    %37 = vector.shape_cast %36 : vector<2x16x16x128xf32> to vector<512x128xf32>
    %c0_39 = arith.constant 0 : index
    %c512 = arith.constant 512 : index
    %38 = vector.load %arg8[%c0_39, %c512] : memref<512x1152xf32, #tpu.memory_space<vmem>>, vector<512x128xf32>
    tpu.vector_store %arg8[%c0_39, %c512], %37 {strides = array<i32>} : memref<512x1152xf32, #tpu.memory_space<vmem>>, vector<512x128xf32>,
    %c0_40 = arith.constant 0 : index
    %c1_41 = arith.constant 1 : index
    %c2_42 = arith.constant 2 : index
    %c0_43 = arith.constant 0 : index
    %39 = vector.load %arg7[%c0_40, %c1_41, %c2_42, %c0_43] : memref<2x18x18x128xf32, #tpu.memory_space<vmem>>, vector<2x16x16x128xf32>
    %40 = vector.shape_cast %39 : vector<2x16x16x128xf32> to vector<512x128xf32>
    %c0_44 = arith.constant 0 : index
    %c640 = arith.constant 640 : index
    %41 = vector.load %arg8[%c0_44, %c640] : memref<512x1152xf32, #tpu.memory_space<vmem>>, vector<512x128xf32>
    tpu.vector_store %arg8[%c0_44, %c640], %40 {strides = array<i32>} : memref<512x1152xf32, #tpu.memory_space<vmem>>, vector<512x128xf32>,
    %c0_45 = arith.constant 0 : index
    %c2_46 = arith.constant 2 : index
    %c0_47 = arith.constant 0 : index
    %c0_48 = arith.constant 0 : index
    %42 = vector.load %arg7[%c0_45, %c2_46, %c0_47, %c0_48] : memref<2x18x18x128xf32, #tpu.memory_space<vmem>>, vector<2x16x16x128xf32>
    %43 = vector.shape_cast %42 : vector<2x16x16x128xf32> to vector<512x128xf32>
    %c0_49 = arith.constant 0 : index
    %c768 = arith.constant 768 : index
    %44 = vector.load %arg8[%c0_49, %c768] : memref<512x1152xf32, #tpu.memory_space<vmem>>, vector<512x128xf32>
    tpu.vector_store %arg8[%c0_49, %c768], %43 {strides = array<i32>} : memref<512x1152xf32, #tpu.memory_space<vmem>>, vector<512x128xf32>,
    %c0_50 = arith.constant 0 : index
    %c2_51 = arith.constant 2 : index
    %c1_52 = arith.constant 1 : index
    %c0_53 = arith.constant 0 : index
    %45 = vector.load %arg7[%c0_50, %c2_51, %c1_52, %c0_53] : memref<2x18x18x128xf32, #tpu.memory_space<vmem>>, vector<2x16x16x128xf32>
    %46 = vector.shape_cast %45 : vector<2x16x16x128xf32> to vector<512x128xf32>
    %c0_54 = arith.constant 0 : index
    %c896 = arith.constant 896 : index
    %47 = vector.load %arg8[%c0_54, %c896] : memref<512x1152xf32, #tpu.memory_space<vmem>>, vector<512x128xf32>
    tpu.vector_store %arg8[%c0_54, %c896], %46 {strides = array<i32>} : memref<512x1152xf32, #tpu.memory_space<vmem>>, vector<512x128xf32>,
    %c0_55 = arith.constant 0 : index
    %c2_56 = arith.constant 2 : index
    %c2_57 = arith.constant 2 : index
    %c0_58 = arith.constant 0 : index
    %48 = vector.load %arg7[%c0_55, %c2_56, %c2_57, %c0_58] : memref<2x18x18x128xf32, #tpu.memory_space<vmem>>, vector<2x16x16x128xf32>
    %49 = vector.shape_cast %48 : vector<2x16x16x128xf32> to vector<512x128xf32>
    %c0_59 = arith.constant 0 : index
    %c1024 = arith.constant 1024 : index
    %50 = vector.load %arg8[%c0_59, %c1024] : memref<512x1152xf32, #tpu.memory_space<vmem>>, vector<512x128xf32>
    tpu.vector_store %arg8[%c0_59, %c1024], %49 {strides = array<i32>} : memref<512x1152xf32, #tpu.memory_space<vmem>>, vector<512x128xf32>,
    %c0_60 = arith.constant 0 : index
    %c0_61 = arith.constant 0 : index
    %51 = vector.load %arg8[%c0_60, %c0_61] : memref<512x1152xf32, #tpu.memory_space<vmem>>, vector<512x1152xf32>
    %c0_62 = arith.constant 0 : index
    %c0_63 = arith.constant 0 : index
    %52 = vector.load %arg3[%c0_62, %c0_63] : memref<1152x128xf32, #tpu.memory_space<vmem>>, vector<1152x128xf32>
    %cst_64 = arith.constant dense<0.000000e+00> : vector<512x128xf32>
    %53 = tpu.matmul %51, %52, %cst_64 {dimension_numbers = #tpu.dot_dimension_numbers<[1], [0], [0], [1], [0, 0, 1, 1], [], []>} : vector<512x1152xf32>, vector<1152x128xf32>, vector<512x128xf32> -> vector<512x128xf32>
    %c3 = arith.constant 3 : index
    %c0_65 = arith.constant 0 : index
    %54 = vector.load %arg4[%c3, %c0_65] : memref<8x128xf32, #tpu.memory_space<vmem>>, vector<1x128xf32>
    %55 = vector.broadcast %54 : vector<1x128xf32> to vector<512x128xf32>
    %56 = arith.addf %53, %55 : vector<512x128xf32>
    %c0_66 = arith.constant 0 : index
    %c0_67 = arith.constant 0 : index
    %57 = vector.load %arg5[%c0_66, %c0_67] : memref<512x128xf32, #tpu.memory_space<vmem>>, vector<512x128xf32>
    tpu.vector_store %arg5[%c0_66, %c0_67], %56 {strides = array<i32>} : memref<512x128xf32, #tpu.memory_space<vmem>>, vector<512x128xf32>,
    %cst_68 = arith.constant dense<0.000000e+00> : vector<128xf32>
    %58 = vector.multi_reduction <add>, %56, %cst_68 [0] : vector<512x128xf32> to vector<128xf32>
    %59 = vector.shape_cast %58 : vector<128xf32> to vector<1x128xf32>
    %cst_69 = arith.constant 0.001953125 : f32
    %60 = vector.broadcast %cst_69 : f32 to vector<1x128xf32>
    %61 = arith.mulf %59, %60 : vector<1x128xf32>
    %62 = vector.broadcast %61 : vector<1x128xf32> to vector<512x128xf32>
    %63 = arith.subf %56, %62 : vector<512x128xf32>
    %64 = arith.mulf %63, %63 : vector<512x128xf32>
    %cst_70 = arith.constant dense<0.000000e+00> : vector<128xf32>
    %65 = vector.multi_reduction <add>, %64, %cst_70 [0] : vector<512x128xf32> to vector<128xf32>
    %66 = vector.shape_cast %65 : vector<128xf32> to vector<1x128xf32>
    %67 = arith.sitofp %arg0 : i32 to f32
    %cst_71 = arith.constant 5.120000e+02 : f32
    %68 = arith.mulf %67, %cst_71 : f32
    %cst_72 = arith.constant 5.120000e+02 : f32
    %69 = arith.addf %68, %cst_72 : f32
    %c0_73 = arith.constant 0 : index
    %c0_74 = arith.constant 0 : index
    %70 = vector.load %arg6[%c0_73, %c0_74] : memref<8x128xf32, #tpu.memory_space<vmem>>, vector<1x128xf32>
    %71 = arith.subf %61, %70 : vector<1x128xf32>
    %cst_75 = arith.constant 5.120000e+02 : f32
    %72 = arith.divf %cst_75, %69 : f32
    %73 = vector.broadcast %72 : f32 to vector<1x128xf32>
    %74 = arith.mulf %71, %73 : vector<1x128xf32>
    %75 = arith.addf %70, %74 : vector<1x128xf32>
    %c0_76 = arith.constant 0 : index
    %c0_77 = arith.constant 0 : index
    %76 = vector.load %arg6[%c0_76, %c0_77] : memref<8x128xf32, #tpu.memory_space<vmem>>, vector<1x128xf32>
    tpu.vector_store %arg6[%c0_76, %c0_77], %75 {strides = array<i32>} : memref<8x128xf32, #tpu.memory_space<vmem>>, vector<1x128xf32>,
    %c1_78 = arith.constant 1 : index
    %c0_79 = arith.constant 0 : index
    %77 = vector.load %arg6[%c1_78, %c0_79] : memref<8x128xf32, #tpu.memory_space<vmem>>, vector<1x128xf32>
    %78 = arith.mulf %71, %71 : vector<1x128xf32>
    %cst_80 = arith.constant 5.120000e+02 : f32
    %79 = arith.divf %cst_80, %69 : f32
    %80 = arith.mulf %68, %79 : f32
    %81 = vector.broadcast %80 : f32 to vector<1x128xf32>
    %82 = arith.mulf %78, %81 : vector<1x128xf32>
    %83 = arith.addf %66, %82 : vector<1x128xf32>
    %84 = arith.addf %77, %83 : vector<1x128xf32>
    %c1_81 = arith.constant 1 : index
    %c0_82 = arith.constant 0 : index
    %85 = vector.load %arg6[%c1_81, %c0_82] : memref<8x128xf32, #tpu.memory_space<vmem>>, vector<1x128xf32>
    tpu.vector_store %arg6[%c1_81, %c0_82], %84 {strides = array<i32>} : memref<8x128xf32, #tpu.memory_space<vmem>>, vector<1x128xf32>,
    return
  }
  func.func @transform_0(%arg0: i32) -> (i32, i32) {
    %c0_i32 = arith.constant 0 : i32
    %c0_i32_0 = arith.constant 0 : i32
    return %arg0, %c0_i32 : i32, i32
  }
  func.func @transform_1(%arg0: i32) -> (i32, i32) {
    %c0_i32 = arith.constant 0 : i32
    %c0_i32_0 = arith.constant 0 : i32
    %c0_i32_1 = arith.constant 0 : i32
    return %c0_i32, %c0_i32_0 : i32, i32
  }
  func.func @transform_2(%arg0: i32) -> (i32, i32) {
    %c0_i32 = arith.constant 0 : i32
    %c0_i32_0 = arith.constant 0 : i32
    %c0_i32_1 = arith.constant 0 : i32
    return %c0_i32, %c0_i32_0 : i32, i32
  }
  func.func @transform_3(%arg0: i32) -> (i32, i32) {
    %c0_i32 = arith.constant 0 : i32
    %c0_i32_0 = arith.constant 0 : i32
    %c0_i32_1 = arith.constant 0 : i32
    return %c0_i32, %c0_i32_0 : i32, i32
  }
  func.func @transform_4(%arg0: i32) -> (i32, i32) {
    %c0_i32 = arith.constant 0 : i32
    %c0_i32_0 = arith.constant 0 : i32
    return %arg0, %c0_i32 : i32, i32
  }
  func.func @transform_5(%arg0: i32) -> (i32, i32) {
    %c0_i32 = arith.constant 0 : i32
    %c0_i32_0 = arith.constant 0 : i32
    %c0_i32_1 = arith.constant 0 : i32
    return %c0_i32, %c0_i32_0 : i32, i32
  }
}

module attributes {stable_mosaic.version = 11 : i64} {
  func.func @_emit_kernel(%arg0: i32, %arg1: memref<512x128xf32, #tpu.memory_space<vmem>>, %arg2: memref<1x2x18x18x128xf32, #tpu.memory_space<vmem>>, %arg3: memref<8x128xf32, #tpu.memory_space<vmem>>, %arg4: memref<8x128xf32, #tpu.memory_space<vmem>>, %arg5: memref<512x128xf32, #tpu.memory_space<vmem>>) attributes {dimension_semantics = [#tpu.dimension_semantics<parallel>], iteration_bounds = array<i64: 1>, scalar_prefetch = 0 : i64, scratch_operands = 0 : i64, tpu.core_type = #tpu.core_type<tc>, window_params = [{transform_indices = @transform_0, window_bounds = array<i64: 512, 128>}, {transform_indices = @transform_1, window_bounds = array<i64: 1, 2, 18, 18, 128>}, {pipeline_mode = #tpu.pipeline_mode<synchronous>, transform_indices = @transform_2, window_bounds = array<i64: 8, 128>}, {pipeline_mode = #tpu.pipeline_mode<synchronous>, transform_indices = @transform_3, window_bounds = array<i64: 8, 128>}, {transform_indices = @transform_4, window_bounds = array<i64: 512, 128>}]} {
    %c0 = arith.constant 0 : index
    %c0_0 = arith.constant 0 : index
    %0 = vector.load %arg1[%c0, %c0_0] : memref<512x128xf32, #tpu.memory_space<vmem>>, vector<512x128xf32>
    %c0_1 = arith.constant 0 : index
    %c0_2 = arith.constant 0 : index
    %1 = vector.load %arg3[%c0_1, %c0_2] : memref<8x128xf32, #tpu.memory_space<vmem>>, vector<1x128xf32>
    %c1 = arith.constant 1 : index
    %c0_3 = arith.constant 0 : index
    %2 = vector.load %arg3[%c1, %c0_3] : memref<8x128xf32, #tpu.memory_space<vmem>>, vector<1x128xf32>
    %cst = arith.constant 0.001953125 : f32
    %3 = vector.broadcast %cst : f32 to vector<1x128xf32>
    %4 = arith.mulf %2, %3 : vector<1x128xf32>
    %cst_4 = arith.constant 9.99999974E-6 : f32
    %5 = vector.broadcast %cst_4 : f32 to vector<1x128xf32>
    %6 = arith.addf %4, %5 : vector<1x128xf32>
    %7 = math.rsqrt %6 : vector<1x128xf32>
    %8 = vector.broadcast %1 : vector<1x128xf32> to vector<512x128xf32>
    %9 = arith.subf %0, %8 : vector<512x128xf32>
    %c4 = arith.constant 4 : index
    %c0_5 = arith.constant 0 : index
    %10 = vector.load %arg4[%c4, %c0_5] : memref<8x128xf32, #tpu.memory_space<vmem>>, vector<1x128xf32>
    %11 = arith.mulf %7, %10 : vector<1x128xf32>
    %12 = vector.broadcast %11 : vector<1x128xf32> to vector<512x128xf32>
    %13 = arith.mulf %9, %12 : vector<512x128xf32>
    %c5 = arith.constant 5 : index
    %c0_6 = arith.constant 0 : index
    %14 = vector.load %arg4[%c5, %c0_6] : memref<8x128xf32, #tpu.memory_space<vmem>>, vector<1x128xf32>
    %15 = vector.broadcast %14 : vector<1x128xf32> to vector<512x128xf32>
    %16 = arith.addf %13, %15 : vector<512x128xf32>
    %c0_7 = arith.constant 0 : index
    %c0_8 = arith.constant 0 : index
    %c1_9 = arith.constant 1 : index
    %c1_10 = arith.constant 1 : index
    %c0_11 = arith.constant 0 : index
    %17 = vector.load %arg2[%c0_7, %c0_8, %c1_9, %c1_10, %c0_11] : memref<1x2x18x18x128xf32, #tpu.memory_space<vmem>>, vector<1x2x16x16x128xf32>
    %18 = vector.shape_cast %17 : vector<1x2x16x16x128xf32> to vector<2x16x16x128xf32>
    %19 = vector.shape_cast %18 : vector<2x16x16x128xf32> to vector<512x128xf32>
    %20 = arith.addf %16, %19 : vector<512x128xf32>
    %cst_12 = arith.constant 0.000000e+00 : f32
    %21 = vector.broadcast %cst_12 : f32 to vector<512x128xf32>
    %22 = arith.maximumf %20, %21 : vector<512x128xf32>
    %c0_13 = arith.constant 0 : index
    %c0_14 = arith.constant 0 : index
    %23 = vector.load %arg5[%c0_13, %c0_14] : memref<512x128xf32, #tpu.memory_space<vmem>>, vector<512x128xf32>
    tpu.vector_store %arg5[%c0_13, %c0_14], %22 {strides = array<i32>} : memref<512x128xf32, #tpu.memory_space<vmem>>, vector<512x128xf32>,
    return
  }
  func.func @transform_0(%arg0: i32) -> (i32, i32) {
    %c0_i32 = arith.constant 0 : i32
    %c0_i32_0 = arith.constant 0 : i32
    return %arg0, %c0_i32 : i32, i32
  }
  func.func @transform_1(%arg0: i32) -> (i32, i32, i32, i32, i32) {
    %c0_i32 = arith.constant 0 : i32
    %c0_i32_0 = arith.constant 0 : i32
    %c0_i32_1 = arith.constant 0 : i32
    %c0_i32_2 = arith.constant 0 : i32
    %c0_i32_3 = arith.constant 0 : i32
    return %c0_i32, %arg0, %c0_i32_0, %c0_i32_1, %c0_i32_2 : i32, i32, i32, i32, i32
  }
  func.func @transform_2(%arg0: i32) -> (i32, i32) {
    %c0_i32 = arith.constant 0 : i32
    %c0_i32_0 = arith.constant 0 : i32
    %c0_i32_1 = arith.constant 0 : i32
    return %c0_i32, %c0_i32_0 : i32, i32
  }
  func.func @transform_3(%arg0: i32) -> (i32, i32) {
    %c0_i32 = arith.constant 0 : i32
    %c0_i32_0 = arith.constant 0 : i32
    %c0_i32_1 = arith.constant 0 : i32
    return %c0_i32, %c0_i32_0 : i32, i32
  }
  func.func @transform_4(%arg0: i32) -> (i32, i32) {
    %c0_i32 = arith.constant 0 : i32
    %c0_i32_0 = arith.constant 0 : i32
    return %arg0, %c0_i32 : i32, i32
  }
}

</mosaic_0001>

<llo_original>
// kernel: forward.5
$region0: #{forward.5}
  #allocation0 [shape = 'u32[]', space=smem, size = 0x4, offset = 0x4, fixed_abs, tag = 'smem constant byte address 0x4 - core index']
  #allocation1 [shape = 'u32[72,128]{1,0:T(1,128)}', space=vmem, size = 0x9000, scoped, tag = 'internal scratch']
  %s0 = inlined_call_operand.vmem [shape: f32[512,128], index: 0, kind: input, shape index: {}]
  %s1 = inlined_call_operand.vmem [shape: f32[1,2,18,18,128], index: 1, kind: input, shape index: {}]
  %s2 = inlined_call_operand.vmem [shape: f32[8,128], index: 2, kind: input, shape index: {}]
  %s3 = inlined_call_operand.vmem [shape: f32[8,128], index: 3, kind: input, shape index: {}]
  %s4 = inlined_call_operand.vmem [shape: f32[512,128], index: 4, kind: output, shape index: {}]
  %s5 = sld [smem:[#allocation0]]
  $region26: #{forward.5} parent=0
    _
  %s7 = ssub.s32 1, %s5
  %s8 = scalar_select 0, %s7, %s5
  // Predicated region
  $region2: #{forward.5} parent=0 // pred_check
    _
  $region3: #{forward.5} parent=0 // pred_check_branch
    %10 = sbr.rel (0) target = $region5
  $region4: #{forward.5} parent=0 // pred_region
    _
  $region5: #{forward.5} parent=0 // pred_fallthru
    _
  // Predicated region
  $region6: #{forward.5} parent=0 // pred_check
    _
  $region7: #{forward.5} parent=0 // pred_check_branch
    %12 = sbr.rel (0) target = $region9
  $region8: #{forward.5} parent=0 // pred_region
    _
  $region9: #{forward.5} parent=0 // pred_fallthru
    _
  // Predicated region
  $region10: #{forward.5} parent=0 // pred_check
    _
  $region11: #{forward.5} parent=0 // pred_check_branch
    %14 = sbr.rel (0) target = $region13
  $region12: #{forward.5} parent=0 // pred_region
    _
  $region13: #{forward.5} parent=0 // pred_fallthru
    _
  // Predicated region
  $region14: #{forward.5} parent=0 // pred_check
    _
  $region15: #{forward.5} parent=0 // pred_check_branch
    %16 = sbr.rel (0) target = $region17
  $region16: #{forward.5} parent=0 // pred_region
    _
  $region17: #{forward.5} parent=0 // pred_fallthru
    _
  %v17 = vld [vmem:[%s0] sm:$0xff]
  %v18 = vld [vmem:[%s0 + $0x8] sm:$0xff]
  %v19 = vld [vmem:[%s0 + $0x10] sm:$0xff]
  %v20 = vld [vmem:[%s0 + $0x18] sm:$0xff]
  %v21 = vld [vmem:[%s0 + $0x20] sm:$0xff]
  %v22 = vld [vmem:[%s0 + $0x28] sm:$0xff]
  %v23 = vld [vmem:[%s0 + $0x30] sm:$0xff]
  %v24 = vld [vmem:[%s0 + $0x38] sm:$0xff]
  %v25 = vld [vmem:[%s0 + $0x40] sm:$0xff]
  %v26 = vld [vmem:[%s0 + $0x48] sm:$0xff]
  %v27 = vld [vmem:[%s0 + $0x50] sm:$0xff]
  %v28 = vld [vmem:[%s0 + $0x58] sm:$0xff]
  %v29 = vld [vmem:[%s0 + $0x60] sm:$0xff]
  %v30 = vld [vmem:[%s0 + $0x68] sm:$0xff]
  %v31 = vld [vmem:[%s0 + $0x70] sm:$0xff]
  %v32 = vld [vmem:[%s0 + $0x78] sm:$0xff]
  %v33 = vld [vmem:[%s0 + $0x80] sm:$0xff]
  %v34 = vld [vmem:[%s0 + $0x88] sm:$0xff]
  %v35 = vld [vmem:[%s0 + $0x90] sm:$0xff]
  %v36 = vld [vmem:[%s0 + $0x98] sm:$0xff]
  %v37 = vld [vmem:[%s0 + $0xa0] sm:$0xff]
  %v38 = vld [vmem:[%s0 + $0xa8] sm:$0xff]
  %v39 = vld [vmem:[%s0 + $0xb0] sm:$0xff]
  %v40 = vld [vmem:[%s0 + $0xb8] sm:$0xff]
  %v41 = vld [vmem:[%s0 + $0xc0] sm:$0xff]
  %v42 = vld [vmem:[%s0 + $0xc8] sm:$0xff]
  %v43 = vld [vmem:[%s0 + $0xd0] sm:$0xff]
  %v44 = vld [vmem:[%s0 + $0xd8] sm:$0xff]
  %v45 = vld [vmem:[%s0 + $0xe0] sm:$0xff]
  %v46 = vld [vmem:[%s0 + $0xe8] sm:$0xff]
  %v47 = vld [vmem:[%s0 + $0xf0] sm:$0xff]
  %v48 = vld [vmem:[%s0 + $0xf8] sm:$0xff]
  %v49 = vld [vmem:[%s0 + $0x100] sm:$0xff]
  %v50 = vld [vmem:[%s0 + $0x108] sm:$0xff]
  %v51 = vld [vmem:[%s0 + $0x110] sm:$0xff]
  %v52 = vld [vmem:[%s0 + $0x118] sm:$0xff]
  %v53 = vld [vmem:[%s0 + $0x120] sm:$0xff]
  %v54 = vld [vmem:[%s0 + $0x128] sm:$0xff]
  %v55 = vld [vmem:[%s0 + $0x130] sm:$0xff]
  %v56 = vld [vmem:[%s0 + $0x138] sm:$0xff]
  %v57 = vld [vmem:[%s0 + $0x140] sm:$0xff]
  %v58 = vld [vmem:[%s0 + $0x148] sm:$0xff]
  %v59 = vld [vmem:[%s0 + $0x150] sm:$0xff]
  %v60 = vld [vmem:[%s0 + $0x158] sm:$0xff]
  %v61 = vld [vmem:[%s0 + $0x160] sm:$0xff]
  %v62 = vld [vmem:[%s0 + $0x168] sm:$0xff]
  %v63 = vld [vmem:[%s0 + $0x170] sm:$0xff]
  %v64 = vld [vmem:[%s0 + $0x178] sm:$0xff]
  %v65 = vld [vmem:[%s0 + $0x180] sm:$0xff]
  %v66 = vld [vmem:[%s0 + $0x188] sm:$0xff]
  %v67 = vld [vmem:[%s0 + $0x190] sm:$0xff]
  %v68 = vld [vmem:[%s0 + $0x198] sm:$0xff]
  %v69 = vld [vmem:[%s0 + $0x1a0] sm:$0xff]
  %v70 = vld [vmem:[%s0 + $0x1a8] sm:$0xff]
  %v71 = vld [vmem:[%s0 + $0x1b0] sm:$0xff]
  %v72 = vld [vmem:[%s0 + $0x1b8] sm:$0xff]
  %v73 = vld [vmem:[%s0 + $0x1c0] sm:$0xff]
  %v74 = vld [vmem:[%s0 + $0x1c8] sm:$0xff]
  %v75 = vld [vmem:[%s0 + $0x1d0] sm:$0xff]
  %v76 = vld [vmem:[%s0 + $0x1d8] sm:$0xff]
  %v77 = vld [vmem:[%s0 + $0x1e0] sm:$0xff]
  %v78 = vld [vmem:[%s0 + $0x1e8] sm:$0xff]
  %v79 = vld [vmem:[%s0 + $0x1f0] sm:$0xff]
  %v80 = vld [vmem:[%s0 + $0x1f8] sm:$0xff]
  %v81 = vld [vmem:[%s2] sm:$0x1]
  %v82 = vld [vmem:[%s2 + $0x1] sm:$0x1]
  %v83 = vmul.f32 %v82, 0.001953125
  %v84 = vadd.f32 %v83, 1e-05
  %v85 = vrsqrt.pop %v84
  %v86 = vmul.f32 %v85, %v84
  %v87 = vmul.f32 %v86, %v85
  %v88 = vmul.f32 0.5, %v87
  %v89 = vsub.f32 1.5, %v88
  %v90 = vmul.f32 %v85, %v89
  %vm91 = vweird.f32 %v84
  %vm92 = vweird.f32 %v85
  %vm93 = vmor %vm91, %vm92
  %v94 = vsel %vm93, %v85, %v90
  %v95 = vperm.slane %v81, 0
  %v96 = vsub.f32 %v17, %v95
  %v97 = vsub.f32 %v18, %v95
  %v98 = vsub.f32 %v19, %v95
  %v99 = vsub.f32 %v20, %v95
  %v100 = vsub.f32 %v21, %v95
  %v101 = vsub.f32 %v22, %v95
  %v102 = vsub.f32 %v23, %v95
  %v103 = vsub.f32 %v24, %v95
  %v104 = vsub.f32 %v25, %v95
  %v105 = vsub.f32 %v26, %v95
  %v106 = vsub.f32 %v27, %v95
  %v107 = vsub.f32 %v28, %v95
  %v108 = vsub.f32 %v29, %v95
  %v109 = vsub.f32 %v30, %v95
  %v110 = vsub.f32 %v31, %v95
  %v111 = vsub.f32 %v32, %v95
  %v112 = vsub.f32 %v33, %v95
  %v113 = vsub.f32 %v34, %v95
  %v114 = vsub.f32 %v35, %v95
  %v115 = vsub.f32 %v36, %v95
  %v116 = vsub.f32 %v37, %v95
  %v117 = vsub.f32 %v38, %v95
  %v118 = vsub.f32 %v39, %v95
  %v119 = vsub.f32 %v40, %v95
  %v120 = vsub.f32 %v41, %v95
  %v121 = vsub.f32 %v42, %v95
  %v122 = vsub.f32 %v43, %v95
  %v123 = vsub.f32 %v44, %v95
  %v124 = vsub.f32 %v45, %v95
  %v125 = vsub.f32 %v46, %v95
  %v126 = vsub.f32 %v47, %v95
  %v127 = vsub.f32 %v48, %v95
  %v128 = vsub.f32 %v49, %v95
  %v129 = vsub.f32 %v50, %v95
  %v130 = vsub.f32 %v51, %v95
  %v131 = vsub.f32 %v52, %v95
  %v132 = vsub.f32 %v53, %v95
  %v133 = vsub.f32 %v54, %v95
  %v134 = vsub.f32 %v55, %v95
  %v135 = vsub.f32 %v56, %v95
  %v136 = vsub.f32 %v57, %v95
  %v137 = vsub.f32 %v58, %v95
  %v138 = vsub.f32 %v59, %v95
  %v139 = vsub.f32 %v60, %v95
  %v140 = vsub.f32 %v61, %v95
  %v141 = vsub.f32 %v62, %v95
  %v142 = vsub.f32 %v63, %v95
  %v143 = vsub.f32 %v64, %v95
  %v144 = vsub.f32 %v65, %v95
  %v145 = vsub.f32 %v66, %v95
  %v146 = vsub.f32 %v67, %v95
  %v147 = vsub.f32 %v68, %v95
  %v148 = vsub.f32 %v69, %v95
  %v149 = vsub.f32 %v70, %v95
  %v150 = vsub.f32 %v71, %v95
  %v151 = vsub.f32 %v72, %v95
  %v152 = vsub.f32 %v73, %v95
  %v153 = vsub.f32 %v74, %v95
  %v154 = vsub.f32 %v75, %v95
  %v155 = vsub.f32 %v76, %v95
  %v156 = vsub.f32 %v77, %v95
  %v157 = vsub.f32 %v78, %v95
  %v158 = vsub.f32 %v79, %v95
  %v159 = vsub.f32 %v80, %v95
  %v160 = vld [vmem:[%s3 + $0x4] sm:$0x1]
  %v161 = vmul.f32 %v94, %v160
  %v162 = vperm.slane %v161, 0
  %v163 = vmul.f32 %v96, %v162
  %v164 = vmul.f32 %v97, %v162
  %v165 = vmul.f32 %v98, %v162
  %v166 = vmul.f32 %v99, %v162
  %v167 = vmul.f32 %v100, %v162
  %v168 = vmul.f32 %v101, %v162
  %v169 = vmul.f32 %v102, %v162
  %v170 = vmul.f32 %v103, %v162
  %v171 = vmul.f32 %v104, %v162
  %v172 = vmul.f32 %v105, %v162
  %v173 = vmul.f32 %v106, %v162
  %v174 = vmul.f32 %v107, %v162
  %v175 = vmul.f32 %v108, %v162
  %v176 = vmul.f32 %v109, %v162
  %v177 = vmul.f32 %v110, %v162
  %v178 = vmul.f32 %v111, %v162
  %v179 = vmul.f32 %v112, %v162
  %v180 = vmul.f32 %v113, %v162
  %v181 = vmul.f32 %v114, %v162
  %v182 = vmul.f32 %v115, %v162
  %v183 = vmul.f32 %v116, %v162
  %v184 = vmul.f32 %v117, %v162
  %v185 = vmul.f32 %v118, %v162
  %v186 = vmul.f32 %v119, %v162
  %v187 = vmul.f32 %v120, %v162
  %v188 = vmul.f32 %v121, %v162
  %v189 = vmul.f32 %v122, %v162
  %v190 = vmul.f32 %v123, %v162
  %v191 = vmul.f32 %v124, %v162
  %v192 = vmul.f32 %v125, %v162
  %v193 = vmul.f32 %v126, %v162
  %v194 = vmul.f32 %v127, %v162
  %v195 = vmul.f32 %v128, %v162
  %v196 = vmul.f32 %v129, %v162
  %v197 = vmul.f32 %v130, %v162
  %v198 = vmul.f32 %v131, %v162
  %v199 = vmul.f32 %v132, %v162
  %v200 = vmul.f32 %v133, %v162
  %v201 = vmul.f32 %v134, %v162
  %v202 = vmul.f32 %v135, %v162
  %v203 = vmul.f32 %v136, %v162
  %v204 = vmul.f32 %v137, %v162
  %v205 = vmul.f32 %v138, %v162
  %v206 = vmul.f32 %v139, %v162
  %v207 = vmul.f32 %v140, %v162
  %v208 = vmul.f32 %v141, %v162
  %v209 = vmul.f32 %v142, %v162
  %v210 = vmul.f32 %v143, %v162
  %v211 = vmul.f32 %v144, %v162
  %v212 = vmul.f32 %v145, %v162
  %v213 = vmul.f32 %v146, %v162
  %v214 = vmul.f32 %v147, %v162
  %v215 = vmul.f32 %v148, %v162
  %v216 = vmul.f32 %v149, %v162
  %v217 = vmul.f32 %v150, %v162
  %v218 = vmul.f32 %v151, %v162
  %v219 = vmul.f32 %v152, %v162
  %v220 = vmul.f32 %v153, %v162
  %v221 = vmul.f32 %v154, %v162
  %v222 = vmul.f32 %v155, %v162
  %v223 = vmul.f32 %v156, %v162
  %v224 = vmul.f32 %v157, %v162
  %v225 = vmul.f32 %v158, %v162
  %v226 = vmul.f32 %v159, %v162
  %v227 = vld [vmem:[%s3 + $0x5] sm:$0x1]
  %v228 = vperm.slane %v227, 0
  %v229 = vadd.f32 %v163, %v228
  %v230 = vadd.f32 %v164, %v228
  %v231 = vadd.f32 %v165, %v228
  %v232 = vadd.f32 %v166, %v228
  %v233 = vadd.f32 %v167, %v228
  %v234 = vadd.f32 %v168, %v228
  %v235 = vadd.f32 %v169, %v228
  %v236 = vadd.f32 %v170, %v228
  %v237 = vadd.f32 %v171, %v228
  %v238 = vadd.f32 %v172, %v228
  %v239 = vadd.f32 %v173, %v228
  %v240 = vadd.f32 %v174, %v228
  %v241 = vadd.f32 %v175, %v228
  %v242 = vadd.f32 %v176, %v228
  %v243 = vadd.f32 %v177, %v228
  %v244 = vadd.f32 %v178, %v228
  %v245 = vadd.f32 %v179, %v228
  %v246 = vadd.f32 %v180, %v228
  %v247 = vadd.f32 %v181, %v228
  %v248 = vadd.f32 %v182, %v228
  %v249 = vadd.f32 %v183, %v228
  %v250 = vadd.f32 %v184, %v228
  %v251 = vadd.f32 %v185, %v228
  %v252 = vadd.f32 %v186, %v228
  %v253 = vadd.f32 %v187, %v228
  %v254 = vadd.f32 %v188, %v228
  %v255 = vadd.f32 %v189, %v228
  %v256 = vadd.f32 %v190, %v228
  %v257 = vadd.f32 %v191, %v228
  %v258 = vadd.f32 %v192, %v228
  %v259 = vadd.f32 %v193, %v228
  %v260 = vadd.f32 %v194, %v228
  %v261 = vadd.f32 %v195, %v228
  %v262 = vadd.f32 %v196, %v228
  %v263 = vadd.f32 %v197, %v228
  %v264 = vadd.f32 %v198, %v228
  %v265 = vadd.f32 %v199, %v228
  %v266 = vadd.f32 %v200, %v228
  %v267 = vadd.f32 %v201, %v228
  %v268 = vadd.f32 %v202, %v228
  %v269 = vadd.f32 %v203, %v228
  %v270 = vadd.f32 %v204, %v228
  %v271 = vadd.f32 %v205, %v228
  %v272 = vadd.f32 %v206, %v228
  %v273 = vadd.f32 %v207, %v228
  %v274 = vadd.f32 %v208, %v228
  %v275 = vadd.f32 %v209, %v228
  %v276 = vadd.f32 %v210, %v228
  %v277 = vadd.f32 %v211, %v228
  %v278 = vadd.f32 %v212, %v228
  %v279 = vadd.f32 %v213, %v228
  %v280 = vadd.f32 %v214, %v228
  %v281 = vadd.f32 %v215, %v228
  %v282 = vadd.f32 %v216, %v228
  %v283 = vadd.f32 %v217, %v228
  %v284 = vadd.f32 %v218, %v228
  %v285 = vadd.f32 %v219, %v228
  %v286 = vadd.f32 %v220, %v228
  %v287 = vadd.f32 %v221, %v228
  %v288 = vadd.f32 %v222, %v228
  %v289 = vadd.f32 %v223, %v228
  %v290 = vadd.f32 %v224, %v228
  %v291 = vadd.f32 %v225, %v228
  %v292 = vadd.f32 %v226, %v228
  %s293 = scalar_lea.vmem %s1, 24
  %v294 = vld [vmem:[%s293 + $0x1] sm:$0xff]
  %v295 = vld [vmem:[%s293 + $0x9] sm:$0xff]
  %v296 = vld [vmem:[%s293 + $0x19] sm:$0xff]
  %v297 = vld [vmem:[%s293 + $0x21] sm:$0xff]
  %v298 = vld [vmem:[%s293 + $0x31] sm:$0xff]
  %v299 = vld [vmem:[%s293 + $0x39] sm:$0xff]
  %v300 = vld [vmem:[%s293 + $0x49] sm:$0xff]
  %v301 = vld [vmem:[%s293 + $0x51] sm:$0xff]
  %v302 = vld [vmem:[%s293 + $0x61] sm:$0xff]
  %v303 = vld [vmem:[%s293 + $0x69] sm:$0xff]
  %v304 = vld [vmem:[%s293 + $0x79] sm:$0xff]
  %v305 = vld [vmem:[%s293 + $0x81] sm:$0xff]
  %v306 = vld [vmem:[%s293 + $0x91] sm:$0xff]
  %v307 = vld [vmem:[%s293 + $0x99] sm:$0xff]
  %v308 = vld [vmem:[%s293 + $0xa9] sm:$0xff]
  %v309 = vld [vmem:[%s293 + $0xb1] sm:$0xff]
  %v310 = vld [vmem:[%s293 + $0xc1] sm:$0xff]
  %v311 = vld [vmem:[%s293 + $0xc9] sm:$0xff]
  %v312 = vld [vmem:[%s293 + $0xd9] sm:$0xff]
  %v313 = vld [vmem:[%s293 + $0xe1] sm:$0xff]
  %v314 = vld [vmem:[%s293 + $0xf1] sm:$0xff]
  %v315 = vld [vmem:[%s293 + $0xf9] sm:$0xff]
  %v316 = vld [vmem:[%s293 + $0x109] sm:$0xff]
  %v317 = vld [vmem:[%s293 + $0x111] sm:$0xff]
  %v318 = vld [vmem:[%s293 + $0x121] sm:$0xff]
  %v319 = vld [vmem:[%s293 + $0x129] sm:$0xff]
  %v320 = vld [vmem:[%s293 + $0x139] sm:$0xff]
  %v321 = vld [vmem:[%s293 + $0x141] sm:$0xff]
  %v322 = vld [vmem:[%s293 + $0x151] sm:$0xff]
  %v323 = vld [vmem:[%s293 + $0x159] sm:$0xff]
  %v324 = vld [vmem:[%s293 + $0x169] sm:$0xff]
  %v325 = vld [vmem:[%s293 + $0x171] sm:$0xff]
  %v326 = vld [vmem:[%s293 + $0x1b1] sm:$0xff]
  %v327 = vld [vmem:[%s293 + $0x1b9] sm:$0xff]
  %v328 = vld [vmem:[%s293 + $0x1c9] sm:$0xff]
  %v329 = vld [vmem:[%s293 + $0x1d1] sm:$0xff]
  %v330 = vld [vmem:[%s293 + $0x1e1] sm:$0xff]
  %v331 = vld [vmem:[%s293 + $0x1e9] sm:$0xff]
  %v332 = vld [vmem:[%s293 + $0x1f9] sm:$0xff]
  %v333 = vld [vmem:[%s293 + $0x201] sm:$0xff]
  %v334 = vld [vmem:[%s293 + $0x211] sm:$0xff]
  %v335 = vld [vmem:[%s293 + $0x219] sm:$0xff]
  %v336 = vld [vmem:[%s293 + $0x229] sm:$0xff]
  %v337 = vld [vmem:[%s293 + $0x231] sm:$0xff]
  %v338 = vld [vmem:[%s293 + $0x241] sm:$0xff]
  %v339 = vld [vmem:[%s293 + $0x249] sm:$0xff]
  %v340 = vld [vmem:[%s293 + $0x259] sm:$0xff]
  %v341 = vld [vmem:[%s293 + $0x261] sm:$0xff]
  %v342 = vld [vmem:[%s293 + $0x271] sm:$0xff]
  %v343 = vld [vmem:[%s293 + $0x279] sm:$0xff]
  %v344 = vld [vmem:[%s293 + $0x289] sm:$0xff]
  %v345 = vld [vmem:[%s293 + $0x291] sm:$0xff]
  %v346 = vld [vmem:[%s293 + $0x2a1] sm:$0xff]
  %v347 = vld [vmem:[%s293 + $0x2a9] sm:$0xff]
  %v348 = vld [vmem:[%s293 + $0x2b9] sm:$0xff]
  %v349 = vld [vmem:[%s293 + $0x2c1] sm:$0xff]
  %v350 = vld [vmem:[%s293 + $0x2d1] sm:$0xff]
  %v351 = vld [vmem:[%s293 + $0x2d9] sm:$0xff]
  %v352 = vld [vmem:[%s293 + $0x2e9] sm:$0xff]
  %v353 = vld [vmem:[%s293 + $0x2f1] sm:$0xff]
  %v354 = vld [vmem:[%s293 + $0x301] sm:$0xff]
  %v355 = vld [vmem:[%s293 + $0x309] sm:$0xff]
  %v356 = vld [vmem:[%s293 + $0x319] sm:$0xff]
  %v357 = vld [vmem:[%s293 + $0x321] sm:$0xff]
  %v358 = vadd.f32 %v229, %v294
  %v359 = vadd.f32 %v230, %v295
  %v360 = vadd.f32 %v231, %v296
  %v361 = vadd.f32 %v232, %v297
  %v362 = vadd.f32 %v233, %v298
  %v363 = vadd.f32 %v234, %v299
  %v364 = vadd.f32 %v235, %v300
  %v365 = vadd.f32 %v236, %v301
  %v366 = vadd.f32 %v237, %v302
  %v367 = vadd.f32 %v238, %v303
  %v368 = vadd.f32 %v239, %v304
  %v369 = vadd.f32 %v240, %v305
  %v370 = vadd.f32 %v241, %v306
  %v371 = vadd.f32 %v242, %v307
  %v372 = vadd.f32 %v243, %v308
  %v373 = vadd.f32 %v244, %v309
  %v374 = vadd.f32 %v245, %v310
  %v375 = vadd.f32 %v246, %v311
  %v376 = vadd.f32 %v247, %v312
  %v377 = vadd.f32 %v248, %v313
  %v378 = vadd.f32 %v249, %v314
  %v379 = vadd.f32 %v250, %v315
  %v380 = vadd.f32 %v251, %v316
  %v381 = vadd.f32 %v252, %v317
  %v382 = vadd.f32 %v253, %v318
  %v383 = vadd.f32 %v254, %v319
  %v384 = vadd.f32 %v255, %v320
  %v385 = vadd.f32 %v256, %v321
  %v386 = vadd.f32 %v257, %v322
  %v387 = vadd.f32 %v258, %v323
  %v388 = vadd.f32 %v259, %v324
  %v389 = vadd.f32 %v260, %v325
  %v390 = vadd.f32 %v261, %v326
  %v391 = vadd.f32 %v262, %v327
  %v392 = vadd.f32 %v263, %v328
  %v393 = vadd.f32 %v264, %v329
  %v394 = vadd.f32 %v265, %v330
  %v395 = vadd.f32 %v266, %v331
  %v396 = vadd.f32 %v267, %v332
  %v397 = vadd.f32 %v268, %v333
  %v398 = vadd.f32 %v269, %v334
  %v399 = vadd.f32 %v270, %v335
  %v400 = vadd.f32 %v271, %v336
  %v401 = vadd.f32 %v272, %v337
  %v402 = vadd.f32 %v273, %v338
  %v403 = vadd.f32 %v274, %v339
  %v404 = vadd.f32 %v275, %v340
  %v405 = vadd.f32 %v276, %v341
  %v406 = vadd.f32 %v277, %v342
  %v407 = vadd.f32 %v278, %v343
  %v408 = vadd.f32 %v279, %v344
  %v409 = vadd.f32 %v280, %v345
  %v410 = vadd.f32 %v281, %v346
  %v411 = vadd.f32 %v282, %v347
  %v412 = vadd.f32 %v283, %v348
  %v413 = vadd.f32 %v284, %v349
  %v414 = vadd.f32 %v285, %v350
  %v415 = vadd.f32 %v286, %v351
  %v416 = vadd.f32 %v287, %v352
  %v417 = vadd.f32 %v288, %v353
  %v418 = vadd.f32 %v289, %v354
  %v419 = vadd.f32 %v290, %v355
  %v420 = vadd.f32 %v291, %v356
  %v421 = vadd.f32 %v292, %v357
  %v422 = vmax.f32 %v358, 0.0
  %v423 = vmax.f32 %v359, 0.0
  %v424 = vmax.f32 %v360, 0.0
  %v425 = vmax.f32 %v361, 0.0
  %v426 = vmax.f32 %v362, 0.0
  %v427 = vmax.f32 %v363, 0.0
  %v428 = vmax.f32 %v364, 0.0
  %v429 = vmax.f32 %v365, 0.0
  %v430 = vmax.f32 %v366, 0.0
  %v431 = vmax.f32 %v367, 0.0
  %v432 = vmax.f32 %v368, 0.0
  %v433 = vmax.f32 %v369, 0.0
  %v434 = vmax.f32 %v370, 0.0
  %v435 = vmax.f32 %v371, 0.0
  %v436 = vmax.f32 %v372, 0.0
  %v437 = vmax.f32 %v373, 0.0
  %v438 = vmax.f32 %v374, 0.0
  %v439 = vmax.f32 %v375, 0.0
  %v440 = vmax.f32 %v376, 0.0
  %v441 = vmax.f32 %v377, 0.0
  %v442 = vmax.f32 %v378, 0.0
  %v443 = vmax.f32 %v379, 0.0
  %v444 = vmax.f32 %v380, 0.0
  %v445 = vmax.f32 %v381, 0.0
  %v446 = vmax.f32 %v382, 0.0
  %v447 = vmax.f32 %v383, 0.0
  %v448 = vmax.f32 %v384, 0.0
  %v449 = vmax.f32 %v385, 0.0
  %v450 = vmax.f32 %v386, 0.0
  %v451 = vmax.f32 %v387, 0.0
  %v452 = vmax.f32 %v388, 0.0
  %v453 = vmax.f32 %v389, 0.0
  %v454 = vmax.f32 %v390, 0.0
  %v455 = vmax.f32 %v391, 0.0
  %v456 = vmax.f32 %v392, 0.0
  %v457 = vmax.f32 %v393, 0.0
  %v458 = vmax.f32 %v394, 0.0
  %v459 = vmax.f32 %v395, 0.0
  %v460 = vmax.f32 %v396, 0.0
  %v461 = vmax.f32 %v397, 0.0
  %v462 = vmax.f32 %v398, 0.0
  %v463 = vmax.f32 %v399, 0.0
  %v464 = vmax.f32 %v400, 0.0
  %v465 = vmax.f32 %v401, 0.0
  %v466 = vmax.f32 %v402, 0.0
  %v467 = vmax.f32 %v403, 0.0
  %v468 = vmax.f32 %v404, 0.0
  %v469 = vmax.f32 %v405, 0.0
  %v470 = vmax.f32 %v406, 0.0
  %v471 = vmax.f32 %v407, 0.0
  %v472 = vmax.f32 %v408, 0.0
  %v473 = vmax.f32 %v409, 0.0
  %v474 = vmax.f32 %v410, 0.0
  %v475 = vmax.f32 %v411, 0.0
  %v476 = vmax.f32 %v412, 0.0
  %v477 = vmax.f32 %v413, 0.0
  %v478 = vmax.f32 %v414, 0.0
  %v479 = vmax.f32 %v415, 0.0
  %v480 = vmax.f32 %v416, 0.0
  %v481 = vmax.f32 %v417, 0.0
  %v482 = vmax.f32 %v418, 0.0
  %v483 = vmax.f32 %v419, 0.0
  %v484 = vmax.f32 %v420, 0.0
  %v485 = vmax.f32 %v421, 0.0
  %486 = vst [vmem:[%s4] sm:$0xff] %v422
  %487 = vst [vmem:[%s4 + $0x8] sm:$0xff] %v423
  %488 = vst [vmem:[%s4 + $0x10] sm:$0xff] %v424
  %489 = vst [vmem:[%s4 + $0x18] sm:$0xff] %v425
  %490 = vst [vmem:[%s4 + $0x20] sm:$0xff] %v426
  %491 = vst [vmem:[%s4 + $0x28] sm:$0xff] %v427
  %492 = vst [vmem:[%s4 + $0x30] sm:$0xff] %v428
  %493 = vst [vmem:[%s4 + $0x38] sm:$0xff] %v429
  %494 = vst [vmem:[%s4 + $0x40] sm:$0xff] %v430
  %495 = vst [vmem:[%s4 + $0x48] sm:$0xff] %v431
  %496 = vst [vmem:[%s4 + $0x50] sm:$0xff] %v432
  %497 = vst [vmem:[%s4 + $0x58] sm:$0xff] %v433
  %498 = vst [vmem:[%s4 + $0x60] sm:$0xff] %v434
  %499 = vst [vmem:[%s4 + $0x68] sm:$0xff] %v435
  %500 = vst [vmem:[%s4 + $0x70] sm:$0xff] %v436
  %501 = vst [vmem:[%s4 + $0x78] sm:$0xff] %v437
  %502 = vst [vmem:[%s4 + $0x80] sm:$0xff] %v438
  %503 = vst [vmem:[%s4 + $0x88] sm:$0xff] %v439
  %504 = vst [vmem:[%s4 + $0x90] sm:$0xff] %v440
  %505 = vst [vmem:[%s4 + $0x98] sm:$0xff] %v441
  %506 = vst [vmem:[%s4 + $0xa0] sm:$0xff] %v442
  %507 = vst [vmem:[%s4 + $0xa8] sm:$0xff] %v443
  %508 = vst [vmem:[%s4 + $0xb0] sm:$0xff] %v444
  %509 = vst [vmem:[%s4 + $0xb8] sm:$0xff] %v445
  %510 = vst [vmem:[%s4 + $0xc0] sm:$0xff] %v446
  %511 = vst [vmem:[%s4 + $0xc8] sm:$0xff] %v447
  %512 = vst [vmem:[%s4 + $0xd0] sm:$0xff] %v448
  %513 = vst [vmem:[%s4 + $0xd8] sm:$0xff] %v449
  %514 = vst [vmem:[%s4 + $0xe0] sm:$0xff] %v450
  %515 = vst [vmem:[%s4 + $0xe8] sm:$0xff] %v451
  %516 = vst [vmem:[%s4 + $0xf0] sm:$0xff] %v452
  %517 = vst [vmem:[%s4 + $0xf8] sm:$0xff] %v453
  %518 = vst [vmem:[%s4 + $0x100] sm:$0xff] %v454
  %519 = vst [vmem:[%s4 + $0x108] sm:$0xff] %v455
  %520 = vst [vmem:[%s4 + $0x110] sm:$0xff] %v456
  %521 = vst [vmem:[%s4 + $0x118] sm:$0xff] %v457
  %522 = vst [vmem:[%s4 + $0x120] sm:$0xff] %v458
  %523 = vst [vmem:[%s4 + $0x128] sm:$0xff] %v459
  %524 = vst [vmem:[%s4 + $0x130] sm:$0xff] %v460
  %525 = vst [vmem:[%s4 + $0x138] sm:$0xff] %v461
  %526 = vst [vmem:[%s4 + $0x140] sm:$0xff] %v462
  %527 = vst [vmem:[%s4 + $0x148] sm:$0xff] %v463
  %528 = vst [vmem:[%s4 + $0x150] sm:$0xff] %v464
  %529 = vst [vmem:[%s4 + $0x158] sm:$0xff] %v465
  %530 = vst [vmem:[%s4 + $0x160] sm:$0xff] %v466
  %531 = vst [vmem:[%s4 + $0x168] sm:$0xff] %v467
  %532 = vst [vmem:[%s4 + $0x170] sm:$0xff] %v468
  %533 = vst [vmem:[%s4 + $0x178] sm:$0xff] %v469
  %534 = vst [vmem:[%s4 + $0x180] sm:$0xff] %v470
  %535 = vst [vmem:[%s4 + $0x188] sm:$0xff] %v471
  %536 = vst [vmem:[%s4 + $0x190] sm:$0xff] %v472
  %537 = vst [vmem:[%s4 + $0x198] sm:$0xff] %v473
  %538 = vst [vmem:[%s4 + $0x1a0] sm:$0xff] %v474
  %539 = vst [vmem:[%s4 + $0x1a8] sm:$0xff] %v475
  %540 = vst [vmem:[%s4 + $0x1b0] sm:$0xff] %v476
  %541 = vst [vmem:[%s4 + $0x1b8] sm:$0xff] %v477
  %542 = vst [vmem:[%s4 + $0x1c0] sm:$0xff] %v478
  %543 = vst [vmem:[%s4 + $0x1c8] sm:$0xff] %v479
  %544 = vst [vmem:[%s4 + $0x1d0] sm:$0xff] %v480
  %545 = vst [vmem:[%s4 + $0x1d8] sm:$0xff] %v481
  %546 = vst [vmem:[%s4 + $0x1e0] sm:$0xff] %v482
  %547 = vst [vmem:[%s4 + $0x1e8] sm:$0xff] %v483
  %548 = vst [vmem:[%s4 + $0x1f0] sm:$0xff] %v484
  %549 = vst [vmem:[%s4 + $0x1f8] sm:$0xff] %v485
  // Predicated region
  $region18: #{forward.5} parent=0 // pred_check
    _
  $region19: #{forward.5} parent=0 // pred_check_branch
    %551 = sbr.rel (0) target = $region21
  $region20: #{forward.5} parent=0 // pred_region
    _
  $region21: #{forward.5} parent=0 // pred_fallthru
    _
  // Predicated region
  $region22: #{forward.5} parent=0 // pred_check
    _
  $region23: #{forward.5} parent=0 // pred_check_branch
    %553 = sbr.rel (0) target = $region25
  $region24: #{forward.5} parent=0 // pred_region
    _
  $region25: #{forward.5} parent=0 // pred_fallthru
    _

// kernel: forward.3
$region0: #{forward.3}
  #allocation0 [shape = 'u32[]', space=smem, size = 0x4, offset = 0x4, fixed_abs, tag = 'smem constant byte address 0x4 - core index']
  #allocation1 [shape = 'u32[72,128]{1,0:T(1,128)}', space=vmem, size = 0x9000, scoped, tag = 'internal scratch']
  #allocation2 [shape = 'f32[512,1152]{1,0:T(8,128)}', space=vmem, size = 0x240000, scoped, tag = 'scratch operand']
  %s0 = inlined_call_operand.vmem [shape: f32[1,2,18,18,128], index: 0, kind: input, shape index: {}]
  %s1 = inlined_call_operand.hbm [shape: f32[1152,128], index: 1, kind: input, shape index: {}]
  %s2 = inlined_call_operand.vmem [shape: f32[8,128], index: 2, kind: input, shape index: {}]
  %s3 = inlined_call_operand.vmem [shape: f32[512,128], index: 3, kind: output, shape index: {0}]
  %s4 = inlined_call_operand.vmem [shape: f32[8,128], index: 4, kind: output, shape index: {1}]
  %5 = xla_tuple %s3, %s4
  %s6 = sld [smem:[#allocation0]]
  $region38: #{forward.3} parent=0
    _
  %s8 = ssub.s32 1, %s6
  %s9 = scalar_select 0, %s8, %s6
  $region1: #{forward.3} parent=0
    #allocation3 [shape = 'u8[589824]{0}', space=vmem, size = 0x90000, scoped, tag = 'input window, operand 1, single buffered']
    #allocation4 [shape = 's32[1]{0}', space=sflag, size = 0x4, scoped, tag = 'scoped memory for forward.3']
    %10 = vsyncpa [#allocation4], 0
    // Predicated region
    $region2: #{forward.3} parent=1 // pred_check
      _
    $region3: #{forward.3} parent=1 // pred_check_branch
      %12 = sbr.rel (0) target = $region5
    $region4: #{forward.3} parent=1 // pred_region
      _
    $region5: #{forward.3} parent=1 // pred_fallthru
      _
    // Predicated region
    $region6: #{forward.3} parent=1 // pred_check
      _
    $region7: #{forward.3} parent=1 // pred_check_branch
      %14 = sbr.rel (0) target = $region9
    $region8: #{forward.3} parent=1 // pred_region
      %16 = vsyncadd [#allocation4], 0
      %s17 = sshll.u32 %s1, 4
      %s18 = int_to_ptr.hbm [resolvable:$true] %s17
      %s19 = sshll.u32 [#allocation3], 4
      %s20 = int_to_ptr.vmem [resolvable:$true] %s19
      %25 = dma.hbm_to_vmem [thread:$0]  %s18, 18432, %s20, [#allocation4], 128, 128, 8
    $region9: #{forward.3} parent=1 // pred_fallthru
      _
    // Predicated region
    $region10: #{forward.3} parent=1 // pred_check
      _
    $region11: #{forward.3} parent=1 // pred_check_branch
      %27 = sbr.rel (0) target = $region13
    $region12: #{forward.3} parent=1 // pred_region
      _
    $region13: #{forward.3} parent=1 // pred_fallthru
      _
    // Predicated region
    $region14: #{forward.3} parent=1 // pred_check
      _
    $region15: #{forward.3} parent=1 // pred_check_branch
      %29 = sbr.rel (0) target = $region17
    $region16: #{forward.3} parent=1 // pred_region
      %31 = dma.done [#allocation4], 18432
    $region17: #{forward.3} parent=1 // pred_fallthru
      _
    %p32 = scmp.eq.s32.totalorder 0, 0
    // Predicated region
    $region18: #{forward.3} parent=1 // pred_check
      %p33 = pneg %p32
    $region19: #{forward.3} parent=1 // pred_check_branch
      %35 = sbr.rel (%p33) target = $region21
    $region20: #{forward.3} parent=1 // pred_region
      %36 = vst [vmem:[%s4] sm:$0xff] 0.0
    $region21: #{forward.3} parent=1 // pred_fallthru
      _
    %v37 = vld [vmem:[%s0] sm:$0xff]
    %v38 = vld [vmem:[%s0 + $0x8] sm:$0xff]
    %v39 = vld [vmem:[%s0 + $0x18] sm:$0xff]
    %v40 = vld [vmem:[%s0 + $0x20] sm:$0xff]
    %v41 = vld [vmem:[%s0 + $0x30] sm:$0xff]
    %v42 = vld [vmem:[%s0 + $0x38] sm:$0xff]
    %v43 = vld [vmem:[%s0 + $0x48] sm:$0xff]
    %v44 = vld [vmem:[%s0 + $0x50] sm:$0xff]
    %v45 = vld [vmem:[%s0 + $0x60] sm:$0xff]
    %v46 = vld [vmem:[%s0 + $0x68] sm:$0xff]
    %v47 = vld [vmem:[%s0 + $0x78] sm:$0xff]
    %v48 = vld [vmem:[%s0 + $0x80] sm:$0xff]
    %v49 = vld [vmem:[%s0 + $0x90] sm:$0xff]
    %v50 = vld [vmem:[%s0 + $0x98] sm:$0xff]
    %v51 = vld [vmem:[%s0 + $0xa8] sm:$0xff]
    %v52 = vld [vmem:[%s0 + $0xb0] sm:$0xff]
    %v53 = vld [vmem:[%s0 + $0xc0] sm:$0xff]
    %v54 = vld [vmem:[%s0 + $0xc8] sm:$0xff]
    %v55 = vld [vmem:[%s0 + $0xd8] sm:$0xff]
    %v56 = vld [vmem:[%s0 + $0xe0] sm:$0xff]
    %v57 = vld [vmem:[%s0 + $0xf0] sm:$0xff]
    %v58 = vld [vmem:[%s0 + $0xf8] sm:$0xff]
    %v59 = vld [vmem:[%s0 + $0x108] sm:$0xff]
    %v60 = vld [vmem:[%s0 + $0x110] sm:$0xff]
    %v61 = vld [vmem:[%s0 + $0x120] sm:$0xff]
    %v62 = vld [vmem:[%s0 + $0x128] sm:$0xff]
    %v63 = vld [vmem:[%s0 + $0x138] sm:$0xff]
    %v64 = vld [vmem:[%s0 + $0x140] sm:$0xff]
    %v65 = vld [vmem:[%s0 + $0x150] sm:$0xff]
    %v66 = vld [vmem:[%s0 + $0x158] sm:$0xff]
    %v67 = vld [vmem:[%s0 + $0x168] sm:$0xff]
    %v68 = vld [vmem:[%s0 + $0x170] sm:$0xff]
    %v69 = vld [vmem:[%s0 + $0x1b0] sm:$0xff]
    %v70 = vld [vmem:[%s0 + $0x1b8] sm:$0xff]
    %v71 = vld [vmem:[%s0 + $0x1c8] sm:$0xff]
    %v72 = vld [vmem:[%s0 + $0x1d0] sm:$0xff]
    %v73 = vld [vmem:[%s0 + $0x1e0] sm:$0xff]
    %v74 = vld [vmem:[%s0 + $0x1e8] sm:$0xff]
    %v75 = vld [vmem:[%s0 + $0x1f8] sm:$0xff]
    %v76 = vld [vmem:[%s0 + $0x200] sm:$0xff]
    %v77 = vld [vmem:[%s0 + $0x210] sm:$0xff]
    %v78 = vld [vmem:[%s0 + $0x218] sm:$0xff]
    %v79 = vld [vmem:[%s0 + $0x228] sm:$0xff]
    %v80 = vld [vmem:[%s0 + $0x230] sm:$0xff]
    %v81 = vld [vmem:[%s0 + $0x240] sm:$0xff]
    %v82 = vld [vmem:[%s0 + $0x248] sm:$0xff]
    %v83 = vld [vmem:[%s0 + $0x258] sm:$0xff]
    %v84 = vld [vmem:[%s0 + $0x260] sm:$0xff]
    %v85 = vld [vmem:[%s0 + $0x270] sm:$0xff]
    %v86 = vld [vmem:[%s0 + $0x278] sm:$0xff]
    %v87 = vld [vmem:[%s0 + $0x288] sm:$0xff]
    %v88 = vld [vmem:[%s0 + $0x290] sm:$0xff]
    %v89 = vld [vmem:[%s0 + $0x2a0] sm:$0xff]
    %v90 = vld [vmem:[%s0 + $0x2a8] sm:$0xff]
    %v91 = vld [vmem:[%s0 + $0x2b8] sm:$0xff]
    %v92 = vld [vmem:[%s0 + $0x2c0] sm:$0xff]
    %v93 = vld [vmem:[%s0 + $0x2d0] sm:$0xff]
    %v94 = vld [vmem:[%s0 + $0x2d8] sm:$0xff]
    %v95 = vld [vmem:[%s0 + $0x2e8] sm:$0xff]
    %v96 = vld [vmem:[%s0 + $0x2f0] sm:$0xff]
    %v97 = vld [vmem:[%s0 + $0x300] sm:$0xff]
    %v98 = vld [vmem:[%s0 + $0x308] sm:$0xff]
    %v99 = vld [vmem:[%s0 + $0x318] sm:$0xff]
    %v100 = vld [vmem:[%s0 + $0x320] sm:$0xff]
    %101 = vst [vmem:[#allocation2] sm:$0xff] %v37
    %102 = vst [vmem:[#allocation2 + $0x48] sm:$0xff] %v38
    %103 = vst [vmem:[#allocation2 + $0x90] sm:$0xff] %v39
    %104 = vst [vmem:[#allocation2 + $0xd8] sm:$0xff] %v40
    %105 = vst [vmem:[#allocation2 + $0x120] sm:$0xff] %v41
    %106 = vst [vmem:[#allocation2 + $0x168] sm:$0xff] %v42
    %107 = vst [vmem:[#allocation2 + $0x1b0] sm:$0xff] %v43
    %108 = vst [vmem:[#allocation2 + $0x1f8] sm:$0xff] %v44
    %109 = vst [vmem:[#allocation2 + $0x240] sm:$0xff] %v45
    %110 = vst [vmem:[#allocation2 + $0x288] sm:$0xff] %v46
    %111 = vst [vmem:[#allocation2 + $0x2d0] sm:$0xff] %v47
    %112 = vst [vmem:[#allocation2 + $0x318] sm:$0xff] %v48
    %113 = vst [vmem:[#allocation2 + $0x360] sm:$0xff] %v49
    %114 = vst [vmem:[#allocation2 + $0x3a8] sm:$0xff] %v50
    %115 = vst [vmem:[#allocation2 + $0x3f0] sm:$0xff] %v51
    %116 = vst [vmem:[#allocation2 + $0x438] sm:$0xff] %v52
    %117 = vst [vmem:[#allocation2 + $0x480] sm:$0xff] %v53
    %118 = vst [vmem:[#allocation2 + $0x4c8] sm:$0xff] %v54
    %119 = vst [vmem:[#allocation2 + $0x510] sm:$0xff] %v55
    %120 = vst [vmem:[#allocation2 + $0x558] sm:$0xff] %v56
    %121 = vst [vmem:[#allocation2 + $0x5a0] sm:$0xff] %v57
    %122 = vst [vmem:[#allocation2 + $0x5e8] sm:$0xff] %v58
    %123 = vst [vmem:[#allocation2 + $0x630] sm:$0xff] %v59
    %124 = vst [vmem:[#allocation2 + $0x678] sm:$0xff] %v60
    %125 = vst [vmem:[#allocation2 + $0x6c0] sm:$0xff] %v61
    %126 = vst [vmem:[#allocation2 + $0x708] sm:$0xff] %v62
    %127 = vst [vmem:[#allocation2 + $0x750] sm:$0xff] %v63
    %128 = vst [vmem:[#allocation2 + $0x798] sm:$0xff] %v64
    %129 = vst [vmem:[#allocation2 + $0x7e0] sm:$0xff] %v65
    %130 = vst [vmem:[#allocation2 + $0x828] sm:$0xff] %v66
    %131 = vst [vmem:[#allocation2 + $0x870] sm:$0xff] %v67
    %132 = vst [vmem:[#allocation2 + $0x8b8] sm:$0xff] %v68
    %133 = vst [vmem:[#allocation2 + $0x900] sm:$0xff] %v69
    %134 = vst [vmem:[#allocation2 + $0x948] sm:$0xff] %v70
    %135 = vst [vmem:[#allocation2 + $0x990] sm:$0xff] %v71
    %136 = vst [vmem:[#allocation2 + $0x9d8] sm:$0xff] %v72
    %137 = vst [vmem:[#allocation2 + $0xa20] sm:$0xff] %v73
    %138 = vst [vmem:[#allocation2 + $0xa68] sm:$0xff] %v74
    %139 = vst [vmem:[#allocation2 + $0xab0] sm:$0xff] %v75
    %140 = vst [vmem:[#allocation2 + $0xaf8] sm:$0xff] %v76
    %141 = vst [vmem:[#allocation2 + $0xb40] sm:$0xff] %v77
    %142 = vst [vmem:[#allocation2 + $0xb88] sm:$0xff] %v78
    %143 = vst [vmem:[#allocation2 + $0xbd0] sm:$0xff] %v79
    %144 = vst [vmem:[#allocation2 + $0xc18] sm:$0xff] %v80
    %145 = vst [vmem:[#allocation2 + $0xc60] sm:$0xff] %v81
    %146 = vst [vmem:[#allocation2 + $0xca8] sm:$0xff] %v82
    %147 = vst [vmem:[#allocation2 + $0xcf0] sm:$0xff] %v83
    %148 = vst [vmem:[#allocation2 + $0xd38] sm:$0xff] %v84
    %149 = vst [vmem:[#allocation2 + $0xd80] sm:$0xff] %v85
    %150 = vst [vmem:[#allocation2 + $0xdc8] sm:$0xff] %v86
    %151 = vst [vmem:[#allocation2 + $0xe10] sm:$0xff] %v87
    %152 = vst [vmem:[#allocation2 + $0xe58] sm:$0xff] %v88
    %153 = vst [vmem:[#allocation2 + $0xea0] sm:$0xff] %v89
    %154 = vst [vmem:[#allocation2 + $0xee8] sm:$0xff] %v90
    %155 = vst [vmem:[#allocation2 + $0xf30] sm:$0xff] %v91
    %156 = vst [vmem:[#allocation2 + $0xf78] sm:$0xff] %v92
    %157 = vst [vmem:[#allocation2 + $0xfc0] sm:$0xff] %v93
    %158 = vst [vmem:[#allocation2 + $0x1008] sm:$0xff] %v94
    %159 = vst [vmem:[#allocation2 + $0x1050] sm:$0xff] %v95
    %160 = vst [vmem:[#allocation2 + $0x1098] sm:$0xff] %v96
    %161 = vst [vmem:[#allocation2 + $0x10e0] sm:$0xff] %v97
    %162 = vst [vmem:[#allocation2 + $0x1128] sm:$0xff] %v98
    %163 = vst [vmem:[#allocation2 + $0x1170] sm:$0xff] %v99
    %164 = vst [vmem:[#allocation2 + $0x11b8] sm:$0xff] %v100
    %v165 = vld [vmem:[%s0 + $0x1] sm:$0xff]
    %v166 = vld [vmem:[%s0 + $0x9] sm:$0xff]
    %v167 = vld [vmem:[%s0 + $0x19] sm:$0xff]
    %v168 = vld [vmem:[%s0 + $0x21] sm:$0xff]
    %v169 = vld [vmem:[%s0 + $0x31] sm:$0xff]
    %v170 = vld [vmem:[%s0 + $0x39] sm:$0xff]
    %v171 = vld [vmem:[%s0 + $0x49] sm:$0xff]
    %v172 = vld [vmem:[%s0 + $0x51] sm:$0xff]
    %v173 = vld [vmem:[%s0 + $0x61] sm:$0xff]
    %v174 = vld [vmem:[%s0 + $0x69] sm:$0xff]
    %v175 = vld [vmem:[%s0 + $0x79] sm:$0xff]
    %v176 = vld [vmem:[%s0 + $0x81] sm:$0xff]
    %v177 = vld [vmem:[%s0 + $0x91] sm:$0xff]
    %v178 = vld [vmem:[%s0 + $0x99] sm:$0xff]
    %v179 = vld [vmem:[%s0 + $0xa9] sm:$0xff]
    %v180 = vld [vmem:[%s0 + $0xb1] sm:$0xff]
    %v181 = vld [vmem:[%s0 + $0xc1] sm:$0xff]
    %v182 = vld [vmem:[%s0 + $0xc9] sm:$0xff]
    %v183 = vld [vmem:[%s0 + $0xd9] sm:$0xff]
    %v184 = vld [vmem:[%s0 + $0xe1] sm:$0xff]
    %v185 = vld [vmem:[%s0 + $0xf1] sm:$0xff]
    %v186 = vld [vmem:[%s0 + $0xf9] sm:$0xff]
    %v187 = vld [vmem:[%s0 + $0x109] sm:$0xff]
    %v188 = vld [vmem:[%s0 + $0x111] sm:$0xff]
    %v189 = vld [vmem:[%s0 + $0x121] sm:$0xff]
    %v190 = vld [vmem:[%s0 + $0x129] sm:$0xff]
    %v191 = vld [vmem:[%s0 + $0x139] sm:$0xff]
    %v192 = vld [vmem:[%s0 + $0x141] sm:$0xff]
    %v193 = vld [vmem:[%s0 + $0x151] sm:$0xff]
    %v194 = vld [vmem:[%s0 + $0x159] sm:$0xff]
    %v195 = vld [vmem:[%s0 + $0x169] sm:$0xff]
    %v196 = vld [vmem:[%s0 + $0x171] sm:$0xff]
    %v197 = vld [vmem:[%s0 + $0x1b1] sm:$0xff]
    %v198 = vld [vmem:[%s0 + $0x1b9] sm:$0xff]
    %v199 = vld [vmem:[%s0 + $0x1c9] sm:$0xff]
    %v200 = vld [vmem:[%s0 + $0x1d1] sm:$0xff]
    %v201 = vld [vmem:[%s0 + $0x1e1] sm:$0xff]
    %v202 = vld [vmem:[%s0 + $0x1e9] sm:$0xff]
    %v203 = vld [vmem:[%s0 + $0x1f9] sm:$0xff]
    %v204 = vld [vmem:[%s0 + $0x201] sm:$0xff]
    %v205 = vld [vmem:[%s0 + $0x211] sm:$0xff]
    %v206 = vld [vmem:[%s0 + $0x219] sm:$0xff]
    %v207 = vld [vmem:[%s0 + $0x229] sm:$0xff]
    %v208 = vld [vmem:[%s0 + $0x231] sm:$0xff]
    %v209 = vld [vmem:[%s0 + $0x241] sm:$0xff]
    %v210 = vld [vmem:[%s0 + $0x249] sm:$0xff]
    %v211 = vld [vmem:[%s0 + $0x259] sm:$0xff]
    %v212 = vld [vmem:[%s0 + $0x261] sm:$0xff]
    %v213 = vld [vmem:[%s0 + $0x271] sm:$0xff]
    %v214 = vld [vmem:[%s0 + $0x279] sm:$0xff]
    %v215 = vld [vmem:[%s0 + $0x289] sm:$0xff]
    %v216 = vld [vmem:[%s0 + $0x291] sm:$0xff]
    %v217 = vld [vmem:[%s0 + $0x2a1] sm:$0xff]
    %v218 = vld [vmem:[%s0 + $0x2a9] sm:$0xff]
    %v219 = vld [vmem:[%s0 + $0x2b9] sm:$0xff]
    %v220 = vld [vmem:[%s0 + $0x2c1] sm:$0xff]
    %v221 = vld [vmem:[%s0 + $0x2d1] sm:$0xff]
    %v222 = vld [vmem:[%s0 + $0x2d9] sm:$0xff]
    %v223 = vld [vmem:[%s0 + $0x2e9] sm:$0xff]
    %v224 = vld [vmem:[%s0 + $0x2f1] sm:$0xff]
    %v225 = vld [vmem:[%s0 + $0x301] sm:$0xff]
    %v226 = vld [vmem:[%s0 + $0x309] sm:$0xff]
    %v227 = vld [vmem:[%s0 + $0x319] sm:$0xff]
    %v228 = vld [vmem:[%s0 + $0x321] sm:$0xff]
    %229 = vst [vmem:[#allocation2 + $0x8] sm:$0xff] %v165
    %230 = vst [vmem:[#allocation2 + $0x50] sm:$0xff] %v166
    %231 = vst [vmem:[#allocation2 + $0x98] sm:$0xff] %v167
    %232 = vst [vmem:[#allocation2 + $0xe0] sm:$0xff] %v168
    %233 = vst [vmem:[#allocation2 + $0x128] sm:$0xff] %v169
    %234 = vst [vmem:[#allocation2 + $0x170] sm:$0xff] %v170
    %235 = vst [vmem:[#allocation2 + $0x1b8] sm:$0xff] %v171
    %236 = vst [vmem:[#allocation2 + $0x200] sm:$0xff] %v172
    %237 = vst [vmem:[#allocation2 + $0x248] sm:$0xff] %v173
    %238 = vst [vmem:[#allocation2 + $0x290] sm:$0xff] %v174
    %239 = vst [vmem:[#allocation2 + $0x2d8] sm:$0xff] %v175
    %240 = vst [vmem:[#allocation2 + $0x320] sm:$0xff] %v176
    %241 = vst [vmem:[#allocation2 + $0x368] sm:$0xff] %v177
    %242 = vst [vmem:[#allocation2 + $0x3b0] sm:$0xff] %v178
    %243 = vst [vmem:[#allocation2 + $0x3f8] sm:$0xff] %v179
    %244 = vst [vmem:[#allocation2 + $0x440] sm:$0xff] %v180
    %245 = vst [vmem:[#allocation2 + $0x488] sm:$0xff] %v181
    %246 = vst [vmem:[#allocation2 + $0x4d0] sm:$0xff] %v182
    %247 = vst [vmem:[#allocation2 + $0x518] sm:$0xff] %v183
    %248 = vst [vmem:[#allocation2 + $0x560] sm:$0xff] %v184
    %249 = vst [vmem:[#allocation2 + $0x5a8] sm:$0xff] %v185
    %250 = vst [vmem:[#allocation2 + $0x5f0] sm:$0xff] %v186
    %251 = vst [vmem:[#allocation2 + $0x638] sm:$0xff] %v187
    %252 = vst [vmem:[#allocation2 + $0x680] sm:$0xff] %v188
    %253 = vst [vmem:[#allocation2 + $0x6c8] sm:$0xff] %v189
    %254 = vst [vmem:[#allocation2 + $0x710] sm:$0xff] %v190
    %255 = vst [vmem:[#allocation2 + $0x758] sm:$0xff] %v191
    %256 = vst [vmem:[#allocation2 + $0x7a0] sm:$0xff] %v192
    %257 = vst [vmem:[#allocation2 + $0x7e8] sm:$0xff] %v193
    %258 = vst [vmem:[#allocation2 + $0x830] sm:$0xff] %v194
    %259 = vst [vmem:[#allocation2 + $0x878] sm:$0xff] %v195
    %260 = vst [vmem:[#allocation2 + $0x8c0] sm:$0xff] %v196
    %261 = vst [vmem:[#allocation2 + $0x908] sm:$0xff] %v197
    %262 = vst [vmem:[#allocation2 + $0x950] sm:$0xff] %v198
    %263 = vst [vmem:[#allocation2 + $0x998] sm:$0xff] %v199
    %264 = vst [vmem:[#allocation2 + $0x9e0] sm:$0xff] %v200
    %265 = vst [vmem:[#allocation2 + $0xa28] sm:$0xff] %v201
    %266 = vst [vmem:[#allocation2 + $0xa70] sm:$0xff] %v202
    %267 = vst [vmem:[#allocation2 + $0xab8] sm:$0xff] %v203
    %268 = vst [vmem:[#allocation2 + $0xb00] sm:$0xff] %v204
    %269 = vst [vmem:[#allocation2 + $0xb48] sm:$0xff] %v205
    %270 = vst [vmem:[#allocation2 + $0xb90] sm:$0xff] %v206
    %271 = vst [vmem:[#allocation2 + $0xbd8] sm:$0xff] %v207
    %272 = vst [vmem:[#allocation2 + $0xc20] sm:$0xff] %v208
    %273 = vst [vmem:[#allocation2 + $0xc68] sm:$0xff] %v209
    %274 = vst [vmem:[#allocation2 + $0xcb0] sm:$0xff] %v210
    %275 = vst [vmem:[#allocation2 + $0xcf8] sm:$0xff] %v211
    %276 = vst [vmem:[#allocation2 + $0xd40] sm:$0xff] %v212
    %277 = vst [vmem:[#allocation2 + $0xd88] sm:$0xff] %v213
    %278 = vst [vmem:[#allocation2 + $0xdd0] sm:$0xff] %v214
    %279 = vst [vmem:[#allocation2 + $0xe18] sm:$0xff] %v215
    %280 = vst [vmem:[#allocation2 + $0xe60] sm:$0xff] %v216
    %281 = vst [vmem:[#allocation2 + $0xea8] sm:$0xff] %v217
    %282 = vst [vmem:[#allocation2 + $0xef0] sm:$0xff] %v218
    %283 = vst [vmem:[#allocation2 + $0xf38] sm:$0xff] %v219
    %284 = vst [vmem:[#allocation2 + $0xf80] sm:$0xff] %v220
    %285 = vst [vmem:[#allocation2 + $0xfc8] sm:$0xff] %v221
    %286 = vst [vmem:[#allocation2 + $0x1010] sm:$0xff] %v222
    %287 = vst [vmem:[#allocation2 + $0x1058] sm:$0xff] %v223
    %288 = vst [vmem:[#allocation2 + $0x10a0] sm:$0xff] %v224
    %289 = vst [vmem:[#allocation2 + $0x10e8] sm:$0xff] %v225
    %290 = vst [vmem:[#allocation2 + $0x1130] sm:$0xff] %v226
    %291 = vst [vmem:[#allocation2 + $0x1178] sm:$0xff] %v227
    %292 = vst [vmem:[#allocation2 + $0x11c0] sm:$0xff] %v228
    %v293 = vld [vmem:[%s0 + $0x2] sm:$0xff]
    %v294 = vld [vmem:[%s0 + $0xa] sm:$0xff]
    %v295 = vld [vmem:[%s0 + $0x1a] sm:$0xff]
    %v296 = vld [vmem:[%s0 + $0x22] sm:$0xff]
    %v297 = vld [vmem:[%s0 + $0x32] sm:$0xff]
    %v298 = vld [vmem:[%s0 + $0x3a] sm:$0xff]
    %v299 = vld [vmem:[%s0 + $0x4a] sm:$0xff]
    %v300 = vld [vmem:[%s0 + $0x52] sm:$0xff]
    %v301 = vld [vmem:[%s0 + $0x62] sm:$0xff]
    %v302 = vld [vmem:[%s0 + $0x6a] sm:$0xff]
    %v303 = vld [vmem:[%s0 + $0x7a] sm:$0xff]
    %v304 = vld [vmem:[%s0 + $0x82] sm:$0xff]
    %v305 = vld [vmem:[%s0 + $0x92] sm:$0xff]
    %v306 = vld [vmem:[%s0 + $0x9a] sm:$0xff]
    %v307 = vld [vmem:[%s0 + $0xaa] sm:$0xff]
    %v308 = vld [vmem:[%s0 + $0xb2] sm:$0xff]
    %v309 = vld [vmem:[%s0 + $0xc2] sm:$0xff]
    %v310 = vld [vmem:[%s0 + $0xca] sm:$0xff]
    %v311 = vld [vmem:[%s0 + $0xda] sm:$0xff]
    %v312 = vld [vmem:[%s0 + $0xe2] sm:$0xff]
    %v313 = vld [vmem:[%s0 + $0xf2] sm:$0xff]
    %v314 = vld [vmem:[%s0 + $0xfa] sm:$0xff]
    %v315 = vld [vmem:[%s0 + $0x10a] sm:$0xff]
    %v316 = vld [vmem:[%s0 + $0x112] sm:$0xff]
    %v317 = vld [vmem:[%s0 + $0x122] sm:$0xff]
    %v318 = vld [vmem:[%s0 + $0x12a] sm:$0xff]
    %v319 = vld [vmem:[%s0 + $0x13a] sm:$0xff]
    %v320 = vld [vmem:[%s0 + $0x142] sm:$0xff]
    %v321 = vld [vmem:[%s0 + $0x152] sm:$0xff]
    %v322 = vld [vmem:[%s0 + $0x15a] sm:$0xff]
    %v323 = vld [vmem:[%s0 + $0x16a] sm:$0xff]
    %v324 = vld [vmem:[%s0 + $0x172] sm:$0xff]
    %v325 = vld [vmem:[%s0 + $0x1b2] sm:$0xff]
    %v326 = vld [vmem:[%s0 + $0x1ba] sm:$0xff]
    %v327 = vld [vmem:[%s0 + $0x1ca] sm:$0xff]
    %v328 = vld [vmem:[%s0 + $0x1d2] sm:$0xff]
    %v329 = vld [vmem:[%s0 + $0x1e2] sm:$0xff]
    %v330 = vld [vmem:[%s0 + $0x1ea] sm:$0xff]
    %v331 = vld [vmem:[%s0 + $0x1fa] sm:$0xff]
    %v332 = vld [vmem:[%s0 + $0x202] sm:$0xff]
    %v333 = vld [vmem:[%s0 + $0x212] sm:$0xff]
    %v334 = vld [vmem:[%s0 + $0x21a] sm:$0xff]
    %v335 = vld [vmem:[%s0 + $0x22a] sm:$0xff]
    %v336 = vld [vmem:[%s0 + $0x232] sm:$0xff]
    %v337 = vld [vmem:[%s0 + $0x242] sm:$0xff]
    %v338 = vld [vmem:[%s0 + $0x24a] sm:$0xff]
    %v339 = vld [vmem:[%s0 + $0x25a] sm:$0xff]
    %v340 = vld [vmem:[%s0 + $0x262] sm:$0xff]
    %v341 = vld [vmem:[%s0 + $0x272] sm:$0xff]
    %v342 = vld [vmem:[%s0 + $0x27a] sm:$0xff]
    %v343 = vld [vmem:[%s0 + $0x28a] sm:$0xff]
    %v344 = vld [vmem:[%s0 + $0x292] sm:$0xff]
    %v345 = vld [vmem:[%s0 + $0x2a2] sm:$0xff]
    %v346 = vld [vmem:[%s0 + $0x2aa] sm:$0xff]
    %v347 = vld [vmem:[%s0 + $0x2ba] sm:$0xff]
    %v348 = vld [vmem:[%s0 + $0x2c2] sm:$0xff]
    %v349 = vld [vmem:[%s0 + $0x2d2] sm:$0xff]
    %v350 = vld [vmem:[%s0 + $0x2da] sm:$0xff]
    %v351 = vld [vmem:[%s0 + $0x2ea] sm:$0xff]
    %v352 = vld [vmem:[%s0 + $0x2f2] sm:$0xff]
    %v353 = vld [vmem:[%s0 + $0x302] sm:$0xff]
    %v354 = vld [vmem:[%s0 + $0x30a] sm:$0xff]
    %v355 = vld [vmem:[%s0 + $0x31a] sm:$0xff]
    %v356 = vld [vmem:[%s0 + $0x322] sm:$0xff]
    %357 = vst [vmem:[#allocation2 + $0x10] sm:$0xff] %v293
    %358 = vst [vmem:[#allocation2 + $0x58] sm:$0xff] %v294
    %359 = vst [vmem:[#allocation2 + $0xa0] sm:$0xff] %v295
    %360 = vst [vmem:[#allocation2 + $0xe8] sm:$0xff] %v296
    %361 = vst [vmem:[#allocation2 + $0x130] sm:$0xff] %v297
    %362 = vst [vmem:[#allocation2 + $0x178] sm:$0xff] %v298
    %363 = vst [vmem:[#allocation2 + $0x1c0] sm:$0xff] %v299
    %364 = vst [vmem:[#allocation2 + $0x208] sm:$0xff] %v300
    %365 = vst [vmem:[#allocation2 + $0x250] sm:$0xff] %v301
    %366 = vst [vmem:[#allocation2 + $0x298] sm:$0xff] %v302
    %367 = vst [vmem:[#allocation2 + $0x2e0] sm:$0xff] %v303
    %368 = vst [vmem:[#allocation2 + $0x328] sm:$0xff] %v304
    %369 = vst [vmem:[#allocation2 + $0x370] sm:$0xff] %v305
    %370 = vst [vmem:[#allocation2 + $0x3b8] sm:$0xff] %v306
    %371 = vst [vmem:[#allocation2 + $0x400] sm:$0xff] %v307
    %372 = vst [vmem:[#allocation2 + $0x448] sm:$0xff] %v308
    %373 = vst [vmem:[#allocation2 + $0x490] sm:$0xff] %v309
    %374 = vst [vmem:[#allocation2 + $0x4d8] sm:$0xff] %v310
    %375 = vst [vmem:[#allocation2 + $0x520] sm:$0xff] %v311
    %376 = vst [vmem:[#allocation2 + $0x568] sm:$0xff] %v312
    %377 = vst [vmem:[#allocation2 + $0x5b0] sm:$0xff] %v313
    %378 = vst [vmem:[#allocation2 + $0x5f8] sm:$0xff] %v314
    %379 = vst [vmem:[#allocation2 + $0x640] sm:$0xff] %v315
    %380 = vst [vmem:[#allocation2 + $0x688] sm:$0xff] %v316
    %381 = vst [vmem:[#allocation2 + $0x6d0] sm:$0xff] %v317
    %382 = vst [vmem:[#allocation2 + $0x718] sm:$0xff] %v318
    %383 = vst [vmem:[#allocation2 + $0x760] sm:$0xff] %v319
    %384 = vst [vmem:[#allocation2 + $0x7a8] sm:$0xff] %v320
    %385 = vst [vmem:[#allocation2 + $0x7f0] sm:$0xff] %v321
    %386 = vst [vmem:[#allocation2 + $0x838] sm:$0xff] %v322
    %387 = vst [vmem:[#allocation2 + $0x880] sm:$0xff] %v323
    %388 = vst [vmem:[#allocation2 + $0x8c8] sm:$0xff] %v324
    %389 = vst [vmem:[#allocation2 + $0x910] sm:$0xff] %v325
    %390 = vst [vmem:[#allocation2 + $0x958] sm:$0xff] %v326
    %391 = vst [vmem:[#allocation2 + $0x9a0] sm:$0xff] %v327
    %392 = vst [vmem:[#allocation2 + $0x9e8] sm:$0xff] %v328
    %393 = vst [vmem:[#allocation2 + $0xa30] sm:$0xff] %v329
    %394 = vst [vmem:[#allocation2 + $0xa78] sm:$0xff] %v330
    %395 = vst [vmem:[#allocation2 + $0xac0] sm:$0xff] %v331
    %396 = vst [vmem:[#allocation2 + $0xb08] sm:$0xff] %v332
    %397 = vst [vmem:[#allocation2 + $0xb50] sm:$0xff] %v333
    %398 = vst [vmem:[#allocation2 + $0xb98] sm:$0xff] %v334
    %399 = vst [vmem:[#allocation2 + $0xbe0] sm:$0xff] %v335
    %400 = vst [vmem:[#allocation2 + $0xc28] sm:$0xff] %v336
    %401 = vst [vmem:[#allocation2 + $0xc70] sm:$0xff] %v337
    %402 = vst [vmem:[#allocation2 + $0xcb8] sm:$0xff] %v338
    %403 = vst [vmem:[#allocation2 + $0xd00] sm:$0xff] %v339
    %404 = vst [vmem:[#allocation2 + $0xd48] sm:$0xff] %v340
    %405 = vst [vmem:[#allocation2 + $0xd90] sm:$0xff] %v341
    %406 = vst [vmem:[#allocation2 + $0xdd8] sm:$0xff] %v342
    %407 = vst [vmem:[#allocation2 + $0xe20] sm:$0xff] %v343
    %408 = vst [vmem:[#allocation2 + $0xe68] sm:$0xff] %v344
    %409 = vst [vmem:[#allocation2 + $0xeb0] sm:$0xff] %v345
    %410 = vst [vmem:[#allocation2 + $0xef8] sm:$0xff] %v346
    %411 = vst [vmem:[#allocation2 + $0xf40] sm:$0xff] %v347
    %412 = vst [vmem:[#allocation2 + $0xf88] sm:$0xff] %v348
    %413 = vst [vmem:[#allocation2 + $0xfd0] sm:$0xff] %v349
    %414 = vst [vmem:[#allocation2 + $0x1018] sm:$0xff] %v350
    %415 = vst [vmem:[#allocation2 + $0x1060] sm:$0xff] %v351
    %416 = vst [vmem:[#allocation2 + $0x10a8] sm:$0xff] %v352
    %417 = vst [vmem:[#allocation2 + $0x10f0] sm:$0xff] %v353
    %418 = vst [vmem:[#allocation2 + $0x1138] sm:$0xff] %v354
    %419 = vst [vmem:[#allocation2 + $0x1180] sm:$0xff] %v355
    %420 = vst [vmem:[#allocation2 + $0x11c8] sm:$0xff] %v356
    %s421 = scalar_lea.vmem %s0, 24
    %v422 = vld [vmem:[%s421] sm:$0xff]
    %v423 = vld [vmem:[%s421 + $0x8] sm:$0xff]
    %v424 = vld [vmem:[%s421 + $0x18] sm:$0xff]
    %v425 = vld [vmem:[%s421 + $0x20] sm:$0xff]
    %v426 = vld [vmem:[%s421 + $0x30] sm:$0xff]
    %v427 = vld [vmem:[%s421 + $0x38] sm:$0xff]
    %v428 = vld [vmem:[%s421 + $0x48] sm:$0xff]
    %v429 = vld [vmem:[%s421 + $0x50] sm:$0xff]
    %v430 = vld [vmem:[%s421 + $0x60] sm:$0xff]
    %v431 = vld [vmem:[%s421 + $0x68] sm:$0xff]
    %v432 = vld [vmem:[%s421 + $0x78] sm:$0xff]
    %v433 = vld [vmem:[%s421 + $0x80] sm:$0xff]
    %v434 = vld [vmem:[%s421 + $0x90] sm:$0xff]
    %v435 = vld [vmem:[%s421 + $0x98] sm:$0xff]
    %v436 = vld [vmem:[%s421 + $0xa8] sm:$0xff]
    %v437 = vld [vmem:[%s421 + $0xb0] sm:$0xff]
    %v438 = vld [vmem:[%s421 + $0xc0] sm:$0xff]
    %v439 = vld [vmem:[%s421 + $0xc8] sm:$0xff]
    %v440 = vld [vmem:[%s421 + $0xd8] sm:$0xff]
    %v441 = vld [vmem:[%s421 + $0xe0] sm:$0xff]
    %v442 = vld [vmem:[%s421 + $0xf0] sm:$0xff]
    %v443 = vld [vmem:[%s421 + $0xf8] sm:$0xff]
    %v444 = vld [vmem:[%s421 + $0x108] sm:$0xff]
    %v445 = vld [vmem:[%s421 + $0x110] sm:$0xff]
    %v446 = vld [vmem:[%s421 + $0x120] sm:$0xff]
    %v447 = vld [vmem:[%s421 + $0x128] sm:$0xff]
    %v448 = vld [vmem:[%s421 + $0x138] sm:$0xff]
    %v449 = vld [vmem:[%s421 + $0x140] sm:$0xff]
    %v450 = vld [vmem:[%s421 + $0x150] sm:$0xff]
    %v451 = vld [vmem:[%s421 + $0x158] sm:$0xff]
    %v452 = vld [vmem:[%s421 + $0x168] sm:$0xff]
    %v453 = vld [vmem:[%s421 + $0x170] sm:$0xff]
    %v454 = vld [vmem:[%s421 + $0x1b0] sm:$0xff]
    %v455 = vld [vmem:[%s421 + $0x1b8] sm:$0xff]
    %v456 = vld [vmem:[%s421 + $0x1c8] sm:$0xff]
    %v457 = vld [vmem:[%s421 + $0x1d0] sm:$0xff]
    %v458 = vld [vmem:[%s421 + $0x1e0] sm:$0xff]
    %v459 = vld [vmem:[%s421 + $0x1e8] sm:$0xff]
    %v460 = vld [vmem:[%s421 + $0x1f8] sm:$0xff]
    %v461 = vld [vmem:[%s421 + $0x200] sm:$0xff]
    %v462 = vld [vmem:[%s421 + $0x210] sm:$0xff]
    %v463 = vld [vmem:[%s421 + $0x218] sm:$0xff]
    %v464 = vld [vmem:[%s421 + $0x228] sm:$0xff]
    %v465 = vld [vmem:[%s421 + $0x230] sm:$0xff]
    %v466 = vld [vmem:[%s421 + $0x240] sm:$0xff]
    %v467 = vld [vmem:[%s421 + $0x248] sm:$0xff]
    %v468 = vld [vmem:[%s421 + $0x258] sm:$0xff]
    %v469 = vld [vmem:[%s421 + $0x260] sm:$0xff]
    %v470 = vld [vmem:[%s421 + $0x270] sm:$0xff]
    %v471 = vld [vmem:[%s421 + $0x278] sm:$0xff]
    %v472 = vld [vmem:[%s421 + $0x288] sm:$0xff]
    %v473 = vld [vmem:[%s421 + $0x290] sm:$0xff]
    %v474 = vld [vmem:[%s421 + $0x2a0] sm:$0xff]
    %v475 = vld [vmem:[%s421 + $0x2a8] sm:$0xff]
    %v476 = vld [vmem:[%s421 + $0x2b8] sm:$0xff]
    %v477 = vld [vmem:[%s421 + $0x2c0] sm:$0xff]
    %v478 = vld [vmem:[%s421 + $0x2d0] sm:$0xff]
    %v479 = vld [vmem:[%s421 + $0x2d8] sm:$0xff]
    %v480 = vld [vmem:[%s421 + $0x2e8] sm:$0xff]
    %v481 = vld [vmem:[%s421 + $0x2f0] sm:$0xff]
    %v482 = vld [vmem:[%s421 + $0x300] sm:$0xff]
    %v483 = vld [vmem:[%s421 + $0x308] sm:$0xff]
    %v484 = vld [vmem:[%s421 + $0x318] sm:$0xff]
    %v485 = vld [vmem:[%s421 + $0x320] sm:$0xff]
    %486 = vst [vmem:[#allocation2 + $0x18] sm:$0xff] %v422
    %487 = vst [vmem:[#allocation2 + $0x60] sm:$0xff] %v423
    %488 = vst [vmem:[#allocation2 + $0xa8] sm:$0xff] %v424
    %489 = vst [vmem:[#allocation2 + $0xf0] sm:$0xff] %v425
    %490 = vst [vmem:[#allocation2 + $0x138] sm:$0xff] %v426
    %491 = vst [vmem:[#allocation2 + $0x180] sm:$0xff] %v427
    %492 = vst [vmem:[#allocation2 + $0x1c8] sm:$0xff] %v428
    %493 = vst [vmem:[#allocation2 + $0x210] sm:$0xff] %v429
    %494 = vst [vmem:[#allocation2 + $0x258] sm:$0xff] %v430
    %495 = vst [vmem:[#allocation2 + $0x2a0] sm:$0xff] %v431
    %496 = vst [vmem:[#allocation2 + $0x2e8] sm:$0xff] %v432
    %497 = vst [vmem:[#allocation2 + $0x330] sm:$0xff] %v433
    %498 = vst [vmem:[#allocation2 + $0x378] sm:$0xff] %v434
    %499 = vst [vmem:[#allocation2 + $0x3c0] sm:$0xff] %v435
    %500 = vst [vmem:[#allocation2 + $0x408] sm:$0xff] %v436
    %501 = vst [vmem:[#allocation2 + $0x450] sm:$0xff] %v437
    %502 = vst [vmem:[#allocation2 + $0x498] sm:$0xff] %v438
    %503 = vst [vmem:[#allocation2 + $0x4e0] sm:$0xff] %v439
    %504 = vst [vmem:[#allocation2 + $0x528] sm:$0xff] %v440
    %505 = vst [vmem:[#allocation2 + $0x570] sm:$0xff] %v441
    %506 = vst [vmem:[#allocation2 + $0x5b8] sm:$0xff] %v442
    %507 = vst [vmem:[#allocation2 + $0x600] sm:$0xff] %v443
    %508 = vst [vmem:[#allocation2 + $0x648] sm:$0xff] %v444
    %509 = vst [vmem:[#allocation2 + $0x690] sm:$0xff] %v445
    %510 = vst [vmem:[#allocation2 + $0x6d8] sm:$0xff] %v446
    %511 = vst [vmem:[#allocation2 + $0x720] sm:$0xff] %v447
    %512 = vst [vmem:[#allocation2 + $0x768] sm:$0xff] %v448
    %513 = vst [vmem:[#allocation2 + $0x7b0] sm:$0xff] %v449
    %514 = vst [vmem:[#allocation2 + $0x7f8] sm:$0xff] %v450
    %515 = vst [vmem:[#allocation2 + $0x840] sm:$0xff] %v451
    %516 = vst [vmem:[#allocation2 + $0x888] sm:$0xff] %v452
    %517 = vst [vmem:[#allocation2 + $0x8d0] sm:$0xff] %v453
    %518 = vst [vmem:[#allocation2 + $0x918] sm:$0xff] %v454
    %519 = vst [vmem:[#allocation2 + $0x960] sm:$0xff] %v455
    %520 = vst [vmem:[#allocation2 + $0x9a8] sm:$0xff] %v456
    %521 = vst [vmem:[#allocation2 + $0x9f0] sm:$0xff] %v457
    %522 = vst [vmem:[#allocation2 + $0xa38] sm:$0xff] %v458
    %523 = vst [vmem:[#allocation2 + $0xa80] sm:$0xff] %v459
    %524 = vst [vmem:[#allocation2 + $0xac8] sm:$0xff] %v460
    %525 = vst [vmem:[#allocation2 + $0xb10] sm:$0xff] %v461
    %526 = vst [vmem:[#allocation2 + $0xb58] sm:$0xff] %v462
    %527 = vst [vmem:[#allocation2 + $0xba0] sm:$0xff] %v463
    %528 = vst [vmem:[#allocation2 + $0xbe8] sm:$0xff] %v464
    %529 = vst [vmem:[#allocation2 + $0xc30] sm:$0xff] %v465
    %530 = vst [vmem:[#allocation2 + $0xc78] sm:$0xff] %v466
    %531 = vst [vmem:[#allocation2 + $0xcc0] sm:$0xff] %v467
    %532 = vst [vmem:[#allocation2 + $0xd08] sm:$0xff] %v468
    %533 = vst [vmem:[#allocation2 + $0xd50] sm:$0xff] %v469
    %534 = vst [vmem:[#allocation2 + $0xd98] sm:$0xff] %v470
    %535 = vst [vmem:[#allocation2 + $0xde0] sm:$0xff] %v471
    %536 = vst [vmem:[#allocation2 + $0xe28] sm:$0xff] %v472
    %537 = vst [vmem:[#allocation2 + $0xe70] sm:$0xff] %v473
    %538 = vst [vmem:[#allocation2 + $0xeb8] sm:$0xff] %v474
    %539 = vst [vmem:[#allocation2 + $0xf00] sm:$0xff] %v475
    %540 = vst [vmem:[#allocation2 + $0xf48] sm:$0xff] %v476
    %541 = vst [vmem:[#allocation2 + $0xf90] sm:$0xff] %v477
    %542 = vst [vmem:[#allocation2 + $0xfd8] sm:$0xff] %v478
    %543 = vst [vmem:[#allocation2 + $0x1020] sm:$0xff] %v479
    %544 = vst [vmem:[#allocation2 + $0x1068] sm:$0xff] %v480
    %545 = vst [vmem:[#allocation2 + $0x10b0] sm:$0xff] %v481
    %546 = vst [vmem:[#allocation2 + $0x10f8] sm:$0xff] %v482
    %547 = vst [vmem:[#allocation2 + $0x1140] sm:$0xff] %v483
    %548 = vst [vmem:[#allocation2 + $0x1188] sm:$0xff] %v484
    %549 = vst [vmem:[#allocation2 + $0x11d0] sm:$0xff] %v485
    %v550 = vld [vmem:[%s421 + $0x1] sm:$0xff]
    %v551 = vld [vmem:[%s421 + $0x9] sm:$0xff]
    %v552 = vld [vmem:[%s421 + $0x19] sm:$0xff]
    %v553 = vld [vmem:[%s421 + $0x21] sm:$0xff]
    %v554 = vld [vmem:[%s421 + $0x31] sm:$0xff]
    %v555 = vld [vmem:[%s421 + $0x39] sm:$0xff]
    %v556 = vld [vmem:[%s421 + $0x49] sm:$0xff]
    %v557 = vld [vmem:[%s421 + $0x51] sm:$0xff]
    %v558 = vld [vmem:[%s421 + $0x61] sm:$0xff]
    %v559 = vld [vmem:[%s421 + $0x69] sm:$0xff]
    %v560 = vld [vmem:[%s421 + $0x79] sm:$0xff]
    %v561 = vld [vmem:[%s421 + $0x81] sm:$0xff]
    %v562 = vld [vmem:[%s421 + $0x91] sm:$0xff]
    %v563 = vld [vmem:[%s421 + $0x99] sm:$0xff]
    %v564 = vld [vmem:[%s421 + $0xa9] sm:$0xff]
    %v565 = vld [vmem:[%s421 + $0xb1] sm:$0xff]
    %v566 = vld [vmem:[%s421 + $0xc1] sm:$0xff]
    %v567 = vld [vmem:[%s421 + $0xc9] sm:$0xff]
    %v568 = vld [vmem:[%s421 + $0xd9] sm:$0xff]
    %v569 = vld [vmem:[%s421 + $0xe1] sm:$0xff]
    %v570 = vld [vmem:[%s421 + $0xf1] sm:$0xff]
    %v571 = vld [vmem:[%s421 + $0xf9] sm:$0xff]
    %v572 = vld [vmem:[%s421 + $0x109] sm:$0xff]
    %v573 = vld [vmem:[%s421 + $0x111] sm:$0xff]
    %v574 = vld [vmem:[%s421 + $0x121] sm:$0xff]
    %v575 = vld [vmem:[%s421 + $0x129] sm:$0xff]
    %v576 = vld [vmem:[%s421 + $0x139] sm:$0xff]
    %v577 = vld [vmem:[%s421 + $0x141] sm:$0xff]
    %v578 = vld [vmem:[%s421 + $0x151] sm:$0xff]
    %v579 = vld [vmem:[%s421 + $0x159] sm:$0xff]
    %v580 = vld [vmem:[%s421 + $0x169] sm:$0xff]
    %v581 = vld [vmem:[%s421 + $0x171] sm:$0xff]
    %v582 = vld [vmem:[%s421 + $0x1b1] sm:$0xff]
    %v583 = vld [vmem:[%s421 + $0x1b9] sm:$0xff]
    %v584 = vld [vmem:[%s421 + $0x1c9] sm:$0xff]
    %v585 = vld [vmem:[%s421 + $0x1d1] sm:$0xff]
    %v586 = vld [vmem:[%s421 + $0x1e1] sm:$0xff]
    %v587 = vld [vmem:[%s421 + $0x1e9] sm:$0xff]
    %v588 = vld [vmem:[%s421 + $0x1f9] sm:$0xff]
    %v589 = vld [vmem:[%s421 + $0x201] sm:$0xff]
    %v590 = vld [vmem:[%s421 + $0x211] sm:$0xff]
    %v591 = vld [vmem:[%s421 + $0x219] sm:$0xff]
    %v592 = vld [vmem:[%s421 + $0x229] sm:$0xff]
    %v593 = vld [vmem:[%s421 + $0x231] sm:$0xff]
    %v594 = vld [vmem:[%s421 + $0x241] sm:$0xff]
    %v595 = vld [vmem:[%s421 + $0x249] sm:$0xff]
    %v596 = vld [vmem:[%s421 + $0x259] sm:$0xff]
    %v597 = vld [vmem:[%s421 + $0x261] sm:$0xff]
    %v598 = vld [vmem:[%s421 + $0x271] sm:$0xff]
    %v599 = vld [vmem:[%s421 + $0x279] sm:$0xff]
    %v600 = vld [vmem:[%s421 + $0x289] sm:$0xff]
    %v601 = vld [vmem:[%s421 + $0x291] sm:$0xff]
    %v602 = vld [vmem:[%s421 + $0x2a1] sm:$0xff]
    %v603 = vld [vmem:[%s421 + $0x2a9] sm:$0xff]
    %v604 = vld [vmem:[%s421 + $0x2b9] sm:$0xff]
    %v605 = vld [vmem:[%s421 + $0x2c1] sm:$0xff]
    %v606 = vld [vmem:[%s421 + $0x2d1] sm:$0xff]
    %v607 = vld [vmem:[%s421 + $0x2d9] sm:$0xff]
    %v608 = vld [vmem:[%s421 + $0x2e9] sm:$0xff]
    %v609 = vld [vmem:[%s421 + $0x2f1] sm:$0xff]
    %v610 = vld [vmem:[%s421 + $0x301] sm:$0xff]
    %v611 = vld [vmem:[%s421 + $0x309] sm:$0xff]
    %v612 = vld [vmem:[%s421 + $0x319] sm:$0xff]
    %v613 = vld [vmem:[%s421 + $0x321] sm:$0xff]
    %614 = vst [vmem:[#allocation2 + $0x20] sm:$0xff] %v550
    %615 = vst [vmem:[#allocation2 + $0x68] sm:$0xff] %v551
    %616 = vst [vmem:[#allocation2 + $0xb0] sm:$0xff] %v552
    %617 = vst [vmem:[#allocation2 + $0xf8] sm:$0xff] %v553
    %618 = vst [vmem:[#allocation2 + $0x140] sm:$0xff] %v554
    %619 = vst [vmem:[#allocation2 + $0x188] sm:$0xff] %v555
    %620 = vst [vmem:[#allocation2 + $0x1d0] sm:$0xff] %v556
    %621 = vst [vmem:[#allocation2 + $0x218] sm:$0xff] %v557
    %622 = vst [vmem:[#allocation2 + $0x260] sm:$0xff] %v558
    %623 = vst [vmem:[#allocation2 + $0x2a8] sm:$0xff] %v559
    %624 = vst [vmem:[#allocation2 + $0x2f0] sm:$0xff] %v560
    %625 = vst [vmem:[#allocation2 + $0x338] sm:$0xff] %v561
    %626 = vst [vmem:[#allocation2 + $0x380] sm:$0xff] %v562
    %627 = vst [vmem:[#allocation2 + $0x3c8] sm:$0xff] %v563
    %628 = vst [vmem:[#allocation2 + $0x410] sm:$0xff] %v564
    %629 = vst [vmem:[#allocation2 + $0x458] sm:$0xff] %v565
    %630 = vst [vmem:[#allocation2 + $0x4a0] sm:$0xff] %v566
    %631 = vst [vmem:[#allocation2 + $0x4e8] sm:$0xff] %v567
    %632 = vst [vmem:[#allocation2 + $0x530] sm:$0xff] %v568
    %633 = vst [vmem:[#allocation2 + $0x578] sm:$0xff] %v569
    %634 = vst [vmem:[#allocation2 + $0x5c0] sm:$0xff] %v570
    %635 = vst [vmem:[#allocation2 + $0x608] sm:$0xff] %v571
    %636 = vst [vmem:[#allocation2 + $0x650] sm:$0xff] %v572
    %637 = vst [vmem:[#allocation2 + $0x698] sm:$0xff] %v573
    %638 = vst [vmem:[#allocation2 + $0x6e0] sm:$0xff] %v574
    %639 = vst [vmem:[#allocation2 + $0x728] sm:$0xff] %v575
    %640 = vst [vmem:[#allocation2 + $0x770] sm:$0xff] %v576
    %641 = vst [vmem:[#allocation2 + $0x7b8] sm:$0xff] %v577
    %642 = vst [vmem:[#allocation2 + $0x800] sm:$0xff] %v578
    %643 = vst [vmem:[#allocation2 + $0x848] sm:$0xff] %v579
    %644 = vst [vmem:[#allocation2 + $0x890] sm:$0xff] %v580
    %645 = vst [vmem:[#allocation2 + $0x8d8] sm:$0xff] %v581
    %646 = vst [vmem:[#allocation2 + $0x920] sm:$0xff] %v582
    %647 = vst [vmem:[#allocation2 + $0x968] sm:$0xff] %v583
    %648 = vst [vmem:[#allocation2 + $0x9b0] sm:$0xff] %v584
    %649 = vst [vmem:[#allocation2 + $0x9f8] sm:$0xff] %v585
    %650 = vst [vmem:[#allocation2 + $0xa40] sm:$0xff] %v586
    %651 = vst [vmem:[#allocation2 + $0xa88] sm:$0xff] %v587
    %652 = vst [vmem:[#allocation2 + $0xad0] sm:$0xff] %v588
    %653 = vst [vmem:[#allocation2 + $0xb18] sm:$0xff] %v589
    %654 = vst [vmem:[#allocation2 + $0xb60] sm:$0xff] %v590
    %655 = vst [vmem:[#allocation2 + $0xba8] sm:$0xff] %v591
    %656 = vst [vmem:[#allocation2 + $0xbf0] sm:$0xff] %v592
    %657 = vst [vmem:[#allocation2 + $0xc38] sm:$0xff] %v593
    %658 = vst [vmem:[#allocation2 + $0xc80] sm:$0xff] %v594
    %659 = vst [vmem:[#allocation2 + $0xcc8] sm:$0xff] %v595
    %660 = vst [vmem:[#allocation2 + $0xd10] sm:$0xff] %v596
    %661 = vst [vmem:[#allocation2 + $0xd58] sm:$0xff] %v597
    %662 = vst [vmem:[#allocation2 + $0xda0] sm:$0xff] %v598
    %663 = vst [vmem:[#allocation2 + $0xde8] sm:$0xff] %v599
    %664 = vst [vmem:[#allocation2 + $0xe30] sm:$0xff] %v600
    %665 = vst [vmem:[#allocation2 + $0xe78] sm:$0xff] %v601
    %666 = vst [vmem:[#allocation2 + $0xec0] sm:$0xff] %v602
    %667 = vst [vmem:[#allocation2 + $0xf08] sm:$0xff] %v603
    %668 = vst [vmem:[#allocation2 + $0xf50] sm:$0xff] %v604
    %669 = vst [vmem:[#allocation2 + $0xf98] sm:$0xff] %v605
    %670 = vst [vmem:[#allocation2 + $0xfe0] sm:$0xff] %v606
    %671 = vst [vmem:[#allocation2 + $0x1028] sm:$0xff] %v607
    %672 = vst [vmem:[#allocation2 + $0x1070] sm:$0xff] %v608
    %673 = vst [vmem:[#allocation2 + $0x10b8] sm:$0xff] %v609
    %674 = vst [vmem:[#allocation2 + $0x1100] sm:$0xff] %v610
    %675 = vst [vmem:[#allocation2 + $0x1148] sm:$0xff] %v611
    %676 = vst [vmem:[#allocation2 + $0x1190] sm:$0xff] %v612
    %677 = vst [vmem:[#allocation2 + $0x11d8] sm:$0xff] %v613
    %v678 = vld [vmem:[%s421 + $0x2] sm:$0xff]
    %v679 = vld [vmem:[%s421 + $0xa] sm:$0xff]
    %v680 = vld [vmem:[%s421 + $0x1a] sm:$0xff]
    %v681 = vld [vmem:[%s421 + $0x22] sm:$0xff]
    %v682 = vld [vmem:[%s421 + $0x32] sm:$0xff]
    %v683 = vld [vmem:[%s421 + $0x3a] sm:$0xff]
    %v684 = vld [vmem:[%s421 + $0x4a] sm:$0xff]
    %v685 = vld [vmem:[%s421 + $0x52] sm:$0xff]
    %v686 = vld [vmem:[%s421 + $0x62] sm:$0xff]
    %v687 = vld [vmem:[%s421 + $0x6a] sm:$0xff]
    %v688 = vld [vmem:[%s421 + $0x7a] sm:$0xff]
    %v689 = vld [vmem:[%s421 + $0x82] sm:$0xff]
    %v690 = vld [vmem:[%s421 + $0x92] sm:$0xff]
    %v691 = vld [vmem:[%s421 + $0x9a] sm:$0xff]
    %v692 = vld [vmem:[%s421 + $0xaa] sm:$0xff]
    %v693 = vld [vmem:[%s421 + $0xb2] sm:$0xff]
    %v694 = vld [vmem:[%s421 + $0xc2] sm:$0xff]
    %v695 = vld [vmem:[%s421 + $0xca] sm:$0xff]
    %v696 = vld [vmem:[%s421 + $0xda] sm:$0xff]
    %v697 = vld [vmem:[%s421 + $0xe2] sm:$0xff]
    %v698 = vld [vmem:[%s421 + $0xf2] sm:$0xff]
    %v699 = vld [vmem:[%s421 + $0xfa] sm:$0xff]
    %v700 = vld [vmem:[%s421 + $0x10a] sm:$0xff]
    %v701 = vld [vmem:[%s421 + $0x112] sm:$0xff]
    %v702 = vld [vmem:[%s421 + $0x122] sm:$0xff]
    %v703 = vld [vmem:[%s421 + $0x12a] sm:$0xff]
    %v704 = vld [vmem:[%s421 + $0x13a] sm:$0xff]
    %v705 = vld [vmem:[%s421 + $0x142] sm:$0xff]
    %v706 = vld [vmem:[%s421 + $0x152] sm:$0xff]
    %v707 = vld [vmem:[%s421 + $0x15a] sm:$0xff]
    %v708 = vld [vmem:[%s421 + $0x16a] sm:$0xff]
    %v709 = vld [vmem:[%s421 + $0x172] sm:$0xff]
    %v710 = vld [vmem:[%s421 + $0x1b2] sm:$0xff]
    %v711 = vld [vmem:[%s421 + $0x1ba] sm:$0xff]
    %v712 = vld [vmem:[%s421 + $0x1ca] sm:$0xff]
    %v713 = vld [vmem:[%s421 + $0x1d2] sm:$0xff]
    %v714 = vld [vmem:[%s421 + $0x1e2] sm:$0xff]
    %v715 = vld [vmem:[%s421 + $0x1ea] sm:$0xff]
    %v716 = vld [vmem:[%s421 + $0x1fa] sm:$0xff]
    %v717 = vld [vmem:[%s421 + $0x202] sm:$0xff]
    %v718 = vld [vmem:[%s421 + $0x212] sm:$0xff]
    %v719 = vld [vmem:[%s421 + $0x21a] sm:$0xff]
    %v720 = vld [vmem:[%s421 + $0x22a] sm:$0xff]
    %v721 = vld [vmem:[%s421 + $0x232] sm:$0xff]
    %v722 = vld [vmem:[%s421 + $0x242] sm:$0xff]
    %v723 = vld [vmem:[%s421 + $0x24a] sm:$0xff]
    %v724 = vld [vmem:[%s421 + $0x25a] sm:$0xff]
    %v725 = vld [vmem:[%s421 + $0x262] sm:$0xff]
    %v726 = vld [vmem:[%s421 + $0x272] sm:$0xff]
    %v727 = vld [vmem:[%s421 + $0x27a] sm:$0xff]
    %v728 = vld [vmem:[%s421 + $0x28a] sm:$0xff]
    %v729 = vld [vmem:[%s421 + $0x292] sm:$0xff]
    %v730 = vld [vmem:[%s421 + $0x2a2] sm:$0xff]
    %v731 = vld [vmem:[%s421 + $0x2aa] sm:$0xff]
    %v732 = vld [vmem:[%s421 + $0x2ba] sm:$0xff]
    %v733 = vld [vmem:[%s421 + $0x2c2] sm:$0xff]
    %v734 = vld [vmem:[%s421 + $0x2d2] sm:$0xff]
    %v735 = vld [vmem:[%s421 + $0x2da] sm:$0xff]
    %v736 = vld [vmem:[%s421 + $0x2ea] sm:$0xff]
    %v737 = vld [vmem:[%s421 + $0x2f2] sm:$0xff]
    %v738 = vld [vmem:[%s421 + $0x302] sm:$0xff]
    %v739 = vld [vmem:[%s421 + $0x30a] sm:$0xff]
    %v740 = vld [vmem:[%s421 + $0x31a] sm:$0xff]
    %v741 = vld [vmem:[%s421 + $0x322] sm:$0xff]
    %742 = vst [vmem:[#allocation2 + $0x28] sm:$0xff] %v678
    %743 = vst [vmem:[#allocation2 + $0x70] sm:$0xff] %v679
    %744 = vst [vmem:[#allocation2 + $0xb8] sm:$0xff] %v680
    %745 = vst [vmem:[#allocation2 + $0x100] sm:$0xff] %v681
    %746 = vst [vmem:[#allocation2 + $0x148] sm:$0xff] %v682
    %747 = vst [vmem:[#allocation2 + $0x190] sm:$0xff] %v683
    %748 = vst [vmem:[#allocation2 + $0x1d8] sm:$0xff] %v684
    %749 = vst [vmem:[#allocation2 + $0x220] sm:$0xff] %v685
    %750 = vst [vmem:[#allocation2 + $0x268] sm:$0xff] %v686
    %751 = vst [vmem:[#allocation2 + $0x2b0] sm:$0xff] %v687
    %752 = vst [vmem:[#allocation2 + $0x2f8] sm:$0xff] %v688
    %753 = vst [vmem:[#allocation2 + $0x340] sm:$0xff] %v689
    %754 = vst [vmem:[#allocation2 + $0x388] sm:$0xff] %v690
    %755 = vst [vmem:[#allocation2 + $0x3d0] sm:$0xff] %v691
    %756 = vst [vmem:[#allocation2 + $0x418] sm:$0xff] %v692
    %757 = vst [vmem:[#allocation2 + $0x460] sm:$0xff] %v693
    %758 = vst [vmem:[#allocation2 + $0x4a8] sm:$0xff] %v694
    %759 = vst [vmem:[#allocation2 + $0x4f0] sm:$0xff] %v695
    %760 = vst [vmem:[#allocation2 + $0x538] sm:$0xff] %v696
    %761 = vst [vmem:[#allocation2 + $0x580] sm:$0xff] %v697
    %762 = vst [vmem:[#allocation2 + $0x5c8] sm:$0xff] %v698
    %763 = vst [vmem:[#allocation2 + $0x610] sm:$0xff] %v699
    %764 = vst [vmem:[#allocation2 + $0x658] sm:$0xff] %v700
    %765 = vst [vmem:[#allocation2 + $0x6a0] sm:$0xff] %v701
    %766 = vst [vmem:[#allocation2 + $0x6e8] sm:$0xff] %v702
    %767 = vst [vmem:[#allocation2 + $0x730] sm:$0xff] %v703
    %768 = vst [vmem:[#allocation2 + $0x778] sm:$0xff] %v704
    %769 = vst [vmem:[#allocation2 + $0x7c0] sm:$0xff] %v705
    %770 = vst [vmem:[#allocation2 + $0x808] sm:$0xff] %v706
    %771 = vst [vmem:[#allocation2 + $0x850] sm:$0xff] %v707
    %772 = vst [vmem:[#allocation2 + $0x898] sm:$0xff] %v708
    %773 = vst [vmem:[#allocation2 + $0x8e0] sm:$0xff] %v709
    %774 = vst [vmem:[#allocation2 + $0x928] sm:$0xff] %v710
    %775 = vst [vmem:[#allocation2 + $0x970] sm:$0xff] %v711
    %776 = vst [vmem:[#allocation2 + $0x9b8] sm:$0xff] %v712
    %777 = vst [vmem:[#allocation2 + $0xa00] sm:$0xff] %v713
    %778 = vst [vmem:[#allocation2 + $0xa48] sm:$0xff] %v714
    %779 = vst [vmem:[#allocation2 + $0xa90] sm:$0xff] %v715
    %780 = vst [vmem:[#allocation2 + $0xad8] sm:$0xff] %v716
    %781 = vst [vmem:[#allocation2 + $0xb20] sm:$0xff] %v717
    %782 = vst [vmem:[#allocation2 + $0xb68] sm:$0xff] %v718
    %783 = vst [vmem:[#allocation2 + $0xbb0] sm:$0xff] %v719
    %784 = vst [vmem:[#allocation2 + $0xbf8] sm:$0xff] %v720
    %785 = vst [vmem:[#allocation2 + $0xc40] sm:$0xff] %v721
    %786 = vst [vmem:[#allocation2 + $0xc88] sm:$0xff] %v722
    %787 = vst [vmem:[#allocation2 + $0xcd0] sm:$0xff] %v723
    %788 = vst [vmem:[#allocation2 + $0xd18] sm:$0xff] %v724
    %789 = vst [vmem:[#allocation2 + $0xd60] sm:$0xff] %v725
    %790 = vst [vmem:[#allocation2 + $0xda8] sm:$0xff] %v726
    %791 = vst [vmem:[#allocation2 + $0xdf0] sm:$0xff] %v727
    %792 = vst [vmem:[#allocation2 + $0xe38] sm:$0xff] %v728
    %793 = vst [vmem:[#allocation2 + $0xe80] sm:$0xff] %v729
    %794 = vst [vmem:[#allocation2 + $0xec8] sm:$0xff] %v730
    %795 = vst [vmem:[#allocation2 + $0xf10] sm:$0xff] %v731
    %796 = vst [vmem:[#allocation2 + $0xf58] sm:$0xff] %v732
    %797 = vst [vmem:[#allocation2 + $0xfa0] sm:$0xff] %v733
    %798 = vst [vmem:[#allocation2 + $0xfe8] sm:$0xff] %v734
    %799 = vst [vmem:[#allocation2 + $0x1030] sm:$0xff] %v735
    %800 = vst [vmem:[#allocation2 + $0x1078] sm:$0xff] %v736
    %801 = vst [vmem:[#allocation2 + $0x10c0] sm:$0xff] %v737
    %802 = vst [vmem:[#allocation2 + $0x1108] sm:$0xff] %v738
    %803 = vst [vmem:[#allocation2 + $0x1150] sm:$0xff] %v739
    %804 = vst [vmem:[#allocation2 + $0x1198] sm:$0xff] %v740
    %805 = vst [vmem:[#allocation2 + $0x11e0] sm:$0xff] %v741
    %s806 = scalar_lea.vmem %s0, 48
    %v807 = vld [vmem:[%s806] sm:$0xff]
    %v808 = vld [vmem:[%s806 + $0x8] sm:$0xff]
    %v809 = vld [vmem:[%s806 + $0x18] sm:$0xff]
    %v810 = vld [vmem:[%s806 + $0x20] sm:$0xff]
    %v811 = vld [vmem:[%s806 + $0x30] sm:$0xff]
    %v812 = vld [vmem:[%s806 + $0x38] sm:$0xff]
    %v813 = vld [vmem:[%s806 + $0x48] sm:$0xff]
    %v814 = vld [vmem:[%s806 + $0x50] sm:$0xff]
    %v815 = vld [vmem:[%s806 + $0x60] sm:$0xff]
    %v816 = vld [vmem:[%s806 + $0x68] sm:$0xff]
    %v817 = vld [vmem:[%s806 + $0x78] sm:$0xff]
    %v818 = vld [vmem:[%s806 + $0x80] sm:$0xff]
    %v819 = vld [vmem:[%s806 + $0x90] sm:$0xff]
    %v820 = vld [vmem:[%s806 + $0x98] sm:$0xff]
    %v821 = vld [vmem:[%s806 + $0xa8] sm:$0xff]
    %v822 = vld [vmem:[%s806 + $0xb0] sm:$0xff]
    %v823 = vld [vmem:[%s806 + $0xc0] sm:$0xff]
    %v824 = vld [vmem:[%s806 + $0xc8] sm:$0xff]
    %v825 = vld [vmem:[%s806 + $0xd8] sm:$0xff]
    %v826 = vld [vmem:[%s806 + $0xe0] sm:$0xff]
    %v827 = vld [vmem:[%s806 + $0xf0] sm:$0xff]
    %v828 = vld [vmem:[%s806 + $0xf8] sm:$0xff]
    %v829 = vld [vmem:[%s806 + $0x108] sm:$0xff]
    %v830 = vld [vmem:[%s806 + $0x110] sm:$0xff]
    %v831 = vld [vmem:[%s806 + $0x120] sm:$0xff]
    %v832 = vld [vmem:[%s806 + $0x128] sm:$0xff]
    %v833 = vld [vmem:[%s806 + $0x138] sm:$0xff]
    %v834 = vld [vmem:[%s806 + $0x140] sm:$0xff]
    %v835 = vld [vmem:[%s806 + $0x150] sm:$0xff]
    %v836 = vld [vmem:[%s806 + $0x158] sm:$0xff]
    %v837 = vld [vmem:[%s806 + $0x168] sm:$0xff]
    %v838 = vld [vmem:[%s806 + $0x170] sm:$0xff]
    %v839 = vld [vmem:[%s806 + $0x1b0] sm:$0xff]
    %v840 = vld [vmem:[%s806 + $0x1b8] sm:$0xff]
    %v841 = vld [vmem:[%s806 + $0x1c8] sm:$0xff]
    %v842 = vld [vmem:[%s806 + $0x1d0] sm:$0xff]
    %v843 = vld [vmem:[%s806 + $0x1e0] sm:$0xff]
    %v844 = vld [vmem:[%s806 + $0x1e8] sm:$0xff]
    %v845 = vld [vmem:[%s806 + $0x1f8] sm:$0xff]
    %v846 = vld [vmem:[%s806 + $0x200] sm:$0xff]
    %v847 = vld [vmem:[%s806 + $0x210] sm:$0xff]
    %v848 = vld [vmem:[%s806 + $0x218] sm:$0xff]
    %v849 = vld [vmem:[%s806 + $0x228] sm:$0xff]
    %v850 = vld [vmem:[%s806 + $0x230] sm:$0xff]
    %v851 = vld [vmem:[%s806 + $0x240] sm:$0xff]
    %v852 = vld [vmem:[%s806 + $0x248] sm:$0xff]
    %v853 = vld [vmem:[%s806 + $0x258] sm:$0xff]
    %v854 = vld [vmem:[%s806 + $0x260] sm:$0xff]
    %v855 = vld [vmem:[%s806 + $0x270] sm:$0xff]
    %v856 = vld [vmem:[%s806 + $0x278] sm:$0xff]
    %v857 = vld [vmem:[%s806 + $0x288] sm:$0xff]
    %v858 = vld [vmem:[%s806 + $0x290] sm:$0xff]
    %v859 = vld [vmem:[%s806 + $0x2a0] sm:$0xff]
    %v860 = vld [vmem:[%s806 + $0x2a8] sm:$0xff]
    %v861 = vld [vmem:[%s806 + $0x2b8] sm:$0xff]
    %v862 = vld [vmem:[%s806 + $0x2c0] sm:$0xff]
    %v863 = vld [vmem:[%s806 + $0x2d0] sm:$0xff]
    %v864 = vld [vmem:[%s806 + $0x2d8] sm:$0xff]
    %v865 = vld [vmem:[%s806 + $0x2e8] sm:$0xff]
    %v866 = vld [vmem:[%s806 + $0x2f0] sm:$0xff]
    %v867 = vld [vmem:[%s806 + $0x300] sm:$0xff]
    %v868 = vld [vmem:[%s806 + $0x308] sm:$0xff]
    %v869 = vld [vmem:[%s806 + $0x318] sm:$0xff]
    %v870 = vld [vmem:[%s806 + $0x320] sm:$0xff]
    %871 = vst [vmem:[#allocation2 + $0x30] sm:$0xff] %v807
    %872 = vst [vmem:[#allocation2 + $0x78] sm:$0xff] %v808
    %873 = vst [vmem:[#allocation2 + $0xc0] sm:$0xff] %v809
    %874 = vst [vmem:[#allocation2 + $0x108] sm:$0xff] %v810
    %875 = vst [vmem:[#allocation2 + $0x150] sm:$0xff] %v811
    %876 = vst [vmem:[#allocation2 + $0x198] sm:$0xff] %v812
    %877 = vst [vmem:[#allocation2 + $0x1e0] sm:$0xff] %v813
    %878 = vst [vmem:[#allocation2 + $0x228] sm:$0xff] %v814
    %879 = vst [vmem:[#allocation2 + $0x270] sm:$0xff] %v815
    %880 = vst [vmem:[#allocation2 + $0x2b8] sm:$0xff] %v816
    %881 = vst [vmem:[#allocation2 + $0x300] sm:$0xff] %v817
    %882 = vst [vmem:[#allocation2 + $0x348] sm:$0xff] %v818
    %883 = vst [vmem:[#allocation2 + $0x390] sm:$0xff] %v819
    %884 = vst [vmem:[#allocation2 + $0x3d8] sm:$0xff] %v820
    %885 = vst [vmem:[#allocation2 + $0x420] sm:$0xff] %v821
    %886 = vst [vmem:[#allocation2 + $0x468] sm:$0xff] %v822
    %887 = vst [vmem:[#allocation2 + $0x4b0] sm:$0xff] %v823
    %888 = vst [vmem:[#allocation2 + $0x4f8] sm:$0xff] %v824
    %889 = vst [vmem:[#allocation2 + $0x540] sm:$0xff] %v825
    %890 = vst [vmem:[#allocation2 + $0x588] sm:$0xff] %v826
    %891 = vst [vmem:[#allocation2 + $0x5d0] sm:$0xff] %v827
    %892 = vst [vmem:[#allocation2 + $0x618] sm:$0xff] %v828
    %893 = vst [vmem:[#allocation2 + $0x660] sm:$0xff] %v829
    %894 = vst [vmem:[#allocation2 + $0x6a8] sm:$0xff] %v830
    %895 = vst [vmem:[#allocation2 + $0x6f0] sm:$0xff] %v831
    %896 = vst [vmem:[#allocation2 + $0x738] sm:$0xff] %v832
    %897 = vst [vmem:[#allocation2 + $0x780] sm:$0xff] %v833
    %898 = vst [vmem:[#allocation2 + $0x7c8] sm:$0xff] %v834
    %899 = vst [vmem:[#allocation2 + $0x810] sm:$0xff] %v835
    %900 = vst [vmem:[#allocation2 + $0x858] sm:$0xff] %v836
    %901 = vst [vmem:[#allocation2 + $0x8a0] sm:$0xff] %v837
    %902 = vst [vmem:[#allocation2 + $0x8e8] sm:$0xff] %v838
    %903 = vst [vmem:[#allocation2 + $0x930] sm:$0xff] %v839
    %904 = vst [vmem:[#allocation2 + $0x978] sm:$0xff] %v840
    %905 = vst [vmem:[#allocation2 + $0x9c0] sm:$0xff] %v841
    %906 = vst [vmem:[#allocation2 + $0xa08] sm:$0xff] %v842
    %907 = vst [vmem:[#allocation2 + $0xa50] sm:$0xff] %v843
    %908 = vst [vmem:[#allocation2 + $0xa98] sm:$0xff] %v844
    %909 = vst [vmem:[#allocation2 + $0xae0] sm:$0xff] %v845
    %910 = vst [vmem:[#allocation2 + $0xb28] sm:$0xff] %v846
    %911 = vst [vmem:[#allocation2 + $0xb70] sm:$0xff] %v847
    %912 = vst [vmem:[#allocation2 + $0xbb8] sm:$0xff] %v848
    %913 = vst [vmem:[#allocation2 + $0xc00] sm:$0xff] %v849
    %914 = vst [vmem:[#allocation2 + $0xc48] sm:$0xff] %v850
    %915 = vst [vmem:[#allocation2 + $0xc90] sm:$0xff] %v851
    %916 = vst [vmem:[#allocation2 + $0xcd8] sm:$0xff] %v852
    %917 = vst [vmem:[#allocation2 + $0xd20] sm:$0xff] %v853
    %918 = vst [vmem:[#allocation2 + $0xd68] sm:$0xff] %v854
    %919 = vst [vmem:[#allocation2 + $0xdb0] sm:$0xff] %v855
    %920 = vst [vmem:[#allocation2 + $0xdf8] sm:$0xff] %v856
    %921 = vst [vmem:[#allocation2 + $0xe40] sm:$0xff] %v857
    %922 = vst [vmem:[#allocation2 + $0xe88] sm:$0xff] %v858
    %923 = vst [vmem:[#allocation2 + $0xed0] sm:$0xff] %v859
    %924 = vst [vmem:[#allocation2 + $0xf18] sm:$0xff] %v860
    %925 = vst [vmem:[#allocation2 + $0xf60] sm:$0xff] %v861
    %926 = vst [vmem:[#allocation2 + $0xfa8] sm:$0xff] %v862
    %927 = vst [vmem:[#allocation2 + $0xff0] sm:$0xff] %v863
    %928 = vst [vmem:[#allocation2 + $0x1038] sm:$0xff] %v864
    %929 = vst [vmem:[#allocation2 + $0x1080] sm:$0xff] %v865
    %930 = vst [vmem:[#allocation2 + $0x10c8] sm:$0xff] %v866
    %931 = vst [vmem:[#allocation2 + $0x1110] sm:$0xff] %v867
    %932 = vst [vmem:[#allocation2 + $0x1158] sm:$0xff] %v868
    %933 = vst [vmem:[#allocation2 + $0x11a0] sm:$0xff] %v869
    %934 = vst [vmem:[#allocation2 + $0x11e8] sm:$0xff] %v870
    %v935 = vld [vmem:[%s806 + $0x1] sm:$0xff]
    %v936 = vld [vmem:[%s806 + $0x9] sm:$0xff]
    %v937 = vld [vmem:[%s806 + $0x19] sm:$0xff]
    %v938 = vld [vmem:[%s806 + $0x21] sm:$0xff]
    %v939 = vld [vmem:[%s806 + $0x31] sm:$0xff]
    %v940 = vld [vmem:[%s806 + $0x39] sm:$0xff]
    %v941 = vld [vmem:[%s806 + $0x49] sm:$0xff]
    %v942 = vld [vmem:[%s806 + $0x51] sm:$0xff]
    %v943 = vld [vmem:[%s806 + $0x61] sm:$0xff]
    %v944 = vld [vmem:[%s806 + $0x69] sm:$0xff]
    %v945 = vld [vmem:[%s806 + $0x79] sm:$0xff]
    %v946 = vld [vmem:[%s806 + $0x81] sm:$0xff]
    %v947 = vld [vmem:[%s806 + $0x91] sm:$0xff]
    %v948 = vld [vmem:[%s806 + $0x99] sm:$0xff]
    %v949 = vld [vmem:[%s806 + $0xa9] sm:$0xff]
    %v950 = vld [vmem:[%s806 + $0xb1] sm:$0xff]
    %v951 = vld [vmem:[%s806 + $0xc1] sm:$0xff]
    %v952 = vld [vmem:[%s806 + $0xc9] sm:$0xff]
    %v953 = vld [vmem:[%s806 + $0xd9] sm:$0xff]
    %v954 = vld [vmem:[%s806 + $0xe1] sm:$0xff]
    %v955 = vld [vmem:[%s806 + $0xf1] sm:$0xff]
    %v956 = vld [vmem:[%s806 + $0xf9] sm:$0xff]
    %v957 = vld [vmem:[%s806 + $0x109] sm:$0xff]
    %v958 = vld [vmem:[%s806 + $0x111] sm:$0xff]
    %v959 = vld [vmem:[%s806 + $0x121] sm:$0xff]
    %v960 = vld [vmem:[%s806 + $0x129] sm:$0xff]
    %v961 = vld [vmem:[%s806 + $0x139] sm:$0xff]
    %v962 = vld [vmem:[%s806 + $0x141] sm:$0xff]
    %v963 = vld [vmem:[%s806 + $0x151] sm:$0xff]
    %v964 = vld [vmem:[%s806 + $0x159] sm:$0xff]
    %v965 = vld [vmem:[%s806 + $0x169] sm:$0xff]
    %v966 = vld [vmem:[%s806 + $0x171] sm:$0xff]
    %v967 = vld [vmem:[%s806 + $0x1b1] sm:$0xff]
    %v968 = vld [vmem:[%s806 + $0x1b9] sm:$0xff]
    %v969 = vld [vmem:[%s806 + $0x1c9] sm:$0xff]
    %v970 = vld [vmem:[%s806 + $0x1d1] sm:$0xff]
    %v971 = vld [vmem:[%s806 + $0x1e1] sm:$0xff]
    %v972 = vld [vmem:[%s806 + $0x1e9] sm:$0xff]
    %v973 = vld [vmem:[%s806 + $0x1f9] sm:$0xff]
    %v974 = vld [vmem:[%s806 + $0x201] sm:$0xff]
    %v975 = vld [vmem:[%s806 + $0x211] sm:$0xff]
    %v976 = vld [vmem:[%s806 + $0x219] sm:$0xff]
    %v977 = vld [vmem:[%s806 + $0x229] sm:$0xff]
    %v978 = vld [vmem:[%s806 + $0x231] sm:$0xff]
    %v979 = vld [vmem:[%s806 + $0x241] sm:$0xff]
    %v980 = vld [vmem:[%s806 + $0x249] sm:$0xff]
    %v981 = vld [vmem:[%s806 + $0x259] sm:$0xff]
    %v982 = vld [vmem:[%s806 + $0x261] sm:$0xff]
    %v983 = vld [vmem:[%s806 + $0x271] sm:$0xff]
    %v984 = vld [vmem:[%s806 + $0x279] sm:$0xff]
    %v985 = vld [vmem:[%s806 + $0x289] sm:$0xff]
    %v986 = vld [vmem:[%s806 + $0x291] sm:$0xff]
    %v987 = vld [vmem:[%s806 + $0x2a1] sm:$0xff]
    %v988 = vld [vmem:[%s806 + $0x2a9] sm:$0xff]
    %v989 = vld [vmem:[%s806 + $0x2b9] sm:$0xff]
    %v990 = vld [vmem:[%s806 + $0x2c1] sm:$0xff]
    %v991 = vld [vmem:[%s806 + $0x2d1] sm:$0xff]
    %v992 = vld [vmem:[%s806 + $0x2d9] sm:$0xff]
    %v993 = vld [vmem:[%s806 + $0x2e9] sm:$0xff]
    %v994 = vld [vmem:[%s806 + $0x2f1] sm:$0xff]
    %v995 = vld [vmem:[%s806 + $0x301] sm:$0xff]
    %v996 = vld [vmem:[%s806 + $0x309] sm:$0xff]
    %v997 = vld [vmem:[%s806 + $0x319] sm:$0xff]
    %v998 = vld [vmem:[%s806 + $0x321] sm:$0xff]
    %999 = vst [vmem:[#allocation2 + $0x38] sm:$0xff] %v935
    %1000 = vst [vmem:[#allocation2 + $0x80] sm:$0xff] %v936
    %1001 = vst [vmem:[#allocation2 + $0xc8] sm:$0xff] %v937
    %1002 = vst [vmem:[#allocation2 + $0x110] sm:$0xff] %v938
    %1003 = vst [vmem:[#allocation2 + $0x158] sm:$0xff] %v939
    %1004 = vst [vmem:[#allocation2 + $0x1a0] sm:$0xff] %v940
    %1005 = vst [vmem:[#allocation2 + $0x1e8] sm:$0xff] %v941
    %1006 = vst [vmem:[#allocation2 + $0x230] sm:$0xff] %v942
    %1007 = vst [vmem:[#allocation2 + $0x278] sm:$0xff] %v943
    %1008 = vst [vmem:[#allocation2 + $0x2c0] sm:$0xff] %v944
    %1009 = vst [vmem:[#allocation2 + $0x308] sm:$0xff] %v945
    %1010 = vst [vmem:[#allocation2 + $0x350] sm:$0xff] %v946
    %1011 = vst [vmem:[#allocation2 + $0x398] sm:$0xff] %v947
    %1012 = vst [vmem:[#allocation2 + $0x3e0] sm:$0xff] %v948
    %1013 = vst [vmem:[#allocation2 + $0x428] sm:$0xff] %v949
    %1014 = vst [vmem:[#allocation2 + $0x470] sm:$0xff] %v950
    %1015 = vst [vmem:[#allocation2 + $0x4b8] sm:$0xff] %v951
    %1016 = vst [vmem:[#allocation2 + $0x500] sm:$0xff] %v952
    %1017 = vst [vmem:[#allocation2 + $0x548] sm:$0xff] %v953
    %1018 = vst [vmem:[#allocation2 + $0x590] sm:$0xff] %v954
    %1019 = vst [vmem:[#allocation2 + $0x5d8] sm:$0xff] %v955
    %1020 = vst [vmem:[#allocation2 + $0x620] sm:$0xff] %v956
    %1021 = vst [vmem:[#allocation2 + $0x668] sm:$0xff] %v957
    %1022 = vst [vmem:[#allocation2 + $0x6b0] sm:$0xff] %v958
    %1023 = vst [vmem:[#allocation2 + $0x6f8] sm:$0xff] %v959
    %1024 = vst [vmem:[#allocation2 + $0x740] sm:$0xff] %v960
    %1025 = vst [vmem:[#allocation2 + $0x788] sm:$0xff] %v961
    %1026 = vst [vmem:[#allocation2 + $0x7d0] sm:$0xff] %v962
    %1027 = vst [vmem:[#allocation2 + $0x818] sm:$0xff] %v963
    %1028 = vst [vmem:[#allocation2 + $0x860] sm:$0xff] %v964
    %1029 = vst [vmem:[#allocation2 + $0x8a8] sm:$0xff] %v965
    %1030 = vst [vmem:[#allocation2 + $0x8f0] sm:$0xff] %v966
    %1031 = vst [vmem:[#allocation2 + $0x938] sm:$0xff] %v967
    %1032 = vst [vmem:[#allocation2 + $0x980] sm:$0xff] %v968
    %1033 = vst [vmem:[#allocation2 + $0x9c8] sm:$0xff] %v969
    %1034 = vst [vmem:[#allocation2 + $0xa10] sm:$0xff] %v970
    %1035 = vst [vmem:[#allocation2 + $0xa58] sm:$0xff] %v971
    %1036 = vst [vmem:[#allocation2 + $0xaa0] sm:$0xff] %v972
    %1037 = vst [vmem:[#allocation2 + $0xae8] sm:$0xff] %v973
    %1038 = vst [vmem:[#allocation2 + $0xb30] sm:$0xff] %v974
    %1039 = vst [vmem:[#allocation2 + $0xb78] sm:$0xff] %v975
    %1040 = vst [vmem:[#allocation2 + $0xbc0] sm:$0xff] %v976
    %1041 = vst [vmem:[#allocation2 + $0xc08] sm:$0xff] %v977
    %1042 = vst [vmem:[#allocation2 + $0xc50] sm:$0xff] %v978
    %1043 = vst [vmem:[#allocation2 + $0xc98] sm:$0xff] %v979
    %1044 = vst [vmem:[#allocation2 + $0xce0] sm:$0xff] %v980
    %1045 = vst [vmem:[#allocation2 + $0xd28] sm:$0xff] %v981
    %1046 = vst [vmem:[#allocation2 + $0xd70] sm:$0xff] %v982
    %1047 = vst [vmem:[#allocation2 + $0xdb8] sm:$0xff] %v983
    %1048 = vst [vmem:[#allocation2 + $0xe00] sm:$0xff] %v984
    %1049 = vst [vmem:[#allocation2 + $0xe48] sm:$0xff] %v985
    %1050 = vst [vmem:[#allocation2 + $0xe90] sm:$0xff] %v986
    %1051 = vst [vmem:[#allocation2 + $0xed8] sm:$0xff] %v987
    %1052 = vst [vmem:[#allocation2 + $0xf20] sm:$0xff] %v988
    %1053 = vst [vmem:[#allocation2 + $0xf68] sm:$0xff] %v989
    %1054 = vst [vmem:[#allocation2 + $0xfb0] sm:$0xff] %v990
    %1055 = vst [vmem:[#allocation2 + $0xff8] sm:$0xff] %v991
    %1056 = vst [vmem:[#allocation2 + $0x1040] sm:$0xff] %v992
    %1057 = vst [vmem:[#allocation2 + $0x1088] sm:$0xff] %v993
    %1058 = vst [vmem:[#allocation2 + $0x10d0] sm:$0xff] %v994
    %1059 = vst [vmem:[#allocation2 + $0x1118] sm:$0xff] %v995
    %1060 = vst [vmem:[#allocation2 + $0x1160] sm:$0xff] %v996
    %1061 = vst [vmem:[#allocation2 + $0x11a8] sm:$0xff] %v997
    %1062 = vst [vmem:[#allocation2 + $0x11f0] sm:$0xff] %v998
    %v1063 = vld [vmem:[%s806 + $0x2] sm:$0xff]
    %v1064 = vld [vmem:[%s806 + $0xa] sm:$0xff]
    %v1065 = vld [vmem:[%s806 + $0x1a] sm:$0xff]
    %v1066 = vld [vmem:[%s806 + $0x22] sm:$0xff]
    %v1067 = vld [vmem:[%s806 + $0x32] sm:$0xff]
    %v1068 = vld [vmem:[%s806 + $0x3a] sm:$0xff]
    %v1069 = vld [vmem:[%s806 + $0x4a] sm:$0xff]
    %v1070 = vld [vmem:[%s806 + $0x52] sm:$0xff]
    %v1071 = vld [vmem:[%s806 + $0x62] sm:$0xff]
    %v1072 = vld [vmem:[%s806 + $0x6a] sm:$0xff]
    %v1073 = vld [vmem:[%s806 + $0x7a] sm:$0xff]
    %v1074 = vld [vmem:[%s806 + $0x82] sm:$0xff]
    %v1075 = vld [vmem:[%s806 + $0x92] sm:$0xff]
    %v1076 = vld [vmem:[%s806 + $0x9a] sm:$0xff]
    %v1077 = vld [vmem:[%s806 + $0xaa] sm:$0xff]
    %v1078 = vld [vmem:[%s806 + $0xb2] sm:$0xff]
    %v1079 = vld [vmem:[%s806 + $0xc2] sm:$0xff]
    %v1080 = vld [vmem:[%s806 + $0xca] sm:$0xff]
    %v1081 = vld [vmem:[%s806 + $0xda] sm:$0xff]
    %v1082 = vld [vmem:[%s806 + $0xe2] sm:$0xff]
    %v1083 = vld [vmem:[%s806 + $0xf2] sm:$0xff]
    %v1084 = vld [vmem:[%s806 + $0xfa] sm:$0xff]
    %v1085 = vld [vmem:[%s806 + $0x10a] sm:$0xff]
    %v1086 = vld [vmem:[%s806 + $0x112] sm:$0xff]
    %v1087 = vld [vmem:[%s806 + $0x122] sm:$0xff]
    %v1088 = vld [vmem:[%s806 + $0x12a] sm:$0xff]
    %v1089 = vld [vmem:[%s806 + $0x13a] sm:$0xff]
    %v1090 = vld [vmem:[%s806 + $0x142] sm:$0xff]
    %v1091 = vld [vmem:[%s806 + $0x152] sm:$0xff]
    %v1092 = vld [vmem:[%s806 + $0x15a] sm:$0xff]
    %v1093 = vld [vmem:[%s806 + $0x16a] sm:$0xff]
    %v1094 = vld [vmem:[%s806 + $0x172] sm:$0xff]
    %v1095 = vld [vmem:[%s806 + $0x1b2] sm:$0xff]
    %v1096 = vld [vmem:[%s806 + $0x1ba] sm:$0xff]
    %v1097 = vld [vmem:[%s806 + $0x1ca] sm:$0xff]
    %v1098 = vld [vmem:[%s806 + $0x1d2] sm:$0xff]
    %v1099 = vld [vmem:[%s806 + $0x1e2] sm:$0xff]
    %v1100 = vld [vmem:[%s806 + $0x1ea] sm:$0xff]
    %v1101 = vld [vmem:[%s806 + $0x1fa] sm:$0xff]
    %v1102 = vld [vmem:[%s806 + $0x202] sm:$0xff]
    %v1103 = vld [vmem:[%s806 + $0x212] sm:$0xff]
    %v1104 = vld [vmem:[%s806 + $0x21a] sm:$0xff]
    %v1105 = vld [vmem:[%s806 + $0x22a] sm:$0xff]
    %v1106 = vld [vmem:[%s806 + $0x232] sm:$0xff]
    %v1107 = vld [vmem:[%s806 + $0x242] sm:$0xff]
    %v1108 = vld [vmem:[%s806 + $0x24a] sm:$0xff]
    %v1109 = vld [vmem:[%s806 + $0x25a] sm:$0xff]
    %v1110 = vld [vmem:[%s806 + $0x262] sm:$0xff]
    %v1111 = vld [vmem:[%s806 + $0x272] sm:$0xff]
    %v1112 = vld [vmem:[%s806 + $0x27a] sm:$0xff]
    %v1113 = vld [vmem:[%s806 + $0x28a] sm:$0xff]
    %v1114 = vld [vmem:[%s806 + $0x292] sm:$0xff]
    %v1115 = vld [vmem:[%s806 + $0x2a2] sm:$0xff]
    %v1116 = vld [vmem:[%s806 + $0x2aa] sm:$0xff]
    %v1117 = vld [vmem:[%s806 + $0x2ba] sm:$0xff]
    %v1118 = vld [vmem:[%s806 + $0x2c2] sm:$0xff]
    %v1119 = vld [vmem:[%s806 + $0x2d2] sm:$0xff]
    %v1120 = vld [vmem:[%s806 + $0x2da] sm:$0xff]
    %v1121 = vld [vmem:[%s806 + $0x2ea] sm:$0xff]
    %v1122 = vld [vmem:[%s806 + $0x2f2] sm:$0xff]
    %v1123 = vld [vmem:[%s806 + $0x302] sm:$0xff]
    %v1124 = vld [vmem:[%s806 + $0x30a] sm:$0xff]
    %v1125 = vld [vmem:[%s806 + $0x31a] sm:$0xff]
    %v1126 = vld [vmem:[%s806 + $0x322] sm:$0xff]
    %1127 = vst [vmem:[#allocation2 + $0x40] sm:$0xff] %v1063
    %1128 = vst [vmem:[#allocation2 + $0x88] sm:$0xff] %v1064
    %1129 = vst [vmem:[#allocation2 + $0xd0] sm:$0xff] %v1065
    %1130 = vst [vmem:[#allocation2 + $0x118] sm:$0xff] %v1066
    %1131 = vst [vmem:[#allocation2 + $0x160] sm:$0xff] %v1067
    %1132 = vst [vmem:[#allocation2 + $0x1a8] sm:$0xff] %v1068
    %1133 = vst [vmem:[#allocation2 + $0x1f0] sm:$0xff] %v1069
    %1134 = vst [vmem:[#allocation2 + $0x238] sm:$0xff] %v1070
    %1135 = vst [vmem:[#allocation2 + $0x280] sm:$0xff] %v1071
    %1136 = vst [vmem:[#allocation2 + $0x2c8] sm:$0xff] %v1072
    %1137 = vst [vmem:[#allocation2 + $0x310] sm:$0xff] %v1073
    %1138 = vst [vmem:[#allocation2 + $0x358] sm:$0xff] %v1074
    %1139 = vst [vmem:[#allocation2 + $0x3a0] sm:$0xff] %v1075
    %1140 = vst [vmem:[#allocation2 + $0x3e8] sm:$0xff] %v1076
    %1141 = vst [vmem:[#allocation2 + $0x430] sm:$0xff] %v1077
    %1142 = vst [vmem:[#allocation2 + $0x478] sm:$0xff] %v1078
    %1143 = vst [vmem:[#allocation2 + $0x4c0] sm:$0xff] %v1079
    %1144 = vst [vmem:[#allocation2 + $0x508] sm:$0xff] %v1080
    %1145 = vst [vmem:[#allocation2 + $0x550] sm:$0xff] %v1081
    %1146 = vst [vmem:[#allocation2 + $0x598] sm:$0xff] %v1082
    %1147 = vst [vmem:[#allocation2 + $0x5e0] sm:$0xff] %v1083
    %1148 = vst [vmem:[#allocation2 + $0x628] sm:$0xff] %v1084
    %1149 = vst [vmem:[#allocation2 + $0x670] sm:$0xff] %v1085
    %1150 = vst [vmem:[#allocation2 + $0x6b8] sm:$0xff] %v1086
    %1151 = vst [vmem:[#allocation2 + $0x700] sm:$0xff] %v1087
    %1152 = vst [vmem:[#allocation2 + $0x748] sm:$0xff] %v1088
    %1153 = vst [vmem:[#allocation2 + $0x790] sm:$0xff] %v1089
    %1154 = vst [vmem:[#allocation2 + $0x7d8] sm:$0xff] %v1090
    %1155 = vst [vmem:[#allocation2 + $0x820] sm:$0xff] %v1091
    %1156 = vst [vmem:[#allocation2 + $0x868] sm:$0xff] %v1092
    %1157 = vst [vmem:[#allocation2 + $0x8b0] sm:$0xff] %v1093
    %1158 = vst [vmem:[#allocation2 + $0x8f8] sm:$0xff] %v1094
    %1159 = vst [vmem:[#allocation2 + $0x940] sm:$0xff] %v1095
    %1160 = vst [vmem:[#allocation2 + $0x988] sm:$0xff] %v1096
    %1161 = vst [vmem:[#allocation2 + $0x9d0] sm:$0xff] %v1097
    %1162 = vst [vmem:[#allocation2 + $0xa18] sm:$0xff] %v1098
    %1163 = vst [vmem:[#allocation2 + $0xa60] sm:$0xff] %v1099
    %1164 = vst [vmem:[#allocation2 + $0xaa8] sm:$0xff] %v1100
    %1165 = vst [vmem:[#allocation2 + $0xaf0] sm:$0xff] %v1101
    %1166 = vst [vmem:[#allocation2 + $0xb38] sm:$0xff] %v1102
    %1167 = vst [vmem:[#allocation2 + $0xb80] sm:$0xff] %v1103
    %1168 = vst [vmem:[#allocation2 + $0xbc8] sm:$0xff] %v1104
    %1169 = vst [vmem:[#allocation2 + $0xc10] sm:$0xff] %v1105
    %1170 = vst [vmem:[#allocation2 + $0xc58] sm:$0xff] %v1106
    %1171 = vst [vmem:[#allocation2 + $0xca0] sm:$0xff] %v1107
    %1172 = vst [vmem:[#allocation2 + $0xce8] sm:$0xff] %v1108
    %1173 = vst [vmem:[#allocation2 + $0xd30] sm:$0xff] %v1109
    %1174 = vst [vmem:[#allocation2 + $0xd78] sm:$0xff] %v1110
    %1175 = vst [vmem:[#allocation2 + $0xdc0] sm:$0xff] %v1111
    %1176 = vst [vmem:[#allocation2 + $0xe08] sm:$0xff] %v1112
    %1177 = vst [vmem:[#allocation2 + $0xe50] sm:$0xff] %v1113
    %1178 = vst [vmem:[#allocation2 + $0xe98] sm:$0xff] %v1114
    %1179 = vst [vmem:[#allocation2 + $0xee0] sm:$0xff] %v1115
    %1180 = vst [vmem:[#allocation2 + $0xf28] sm:$0xff] %v1116
    %1181 = vst [vmem:[#allocation2 + $0xf70] sm:$0xff] %v1117
    %1182 = vst [vmem:[#allocation2 + $0xfb8] sm:$0xff] %v1118
    %1183 = vst [vmem:[#allocation2 + $0x1000] sm:$0xff] %v1119
    %1184 = vst [vmem:[#allocation2 + $0x1048] sm:$0xff] %v1120
    %1185 = vst [vmem:[#allocation2 + $0x1090] sm:$0xff] %v1121
    %1186 = vst [vmem:[#allocation2 + $0x10d8] sm:$0xff] %v1122
    %1187 = vst [vmem:[#allocation2 + $0x1120] sm:$0xff] %v1123
    %1188 = vst [vmem:[#allocation2 + $0x1168] sm:$0xff] %v1124
    %1189 = vst [vmem:[#allocation2 + $0x11b0] sm:$0xff] %v1125
    %1190 = vst [vmem:[#allocation2 + $0x11f8] sm:$0xff] %v1126
    %v1191 = vld [vmem:[#allocation2] sm:$0xff]
    %v1192 = vld [vmem:[#allocation2 + $0x8] sm:$0xff]
    %v1193 = vld [vmem:[#allocation2 + $0x10] sm:$0xff]
    %v1194 = vld [vmem:[#allocation2 + $0x18] sm:$0xff]
    %v1195 = vld [vmem:[#allocation2 + $0x20] sm:$0xff]
    %v1196 = vld [vmem:[#allocation2 + $0x28] sm:$0xff]
    %v1197 = vld [vmem:[#allocation2 + $0x30] sm:$0xff]
    %v1198 = vld [vmem:[#allocation2 + $0x38] sm:$0xff]
    %v1199 = vld [vmem:[#allocation2 + $0x40] sm:$0xff]
    %v1200 = vld [vmem:[#allocation2 + $0x48] sm:$0xff]
    %v1201 = vld [vmem:[#allocation2 + $0x50] sm:$0xff]
    %v1202 = vld [vmem:[#allocation2 + $0x58] sm:$0xff]
    %v1203 = vld [vmem:[#allocation2 + $0x60] sm:$0xff]
    %v1204 = vld [vmem:[#allocation2 + $0x68] sm:$0xff]
    %v1205 = vld [vmem:[#allocation2 + $0x70] sm:$0xff]
    %v1206 = vld [vmem:[#allocation2 + $0x78] sm:$0xff]
    %v1207 = vld [vmem:[#allocation2 + $0x80] sm:$0xff]
    %v1208 = vld [vmem:[#allocation2 + $0x88] sm:$0xff]
    %v1209 = vld [vmem:[#allocation2 + $0x90] sm:$0xff]
    %v1210 = vld [vmem:[#allocation2 + $0x98] sm:$0xff]
    %v1211 = vld [vmem:[#allocation2 + $0xa0] sm:$0xff]
    %v1212 = vld [vmem:[#allocation2 + $0xa8] sm:$0xff]
    %v1213 = vld [vmem:[#allocation2 + $0xb0] sm:$0xff]
    %v1214 = vld [vmem:[#allocation2 + $0xb8] sm:$0xff]
    %v1215 = vld [vmem:[#allocation2 + $0xc0] sm:$0xff]
    %v1216 = vld [vmem:[#allocation2 + $0xc8] sm:$0xff]
    %v1217 = vld [vmem:[#allocation2 + $0xd0] sm:$0xff]
    %v1218 = vld [vmem:[#allocation2 + $0xd8] sm:$0xff]
    %v1219 = vld [vmem:[#allocation2 + $0xe0] sm:$0xff]
    %v1220 = vld [vmem:[#allocation2 + $0xe8] sm:$0xff]
    %v1221 = vld [vmem:[#allocation2 + $0xf0] sm:$0xff]
    %v1222 = vld [vmem:[#allocation2 + $0xf8] sm:$0xff]
    %v1223 = vld [vmem:[#allocation2 + $0x100] sm:$0xff]
    %v1224 = vld [vmem:[#allocation2 + $0x108] sm:$0xff]
    %v1225 = vld [vmem:[#allocation2 + $0x110] sm:$0xff]
    %v1226 = vld [vmem:[#allocation2 + $0x118] sm:$0xff]
    %v1227 = vld [vmem:[#allocation2 + $0x120] sm:$0xff]
    %v1228 = vld [vmem:[#allocation2 + $0x128] sm:$0xff]
    %v1229 = vld [vmem:[#allocation2 + $0x130] sm:$0xff]
    %v1230 = vld [vmem:[#allocation2 + $0x138] sm:$0xff]
    %v1231 = vld [vmem:[#allocation2 + $0x140] sm:$0xff]
    %v1232 = vld [vmem:[#allocation2 + $0x148] sm:$0xff]
    %v1233 = vld [vmem:[#allocation2 + $0x150] sm:$0xff]
    %v1234 = vld [vmem:[#allocation2 + $0x158] sm:$0xff]
    %v1235 = vld [vmem:[#allocation2 + $0x160] sm:$0xff]
    %v1236 = vld [vmem:[#allocation2 + $0x168] sm:$0xff]
    %v1237 = vld [vmem:[#allocation2 + $0x170] sm:$0xff]
    %v1238 = vld [vmem:[#allocation2 + $0x178] sm:$0xff]
    %v1239 = vld [vmem:[#allocation2 + $0x180] sm:$0xff]
    %v1240 = vld [vmem:[#allocation2 + $0x188] sm:$0xff]
    %v1241 = vld [vmem:[#allocation2 + $0x190] sm:$0xff]
    %v1242 = vld [vmem:[#allocation2 + $0x198] sm:$0xff]
    %v1243 = vld [vmem:[#allocation2 + $0x1a0] sm:$0xff]
    %v1244 = vld [vmem:[#allocation2 + $0x1a8] sm:$0xff]
    %v1245 = vld [vmem:[#allocation2 + $0x1b0] sm:$0xff]
    %v1246 = vld [vmem:[#allocation2 + $0x1b8] sm:$0xff]
    %v1247 = vld [vmem:[#allocation2 + $0x1c0] sm:$0xff]
    %v1248 = vld [vmem:[#allocation2 + $0x1c8] sm:$0xff]
    %v1249 = vld [vmem:[#allocation2 + $0x1d0] sm:$0xff]
    %v1250 = vld [vmem:[#allocation2 + $0x1d8] sm:$0xff]
    %v1251 = vld [vmem:[#allocation2 + $0x1e0] sm:$0xff]
    %v1252 = vld [vmem:[#allocation2 + $0x1e8] sm:$0xff]
    %v1253 = vld [vmem:[#allocation2 + $0x1f0] sm:$0xff]
    %v1254 = vld [vmem:[#allocation2 + $0x1f8] sm:$0xff]
    %v1255 = vld [vmem:[#allocation2 + $0x200] sm:$0xff]
    %v1256 = vld [vmem:[#allocation2 + $0x208] sm:$0xff]
    %v1257 = vld [vmem:[#allocation2 + $0x210] sm:$0xff]
    %v1258 = vld [vmem:[#allocation2 + $0x218] sm:$0xff]
    %v1259 = vld [vmem:[#allocation2 + $0x220] sm:$0xff]
    %v1260 = vld [vmem:[#allocation2 + $0x228] sm:$0xff]
    %v1261 = vld [vmem:[#allocation2 + $0x230] sm:$0xff]
    %v1262 = vld [vmem:[#allocation2 + $0x238] sm:$0xff]
    %v1263 = vld [vmem:[#allocation2 + $0x240] sm:$0xff]
    %v1264 = vld [vmem:[#allocation2 + $0x248] sm:$0xff]
    %v1265 = vld [vmem:[#allocation2 + $0x250] sm:$0xff]
    %v1266 = vld [vmem:[#allocation2 + $0x258] sm:$0xff]
    %v1267 = vld [vmem:[#allocation2 + $0x260] sm:$0xff]
    %v1268 = vld [vmem:[#allocation2 + $0x268] sm:$0xff]
    %v1269 = vld [vmem:[#allocation2 + $0x270] sm:$0xff]
    %v1270 = vld [vmem:[#allocation2 + $0x278] sm:$0xff]
    %v1271 = vld [vmem:[#allocation2 + $0x280] sm:$0xff]
    %v1272 = vld [vmem:[#allocation2 + $0x288] sm:$0xff]
    %v1273 = vld [vmem:[#allocation2 + $0x290] sm:$0xff]
    %v1274 = vld [vmem:[#allocation2 + $0x298] sm:$0xff]
    %v1275 = vld [vmem:[#allocation2 + $0x2a0] sm:$0xff]
    %v1276 = vld [vmem:[#allocation2 + $0x2a8] sm:$0xff]
    %v1277 = vld [vmem:[#allocation2 + $0x2b0] sm:$0xff]
    %v1278 = vld [vmem:[#allocation2 + $0x2b8] sm:$0xff]
    %v1279 = vld [vmem:[#allocation2 + $0x2c0] sm:$0xff]
    %v1280 = vld [vmem:[#allocation2 + $0x2c8] sm:$0xff]
    %v1281 = vld [vmem:[#allocation2 + $0x2d0] sm:$0xff]
    %v1282 = vld [vmem:[#allocation2 + $0x2d8] sm:$0xff]
    %v1283 = vld [vmem:[#allocation2 + $0x2e0] sm:$0xff]
    %v1284 = vld [vmem:[#allocation2 + $0x2e8] sm:$0xff]
    %v1285 = vld [vmem:[#allocation2 + $0x2f0] sm:$0xff]
    %v1286 = vld [vmem:[#allocation2 + $0x2f8] sm:$0xff]
    %v1287 = vld [vmem:[#allocation2 + $0x300] sm:$0xff]
    %v1288 = vld [vmem:[#allocation2 + $0x308] sm:$0xff]
    %v1289 = vld [vmem:[#allocation2 + $0x310] sm:$0xff]
    %v1290 = vld [vmem:[#allocation2 + $0x318] sm:$0xff]
    %v1291 = vld [vmem:[#allocation2 + $0x320] sm:$0xff]
    %v1292 = vld [vmem:[#allocation2 + $0x328] sm:$0xff]
    %v1293 = vld [vmem:[#allocation2 + $0x330] sm:$0xff]
    %v1294 = vld [vmem:[#allocation2 + $0x338] sm:$0xff]
    %v1295 = vld [vmem:[#allocation2 + $0x340] sm:$0xff]
    %v1296 = vld [vmem:[#allocation2 + $0x348] sm:$0xff]
    %v1297 = vld [vmem:[#allocation2 + $0x350] sm:$0xff]
    %v1298 = vld [vmem:[#allocation2 + $0x358] sm:$0xff]
    %v1299 = vld [vmem:[#allocation2 + $0x360] sm:$0xff]
    %v1300 = vld [vmem:[#allocation2 + $0x368] sm:$0xff]
    %v1301 = vld [vmem:[#allocation2 + $0x370] sm:$0xff]
    %v1302 = vld [vmem:[#allocation2 + $0x378] sm:$0xff]
    %v1303 = vld [vmem:[#allocation2 + $0x380] sm:$0xff]
    %v1304 = vld [vmem:[#allocation2 + $0x388] sm:$0xff]
    %v1305 = vld [vmem:[#allocation2 + $0x390] sm:$0xff]
    %v1306 = vld [vmem:[#allocation2 + $0x398] sm:$0xff]
    %v1307 = vld [vmem:[#allocation2 + $0x3a0] sm:$0xff]
    %v1308 = vld [vmem:[#allocation2 + $0x3a8] sm:$0xff]
    %v1309 = vld [vmem:[#allocation2 + $0x3b0] sm:$0xff]
    %v1310 = vld [vmem:[#allocation2 + $0x3b8] sm:$0xff]
    %v1311 = vld [vmem:[#allocation2 + $0x3c0] sm:$0xff]
    %v1312 = vld [vmem:[#allocation2 + $0x3c8] sm:$0xff]
    %v1313 = vld [vmem:[#allocation2 + $0x3d0] sm:$0xff]
    %v1314 = vld [vmem:[#allocation2 + $0x3d8] sm:$0xff]
    %v1315 = vld [vmem:[#allocation2 + $0x3e0] sm:$0xff]
    %v1316 = vld [vmem:[#allocation2 + $0x3e8] sm:$0xff]
    %v1317 = vld [vmem:[#allocation2 + $0x3f0] sm:$0xff]
    %v1318 = vld [vmem:[#allocation2 + $0x3f8] sm:$0xff]
    %v1319 = vld [vmem:[#allocation2 + $0x400] sm:$0xff]
    %v1320 = vld [vmem:[#allocation2 + $0x408] sm:$0xff]
    %v1321 = vld [vmem:[#allocation2 + $0x410] sm:$0xff]
    %v1322 = vld [vmem:[#allocation2 + $0x418] sm:$0xff]
    %v1323 = vld [vmem:[#allocation2 + $0x420] sm:$0xff]
    %v1324 = vld [vmem:[#allocation2 + $0x428] sm:$0xff]
    %v1325 = vld [vmem:[#allocation2 + $0x430] sm:$0xff]
    %v1326 = vld [vmem:[#allocation2 + $0x438] sm:$0xff]
    %v1327 = vld [vmem:[#allocation2 + $0x440] sm:$0xff]
    %v1328 = vld [vmem:[#allocation2 + $0x448] sm:$0xff]
    %v1329 = vld [vmem:[#allocation2 + $0x450] sm:$0xff]
    %v1330 = vld [vmem:[#allocation2 + $0x458] sm:$0xff]
    %v1331 = vld [vmem:[#allocation2 + $0x460] sm:$0xff]
    %v1332 = vld [vmem:[#allocation2 + $0x468] sm:$0xff]
    %v1333 = vld [vmem:[#allocation2 + $0x470] sm:$0xff]
    %v1334 = vld [vmem:[#allocation2 + $0x478] sm:$0xff]
    %v1335 = vld [vmem:[#allocation2 + $0x480] sm:$0xff]
    %v1336 = vld [vmem:[#allocation2 + $0x488] sm:$0xff]
    %v1337 = vld [vmem:[#allocation2 + $0x490] sm:$0xff]
    %v1338 = vld [vmem:[#allocation2 + $0x498] sm:$0xff]
    %v1339 = vld [vmem:[#allocation2 + $0x4a0] sm:$0xff]
    %v1340 = vld [vmem:[#allocation2 + $0x4a8] sm:$0xff]
    %v1341 = vld [vmem:[#allocation2 + $0x4b0] sm:$0xff]
    %v1342 = vld [vmem:[#allocation2 + $0x4b8] sm:$0xff]
    %v1343 = vld [vmem:[#allocation2 + $0x4c0] sm:$0xff]
    %v1344 = vld [vmem:[#allocation2 + $0x4c8] sm:$0xff]
    %v1345 = vld [vmem:[#allocation2 + $0x4d0] sm:$0xff]
    %v1346 = vld [vmem:[#allocation2 + $0x4d8] sm:$0xff]
    %v1347 = vld [vmem:[#allocation2 + $0x4e0] sm:$0xff]
    %v1348 = vld [vmem:[#allocation2 + $0x4e8] sm:$0xff]
    %v1349 = vld [vmem:[#allocation2 + $0x4f0] sm:$0xff]
    %v1350 = vld [vmem:[#allocation2 + $0x4f8] sm:$0xff]
    %v1351 = vld [vmem:[#allocation2 + $0x500] sm:$0xff]
    %v1352 = vld [vmem:[#allocation2 + $0x508] sm:$0xff]
    %v1353 = vld [vmem:[#allocation2 + $0x510] sm:$0xff]
    %v1354 = vld [vmem:[#allocation2 + $0x518] sm:$0xff]
    %v1355 = vld [vmem:[#allocation2 + $0x520] sm:$0xff]
    %v1356 = vld [vmem:[#allocation2 + $0x528] sm:$0xff]
    %v1357 = vld [vmem:[#allocation2 + $0x530] sm:$0xff]
    %v1358 = vld [vmem:[#allocation2 + $0x538] sm:$0xff]
    %v1359 = vld [vmem:[#allocation2 + $0x540] sm:$0xff]
    %v1360 = vld [vmem:[#allocation2 + $0x548] sm:$0xff]
    %v1361 = vld [vmem:[#allocation2 + $0x550] sm:$0xff]
    %v1362 = vld [vmem:[#allocation2 + $0x558] sm:$0xff]
    %v1363 = vld [vmem:[#allocation2 + $0x560] sm:$0xff]
    %v1364 = vld [vmem:[#allocation2 + $0x568] sm:$0xff]
    %v1365 = vld [vmem:[#allocation2 + $0x570] sm:$0xff]
    %v1366 = vld [vmem:[#allocation2 + $0x578] sm:$0xff]
    %v1367 = vld [vmem:[#allocation2 + $0x580] sm:$0xff]
    %v1368 = vld [vmem:[#allocation2 + $0x588] sm:$0xff]
    %v1369 = vld [vmem:[#allocation2 + $0x590] sm:$0xff]
    %v1370 = vld [vmem:[#allocation2 + $0x598] sm:$0xff]
    %v1371 = vld [vmem:[#allocation2 + $0x5a0] sm:$0xff]
    %v1372 = vld [vmem:[#allocation2 + $0x5a8] sm:$0xff]
    %v1373 = vld [vmem:[#allocation2 + $0x5b0] sm:$0xff]
    %v1374 = vld [vmem:[#allocation2 + $0x5b8] sm:$0xff]
    %v1375 = vld [vmem:[#allocation2 + $0x5c0] sm:$0xff]
    %v1376 = vld [vmem:[#allocation2 + $0x5c8] sm:$0xff]
    %v1377 = vld [vmem:[#allocation2 + $0x5d0] sm:$0xff]
    %v1378 = vld [vmem:[#allocation2 + $0x5d8] sm:$0xff]
    %v1379 = vld [vmem:[#allocation2 + $0x5e0] sm:$0xff]
    %v1380 = vld [vmem:[#allocation2 + $0x5e8] sm:$0xff]
    %v1381 = vld [vmem:[#allocation2 + $0x5f0] sm:$0xff]
    %v1382 = vld [vmem:[#allocation2 + $0x5f8] sm:$0xff]
    %v1383 = vld [vmem:[#allocation2 + $0x600] sm:$0xff]
    %v1384 = vld [vmem:[#allocation2 + $0x608] sm:$0xff]
    %v1385 = vld [vmem:[#allocation2 + $0x610] sm:$0xff]
    %v1386 = vld [vmem:[#allocation2 + $0x618] sm:$0xff]
    %v1387 = vld [vmem:[#allocation2 + $0x620] sm:$0xff]
    %v1388 = vld [vmem:[#allocation2 + $0x628] sm:$0xff]
    %v1389 = vld [vmem:[#allocation2 + $0x630] sm:$0xff]
    %v1390 = vld [vmem:[#allocation2 + $0x638] sm:$0xff]
    %v1391 = vld [vmem:[#allocation2 + $0x640] sm:$0xff]
    %v1392 = vld [vmem:[#allocation2 + $0x648] sm:$0xff]
    %v1393 = vld [vmem:[#allocation2 + $0x650] sm:$0xff]
    %v1394 = vld [vmem:[#allocation2 + $0x658] sm:$0xff]
    %v1395 = vld [vmem:[#allocation2 + $0x660] sm:$0xff]
    %v1396 = vld [vmem:[#allocation2 + $0x668] sm:$0xff]
    %v1397 = vld [vmem:[#allocation2 + $0x670] sm:$0xff]
    %v1398 = vld [vmem:[#allocation2 + $0x678] sm:$0xff]
    %v1399 = vld [vmem:[#allocation2 + $0x680] sm:$0xff]
    %v1400 = vld [vmem:[#allocation2 + $0x688] sm:$0xff]
    %v1401 = vld [vmem:[#allocation2 + $0x690] sm:$0xff]
    %v1402 = vld [vmem:[#allocation2 + $0x698] sm:$0xff]
    %v1403 = vld [vmem:[#allocation2 + $0x6a0] sm:$0xff]
    %v1404 = vld [vmem:[#allocation2 + $0x6a8] sm:$0xff]
    %v1405 = vld [vmem:[#allocation2 + $0x6b0] sm:$0xff]
    %v1406 = vld [vmem:[#allocation2 + $0x6b8] sm:$0xff]
    %v1407 = vld [vmem:[#allocation2 + $0x6c0] sm:$0xff]
    %v1408 = vld [vmem:[#allocation2 + $0x6c8] sm:$0xff]
    %v1409 = vld [vmem:[#allocation2 + $0x6d0] sm:$0xff]
    %v1410 = vld [vmem:[#allocation2 + $0x6d8] sm:$0xff]
    %v1411 = vld [vmem:[#allocation2 + $0x6e0] sm:$0xff]
    %v1412 = vld [vmem:[#allocation2 + $0x6e8] sm:$0xff]
    %v1413 = vld [vmem:[#allocation2 + $0x6f0] sm:$0xff]
    %v1414 = vld [vmem:[#allocation2 + $0x6f8] sm:$0xff]
    %v1415 = vld [vmem:[#allocation2 + $0x700] sm:$0xff]
    %v1416 = vld [vmem:[#allocation2 + $0x708] sm:$0xff]
    %v1417 = vld [vmem:[#allocation2 + $0x710] sm:$0xff]
    %v1418 = vld [vmem:[#allocation2 + $0x718] sm:$0xff]
    %v1419 = vld [vmem:[#allocation2 + $0x720] sm:$0xff]
    %v1420 = vld [vmem:[#allocation2 + $0x728] sm:$0xff]
    %v1421 = vld [vmem:[#allocation2 + $0x730] sm:$0xff]
    %v1422 = vld [vmem:[#allocation2 + $0x738] sm:$0xff]
    %v1423 = vld [vmem:[#allocation2 + $0x740] sm:$0xff]
    %v1424 = vld [vmem:[#allocation2 + $0x748] sm:$0xff]
    %v1425 = vld [vmem:[#allocation2 + $0x750] sm:$0xff]
    %v1426 = vld [vmem:[#allocation2 + $0x758] sm:$0xff]
    %v1427 = vld [vmem:[#allocation2 + $0x760] sm:$0xff]
    %v1428 = vld [vmem:[#allocation2 + $0x768] sm:$0xff]
    %v1429 = vld [vmem:[#allocation2 + $0x770] sm:$0xff]
    %v1430 = vld [vmem:[#allocation2 + $0x778] sm:$0xff]
    %v1431 = vld [vmem:[#allocation2 + $0x780] sm:$0xff]
    %v1432 = vld [vmem:[#allocation2 + $0x788] sm:$0xff]
    %v1433 = vld [vmem:[#allocation2 + $0x790] sm:$0xff]
    %v1434 = vld [vmem:[#allocation2 + $0x798] sm:$0xff]
    %v1435 = vld [vmem:[#allocation2 + $0x7a0] sm:$0xff]
    %v1436 = vld [vmem:[#allocation2 + $0x7a8] sm:$0xff]
    %v1437 = vld [vmem:[#allocation2 + $0x7b0] sm:$0xff]
    %v1438 = vld [vmem:[#allocation2 + $0x7b8] sm:$0xff]
    %v1439 = vld [vmem:[#allocation2 + $0x7c0] sm:$0xff]
    %v1440 = vld [vmem:[#allocation2 + $0x7c8] sm:$0xff]
    %v1441 = vld [vmem:[#allocation2 + $0x7d0] sm:$0xff]
    %v1442 = vld [vmem:[#allocation2 + $0x7d8] sm:$0xff]
    %v1443 = vld [vmem:[#allocation2 + $0x7e0] sm:$0xff]
    %v1444 = vld [vmem:[#allocation2 + $0x7e8] sm:$0xff]
    %v1445 = vld [vmem:[#allocation2 + $0x7f0] sm:$0xff]
    %v1446 = vld [vmem:[#allocation2 + $0x7f8] sm:$0xff]
    %v1447 = vld [vmem:[#allocation2 + $0x800] sm:$0xff]
    %v1448 = vld [vmem:[#allocation2 + $0x808] sm:$0xff]
    %v1449 = vld [vmem:[#allocation2 + $0x810] sm:$0xff]
    %v1450 = vld [vmem:[#allocation2 + $0x818] sm:$0xff]
    %v1451 = vld [vmem:[#allocation2 + $0x820] sm:$0xff]
    %v1452 = vld [vmem:[#allocation2 + $0x828] sm:$0xff]
    %v1453 = vld [vmem:[#allocation2 + $0x830] sm:$0xff]
    %v1454 = vld [vmem:[#allocation2 + $0x838] sm:$0xff]
    %v1455 = vld [vmem:[#allocation2 + $0x840] sm:$0xff]
    %v1456 = vld [vmem:[#allocation2 + $0x848] sm:$0xff]
    %v1457 = vld [vmem:[#allocation2 + $0x850] sm:$0xff]
    %v1458 = vld [vmem:[#allocation2 + $0x858] sm:$0xff]
    %v1459 = vld [vmem:[#allocation2 + $0x860] sm:$0xff]
    %v1460 = vld [vmem:[#allocation2 + $0x868] sm:$0xff]
    %v1461 = vld [vmem:[#allocation2 + $0x870] sm:$0xff]
    %v1462 = vld [vmem:[#allocation2 + $0x878] sm:$0xff]
    %v1463 = vld [vmem:[#allocation2 + $0x880] sm:$0xff]
    %v1464 = vld [vmem:[#allocation2 + $0x888] sm:$0xff]
    %v1465 = vld [vmem:[#allocation2 + $0x890] sm:$0xff]
    %v1466 = vld [vmem:[#allocation2 + $0x898] sm:$0xff]
    %v1467 = vld [vmem:[#allocation2 + $0x8a0] sm:$0xff]
    %v1468 = vld [vmem:[#allocation2 + $0x8a8] sm:$0xff]
    %v1469 = vld [vmem:[#allocation2 + $0x8b0] sm:$0xff]
    %v1470 = vld [vmem:[#allocation2 + $0x8b8] sm:$0xff]
    %v1471 = vld [vmem:[#allocation2 + $0x8c0] sm:$0xff]
    %v1472 = vld [vmem:[#allocation2 + $0x8c8] sm:$0xff]
    %v1473 = vld [vmem:[#allocation2 + $0x8d0] sm:$0xff]
    %v1474 = vld [vmem:[#allocation2 + $0x8d8] sm:$0xff]
    %v1475 = vld [vmem:[#allocation2 + $0x8e0] sm:$0xff]
    %v1476 = vld [vmem:[#allocation2 + $0x8e8] sm:$0xff]
    %v1477 = vld [vmem:[#allocation2 + $0x8f0] sm:$0xff]
    %v1478 = vld [vmem:[#allocation2 + $0x8f8] sm:$0xff]
    %v1479 = vld [vmem:[#allocation2 + $0x900] sm:$0xff]
    %v1480 = vld [vmem:[#allocation2 + $0x908] sm:$0xff]
    %v1481 = vld [vmem:[#allocation2 + $0x910] sm:$0xff]
    %v1482 = vld [vmem:[#allocation2 + $0x918] sm:$0xff]
    %v1483 = vld [vmem:[#allocation2 + $0x920] sm:$0xff]
    %v1484 = vld [vmem:[#allocation2 + $0x928] sm:$0xff]
    %v1485 = vld [vmem:[#allocation2 + $0x930] sm:$0xff]
    %v1486 = vld [vmem:[#allocation2 + $0x938] sm:$0xff]
    %v1487 = vld [vmem:[#allocation2 + $0x940] sm:$0xff]
    %v1488 = vld [vmem:[#allocation2 + $0x948] sm:$0xff]
    %v1489 = vld [vmem:[#allocation2 + $0x950] sm:$0xff]
    %v1490 = vld [vmem:[#allocation2 + $0x958] sm:$0xff]
    %v1491 = vld [vmem:[#allocation2 + $0x960] sm:$0xff]
    %v1492 = vld [vmem:[#allocation2 + $0x968] sm:$0xff]
    %v1493 = vld [vmem:[#allocation2 + $0x970] sm:$0xff]
    %v1494 = vld [vmem:[#allocation2 + $0x978] sm:$0xff]
    %v1495 = vld [vmem:[#allocation2 + $0x980] sm:$0xff]
    %v1496 = vld [vmem:[#allocation2 + $0x988] sm:$0xff]
    %v1497 = vld [vmem:[#allocation2 + $0x990] sm:$0xff]
    %v1498 = vld [vmem:[#allocation2 + $0x998] sm:$0xff]
    %v1499 = vld [vmem:[#allocation2 + $0x9a0] sm:$0xff]
    %v1500 = vld [vmem:[#allocation2 + $0x9a8] sm:$0xff]
    %v1501 = vld [vmem:[#allocation2 + $0x9b0] sm:$0xff]
    %v1502 = vld [vmem:[#allocation2 + $0x9b8] sm:$0xff]
    %v1503 = vld [vmem:[#allocation2 + $0x9c0] sm:$0xff]
    %v1504 = vld [vmem:[#allocation2 + $0x9c8] sm:$0xff]
    %v1505 = vld [vmem:[#allocation2 + $0x9d0] sm:$0xff]
    %v1506 = vld [vmem:[#allocation2 + $0x9d8] sm:$0xff]
    %v1507 = vld [vmem:[#allocation2 + $0x9e0] sm:$0xff]
    %v1508 = vld [vmem:[#allocation2 + $0x9e8] sm:$0xff]
    %v1509 = vld [vmem:[#allocation2 + $0x9f0] sm:$0xff]
    %v1510 = vld [vmem:[#allocation2 + $0x9f8] sm:$0xff]
    %v1511 = vld [vmem:[#allocation2 + $0xa00] sm:$0xff]
    %v1512 = vld [vmem:[#allocation2 + $0xa08] sm:$0xff]
    %v1513 = vld [vmem:[#allocation2 + $0xa10] sm:$0xff]
    %v1514 = vld [vmem:[#allocation2 + $0xa18] sm:$0xff]
    %v1515 = vld [vmem:[#allocation2 + $0xa20] sm:$0xff]
    %v1516 = vld [vmem:[#allocation2 + $0xa28] sm:$0xff]
    %v1517 = vld [vmem:[#allocation2 + $0xa30] sm:$0xff]
    %v1518 = vld [vmem:[#allocation2 + $0xa38] sm:$0xff]
    %v1519 = vld [vmem:[#allocation2 + $0xa40] sm:$0xff]
    %v1520 = vld [vmem:[#allocation2 + $0xa48] sm:$0xff]
    %v1521 = vld [vmem:[#allocation2 + $0xa50] sm:$0xff]
    %v1522 = vld [vmem:[#allocation2 + $0xa58] sm:$0xff]
    %v1523 = vld [vmem:[#allocation2 + $0xa60] sm:$0xff]
    %v1524 = vld [vmem:[#allocation2 + $0xa68] sm:$0xff]
    %v1525 = vld [vmem:[#allocation2 + $0xa70] sm:$0xff]
    %v1526 = vld [vmem:[#allocation2 + $0xa78] sm:$0xff]
    %v1527 = vld [vmem:[#allocation2 + $0xa80] sm:$0xff]
    %v1528 = vld [vmem:[#allocation2 + $0xa88] sm:$0xff]
    %v1529 = vld [vmem:[#allocation2 + $0xa90] sm:$0xff]
    %v1530 = vld [vmem:[#allocation2 + $0xa98] sm:$0xff]
    %v1531 = vld [vmem:[#allocation2 + $0xaa0] sm:$0xff]
    %v1532 = vld [vmem:[#allocation2 + $0xaa8] sm:$0xff]
    %v1533 = vld [vmem:[#allocation2 + $0xab0] sm:$0xff]
    %v1534 = vld [vmem:[#allocation2 + $0xab8] sm:$0xff]
    %v1535 = vld [vmem:[#allocation2 + $0xac0] sm:$0xff]
    %v1536 = vld [vmem:[#allocation2 + $0xac8] sm:$0xff]
    %v1537 = vld [vmem:[#allocation2 + $0xad0] sm:$0xff]
    %v1538 = vld [vmem:[#allocation2 + $0xad8] sm:$0xff]
    %v1539 = vld [vmem:[#allocation2 + $0xae0] sm:$0xff]
    %v1540 = vld [vmem:[#allocation2 + $0xae8] sm:$0xff]
    %v1541 = vld [vmem:[#allocation2 + $0xaf0] sm:$0xff]
    %v1542 = vld [vmem:[#allocation2 + $0xaf8] sm:$0xff]
    %v1543 = vld [vmem:[#allocation2 + $0xb00] sm:$0xff]
    %v1544 = vld [vmem:[#allocation2 + $0xb08] sm:$0xff]
    %v1545 = vld [vmem:[#allocation2 + $0xb10] sm:$0xff]
    %v1546 = vld [vmem:[#allocation2 + $0xb18] sm:$0xff]
    %v1547 = vld [vmem:[#allocation2 + $0xb20] sm:$0xff]
    %v1548 = vld [vmem:[#allocation2 + $0xb28] sm:$0xff]
    %v1549 = vld [vmem:[#allocation2 + $0xb30] sm:$0xff]
    %v1550 = vld [vmem:[#allocation2 + $0xb38] sm:$0xff]
    %v1551 = vld [vmem:[#allocation2 + $0xb40] sm:$0xff]
    %v1552 = vld [vmem:[#allocation2 + $0xb48] sm:$0xff]
    %v1553 = vld [vmem:[#allocation2 + $0xb50] sm:$0xff]
    %v1554 = vld [vmem:[#allocation2 + $0xb58] sm:$0xff]
    %v1555 = vld [vmem:[#allocation2 + $0xb60] sm:$0xff]
    %v1556 = vld [vmem:[#allocation2 + $0xb68] sm:$0xff]
    %v1557 = vld [vmem:[#allocation2 + $0xb70] sm:$0xff]
    %v1558 = vld [vmem:[#allocation2 + $0xb78] sm:$0xff]
    %v1559 = vld [vmem:[#allocation2 + $0xb80] sm:$0xff]
    %v1560 = vld [vmem:[#allocation2 + $0xb88] sm:$0xff]
    %v1561 = vld [vmem:[#allocation2 + $0xb90] sm:$0xff]
    %v1562 = vld [vmem:[#allocation2 + $0xb98] sm:$0xff]
    %v1563 = vld [vmem:[#allocation2 + $0xba0] sm:$0xff]
    %v1564 = vld [vmem:[#allocation2 + $0xba8] sm:$0xff]
    %v1565 = vld [vmem:[#allocation2 + $0xbb0] sm:$0xff]
    %v1566 = vld [vmem:[#allocation2 + $0xbb8] sm:$0xff]
    %v1567 = vld [vmem:[#allocation2 + $0xbc0] sm:$0xff]
    %v1568 = vld [vmem:[#allocation2 + $0xbc8] sm:$0xff]
    %v1569 = vld [vmem:[#allocation2 + $0xbd0] sm:$0xff]
    %v1570 = vld [vmem:[#allocation2 + $0xbd8] sm:$0xff]
    %v1571 = vld [vmem:[#allocation2 + $0xbe0] sm:$0xff]
    %v1572 = vld [vmem:[#allocation2 + $0xbe8] sm:$0xff]
    %v1573 = vld [vmem:[#allocation2 + $0xbf0] sm:$0xff]
    %v1574 = vld [vmem:[#allocation2 + $0xbf8] sm:$0xff]
    %v1575 = vld [vmem:[#allocation2 + $0xc00] sm:$0xff]
    %v1576 = vld [vmem:[#allocation2 + $0xc08] sm:$0xff]
    %v1577 = vld [vmem:[#allocation2 + $0xc10] sm:$0xff]
    %v1578 = vld [vmem:[#allocation2 + $0xc18] sm:$0xff]
    %v1579 = vld [vmem:[#allocation2 + $0xc20] sm:$0xff]
    %v1580 = vld [vmem:[#allocation2 + $0xc28] sm:$0xff]
    %v1581 = vld [vmem:[#allocation2 + $0xc30] sm:$0xff]
    %v1582 = vld [vmem:[#allocation2 + $0xc38] sm:$0xff]
    %v1583 = vld [vmem:[#allocation2 + $0xc40] sm:$0xff]
    %v1584 = vld [vmem:[#allocation2 + $0xc48] sm:$0xff]
    %v1585 = vld [vmem:[#allocation2 + $0xc50] sm:$0xff]
    %v1586 = vld [vmem:[#allocation2 + $0xc58] sm:$0xff]
    %v1587 = vld [vmem:[#allocation2 + $0xc60] sm:$0xff]
    %v1588 = vld [vmem:[#allocation2 + $0xc68] sm:$0xff]
    %v1589 = vld [vmem:[#allocation2 + $0xc70] sm:$0xff]
    %v1590 = vld [vmem:[#allocation2 + $0xc78] sm:$0xff]
    %v1591 = vld [vmem:[#allocation2 + $0xc80] sm:$0xff]
    %v1592 = vld [vmem:[#allocation2 + $0xc88] sm:$0xff]
    %v1593 = vld [vmem:[#allocation2 + $0xc90] sm:$0xff]
    %v1594 = vld [vmem:[#allocation2 + $0xc98] sm:$0xff]
    %v1595 = vld [vmem:[#allocation2 + $0xca0] sm:$0xff]
    %v1596 = vld [vmem:[#allocation2 + $0xca8] sm:$0xff]
    %v1597 = vld [vmem:[#allocation2 + $0xcb0] sm:$0xff]
    %v1598 = vld [vmem:[#allocation2 + $0xcb8] sm:$0xff]
    %v1599 = vld [vmem:[#allocation2 + $0xcc0] sm:$0xff]
    %v1600 = vld [vmem:[#allocation2 + $0xcc8] sm:$0xff]
    %v1601 = vld [vmem:[#allocation2 + $0xcd0] sm:$0xff]
    %v1602 = vld [vmem:[#allocation2 + $0xcd8] sm:$0xff]
    %v1603 = vld [vmem:[#allocation2 + $0xce0] sm:$0xff]
    %v1604 = vld [vmem:[#allocation2 + $0xce8] sm:$0xff]
    %v1605 = vld [vmem:[#allocation2 + $0xcf0] sm:$0xff]
    %v1606 = vld [vmem:[#allocation2 + $0xcf8] sm:$0xff]
    %v1607 = vld [vmem:[#allocation2 + $0xd00] sm:$0xff]
    %v1608 = vld [vmem:[#allocation2 + $0xd08] sm:$0xff]
    %v1609 = vld [vmem:[#allocation2 + $0xd10] sm:$0xff]
    %v1610 = vld [vmem:[#allocation2 + $0xd18] sm:$0xff]
    %v1611 = vld [vmem:[#allocation2 + $0xd20] sm:$0xff]
    %v1612 = vld [vmem:[#allocation2 + $0xd28] sm:$0xff]
    %v1613 = vld [vmem:[#allocation2 + $0xd30] sm:$0xff]
    %v1614 = vld [vmem:[#allocation2 + $0xd38] sm:$0xff]
    %v1615 = vld [vmem:[#allocation2 + $0xd40] sm:$0xff]
    %v1616 = vld [vmem:[#allocation2 + $0xd48] sm:$0xff]
    %v1617 = vld [vmem:[#allocation2 + $0xd50] sm:$0xff]
    %v1618 = vld [vmem:[#allocation2 + $0xd58] sm:$0xff]
    %v1619 = vld [vmem:[#allocation2 + $0xd60] sm:$0xff]
    %v1620 = vld [vmem:[#allocation2 + $0xd68] sm:$0xff]
    %v1621 = vld [vmem:[#allocation2 + $0xd70] sm:$0xff]
    %v1622 = vld [vmem:[#allocation2 + $0xd78] sm:$0xff]
    %v1623 = vld [vmem:[#allocation2 + $0xd80] sm:$0xff]
    %v1624 = vld [vmem:[#allocation2 + $0xd88] sm:$0xff]
    %v1625 = vld [vmem:[#allocation2 + $0xd90] sm:$0xff]
    %v1626 = vld [vmem:[#allocation2 + $0xd98] sm:$0xff]
    %v1627 = vld [vmem:[#allocation2 + $0xda0] sm:$0xff]
    %v1628 = vld [vmem:[#allocation2 + $0xda8] sm:$0xff]
    %v1629 = vld [vmem:[#allocation2 + $0xdb0] sm:$0xff]
    %v1630 = vld [vmem:[#allocation2 + $0xdb8] sm:$0xff]
    %v1631 = vld [vmem:[#allocation2 + $0xdc0] sm:$0xff]
    %v1632 = vld [vmem:[#allocation2 + $0xdc8] sm:$0xff]
    %v1633 = vld [vmem:[#allocation2 + $0xdd0] sm:$0xff]
    %v1634 = vld [vmem:[#allocation2 + $0xdd8] sm:$0xff]
    %v1635 = vld [vmem:[#allocation2 + $0xde0] sm:$0xff]
    %v1636 = vld [vmem:[#allocation2 + $0xde8] sm:$0xff]
    %v1637 = vld [vmem:[#allocation2 + $0xdf0] sm:$0xff]
    %v1638 = vld [vmem:[#allocation2 + $0xdf8] sm:$0xff]
    %v1639 = vld [vmem:[#allocation2 + $0xe00] sm:$0xff]
    %v1640 = vld [vmem:[#allocation2 + $0xe08] sm:$0xff]
    %v1641 = vld [vmem:[#allocation2 + $0xe10] sm:$0xff]
    %v1642 = vld [vmem:[#allocation2 + $0xe18] sm:$0xff]
    %v1643 = vld [vmem:[#allocation2 + $0xe20] sm:$0xff]
    %v1644 = vld [vmem:[#allocation2 + $0xe28] sm:$0xff]
    %v1645 = vld [vmem:[#allocation2 + $0xe30] sm:$0xff]
    %v1646 = vld [vmem:[#allocation2 + $0xe38] sm:$0xff]
    %v1647 = vld [vmem:[#allocation2 + $0xe40] sm:$0xff]
    %v1648 = vld [vmem:[#allocation2 + $0xe48] sm:$0xff]
    %v1649 = vld [vmem:[#allocation2 + $0xe50] sm:$0xff]
    %v1650 = vld [vmem:[#allocation2 + $0xe58] sm:$0xff]
    %v1651 = vld [vmem:[#allocation2 + $0xe60] sm:$0xff]
    %v1652 = vld [vmem:[#allocation2 + $0xe68] sm:$0xff]
    %v1653 = vld [vmem:[#allocation2 + $0xe70] sm:$0xff]
    %v1654 = vld [vmem:[#allocation2 + $0xe78] sm:$0xff]
    %v1655 = vld [vmem:[#allocation2 + $0xe80] sm:$0xff]
    %v1656 = vld [vmem:[#allocation2 + $0xe88] sm:$0xff]
    %v1657 = vld [vmem:[#allocation2 + $0xe90] sm:$0xff]
    %v1658 = vld [vmem:[#allocation2 + $0xe98] sm:$0xff]
    %v1659 = vld [vmem:[#allocation2 + $0xea0] sm:$0xff]
    %v1660 = vld [vmem:[#allocation2 + $0xea8] sm:$0xff]
    %v1661 = vld [vmem:[#allocation2 + $0xeb0] sm:$0xff]
    %v1662 = vld [vmem:[#allocation2 + $0xeb8] sm:$0xff]
    %v1663 = vld [vmem:[#allocation2 + $0xec0] sm:$0xff]
    %v1664 = vld [vmem:[#allocation2 + $0xec8] sm:$0xff]
    %v1665 = vld [vmem:[#allocation2 + $0xed0] sm:$0xff]
    %v1666 = vld [vmem:[#allocation2 + $0xed8] sm:$0xff]
    %v1667 = vld [vmem:[#allocation2 + $0xee0] sm:$0xff]
    %v1668 = vld [vmem:[#allocation2 + $0xee8] sm:$0xff]
    %v1669 = vld [vmem:[#allocation2 + $0xef0] sm:$0xff]
    %v1670 = vld [vmem:[#allocation2 + $0xef8] sm:$0xff]
    %v1671 = vld [vmem:[#allocation2 + $0xf00] sm:$0xff]
    %v1672 = vld [vmem:[#allocation2 + $0xf08] sm:$0xff]
    %v1673 = vld [vmem:[#allocation2 + $0xf10] sm:$0xff]
    %v1674 = vld [vmem:[#allocation2 + $0xf18] sm:$0xff]
    %v1675 = vld [vmem:[#allocation2 + $0xf20] sm:$0xff]
    %v1676 = vld [vmem:[#allocation2 + $0xf28] sm:$0xff]
    %v1677 = vld [vmem:[#allocation2 + $0xf30] sm:$0xff]
    %v1678 = vld [vmem:[#allocation2 + $0xf38] sm:$0xff]
    %v1679 = vld [vmem:[#allocation2 + $0xf40] sm:$0xff]
    %v1680 = vld [vmem:[#allocation2 + $0xf48] sm:$0xff]
    %v1681 = vld [vmem:[#allocation2 + $0xf50] sm:$0xff]
    %v1682 = vld [vmem:[#allocation2 + $0xf58] sm:$0xff]
    %v1683 = vld [vmem:[#allocation2 + $0xf60] sm:$0xff]
    %v1684 = vld [vmem:[#allocation2 + $0xf68] sm:$0xff]
    %v1685 = vld [vmem:[#allocation2 + $0xf70] sm:$0xff]
    %v1686 = vld [vmem:[#allocation2 + $0xf78] sm:$0xff]
    %v1687 = vld [vmem:[#allocation2 + $0xf80] sm:$0xff]
    %v1688 = vld [vmem:[#allocation2 + $0xf88] sm:$0xff]
    %v1689 = vld [vmem:[#allocation2 + $0xf90] sm:$0xff]
    %v1690 = vld [vmem:[#allocation2 + $0xf98] sm:$0xff]
    %v1691 = vld [vmem:[#allocation2 + $0xfa0] sm:$0xff]
    %v1692 = vld [vmem:[#allocation2 + $0xfa8] sm:$0xff]
    %v1693 = vld [vmem:[#allocation2 + $0xfb0] sm:$0xff]
    %v1694 = vld [vmem:[#allocation2 + $0xfb8] sm:$0xff]
    %v1695 = vld [vmem:[#allocation2 + $0xfc0] sm:$0xff]
    %v1696 = vld [vmem:[#allocation2 + $0xfc8] sm:$0xff]
    %v1697 = vld [vmem:[#allocation2 + $0xfd0] sm:$0xff]
    %v1698 = vld [vmem:[#allocation2 + $0xfd8] sm:$0xff]
    %v1699 = vld [vmem:[#allocation2 + $0xfe0] sm:$0xff]
    %v1700 = vld [vmem:[#allocation2 + $0xfe8] sm:$0xff]
    %v1701 = vld [vmem:[#allocation2 + $0xff0] sm:$0xff]
    %v1702 = vld [vmem:[#allocation2 + $0xff8] sm:$0xff]
    %v1703 = vld [vmem:[#allocation2 + $0x1000] sm:$0xff]
    %v1704 = vld [vmem:[#allocation2 + $0x1008] sm:$0xff]
    %v1705 = vld [vmem:[#allocation2 + $0x1010] sm:$0xff]
    %v1706 = vld [vmem:[#allocation2 + $0x1018] sm:$0xff]
    %v1707 = vld [vmem:[#allocation2 + $0x1020] sm:$0xff]
    %v1708 = vld [vmem:[#allocation2 + $0x1028] sm:$0xff]
    %v1709 = vld [vmem:[#allocation2 + $0x1030] sm:$0xff]
    %v1710 = vld [vmem:[#allocation2 + $0x1038] sm:$0xff]
    %v1711 = vld [vmem:[#allocation2 + $0x1040] sm:$0xff]
    %v1712 = vld [vmem:[#allocation2 + $0x1048] sm:$0xff]
    %v1713 = vld [vmem:[#allocation2 + $0x1050] sm:$0xff]
    %v1714 = vld [vmem:[#allocation2 + $0x1058] sm:$0xff]
    %v1715 = vld [vmem:[#allocation2 + $0x1060] sm:$0xff]
    %v1716 = vld [vmem:[#allocation2 + $0x1068] sm:$0xff]
    %v1717 = vld [vmem:[#allocation2 + $0x1070] sm:$0xff]
    %v1718 = vld [vmem:[#allocation2 + $0x1078] sm:$0xff]
    %v1719 = vld [vmem:[#allocation2 + $0x1080] sm:$0xff]
    %v1720 = vld [vmem:[#allocation2 + $0x1088] sm:$0xff]
    %v1721 = vld [vmem:[#allocation2 + $0x1090] sm:$0xff]
    %v1722 = vld [vmem:[#allocation2 + $0x1098] sm:$0xff]
    %v1723 = vld [vmem:[#allocation2 + $0x10a0] sm:$0xff]
    %v1724 = vld [vmem:[#allocation2 + $0x10a8] sm:$0xff]
    %v1725 = vld [vmem:[#allocation2 + $0x10b0] sm:$0xff]
    %v1726 = vld [vmem:[#allocation2 + $0x10b8] sm:$0xff]
    %v1727 = vld [vmem:[#allocation2 + $0x10c0] sm:$0xff]
    %v1728 = vld [vmem:[#allocation2 + $0x10c8] sm:$0xff]
    %v1729 = vld [vmem:[#allocation2 + $0x10d0] sm:$0xff]
    %v1730 = vld [vmem:[#allocation2 + $0x10d8] sm:$0xff]
    %v1731 = vld [vmem:[#allocation2 + $0x10e0] sm:$0xff]
    %v1732 = vld [vmem:[#allocation2 + $0x10e8] sm:$0xff]
    %v1733 = vld [vmem:[#allocation2 + $0x10f0] sm:$0xff]
    %v1734 = vld [vmem:[#allocation2 + $0x10f8] sm:$0xff]
    %v1735 = vld [vmem:[#allocation2 + $0x1100] sm:$0xff]
    %v1736 = vld [vmem:[#allocation2 + $0x1108] sm:$0xff]
    %v1737 = vld [vmem:[#allocation2 + $0x1110] sm:$0xff]
    %v1738 = vld [vmem:[#allocation2 + $0x1118] sm:$0xff]
    %v1739 = vld [vmem:[#allocation2 + $0x1120] sm:$0xff]
    %v1740 = vld [vmem:[#allocation2 + $0x1128] sm:$0xff]
    %v1741 = vld [vmem:[#allocation2 + $0x1130] sm:$0xff]
    %v1742 = vld [vmem:[#allocation2 + $0x1138] sm:$0xff]
    %v1743 = vld [vmem:[#allocation2 + $0x1140] sm:$0xff]
    %v1744 = vld [vmem:[#allocation2 + $0x1148] sm:$0xff]
    %v1745 = vld [vmem:[#allocation2 + $0x1150] sm:$0xff]
    %v1746 = vld [vmem:[#allocation2 + $0x1158] sm:$0xff]
    %v1747 = vld [vmem:[#allocation2 + $0x1160] sm:$0xff]
    %v1748 = vld [vmem:[#allocation2 + $0x1168] sm:$0xff]
    %v1749 = vld [vmem:[#allocation2 + $0x1170] sm:$0xff]
    %v1750 = vld [vmem:[#allocation2 + $0x1178] sm:$0xff]
    %v1751 = vld [vmem:[#allocation2 + $0x1180] sm:$0xff]
    %v1752 = vld [vmem:[#allocation2 + $0x1188] sm:$0xff]
    %v1753 = vld [vmem:[#allocation2 + $0x1190] sm:$0xff]
    %v1754 = vld [vmem:[#allocation2 + $0x1198] sm:$0xff]
    %v1755 = vld [vmem:[#allocation2 + $0x11a0] sm:$0xff]
    %v1756 = vld [vmem:[#allocation2 + $0x11a8] sm:$0xff]
    %v1757 = vld [vmem:[#allocation2 + $0x11b0] sm:$0xff]
    %v1758 = vld [vmem:[#allocation2 + $0x11b8] sm:$0xff]
    %v1759 = vld [vmem:[#allocation2 + $0x11c0] sm:$0xff]
    %v1760 = vld [vmem:[#allocation2 + $0x11c8] sm:$0xff]
    %v1761 = vld [vmem:[#allocation2 + $0x11d0] sm:$0xff]
    %v1762 = vld [vmem:[#allocation2 + $0x11d8] sm:$0xff]
    %v1763 = vld [vmem:[#allocation2 + $0x11e0] sm:$0xff]
    %v1764 = vld [vmem:[#allocation2 + $0x11e8] sm:$0xff]
    %v1765 = vld [vmem:[#allocation2 + $0x11f0] sm:$0xff]
    %v1766 = vld [vmem:[#allocation2 + $0x11f8] sm:$0xff]
    %v1767 = vld [vmem:[#allocation3] sm:$0xff]
    %v1768 = vld [vmem:[#allocation3 + $0x8] sm:$0xff]
    %v1769 = vld [vmem:[#allocation3 + $0x10] sm:$0xff]
    %v1770 = vld [vmem:[#allocation3 + $0x18] sm:$0xff]
    %v1771 = vld [vmem:[#allocation3 + $0x20] sm:$0xff]
    %v1772 = vld [vmem:[#allocation3 + $0x28] sm:$0xff]
    %v1773 = vld [vmem:[#allocation3 + $0x30] sm:$0xff]
    %v1774 = vld [vmem:[#allocation3 + $0x38] sm:$0xff]
    %v1775 = vld [vmem:[#allocation3 + $0x40] sm:$0xff]
    %v1776 = vld [vmem:[#allocation3 + $0x48] sm:$0xff]
    %v1777 = vld [vmem:[#allocation3 + $0x50] sm:$0xff]
    %v1778 = vld [vmem:[#allocation3 + $0x58] sm:$0xff]
    %v1779 = vld [vmem:[#allocation3 + $0x60] sm:$0xff]
    %v1780 = vld [vmem:[#allocation3 + $0x68] sm:$0xff]
    %v1781 = vld [vmem:[#allocation3 + $0x70] sm:$0xff]
    %v1782 = vld [vmem:[#allocation3 + $0x78] sm:$0xff]
    %v1783 = vld [vmem:[#allocation3 + $0x80] sm:$0xff]
    %v1784 = vld [vmem:[#allocation3 + $0x88] sm:$0xff]
    %v1785 = vld [vmem:[#allocation3 + $0x90] sm:$0xff]
    %v1786 = vld [vmem:[#allocation3 + $0x98] sm:$0xff]
    %v1787 = vld [vmem:[#allocation3 + $0xa0] sm:$0xff]
    %v1788 = vld [vmem:[#allocation3 + $0xa8] sm:$0xff]
    %v1789 = vld [vmem:[#allocation3 + $0xb0] sm:$0xff]
    %v1790 = vld [vmem:[#allocation3 + $0xb8] sm:$0xff]
    %v1791 = vld [vmem:[#allocation3 + $0xc0] sm:$0xff]
    %v1792 = vld [vmem:[#allocation3 + $0xc8] sm:$0xff]
    %v1793 = vld [vmem:[#allocation3 + $0xd0] sm:$0xff]
    %v1794 = vld [vmem:[#allocation3 + $0xd8] sm:$0xff]
    %v1795 = vld [vmem:[#allocation3 + $0xe0] sm:$0xff]
    %v1796 = vld [vmem:[#allocation3 + $0xe8] sm:$0xff]
    %v1797 = vld [vmem:[#allocation3 + $0xf0] sm:$0xff]
    %v1798 = vld [vmem:[#allocation3 + $0xf8] sm:$0xff]
    %v1799 = vld [vmem:[#allocation3 + $0x100] sm:$0xff]
    %v1800 = vld [vmem:[#allocation3 + $0x108] sm:$0xff]
    %v1801 = vld [vmem:[#allocation3 + $0x110] sm:$0xff]
    %v1802 = vld [vmem:[#allocation3 + $0x118] sm:$0xff]
    %v1803 = vld [vmem:[#allocation3 + $0x120] sm:$0xff]
    %v1804 = vld [vmem:[#allocation3 + $0x128] sm:$0xff]
    %v1805 = vld [vmem:[#allocation3 + $0x130] sm:$0xff]
    %v1806 = vld [vmem:[#allocation3 + $0x138] sm:$0xff]
    %v1807 = vld [vmem:[#allocation3 + $0x140] sm:$0xff]
    %v1808 = vld [vmem:[#allocation3 + $0x148] sm:$0xff]
    %v1809 = vld [vmem:[#allocation3 + $0x150] sm:$0xff]
    %v1810 = vld [vmem:[#allocation3 + $0x158] sm:$0xff]
    %v1811 = vld [vmem:[#allocation3 + $0x160] sm:$0xff]
    %v1812 = vld [vmem:[#allocation3 + $0x168] sm:$0xff]
    %v1813 = vld [vmem:[#allocation3 + $0x170] sm:$0xff]
    %v1814 = vld [vmem:[#allocation3 + $0x178] sm:$0xff]
    %v1815 = vld [vmem:[#allocation3 + $0x180] sm:$0xff]
    %v1816 = vld [vmem:[#allocation3 + $0x188] sm:$0xff]
    %v1817 = vld [vmem:[#allocation3 + $0x190] sm:$0xff]
    %v1818 = vld [vmem:[#allocation3 + $0x198] sm:$0xff]
    %v1819 = vld [vmem:[#allocation3 + $0x1a0] sm:$0xff]
    %v1820 = vld [vmem:[#allocation3 + $0x1a8] sm:$0xff]
    %v1821 = vld [vmem:[#allocation3 + $0x1b0] sm:$0xff]
    %v1822 = vld [vmem:[#allocation3 + $0x1b8] sm:$0xff]
    %v1823 = vld [vmem:[#allocation3 + $0x1c0] sm:$0xff]
    %v1824 = vld [vmem:[#allocation3 + $0x1c8] sm:$0xff]
    %v1825 = vld [vmem:[#allocation3 + $0x1d0] sm:$0xff]
    %v1826 = vld [vmem:[#allocation3 + $0x1d8] sm:$0xff]
    %v1827 = vld [vmem:[#allocation3 + $0x1e0] sm:$0xff]
    %v1828 = vld [vmem:[#allocation3 + $0x1e8] sm:$0xff]
    %v1829 = vld [vmem:[#allocation3 + $0x1f0] sm:$0xff]
    %v1830 = vld [vmem:[#allocation3 + $0x1f8] sm:$0xff]
    %v1831 = vld [vmem:[#allocation3 + $0x200] sm:$0xff]
    %v1832 = vld [vmem:[#allocation3 + $0x208] sm:$0xff]
    %v1833 = vld [vmem:[#allocation3 + $0x210] sm:$0xff]
    %v1834 = vld [vmem:[#allocation3 + $0x218] sm:$0xff]
    %v1835 = vld [vmem:[#allocation3 + $0x220] sm:$0xff]
    %v1836 = vld [vmem:[#allocation3 + $0x228] sm:$0xff]
    %v1837 = vld [vmem:[#allocation3 + $0x230] sm:$0xff]
    %v1838 = vld [vmem:[#allocation3 + $0x238] sm:$0xff]
    %v1839 = vld [vmem:[#allocation3 + $0x240] sm:$0xff]
    %v1840 = vld [vmem:[#allocation3 + $0x248] sm:$0xff]
    %v1841 = vld [vmem:[#allocation3 + $0x250] sm:$0xff]
    %v1842 = vld [vmem:[#allocation3 + $0x258] sm:$0xff]
    %v1843 = vld [vmem:[#allocation3 + $0x260] sm:$0xff]
    %v1844 = vld [vmem:[#allocation3 + $0x268] sm:$0xff]
    %v1845 = vld [vmem:[#allocation3 + $0x270] sm:$0xff]
    %v1846 = vld [vmem:[#allocation3 + $0x278] sm:$0xff]
    %v1847 = vld [vmem:[#allocation3 + $0x280] sm:$0xff]
    %v1848 = vld [vmem:[#allocation3 + $0x288] sm:$0xff]
    %v1849 = vld [vmem:[#allocation3 + $0x290] sm:$0xff]
    %v1850 = vld [vmem:[#allocation3 + $0x298] sm:$0xff]
    %v1851 = vld [vmem:[#allocation3 + $0x2a0] sm:$0xff]
    %v1852 = vld [vmem:[#allocation3 + $0x2a8] sm:$0xff]
    %v1853 = vld [vmem:[#allocation3 + $0x2b0] sm:$0xff]
    %v1854 = vld [vmem:[#allocation3 + $0x2b8] sm:$0xff]
    %v1855 = vld [vmem:[#allocation3 + $0x2c0] sm:$0xff]
    %v1856 = vld [vmem:[#allocation3 + $0x2c8] sm:$0xff]
    %v1857 = vld [vmem:[#allocation3 + $0x2d0] sm:$0xff]
    %v1858 = vld [vmem:[#allocation3 + $0x2d8] sm:$0xff]
    %v1859 = vld [vmem:[#allocation3 + $0x2e0] sm:$0xff]
    %v1860 = vld [vmem:[#allocation3 + $0x2e8] sm:$0xff]
    %v1861 = vld [vmem:[#allocation3 + $0x2f0] sm:$0xff]
    %v1862 = vld [vmem:[#allocation3 + $0x2f8] sm:$0xff]
    %v1863 = vld [vmem:[#allocation3 + $0x300] sm:$0xff]
    %v1864 = vld [vmem:[#allocation3 + $0x308] sm:$0xff]
    %v1865 = vld [vmem:[#allocation3 + $0x310] sm:$0xff]
    %v1866 = vld [vmem:[#allocation3 + $0x318] sm:$0xff]
    %v1867 = vld [vmem:[#allocation3 + $0x320] sm:$0xff]
    %v1868 = vld [vmem:[#allocation3 + $0x328] sm:$0xff]
    %v1869 = vld [vmem:[#allocation3 + $0x330] sm:$0xff]
    %v1870 = vld [vmem:[#allocation3 + $0x338] sm:$0xff]
    %v1871 = vld [vmem:[#allocation3 + $0x340] sm:$0xff]
    %v1872 = vld [vmem:[#allocation3 + $0x348] sm:$0xff]
    %v1873 = vld [vmem:[#allocation3 + $0x350] sm:$0xff]
    %v1874 = vld [vmem:[#allocation3 + $0x358] sm:$0xff]
    %v1875 = vld [vmem:[#allocation3 + $0x360] sm:$0xff]
    %v1876 = vld [vmem:[#allocation3 + $0x368] sm:$0xff]
    %v1877 = vld [vmem:[#allocation3 + $0x370] sm:$0xff]
    %v1878 = vld [vmem:[#allocation3 + $0x378] sm:$0xff]
    %v1879 = vld [vmem:[#allocation3 + $0x380] sm:$0xff]
    %v1880 = vld [vmem:[#allocation3 + $0x388] sm:$0xff]
    %v1881 = vld [vmem:[#allocation3 + $0x390] sm:$0xff]
    %v1882 = vld [vmem:[#allocation3 + $0x398] sm:$0xff]
    %v1883 = vld [vmem:[#allocation3 + $0x3a0] sm:$0xff]
    %v1884 = vld [vmem:[#allocation3 + $0x3a8] sm:$0xff]
    %v1885 = vld [vmem:[#allocation3 + $0x3b0] sm:$0xff]
    %v1886 = vld [vmem:[#allocation3 + $0x3b8] sm:$0xff]
    %v1887 = vld [vmem:[#allocation3 + $0x3c0] sm:$0xff]
    %v1888 = vld [vmem:[#allocation3 + $0x3c8] sm:$0xff]
    %v1889 = vld [vmem:[#allocation3 + $0x3d0] sm:$0xff]
    %v1890 = vld [vmem:[#allocation3 + $0x3d8] sm:$0xff]
    %v1891 = vld [vmem:[#allocation3 + $0x3e0] sm:$0xff]
    %v1892 = vld [vmem:[#allocation3 + $0x3e8] sm:$0xff]
    %v1893 = vld [vmem:[#allocation3 + $0x3f0] sm:$0xff]
    %v1894 = vld [vmem:[#allocation3 + $0x3f8] sm:$0xff]
    %v1895 = vld [vmem:[#allocation3 + $0x400] sm:$0xff]
    %v1896 = vld [vmem:[#allocation3 + $0x408] sm:$0xff]
    %v1897 = vld [vmem:[#allocation3 + $0x410] sm:$0xff]
    %v1898 = vld [vmem:[#allocation3 + $0x418] sm:$0xff]
    %v1899 = vld [vmem:[#allocation3 + $0x420] sm:$0xff]
    %v1900 = vld [vmem:[#allocation3 + $0x428] sm:$0xff]
    %v1901 = vld [vmem:[#allocation3 + $0x430] sm:$0xff]
    %v1902 = vld [vmem:[#allocation3 + $0x438] sm:$0xff]
    %v1903 = vld [vmem:[#allocation3 + $0x440] sm:$0xff]
    %v1904 = vld [vmem:[#allocation3 + $0x448] sm:$0xff]
    %v1905 = vld [vmem:[#allocation3 + $0x450] sm:$0xff]
    %v1906 = vld [vmem:[#allocation3 + $0x458] sm:$0xff]
    %v1907 = vld [vmem:[#allocation3 + $0x460] sm:$0xff]
    %v1908 = vld [vmem:[#allocation3 + $0x468] sm:$0xff]
    %v1909 = vld [vmem:[#allocation3 + $0x470] sm:$0xff]
    %v1910 = vld [vmem:[#allocation3 + $0x478] sm:$0xff]
    %v1911 = vld [vmem:[%s2] sm:$0x1]
    %v1912 = vperm.slane %v1911, 0
    %1913 = vmatpush.msra.mxu0 %v1782
    %1914 = vmatpush.msra.mxu0 %v1781
    %1915 = vmatpush.msra.mxu0 %v1780
    %1916 = vmatpush.msra.mxu0 %v1779
    %1917 = vmatpush.msra.mxu0 %v1778
    %1918 = vmatpush.msra.mxu0 %v1777
    %1919 = vmatpush.msra.mxu0 %v1776
    %1920 = vmatpush.msra.mxu0 %v1775
    %1921 = vmatpush.msra.mxu0 %v1774
    %1922 = vmatpush.msra.mxu0 %v1773
    %1923 = vmatpush.msra.mxu0 %v1772
    %1924 = vmatpush.msra.mxu0 %v1771
    %1925 = vmatpush.msra.mxu0 %v1770
    %1926 = vmatpush.msra.mxu0 %v1769
    %1927 = vmatpush.msra.mxu0 %v1768
    %1928 = vmatpush.msra.mxu0 %v1767
    %1929 = vmatmul.f32.gmra.mxu0 %v1191
    %v1930 = vpop.f32.mrf.mxu0
    %v1931 = vadd.f32 %v1912, %v1930
    %1932 = vmatmul.f32.gmra.mxu0 %v1200
    %v1933 = vpop.f32.mrf.mxu0
    %v1934 = vadd.f32 %v1912, %v1933
    %1935 = vmatmul.f32.gmra.mxu0 %v1209
    %v1936 = vpop.f32.mrf.mxu0
    %v1937 = vadd.f32 %v1912, %v1936
    %1938 = vmatmul.f32.gmra.mxu0 %v1218
    %v1939 = vpop.f32.mrf.mxu0
    %v1940 = vadd.f32 %v1912, %v1939
    %1941 = vmatmul.f32.gmra.mxu0 %v1227
    %v1942 = vpop.f32.mrf.mxu0
    %v1943 = vadd.f32 %v1912, %v1942
    %1944 = vmatmul.f32.gmra.mxu0 %v1236
    %v1945 = vpop.f32.mrf.mxu0
    %v1946 = vadd.f32 %v1912, %v1945
    %1947 = vmatmul.f32.gmra.mxu0 %v1245
    %v1948 = vpop.f32.mrf.mxu0
    %v1949 = vadd.f32 %v1912, %v1948
    %1950 = vmatmul.f32.gmra.mxu0 %v1254
    %v1951 = vpop.f32.mrf.mxu0
    %v1952 = vadd.f32 %v1912, %v1951
    %1953 = vmatmul.f32.gmra.mxu0 %v1263
    %v1954 = vpop.f32.mrf.mxu0
    %v1955 = vadd.f32 %v1912, %v1954
    %1956 = vmatmul.f32.gmra.mxu0 %v1272
    %v1957 = vpop.f32.mrf.mxu0
    %v1958 = vadd.f32 %v1912, %v1957
    %1959 = vmatmul.f32.gmra.mxu0 %v1281
    %v1960 = vpop.f32.mrf.mxu0
    %v1961 = vadd.f32 %v1912, %v1960
    %1962 = vmatmul.f32.gmra.mxu0 %v1290
    %v1963 = vpop.f32.mrf.mxu0
    %v1964 = vadd.f32 %v1912, %v1963
    %1965 = vmatmul.f32.gmra.mxu0 %v1299
    %v1966 = vpop.f32.mrf.mxu0
    %v1967 = vadd.f32 %v1912, %v1966
    %1968 = vmatmul.f32.gmra.mxu0 %v1308
    %v1969 = vpop.f32.mrf.mxu0
    %v1970 = vadd.f32 %v1912, %v1969
    %1971 = vmatmul.f32.gmra.mxu0 %v1317
    %v1972 = vpop.f32.mrf.mxu0
    %v1973 = vadd.f32 %v1912, %v1972
    %1974 = vmatmul.f32.gmra.mxu0 %v1326
    %v1975 = vpop.f32.mrf.mxu0
    %v1976 = vadd.f32 %v1912, %v1975
    %1977 = vmatmul.f32.gmra.mxu0 %v1335
    %v1978 = vpop.f32.mrf.mxu0
    %v1979 = vadd.f32 %v1912, %v1978
    %1980 = vmatmul.f32.gmra.mxu0 %v1344
    %v1981 = vpop.f32.mrf.mxu0
    %v1982 = vadd.f32 %v1912, %v1981
    %1983 = vmatmul.f32.gmra.mxu0 %v1353
    %v1984 = vpop.f32.mrf.mxu0
    %v1985 = vadd.f32 %v1912, %v1984
    %1986 = vmatmul.f32.gmra.mxu0 %v1362
    %v1987 = vpop.f32.mrf.mxu0
    %v1988 = vadd.f32 %v1912, %v1987
    %1989 = vmatmul.f32.gmra.mxu0 %v1371
    %v1990 = vpop.f32.mrf.mxu0
    %v1991 = vadd.f32 %v1912, %v1990
    %1992 = vmatmul.f32.gmra.mxu0 %v1380
    %v1993 = vpop.f32.mrf.mxu0
    %v1994 = vadd.f32 %v1912, %v1993
    %1995 = vmatmul.f32.gmra.mxu0 %v1389
    %v1996 = vpop.f32.mrf.mxu0
    %v1997 = vadd.f32 %v1912, %v1996
    %1998 = vmatmul.f32.gmra.mxu0 %v1398
    %v1999 = vpop.f32.mrf.mxu0
    %v2000 = vadd.f32 %v1912, %v1999
    %2001 = vmatmul.f32.gmra.mxu0 %v1407
    %v2002 = vpop.f32.mrf.mxu0
    %v2003 = vadd.f32 %v1912, %v2002
    %2004 = vmatmul.f32.gmra.mxu0 %v1416
    %v2005 = vpop.f32.mrf.mxu0
    %v2006 = vadd.f32 %v1912, %v2005
    %2007 = vmatmul.f32.gmra.mxu0 %v1425
    %v2008 = vpop.f32.mrf.mxu0
    %v2009 = vadd.f32 %v1912, %v2008
    %2010 = vmatmul.f32.gmra.mxu0 %v1434
    %v2011 = vpop.f32.mrf.mxu0
    %v2012 = vadd.f32 %v1912, %v2011
    %2013 = vmatmul.f32.gmra.mxu0 %v1443
    %v2014 = vpop.f32.mrf.mxu0
    %v2015 = vadd.f32 %v1912, %v2014
    %2016 = vmatmul.f32.gmra.mxu0 %v1452
    %v2017 = vpop.f32.mrf.mxu0
    %v2018 = vadd.f32 %v1912, %v2017
    %2019 = vmatmul.f32.gmra.mxu0 %v1461
    %v2020 = vpop.f32.mrf.mxu0
    %v2021 = vadd.f32 %v1912, %v2020
    %2022 = vmatmul.f32.gmra.mxu0 %v1470
    %v2023 = vpop.f32.mrf.mxu0
    %v2024 = vadd.f32 %v1912, %v2023
    %2025 = vmatmul.f32.gmra.mxu0 %v1479
    %v2026 = vpop.f32.mrf.mxu0
    %v2027 = vadd.f32 %v1912, %v2026
    %2028 = vmatmul.f32.gmra.mxu0 %v1488
    %v2029 = vpop.f32.mrf.mxu0
    %v2030 = vadd.f32 %v1912, %v2029
    %2031 = vmatmul.f32.gmra.mxu0 %v1497
    %v2032 = vpop.f32.mrf.mxu0
    %v2033 = vadd.f32 %v1912, %v2032
    %2034 = vmatmul.f32.gmra.mxu0 %v1506
    %v2035 = vpop.f32.mrf.mxu0
    %v2036 = vadd.f32 %v1912, %v2035
    %2037 = vmatmul.f32.gmra.mxu0 %v1515
    %v2038 = vpop.f32.mrf.mxu0
    %v2039 = vadd.f32 %v1912, %v2038
    %2040 = vmatmul.f32.gmra.mxu0 %v1524
    %v2041 = vpop.f32.mrf.mxu0
    %v2042 = vadd.f32 %v1912, %v2041
    %2043 = vmatmul.f32.gmra.mxu0 %v1533
    %v2044 = vpop.f32.mrf.mxu0
    %v2045 = vadd.f32 %v1912, %v2044
    %2046 = vmatmul.f32.gmra.mxu0 %v1542
    %v2047 = vpop.f32.mrf.mxu0
    %v2048 = vadd.f32 %v1912, %v2047
    %2049 = vmatmul.f32.gmra.mxu0 %v1551
    %v2050 = vpop.f32.mrf.mxu0
    %v2051 = vadd.f32 %v1912, %v2050
    %2052 = vmatmul.f32.gmra.mxu0 %v1560
    %v2053 = vpop.f32.mrf.mxu0
    %v2054 = vadd.f32 %v1912, %v2053
    %2055 = vmatmul.f32.gmra.mxu0 %v1569
    %v2056 = vpop.f32.mrf.mxu0
    %v2057 = vadd.f32 %v1912, %v2056
    %2058 = vmatmul.f32.gmra.mxu0 %v1578
    %v2059 = vpop.f32.mrf.mxu0
    %v2060 = vadd.f32 %v1912, %v2059
    %2061 = vmatmul.f32.gmra.mxu0 %v1587
    %v2062 = vpop.f32.mrf.mxu0
    %v2063 = vadd.f32 %v1912, %v2062
    %2064 = vmatmul.f32.gmra.mxu0 %v1596
    %v2065 = vpop.f32.mrf.mxu0
    %v2066 = vadd.f32 %v1912, %v2065
    %2067 = vmatmul.f32.gmra.mxu0 %v1605
    %v2068 = vpop.f32.mrf.mxu0
    %v2069 = vadd.f32 %v1912, %v2068
    %2070 = vmatmul.f32.gmra.mxu0 %v1614
    %v2071 = vpop.f32.mrf.mxu0
    %v2072 = vadd.f32 %v1912, %v2071
    %2073 = vmatmul.f32.gmra.mxu0 %v1623
    %v2074 = vpop.f32.mrf.mxu0
    %v2075 = vadd.f32 %v1912, %v2074
    %2076 = vmatmul.f32.gmra.mxu0 %v1632
    %v2077 = vpop.f32.mrf.mxu0
    %v2078 = vadd.f32 %v1912, %v2077
    %2079 = vmatmul.f32.gmra.mxu0 %v1641
    %v2080 = vpop.f32.mrf.mxu0
    %v2081 = vadd.f32 %v1912, %v2080
    %2082 = vmatmul.f32.gmra.mxu0 %v1650
    %v2083 = vpop.f32.mrf.mxu0
    %v2084 = vadd.f32 %v1912, %v2083
    %2085 = vmatmul.f32.gmra.mxu0 %v1659
    %v2086 = vpop.f32.mrf.mxu0
    %v2087 = vadd.f32 %v1912, %v2086
    %2088 = vmatmul.f32.gmra.mxu0 %v1668
    %v2089 = vpop.f32.mrf.mxu0
    %v2090 = vadd.f32 %v1912, %v2089
    %2091 = vmatmul.f32.gmra.mxu0 %v1677
    %v2092 = vpop.f32.mrf.mxu0
    %v2093 = vadd.f32 %v1912, %v2092
    %2094 = vmatmul.f32.gmra.mxu0 %v1686
    %v2095 = vpop.f32.mrf.mxu0
    %v2096 = vadd.f32 %v1912, %v2095
    %2097 = vmatmul.f32.gmra.mxu0 %v1695
    %v2098 = vpop.f32.mrf.mxu0
    %v2099 = vadd.f32 %v1912, %v2098
    %2100 = vmatmul.f32.gmra.mxu0 %v1704
    %v2101 = vpop.f32.mrf.mxu0
    %v2102 = vadd.f32 %v1912, %v2101
    %2103 = vmatmul.f32.gmra.mxu0 %v1713
    %v2104 = vpop.f32.mrf.mxu0
    %v2105 = vadd.f32 %v1912, %v2104
    %2106 = vmatmul.f32.gmra.mxu0 %v1722
    %v2107 = vpop.f32.mrf.mxu0
    %v2108 = vadd.f32 %v1912, %v2107
    %2109 = vmatmul.f32.gmra.mxu0 %v1731
    %v2110 = vpop.f32.mrf.mxu0
    %v2111 = vadd.f32 %v1912, %v2110
    %2112 = vmatmul.f32.gmra.mxu0 %v1740
    %v2113 = vpop.f32.mrf.mxu0
    %v2114 = vadd.f32 %v1912, %v2113
    %2115 = vmatmul.f32.gmra.mxu0 %v1749
    %v2116 = vpop.f32.mrf.mxu0
    %v2117 = vadd.f32 %v1912, %v2116
    %2118 = vmatmul.f32.gmra.mxu0 %v1758
    %v2119 = vpop.f32.mrf.mxu0
    %v2120 = vadd.f32 %v1912, %v2119
    %2121 = vdwg.mxu0
    %2122 = vmatpush.msra.mxu0 %v1798
    %2123 = vmatpush.msra.mxu0 %v1797
    %2124 = vmatpush.msra.mxu0 %v1796
    %2125 = vmatpush.msra.mxu0 %v1795
    %2126 = vmatpush.msra.mxu0 %v1794
    %2127 = vmatpush.msra.mxu0 %v1793
    %2128 = vmatpush.msra.mxu0 %v1792
    %2129 = vmatpush.msra.mxu0 %v1791
    %2130 = vmatpush.msra.mxu0 %v1790
    %2131 = vmatpush.msra.mxu0 %v1789
    %2132 = vmatpush.msra.mxu0 %v1788
    %2133 = vmatpush.msra.mxu0 %v1787
    %2134 = vmatpush.msra.mxu0 %v1786
    %2135 = vmatpush.msra.mxu0 %v1785
    %2136 = vmatpush.msra.mxu0 %v1784
    %2137 = vmatpush.msra.mxu0 %v1783
    %2138 = vmatmul.f32.gmra.mxu0 %v1192
    %v2139 = vpop.f32.mrf.mxu0
    %v2140 = vadd.f32 %v1931, %v2139
    %2141 = vmatmul.f32.gmra.mxu0 %v1201
    %v2142 = vpop.f32.mrf.mxu0
    %v2143 = vadd.f32 %v1934, %v2142
    %2144 = vmatmul.f32.gmra.mxu0 %v1210
    %v2145 = vpop.f32.mrf.mxu0
    %v2146 = vadd.f32 %v1937, %v2145
    %2147 = vmatmul.f32.gmra.mxu0 %v1219
    %v2148 = vpop.f32.mrf.mxu0
    %v2149 = vadd.f32 %v1940, %v2148
    %2150 = vmatmul.f32.gmra.mxu0 %v1228
    %v2151 = vpop.f32.mrf.mxu0
    %v2152 = vadd.f32 %v1943, %v2151
    %2153 = vmatmul.f32.gmra.mxu0 %v1237
    %v2154 = vpop.f32.mrf.mxu0
    %v2155 = vadd.f32 %v1946, %v2154
    %2156 = vmatmul.f32.gmra.mxu0 %v1246
    %v2157 = vpop.f32.mrf.mxu0
    %v2158 = vadd.f32 %v1949, %v2157
    %2159 = vmatmul.f32.gmra.mxu0 %v1255
    %v2160 = vpop.f32.mrf.mxu0
    %v2161 = vadd.f32 %v1952, %v2160
    %2162 = vmatmul.f32.gmra.mxu0 %v1264
    %v2163 = vpop.f32.mrf.mxu0
    %v2164 = vadd.f32 %v1955, %v2163
    %2165 = vmatmul.f32.gmra.mxu0 %v1273
    %v2166 = vpop.f32.mrf.mxu0
    %v2167 = vadd.f32 %v1958, %v2166
    %2168 = vmatmul.f32.gmra.mxu0 %v1282
    %v2169 = vpop.f32.mrf.mxu0
    %v2170 = vadd.f32 %v1961, %v2169
    %2171 = vmatmul.f32.gmra.mxu0 %v1291
    %v2172 = vpop.f32.mrf.mxu0
    %v2173 = vadd.f32 %v1964, %v2172
    %2174 = vmatmul.f32.gmra.mxu0 %v1300
    %v2175 = vpop.f32.mrf.mxu0
    %v2176 = vadd.f32 %v1967, %v2175
    %2177 = vmatmul.f32.gmra.mxu0 %v1309
    %v2178 = vpop.f32.mrf.mxu0
    %v2179 = vadd.f32 %v1970, %v2178
    %2180 = vmatmul.f32.gmra.mxu0 %v1318
    %v2181 = vpop.f32.mrf.mxu0
    %v2182 = vadd.f32 %v1973, %v2181
    %2183 = vmatmul.f32.gmra.mxu0 %v1327
    %v2184 = vpop.f32.mrf.mxu0
    %v2185 = vadd.f32 %v1976, %v2184
    %2186 = vmatmul.f32.gmra.mxu0 %v1336
    %v2187 = vpop.f32.mrf.mxu0
    %v2188 = vadd.f32 %v1979, %v2187
    %2189 = vmatmul.f32.gmra.mxu0 %v1345
    %v2190 = vpop.f32.mrf.mxu0
    %v2191 = vadd.f32 %v1982, %v2190
    %2192 = vmatmul.f32.gmra.mxu0 %v1354
    %v2193 = vpop.f32.mrf.mxu0
    %v2194 = vadd.f32 %v1985, %v2193
    %2195 = vmatmul.f32.gmra.mxu0 %v1363
    %v2196 = vpop.f32.mrf.mxu0
    %v2197 = vadd.f32 %v1988, %v2196
    %2198 = vmatmul.f32.gmra.mxu0 %v1372
    %v2199 = vpop.f32.mrf.mxu0
    %v2200 = vadd.f32 %v1991, %v2199
    %2201 = vmatmul.f32.gmra.mxu0 %v1381
    %v2202 = vpop.f32.mrf.mxu0
    %v2203 = vadd.f32 %v1994, %v2202
    %2204 = vmatmul.f32.gmra.mxu0 %v1390
    %v2205 = vpop.f32.mrf.mxu0
    %v2206 = vadd.f32 %v1997, %v2205
    %2207 = vmatmul.f32.gmra.mxu0 %v1399
    %v2208 = vpop.f32.mrf.mxu0
    %v2209 = vadd.f32 %v2000, %v2208
    %2210 = vmatmul.f32.gmra.mxu0 %v1408
    %v2211 = vpop.f32.mrf.mxu0
    %v2212 = vadd.f32 %v2003, %v2211
    %2213 = vmatmul.f32.gmra.mxu0 %v1417
    %v2214 = vpop.f32.mrf.mxu0
    %v2215 = vadd.f32 %v2006, %v2214
    %2216 = vmatmul.f32.gmra.mxu0 %v1426
    %v2217 = vpop.f32.mrf.mxu0
    %v2218 = vadd.f32 %v2009, %v2217
    %2219 = vmatmul.f32.gmra.mxu0 %v1435
    %v2220 = vpop.f32.mrf.mxu0
    %v2221 = vadd.f32 %v2012, %v2220
    %2222 = vmatmul.f32.gmra.mxu0 %v1444
    %v2223 = vpop.f32.mrf.mxu0
    %v2224 = vadd.f32 %v2015, %v2223
    %2225 = vmatmul.f32.gmra.mxu0 %v1453
    %v2226 = vpop.f32.mrf.mxu0
    %v2227 = vadd.f32 %v2018, %v2226
    %2228 = vmatmul.f32.gmra.mxu0 %v1462
    %v2229 = vpop.f32.mrf.mxu0
    %v2230 = vadd.f32 %v2021, %v2229
    %2231 = vmatmul.f32.gmra.mxu0 %v1471
    %v2232 = vpop.f32.mrf.mxu0
    %v2233 = vadd.f32 %v2024, %v2232
    %2234 = vmatmul.f32.gmra.mxu0 %v1480
    %v2235 = vpop.f32.mrf.mxu0
    %v2236 = vadd.f32 %v2027, %v2235
    %2237 = vmatmul.f32.gmra.mxu0 %v1489
    %v2238 = vpop.f32.mrf.mxu0
    %v2239 = vadd.f32 %v2030, %v2238
    %2240 = vmatmul.f32.gmra.mxu0 %v1498
    %v2241 = vpop.f32.mrf.mxu0
    %v2242 = vadd.f32 %v2033, %v2241
    %2243 = vmatmul.f32.gmra.mxu0 %v1507
    %v2244 = vpop.f32.mrf.mxu0
    %v2245 = vadd.f32 %v2036, %v2244
    %2246 = vmatmul.f32.gmra.mxu0 %v1516
    %v2247 = vpop.f32.mrf.mxu0
    %v2248 = vadd.f32 %v2039, %v2247
    %2249 = vmatmul.f32.gmra.mxu0 %v1525
    %v2250 = vpop.f32.mrf.mxu0
    %v2251 = vadd.f32 %v2042, %v2250
    %2252 = vmatmul.f32.gmra.mxu0 %v1534
    %v2253 = vpop.f32.mrf.mxu0
    %v2254 = vadd.f32 %v2045, %v2253
    %2255 = vmatmul.f32.gmra.mxu0 %v1543
    %v2256 = vpop.f32.mrf.mxu0
    %v2257 = vadd.f32 %v2048, %v2256
    %2258 = vmatmul.f32.gmra.mxu0 %v1552
    %v2259 = vpop.f32.mrf.mxu0
    %v2260 = vadd.f32 %v2051, %v2259
    %2261 = vmatmul.f32.gmra.mxu0 %v1561
    %v2262 = vpop.f32.mrf.mxu0
    %v2263 = vadd.f32 %v2054, %v2262
    %2264 = vmatmul.f32.gmra.mxu0 %v1570
    %v2265 = vpop.f32.mrf.mxu0
    %v2266 = vadd.f32 %v2057, %v2265
    %2267 = vmatmul.f32.gmra.mxu0 %v1579
    %v2268 = vpop.f32.mrf.mxu0
    %v2269 = vadd.f32 %v2060, %v2268
    %2270 = vmatmul.f32.gmra.mxu0 %v1588
    %v2271 = vpop.f32.mrf.mxu0
    %v2272 = vadd.f32 %v2063, %v2271
    %2273 = vmatmul.f32.gmra.mxu0 %v1597
    %v2274 = vpop.f32.mrf.mxu0
    %v2275 = vadd.f32 %v2066, %v2274
    %2276 = vmatmul.f32.gmra.mxu0 %v1606
    %v2277 = vpop.f32.mrf.mxu0
    %v2278 = vadd.f32 %v2069, %v2277
    %2279 = vmatmul.f32.gmra.mxu0 %v1615
    %v2280 = vpop.f32.mrf.mxu0
    %v2281 = vadd.f32 %v2072, %v2280
    %2282 = vmatmul.f32.gmra.mxu0 %v1624
    %v2283 = vpop.f32.mrf.mxu0
    %v2284 = vadd.f32 %v2075, %v2283
    %2285 = vmatmul.f32.gmra.mxu0 %v1633
    %v2286 = vpop.f32.mrf.mxu0
    %v2287 = vadd.f32 %v2078, %v2286
    %2288 = vmatmul.f32.gmra.mxu0 %v1642
    %v2289 = vpop.f32.mrf.mxu0
    %v2290 = vadd.f32 %v2081, %v2289
    %2291 = vmatmul.f32.gmra.mxu0 %v1651
    %v2292 = vpop.f32.mrf.mxu0
    %v2293 = vadd.f32 %v2084, %v2292
    %2294 = vmatmul.f32.gmra.mxu0 %v1660
    %v2295 = vpop.f32.mrf.mxu0
    %v2296 = vadd.f32 %v2087, %v2295
    %2297 = vmatmul.f32.gmra.mxu0 %v1669
    %v2298 = vpop.f32.mrf.mxu0
    %v2299 = vadd.f32 %v2090, %v2298
    %2300 = vmatmul.f32.gmra.mxu0 %v1678
    %v2301 = vpop.f32.mrf.mxu0
    %v2302 = vadd.f32 %v2093, %v2301
    %2303 = vmatmul.f32.gmra.mxu0 %v1687
    %v2304 = vpop.f32.mrf.mxu0
    %v2305 = vadd.f32 %v2096, %v2304
    %2306 = vmatmul.f32.gmra.mxu0 %v1696
    %v2307 = vpop.f32.mrf.mxu0
    %v2308 = vadd.f32 %v2099, %v2307
    %2309 = vmatmul.f32.gmra.mxu0 %v1705
    %v2310 = vpop.f32.mrf.mxu0
    %v2311 = vadd.f32 %v2102, %v2310
    %2312 = vmatmul.f32.gmra.mxu0 %v1714
    %v2313 = vpop.f32.mrf.mxu0
    %v2314 = vadd.f32 %v2105, %v2313
    %2315 = vmatmul.f32.gmra.mxu0 %v1723
    %v2316 = vpop.f32.mrf.mxu0
    %v2317 = vadd.f32 %v2108, %v2316
    %2318 = vmatmul.f32.gmra.mxu0 %v1732
    %v2319 = vpop.f32.mrf.mxu0
    %v2320 = vadd.f32 %v2111, %v2319
    %2321 = vmatmul.f32.gmra.mxu0 %v1741
    %v2322 = vpop.f32.mrf.mxu0
    %v2323 = vadd.f32 %v2114, %v2322
    %2324 = vmatmul.f32.gmra.mxu0 %v1750
    %v2325 = vpop.f32.mrf.mxu0
    %v2326 = vadd.f32 %v2117, %v2325
    %2327 = vmatmul.f32.gmra.mxu0 %v1759
    %v2328 = vpop.f32.mrf.mxu0
    %v2329 = vadd.f32 %v2120, %v2328
    %2330 = vdwg.mxu0
    %2331 = vmatpush.msra.mxu0 %v1814
    %2332 = vmatpush.msra.mxu0 %v1813
    %2333 = vmatpush.msra.mxu0 %v1812
    %2334 = vmatpush.msra.mxu0 %v1811
    %2335 = vmatpush.msra.mxu0 %v1810
    %2336 = vmatpush.msra.mxu0 %v1809
    %2337 = vmatpush.msra.mxu0 %v1808
    %2338 = vmatpush.msra.mxu0 %v1807
    %2339 = vmatpush.msra.mxu0 %v1806
    %2340 = vmatpush.msra.mxu0 %v1805
    %2341 = vmatpush.msra.mxu0 %v1804
    %2342 = vmatpush.msra.mxu0 %v1803
    %2343 = vmatpush.msra.mxu0 %v1802
    %2344 = vmatpush.msra.mxu0 %v1801
    %2345 = vmatpush.msra.mxu0 %v1800
    %2346 = vmatpush.msra.mxu0 %v1799
    %2347 = vmatmul.f32.gmra.mxu0 %v1193
    %v2348 = vpop.f32.mrf.mxu0
    %v2349 = vadd.f32 %v2140, %v2348
    %2350 = vmatmul.f32.gmra.mxu0 %v1202
    %v2351 = vpop.f32.mrf.mxu0
    %v2352 = vadd.f32 %v2143, %v2351
    %2353 = vmatmul.f32.gmra.mxu0 %v1211
    %v2354 = vpop.f32.mrf.mxu0
    %v2355 = vadd.f32 %v2146, %v2354
    %2356 = vmatmul.f32.gmra.mxu0 %v1220
    %v2357 = vpop.f32.mrf.mxu0
    %v2358 = vadd.f32 %v2149, %v2357
    %2359 = vmatmul.f32.gmra.mxu0 %v1229
    %v2360 = vpop.f32.mrf.mxu0
    %v2361 = vadd.f32 %v2152, %v2360
    %2362 = vmatmul.f32.gmra.mxu0 %v1238
    %v2363 = vpop.f32.mrf.mxu0
    %v2364 = vadd.f32 %v2155, %v2363
    %2365 = vmatmul.f32.gmra.mxu0 %v1247
    %v2366 = vpop.f32.mrf.mxu0
    %v2367 = vadd.f32 %v2158, %v2366
    %2368 = vmatmul.f32.gmra.mxu0 %v1256
    %v2369 = vpop.f32.mrf.mxu0
    %v2370 = vadd.f32 %v2161, %v2369
    %2371 = vmatmul.f32.gmra.mxu0 %v1265
    %v2372 = vpop.f32.mrf.mxu0
    %v2373 = vadd.f32 %v2164, %v2372
    %2374 = vmatmul.f32.gmra.mxu0 %v1274
    %v2375 = vpop.f32.mrf.mxu0
    %v2376 = vadd.f32 %v2167, %v2375
    %2377 = vmatmul.f32.gmra.mxu0 %v1283
    %v2378 = vpop.f32.mrf.mxu0
    %v2379 = vadd.f32 %v2170, %v2378
    %2380 = vmatmul.f32.gmra.mxu0 %v1292
    %v2381 = vpop.f32.mrf.mxu0
    %v2382 = vadd.f32 %v2173, %v2381
    %2383 = vmatmul.f32.gmra.mxu0 %v1301
    %v2384 = vpop.f32.mrf.mxu0
    %v2385 = vadd.f32 %v2176, %v2384
    %2386 = vmatmul.f32.gmra.mxu0 %v1310
    %v2387 = vpop.f32.mrf.mxu0
    %v2388 = vadd.f32 %v2179, %v2387
    %2389 = vmatmul.f32.gmra.mxu0 %v1319
    %v2390 = vpop.f32.mrf.mxu0
    %v2391 = vadd.f32 %v2182, %v2390
    %2392 = vmatmul.f32.gmra.mxu0 %v1328
    %v2393 = vpop.f32.mrf.mxu0
    %v2394 = vadd.f32 %v2185, %v2393
    %2395 = vmatmul.f32.gmra.mxu0 %v1337
    %v2396 = vpop.f32.mrf.mxu0
    %v2397 = vadd.f32 %v2188, %v2396
    %2398 = vmatmul.f32.gmra.mxu0 %v1346
    %v2399 = vpop.f32.mrf.mxu0
    %v2400 = vadd.f32 %v2191, %v2399
    %2401 = vmatmul.f32.gmra.mxu0 %v1355
    %v2402 = vpop.f32.mrf.mxu0
    %v2403 = vadd.f32 %v2194, %v2402
    %2404 = vmatmul.f32.gmra.mxu0 %v1364
    %v2405 = vpop.f32.mrf.mxu0
    %v2406 = vadd.f32 %v2197, %v2405
    %2407 = vmatmul.f32.gmra.mxu0 %v1373
    %v2408 = vpop.f32.mrf.mxu0
    %v2409 = vadd.f32 %v2200, %v2408
    %2410 = vmatmul.f32.gmra.mxu0 %v1382
    %v2411 = vpop.f32.mrf.mxu0
    %v2412 = vadd.f32 %v2203, %v2411
    %2413 = vmatmul.f32.gmra.mxu0 %v1391
    %v2414 = vpop.f32.mrf.mxu0
    %v2415 = vadd.f32 %v2206, %v2414
    %2416 = vmatmul.f32.gmra.mxu0 %v1400
    %v2417 = vpop.f32.mrf.mxu0
    %v2418 = vadd.f32 %v2209, %v2417
    %2419 = vmatmul.f32.gmra.mxu0 %v1409
    %v2420 = vpop.f32.mrf.mxu0
    %v2421 = vadd.f32 %v2212, %v2420
    %2422 = vmatmul.f32.gmra.mxu0 %v1418
    %v2423 = vpop.f32.mrf.mxu0
    %v2424 = vadd.f32 %v2215, %v2423
    %2425 = vmatmul.f32.gmra.mxu0 %v1427
    %v2426 = vpop.f32.mrf.mxu0
    %v2427 = vadd.f32 %v2218, %v2426
    %2428 = vmatmul.f32.gmra.mxu0 %v1436
    %v2429 = vpop.f32.mrf.mxu0
    %v2430 = vadd.f32 %v2221, %v2429
    %2431 = vmatmul.f32.gmra.mxu0 %v1445
    %v2432 = vpop.f32.mrf.mxu0
    %v2433 = vadd.f32 %v2224, %v2432
    %2434 = vmatmul.f32.gmra.mxu0 %v1454
    %v2435 = vpop.f32.mrf.mxu0
    %v2436 = vadd.f32 %v2227, %v2435
    %2437 = vmatmul.f32.gmra.mxu0 %v1463
    %v2438 = vpop.f32.mrf.mxu0
    %v2439 = vadd.f32 %v2230, %v2438
    %2440 = vmatmul.f32.gmra.mxu0 %v1472
    %v2441 = vpop.f32.mrf.mxu0
    %v2442 = vadd.f32 %v2233, %v2441
    %2443 = vmatmul.f32.gmra.mxu0 %v1481
    %v2444 = vpop.f32.mrf.mxu0
    %v2445 = vadd.f32 %v2236, %v2444
    %2446 = vmatmul.f32.gmra.mxu0 %v1490
    %v2447 = vpop.f32.mrf.mxu0
    %v2448 = vadd.f32 %v2239, %v2447
    %2449 = vmatmul.f32.gmra.mxu0 %v1499
    %v2450 = vpop.f32.mrf.mxu0
    %v2451 = vadd.f32 %v2242, %v2450
    %2452 = vmatmul.f32.gmra.mxu0 %v1508
    %v2453 = vpop.f32.mrf.mxu0
    %v2454 = vadd.f32 %v2245, %v2453
    %2455 = vmatmul.f32.gmra.mxu0 %v1517
    %v2456 = vpop.f32.mrf.mxu0
    %v2457 = vadd.f32 %v2248, %v2456
    %2458 = vmatmul.f32.gmra.mxu0 %v1526
    %v2459 = vpop.f32.mrf.mxu0
    %v2460 = vadd.f32 %v2251, %v2459
    %2461 = vmatmul.f32.gmra.mxu0 %v1535
    %v2462 = vpop.f32.mrf.mxu0
    %v2463 = vadd.f32 %v2254, %v2462
    %2464 = vmatmul.f32.gmra.mxu0 %v1544
    %v2465 = vpop.f32.mrf.mxu0
    %v2466 = vadd.f32 %v2257, %v2465
    %2467 = vmatmul.f32.gmra.mxu0 %v1553
    %v2468 = vpop.f32.mrf.mxu0
    %v2469 = vadd.f32 %v2260, %v2468
    %2470 = vmatmul.f32.gmra.mxu0 %v1562
    %v2471 = vpop.f32.mrf.mxu0
    %v2472 = vadd.f32 %v2263, %v2471
    %2473 = vmatmul.f32.gmra.mxu0 %v1571
    %v2474 = vpop.f32.mrf.mxu0
    %v2475 = vadd.f32 %v2266, %v2474
    %2476 = vmatmul.f32.gmra.mxu0 %v1580
    %v2477 = vpop.f32.mrf.mxu0
    %v2478 = vadd.f32 %v2269, %v2477
    %2479 = vmatmul.f32.gmra.mxu0 %v1589
    %v2480 = vpop.f32.mrf.mxu0
    %v2481 = vadd.f32 %v2272, %v2480
    %2482 = vmatmul.f32.gmra.mxu0 %v1598
    %v2483 = vpop.f32.mrf.mxu0
    %v2484 = vadd.f32 %v2275, %v2483
    %2485 = vmatmul.f32.gmra.mxu0 %v1607
    %v2486 = vpop.f32.mrf.mxu0
    %v2487 = vadd.f32 %v2278, %v2486
    %2488 = vmatmul.f32.gmra.mxu0 %v1616
    %v2489 = vpop.f32.mrf.mxu0
    %v2490 = vadd.f32 %v2281, %v2489
    %2491 = vmatmul.f32.gmra.mxu0 %v1625
    %v2492 = vpop.f32.mrf.mxu0
    %v2493 = vadd.f32 %v2284, %v2492
    %2494 = vmatmul.f32.gmra.mxu0 %v1634
    %v2495 = vpop.f32.mrf.mxu0
    %v2496 = vadd.f32 %v2287, %v2495
    %2497 = vmatmul.f32.gmra.mxu0 %v1643
    %v2498 = vpop.f32.mrf.mxu0
    %v2499 = vadd.f32 %v2290, %v2498
    %2500 = vmatmul.f32.gmra.mxu0 %v1652
    %v2501 = vpop.f32.mrf.mxu0
    %v2502 = vadd.f32 %v2293, %v2501
    %2503 = vmatmul.f32.gmra.mxu0 %v1661
    %v2504 = vpop.f32.mrf.mxu0
    %v2505 = vadd.f32 %v2296, %v2504
    %2506 = vmatmul.f32.gmra.mxu0 %v1670
    %v2507 = vpop.f32.mrf.mxu0
    %v2508 = vadd.f32 %v2299, %v2507
    %2509 = vmatmul.f32.gmra.mxu0 %v1679
    %v2510 = vpop.f32.mrf.mxu0
    %v2511 = vadd.f32 %v2302, %v2510
    %2512 = vmatmul.f32.gmra.mxu0 %v1688
    %v2513 = vpop.f32.mrf.mxu0
    %v2514 = vadd.f32 %v2305, %v2513
    %2515 = vmatmul.f32.gmra.mxu0 %v1697
    %v2516 = vpop.f32.mrf.mxu0
    %v2517 = vadd.f32 %v2308, %v2516
    %2518 = vmatmul.f32.gmra.mxu0 %v1706
    %v2519 = vpop.f32.mrf.mxu0
    %v2520 = vadd.f32 %v2311, %v2519
    %2521 = vmatmul.f32.gmra.mxu0 %v1715
    %v2522 = vpop.f32.mrf.mxu0
    %v2523 = vadd.f32 %v2314, %v2522
    %2524 = vmatmul.f32.gmra.mxu0 %v1724
    %v2525 = vpop.f32.mrf.mxu0
    %v2526 = vadd.f32 %v2317, %v2525
    %2527 = vmatmul.f32.gmra.mxu0 %v1733
    %v2528 = vpop.f32.mrf.mxu0
    %v2529 = vadd.f32 %v2320, %v2528
    %2530 = vmatmul.f32.gmra.mxu0 %v1742
    %v2531 = vpop.f32.mrf.mxu0
    %v2532 = vadd.f32 %v2323, %v2531
    %2533 = vmatmul.f32.gmra.mxu0 %v1751
    %v2534 = vpop.f32.mrf.mxu0
    %v2535 = vadd.f32 %v2326, %v2534
    %2536 = vmatmul.f32.gmra.mxu0 %v1760
    %v2537 = vpop.f32.mrf.mxu0
    %v2538 = vadd.f32 %v2329, %v2537
    %2539 = vdwg.mxu0
    %2540 = vmatpush.msra.mxu0 %v1830
    %2541 = vmatpush.msra.mxu0 %v1829
    %2542 = vmatpush.msra.mxu0 %v1828
    %2543 = vmatpush.msra.mxu0 %v1827
    %2544 = vmatpush.msra.mxu0 %v1826
    %2545 = vmatpush.msra.mxu0 %v1825
    %2546 = vmatpush.msra.mxu0 %v1824
    %2547 = vmatpush.msra.mxu0 %v1823
    %2548 = vmatpush.msra.mxu0 %v1822
    %2549 = vmatpush.msra.mxu0 %v1821
    %2550 = vmatpush.msra.mxu0 %v1820
    %2551 = vmatpush.msra.mxu0 %v1819
    %2552 = vmatpush.msra.mxu0 %v1818
    %2553 = vmatpush.msra.mxu0 %v1817
    %2554 = vmatpush.msra.mxu0 %v1816
    %2555 = vmatpush.msra.mxu0 %v1815
    %2556 = vmatmul.f32.gmra.mxu0 %v1194
    %v2557 = vpop.f32.mrf.mxu0
    %v2558 = vadd.f32 %v2349, %v2557
    %2559 = vmatmul.f32.gmra.mxu0 %v1203
    %v2560 = vpop.f32.mrf.mxu0
    %v2561 = vadd.f32 %v2352, %v2560
    %2562 = vmatmul.f32.gmra.mxu0 %v1212
    %v2563 = vpop.f32.mrf.mxu0
    %v2564 = vadd.f32 %v2355, %v2563
    %2565 = vmatmul.f32.gmra.mxu0 %v1221
    %v2566 = vpop.f32.mrf.mxu0
    %v2567 = vadd.f32 %v2358, %v2566
    %2568 = vmatmul.f32.gmra.mxu0 %v1230
    %v2569 = vpop.f32.mrf.mxu0
    %v2570 = vadd.f32 %v2361, %v2569
    %2571 = vmatmul.f32.gmra.mxu0 %v1239
    %v2572 = vpop.f32.mrf.mxu0
    %v2573 = vadd.f32 %v2364, %v2572
    %2574 = vmatmul.f32.gmra.mxu0 %v1248
    %v2575 = vpop.f32.mrf.mxu0
    %v2576 = vadd.f32 %v2367, %v2575
    %2577 = vmatmul.f32.gmra.mxu0 %v1257
    %v2578 = vpop.f32.mrf.mxu0
    %v2579 = vadd.f32 %v2370, %v2578
    %2580 = vmatmul.f32.gmra.mxu0 %v1266
    %v2581 = vpop.f32.mrf.mxu0
    %v2582 = vadd.f32 %v2373, %v2581
    %2583 = vmatmul.f32.gmra.mxu0 %v1275
    %v2584 = vpop.f32.mrf.mxu0
    %v2585 = vadd.f32 %v2376, %v2584
    %2586 = vmatmul.f32.gmra.mxu0 %v1284
    %v2587 = vpop.f32.mrf.mxu0
    %v2588 = vadd.f32 %v2379, %v2587
    %2589 = vmatmul.f32.gmra.mxu0 %v1293
    %v2590 = vpop.f32.mrf.mxu0
    %v2591 = vadd.f32 %v2382, %v2590
    %2592 = vmatmul.f32.gmra.mxu0 %v1302
    %v2593 = vpop.f32.mrf.mxu0
    %v2594 = vadd.f32 %v2385, %v2593
    %2595 = vmatmul.f32.gmra.mxu0 %v1311
    %v2596 = vpop.f32.mrf.mxu0
    %v2597 = vadd.f32 %v2388, %v2596
    %2598 = vmatmul.f32.gmra.mxu0 %v1320
    %v2599 = vpop.f32.mrf.mxu0
    %v2600 = vadd.f32 %v2391, %v2599
    %2601 = vmatmul.f32.gmra.mxu0 %v1329
    %v2602 = vpop.f32.mrf.mxu0
    %v2603 = vadd.f32 %v2394, %v2602
    %2604 = vmatmul.f32.gmra.mxu0 %v1338
    %v2605 = vpop.f32.mrf.mxu0
    %v2606 = vadd.f32 %v2397, %v2605
    %2607 = vmatmul.f32.gmra.mxu0 %v1347
    %v2608 = vpop.f32.mrf.mxu0
    %v2609 = vadd.f32 %v2400, %v2608
    %2610 = vmatmul.f32.gmra.mxu0 %v1356
    %v2611 = vpop.f32.mrf.mxu0
    %v2612 = vadd.f32 %v2403, %v2611
    %2613 = vmatmul.f32.gmra.mxu0 %v1365
    %v2614 = vpop.f32.mrf.mxu0
    %v2615 = vadd.f32 %v2406, %v2614
    %2616 = vmatmul.f32.gmra.mxu0 %v1374
    %v2617 = vpop.f32.mrf.mxu0
    %v2618 = vadd.f32 %v2409, %v2617
    %2619 = vmatmul.f32.gmra.mxu0 %v1383
    %v2620 = vpop.f32.mrf.mxu0
    %v2621 = vadd.f32 %v2412, %v2620
    %2622 = vmatmul.f32.gmra.mxu0 %v1392
    %v2623 = vpop.f32.mrf.mxu0
    %v2624 = vadd.f32 %v2415, %v2623
    %2625 = vmatmul.f32.gmra.mxu0 %v1401
    %v2626 = vpop.f32.mrf.mxu0
    %v2627 = vadd.f32 %v2418, %v2626
    %2628 = vmatmul.f32.gmra.mxu0 %v1410
    %v2629 = vpop.f32.mrf.mxu0
    %v2630 = vadd.f32 %v2421, %v2629
    %2631 = vmatmul.f32.gmra.mxu0 %v1419
    %v2632 = vpop.f32.mrf.mxu0
    %v2633 = vadd.f32 %v2424, %v2632
    %2634 = vmatmul.f32.gmra.mxu0 %v1428
    %v2635 = vpop.f32.mrf.mxu0
    %v2636 = vadd.f32 %v2427, %v2635
    %2637 = vmatmul.f32.gmra.mxu0 %v1437
    %v2638 = vpop.f32.mrf.mxu0
    %v2639 = vadd.f32 %v2430, %v2638
    %2640 = vmatmul.f32.gmra.mxu0 %v1446
    %v2641 = vpop.f32.mrf.mxu0
    %v2642 = vadd.f32 %v2433, %v2641
    %2643 = vmatmul.f32.gmra.mxu0 %v1455
    %v2644 = vpop.f32.mrf.mxu0
    %v2645 = vadd.f32 %v2436, %v2644
    %2646 = vmatmul.f32.gmra.mxu0 %v1464
    %v2647 = vpop.f32.mrf.mxu0
    %v2648 = vadd.f32 %v2439, %v2647
    %2649 = vmatmul.f32.gmra.mxu0 %v1473
    %v2650 = vpop.f32.mrf.mxu0
    %v2651 = vadd.f32 %v2442, %v2650
    %2652 = vmatmul.f32.gmra.mxu0 %v1482
    %v2653 = vpop.f32.mrf.mxu0
    %v2654 = vadd.f32 %v2445, %v2653
    %2655 = vmatmul.f32.gmra.mxu0 %v1491
    %v2656 = vpop.f32.mrf.mxu0
    %v2657 = vadd.f32 %v2448, %v2656
    %2658 = vmatmul.f32.gmra.mxu0 %v1500
    %v2659 = vpop.f32.mrf.mxu0
    %v2660 = vadd.f32 %v2451, %v2659
    %2661 = vmatmul.f32.gmra.mxu0 %v1509
    %v2662 = vpop.f32.mrf.mxu0
    %v2663 = vadd.f32 %v2454, %v2662
    %2664 = vmatmul.f32.gmra.mxu0 %v1518
    %v2665 = vpop.f32.mrf.mxu0
    %v2666 = vadd.f32 %v2457, %v2665
    %2667 = vmatmul.f32.gmra.mxu0 %v1527
    %v2668 = vpop.f32.mrf.mxu0
    %v2669 = vadd.f32 %v2460, %v2668
    %2670 = vmatmul.f32.gmra.mxu0 %v1536
    %v2671 = vpop.f32.mrf.mxu0
    %v2672 = vadd.f32 %v2463, %v2671
    %2673 = vmatmul.f32.gmra.mxu0 %v1545
    %v2674 = vpop.f32.mrf.mxu0
    %v2675 = vadd.f32 %v2466, %v2674
    %2676 = vmatmul.f32.gmra.mxu0 %v1554
    %v2677 = vpop.f32.mrf.mxu0
    %v2678 = vadd.f32 %v2469, %v2677
    %2679 = vmatmul.f32.gmra.mxu0 %v1563
    %v2680 = vpop.f32.mrf.mxu0
    %v2681 = vadd.f32 %v2472, %v2680
    %2682 = vmatmul.f32.gmra.mxu0 %v1572
    %v2683 = vpop.f32.mrf.mxu0
    %v2684 = vadd.f32 %v2475, %v2683
    %2685 = vmatmul.f32.gmra.mxu0 %v1581
    %v2686 = vpop.f32.mrf.mxu0
    %v2687 = vadd.f32 %v2478, %v2686
    %2688 = vmatmul.f32.gmra.mxu0 %v1590
    %v2689 = vpop.f32.mrf.mxu0
    %v2690 = vadd.f32 %v2481, %v2689
    %2691 = vmatmul.f32.gmra.mxu0 %v1599
    %v2692 = vpop.f32.mrf.mxu0
    %v2693 = vadd.f32 %v2484, %v2692
    %2694 = vmatmul.f32.gmra.mxu0 %v1608
    %v2695 = vpop.f32.mrf.mxu0
    %v2696 = vadd.f32 %v2487, %v2695
    %2697 = vmatmul.f32.gmra.mxu0 %v1617
    %v2698 = vpop.f32.mrf.mxu0
    %v2699 = vadd.f32 %v2490, %v2698
    %2700 = vmatmul.f32.gmra.mxu0 %v1626
    %v2701 = vpop.f32.mrf.mxu0
    %v2702 = vadd.f32 %v2493, %v2701
    %2703 = vmatmul.f32.gmra.mxu0 %v1635
    %v2704 = vpop.f32.mrf.mxu0
    %v2705 = vadd.f32 %v2496, %v2704
    %2706 = vmatmul.f32.gmra.mxu0 %v1644
    %v2707 = vpop.f32.mrf.mxu0
    %v2708 = vadd.f32 %v2499, %v2707
    %2709 = vmatmul.f32.gmra.mxu0 %v1653
    %v2710 = vpop.f32.mrf.mxu0
    %v2711 = vadd.f32 %v2502, %v2710
    %2712 = vmatmul.f32.gmra.mxu0 %v1662
    %v2713 = vpop.f32.mrf.mxu0
    %v2714 = vadd.f32 %v2505, %v2713
    %2715 = vmatmul.f32.gmra.mxu0 %v1671
    %v2716 = vpop.f32.mrf.mxu0
    %v2717 = vadd.f32 %v2508, %v2716
    %2718 = vmatmul.f32.gmra.mxu0 %v1680
    %v2719 = vpop.f32.mrf.mxu0
    %v2720 = vadd.f32 %v2511, %v2719
    %2721 = vmatmul.f32.gmra.mxu0 %v1689
    %v2722 = vpop.f32.mrf.mxu0
    %v2723 = vadd.f32 %v2514, %v2722
    %2724 = vmatmul.f32.gmra.mxu0 %v1698
    %v2725 = vpop.f32.mrf.mxu0
    %v2726 = vadd.f32 %v2517, %v2725
    %2727 = vmatmul.f32.gmra.mxu0 %v1707
    %v2728 = vpop.f32.mrf.mxu0
    %v2729 = vadd.f32 %v2520, %v2728
    %2730 = vmatmul.f32.gmra.mxu0 %v1716
    %v2731 = vpop.f32.mrf.mxu0
    %v2732 = vadd.f32 %v2523, %v2731
    %2733 = vmatmul.f32.gmra.mxu0 %v1725
    %v2734 = vpop.f32.mrf.mxu0
    %v2735 = vadd.f32 %v2526, %v2734
    %2736 = vmatmul.f32.gmra.mxu0 %v1734
    %v2737 = vpop.f32.mrf.mxu0
    %v2738 = vadd.f32 %v2529, %v2737
    %2739 = vmatmul.f32.gmra.mxu0 %v1743
    %v2740 = vpop.f32.mrf.mxu0
    %v2741 = vadd.f32 %v2532, %v2740
    %2742 = vmatmul.f32.gmra.mxu0 %v1752
    %v2743 = vpop.f32.mrf.mxu0
    %v2744 = vadd.f32 %v2535, %v2743
    %2745 = vmatmul.f32.gmra.mxu0 %v1761
    %v2746 = vpop.f32.mrf.mxu0
    %v2747 = vadd.f32 %v2538, %v2746
    %2748 = vdwg.mxu0
    %2749 = vmatpush.msra.mxu0 %v1846
    %2750 = vmatpush.msra.mxu0 %v1845
    %2751 = vmatpush.msra.mxu0 %v1844
    %2752 = vmatpush.msra.mxu0 %v1843
    %2753 = vmatpush.msra.mxu0 %v1842
    %2754 = vmatpush.msra.mxu0 %v1841
    %2755 = vmatpush.msra.mxu0 %v1840
    %2756 = vmatpush.msra.mxu0 %v1839
    %2757 = vmatpush.msra.mxu0 %v1838
    %2758 = vmatpush.msra.mxu0 %v1837
    %2759 = vmatpush.msra.mxu0 %v1836
    %2760 = vmatpush.msra.mxu0 %v1835
    %2761 = vmatpush.msra.mxu0 %v1834
    %2762 = vmatpush.msra.mxu0 %v1833
    %2763 = vmatpush.msra.mxu0 %v1832
    %2764 = vmatpush.msra.mxu0 %v1831
    %2765 = vmatmul.f32.gmra.mxu0 %v1195
    %v2766 = vpop.f32.mrf.mxu0
    %v2767 = vadd.f32 %v2558, %v2766
    %2768 = vmatmul.f32.gmra.mxu0 %v1204
    %v2769 = vpop.f32.mrf.mxu0
    %v2770 = vadd.f32 %v2561, %v2769
    %2771 = vmatmul.f32.gmra.mxu0 %v1213
    %v2772 = vpop.f32.mrf.mxu0
    %v2773 = vadd.f32 %v2564, %v2772
    %2774 = vmatmul.f32.gmra.mxu0 %v1222
    %v2775 = vpop.f32.mrf.mxu0
    %v2776 = vadd.f32 %v2567, %v2775
    %2777 = vmatmul.f32.gmra.mxu0 %v1231
    %v2778 = vpop.f32.mrf.mxu0
    %v2779 = vadd.f32 %v2570, %v2778
    %2780 = vmatmul.f32.gmra.mxu0 %v1240
    %v2781 = vpop.f32.mrf.mxu0
    %v2782 = vadd.f32 %v2573, %v2781
    %2783 = vmatmul.f32.gmra.mxu0 %v1249
    %v2784 = vpop.f32.mrf.mxu0
    %v2785 = vadd.f32 %v2576, %v2784
    %2786 = vmatmul.f32.gmra.mxu0 %v1258
    %v2787 = vpop.f32.mrf.mxu0
    %v2788 = vadd.f32 %v2579, %v2787
    %2789 = vmatmul.f32.gmra.mxu0 %v1267
    %v2790 = vpop.f32.mrf.mxu0
    %v2791 = vadd.f32 %v2582, %v2790
    %2792 = vmatmul.f32.gmra.mxu0 %v1276
    %v2793 = vpop.f32.mrf.mxu0
    %v2794 = vadd.f32 %v2585, %v2793
    %2795 = vmatmul.f32.gmra.mxu0 %v1285
    %v2796 = vpop.f32.mrf.mxu0
    %v2797 = vadd.f32 %v2588, %v2796
    %2798 = vmatmul.f32.gmra.mxu0 %v1294
    %v2799 = vpop.f32.mrf.mxu0
    %v2800 = vadd.f32 %v2591, %v2799
    %2801 = vmatmul.f32.gmra.mxu0 %v1303
    %v2802 = vpop.f32.mrf.mxu0
    %v2803 = vadd.f32 %v2594, %v2802
    %2804 = vmatmul.f32.gmra.mxu0 %v1312
    %v2805 = vpop.f32.mrf.mxu0
    %v2806 = vadd.f32 %v2597, %v2805
    %2807 = vmatmul.f32.gmra.mxu0 %v1321
    %v2808 = vpop.f32.mrf.mxu0
    %v2809 = vadd.f32 %v2600, %v2808
    %2810 = vmatmul.f32.gmra.mxu0 %v1330
    %v2811 = vpop.f32.mrf.mxu0
    %v2812 = vadd.f32 %v2603, %v2811
    %2813 = vmatmul.f32.gmra.mxu0 %v1339
    %v2814 = vpop.f32.mrf.mxu0
    %v2815 = vadd.f32 %v2606, %v2814
    %2816 = vmatmul.f32.gmra.mxu0 %v1348
    %v2817 = vpop.f32.mrf.mxu0
    %v2818 = vadd.f32 %v2609, %v2817
    %2819 = vmatmul.f32.gmra.mxu0 %v1357
    %v2820 = vpop.f32.mrf.mxu0
    %v2821 = vadd.f32 %v2612, %v2820
    %2822 = vmatmul.f32.gmra.mxu0 %v1366
    %v2823 = vpop.f32.mrf.mxu0
    %v2824 = vadd.f32 %v2615, %v2823
    %2825 = vmatmul.f32.gmra.mxu0 %v1375
    %v2826 = vpop.f32.mrf.mxu0
    %v2827 = vadd.f32 %v2618, %v2826
    %2828 = vmatmul.f32.gmra.mxu0 %v1384
    %v2829 = vpop.f32.mrf.mxu0
    %v2830 = vadd.f32 %v2621, %v2829
    %2831 = vmatmul.f32.gmra.mxu0 %v1393
    %v2832 = vpop.f32.mrf.mxu0
    %v2833 = vadd.f32 %v2624, %v2832
    %2834 = vmatmul.f32.gmra.mxu0 %v1402
    %v2835 = vpop.f32.mrf.mxu0
    %v2836 = vadd.f32 %v2627, %v2835
    %2837 = vmatmul.f32.gmra.mxu0 %v1411
    %v2838 = vpop.f32.mrf.mxu0
    %v2839 = vadd.f32 %v2630, %v2838
    %2840 = vmatmul.f32.gmra.mxu0 %v1420
    %v2841 = vpop.f32.mrf.mxu0
    %v2842 = vadd.f32 %v2633, %v2841
    %2843 = vmatmul.f32.gmra.mxu0 %v1429
    %v2844 = vpop.f32.mrf.mxu0
    %v2845 = vadd.f32 %v2636, %v2844
    %2846 = vmatmul.f32.gmra.mxu0 %v1438
    %v2847 = vpop.f32.mrf.mxu0
    %v2848 = vadd.f32 %v2639, %v2847
    %2849 = vmatmul.f32.gmra.mxu0 %v1447
    %v2850 = vpop.f32.mrf.mxu0
    %v2851 = vadd.f32 %v2642, %v2850
    %2852 = vmatmul.f32.gmra.mxu0 %v1456
    %v2853 = vpop.f32.mrf.mxu0
    %v2854 = vadd.f32 %v2645, %v2853
    %2855 = vmatmul.f32.gmra.mxu0 %v1465
    %v2856 = vpop.f32.mrf.mxu0
    %v2857 = vadd.f32 %v2648, %v2856
    %2858 = vmatmul.f32.gmra.mxu0 %v1474
    %v2859 = vpop.f32.mrf.mxu0
    %v2860 = vadd.f32 %v2651, %v2859
    %2861 = vmatmul.f32.gmra.mxu0 %v1483
    %v2862 = vpop.f32.mrf.mxu0
    %v2863 = vadd.f32 %v2654, %v2862
    %2864 = vmatmul.f32.gmra.mxu0 %v1492
    %v2865 = vpop.f32.mrf.mxu0
    %v2866 = vadd.f32 %v2657, %v2865
    %2867 = vmatmul.f32.gmra.mxu0 %v1501
    %v2868 = vpop.f32.mrf.mxu0
    %v2869 = vadd.f32 %v2660, %v2868
    %2870 = vmatmul.f32.gmra.mxu0 %v1510
    %v2871 = vpop.f32.mrf.mxu0
    %v2872 = vadd.f32 %v2663, %v2871
    %2873 = vmatmul.f32.gmra.mxu0 %v1519
    %v2874 = vpop.f32.mrf.mxu0
    %v2875 = vadd.f32 %v2666, %v2874
    %2876 = vmatmul.f32.gmra.mxu0 %v1528
    %v2877 = vpop.f32.mrf.mxu0
    %v2878 = vadd.f32 %v2669, %v2877
    %2879 = vmatmul.f32.gmra.mxu0 %v1537
    %v2880 = vpop.f32.mrf.mxu0
    %v2881 = vadd.f32 %v2672, %v2880
    %2882 = vmatmul.f32.gmra.mxu0 %v1546
    %v2883 = vpop.f32.mrf.mxu0
    %v2884 = vadd.f32 %v2675, %v2883
    %2885 = vmatmul.f32.gmra.mxu0 %v1555
    %v2886 = vpop.f32.mrf.mxu0
    %v2887 = vadd.f32 %v2678, %v2886
    %2888 = vmatmul.f32.gmra.mxu0 %v1564
    %v2889 = vpop.f32.mrf.mxu0
    %v2890 = vadd.f32 %v2681, %v2889
    %2891 = vmatmul.f32.gmra.mxu0 %v1573
    %v2892 = vpop.f32.mrf.mxu0
    %v2893 = vadd.f32 %v2684, %v2892
    %2894 = vmatmul.f32.gmra.mxu0 %v1582
    %v2895 = vpop.f32.mrf.mxu0
    %v2896 = vadd.f32 %v2687, %v2895
    %2897 = vmatmul.f32.gmra.mxu0 %v1591
    %v2898 = vpop.f32.mrf.mxu0
    %v2899 = vadd.f32 %v2690, %v2898
    %2900 = vmatmul.f32.gmra.mxu0 %v1600
    %v2901 = vpop.f32.mrf.mxu0
    %v2902 = vadd.f32 %v2693, %v2901
    %2903 = vmatmul.f32.gmra.mxu0 %v1609
    %v2904 = vpop.f32.mrf.mxu0
    %v2905 = vadd.f32 %v2696, %v2904
    %2906 = vmatmul.f32.gmra.mxu0 %v1618
    %v2907 = vpop.f32.mrf.mxu0
    %v2908 = vadd.f32 %v2699, %v2907
    %2909 = vmatmul.f32.gmra.mxu0 %v1627
    %v2910 = vpop.f32.mrf.mxu0
    %v2911 = vadd.f32 %v2702, %v2910
    %2912 = vmatmul.f32.gmra.mxu0 %v1636
    %v2913 = vpop.f32.mrf.mxu0
    %v2914 = vadd.f32 %v2705, %v2913
    %2915 = vmatmul.f32.gmra.mxu0 %v1645
    %v2916 = vpop.f32.mrf.mxu0
    %v2917 = vadd.f32 %v2708, %v2916
    %2918 = vmatmul.f32.gmra.mxu0 %v1654
    %v2919 = vpop.f32.mrf.mxu0
    %v2920 = vadd.f32 %v2711, %v2919
    %2921 = vmatmul.f32.gmra.mxu0 %v1663
    %v2922 = vpop.f32.mrf.mxu0
    %v2923 = vadd.f32 %v2714, %v2922
    %2924 = vmatmul.f32.gmra.mxu0 %v1672
    %v2925 = vpop.f32.mrf.mxu0
    %v2926 = vadd.f32 %v2717, %v2925
    %2927 = vmatmul.f32.gmra.mxu0 %v1681
    %v2928 = vpop.f32.mrf.mxu0
    %v2929 = vadd.f32 %v2720, %v2928
    %2930 = vmatmul.f32.gmra.mxu0 %v1690
    %v2931 = vpop.f32.mrf.mxu0
    %v2932 = vadd.f32 %v2723, %v2931
    %2933 = vmatmul.f32.gmra.mxu0 %v1699
    %v2934 = vpop.f32.mrf.mxu0
    %v2935 = vadd.f32 %v2726, %v2934
    %2936 = vmatmul.f32.gmra.mxu0 %v1708
    %v2937 = vpop.f32.mrf.mxu0
    %v2938 = vadd.f32 %v2729, %v2937
    %2939 = vmatmul.f32.gmra.mxu0 %v1717
    %v2940 = vpop.f32.mrf.mxu0
    %v2941 = vadd.f32 %v2732, %v2940
    %2942 = vmatmul.f32.gmra.mxu0 %v1726
    %v2943 = vpop.f32.mrf.mxu0
    %v2944 = vadd.f32 %v2735, %v2943
    %2945 = vmatmul.f32.gmra.mxu0 %v1735
    %v2946 = vpop.f32.mrf.mxu0
    %v2947 = vadd.f32 %v2738, %v2946
    %2948 = vmatmul.f32.gmra.mxu0 %v1744
    %v2949 = vpop.f32.mrf.mxu0
    %v2950 = vadd.f32 %v2741, %v2949
    %2951 = vmatmul.f32.gmra.mxu0 %v1753
    %v2952 = vpop.f32.mrf.mxu0
    %v2953 = vadd.f32 %v2744, %v2952
    %2954 = vmatmul.f32.gmra.mxu0 %v1762
    %v2955 = vpop.f32.mrf.mxu0
    %v2956 = vadd.f32 %v2747, %v2955
    %2957 = vdwg.mxu0
    %2958 = vmatpush.msra.mxu0 %v1862
    %2959 = vmatpush.msra.mxu0 %v1861
    %2960 = vmatpush.msra.mxu0 %v1860
    %2961 = vmatpush.msra.mxu0 %v1859
    %2962 = vmatpush.msra.mxu0 %v1858
    %2963 = vmatpush.msra.mxu0 %v1857
    %2964 = vmatpush.msra.mxu0 %v1856
    %2965 = vmatpush.msra.mxu0 %v1855
    %2966 = vmatpush.msra.mxu0 %v1854
    %2967 = vmatpush.msra.mxu0 %v1853
    %2968 = vmatpush.msra.mxu0 %v1852
    %2969 = vmatpush.msra.mxu0 %v1851
    %2970 = vmatpush.msra.mxu0 %v1850
    %2971 = vmatpush.msra.mxu0 %v1849
    %2972 = vmatpush.msra.mxu0 %v1848
    %2973 = vmatpush.msra.mxu0 %v1847
    %2974 = vmatmul.f32.gmra.mxu0 %v1196
    %v2975 = vpop.f32.mrf.mxu0
    %v2976 = vadd.f32 %v2767, %v2975
    %2977 = vmatmul.f32.gmra.mxu0 %v1205
    %v2978 = vpop.f32.mrf.mxu0
    %v2979 = vadd.f32 %v2770, %v2978
    %2980 = vmatmul.f32.gmra.mxu0 %v1214
    %v2981 = vpop.f32.mrf.mxu0
    %v2982 = vadd.f32 %v2773, %v2981
    %2983 = vmatmul.f32.gmra.mxu0 %v1223
    %v2984 = vpop.f32.mrf.mxu0
    %v2985 = vadd.f32 %v2776, %v2984
    %2986 = vmatmul.f32.gmra.mxu0 %v1232
    %v2987 = vpop.f32.mrf.mxu0
    %v2988 = vadd.f32 %v2779, %v2987
    %2989 = vmatmul.f32.gmra.mxu0 %v1241
    %v2990 = vpop.f32.mrf.mxu0
    %v2991 = vadd.f32 %v2782, %v2990
    %2992 = vmatmul.f32.gmra.mxu0 %v1250
    %v2993 = vpop.f32.mrf.mxu0
    %v2994 = vadd.f32 %v2785, %v2993
    %2995 = vmatmul.f32.gmra.mxu0 %v1259
    %v2996 = vpop.f32.mrf.mxu0
    %v2997 = vadd.f32 %v2788, %v2996
    %2998 = vmatmul.f32.gmra.mxu0 %v1268
    %v2999 = vpop.f32.mrf.mxu0
    %v3000 = vadd.f32 %v2791, %v2999
    %3001 = vmatmul.f32.gmra.mxu0 %v1277
    %v3002 = vpop.f32.mrf.mxu0
    %v3003 = vadd.f32 %v2794, %v3002
    %3004 = vmatmul.f32.gmra.mxu0 %v1286
    %v3005 = vpop.f32.mrf.mxu0
    %v3006 = vadd.f32 %v2797, %v3005
    %3007 = vmatmul.f32.gmra.mxu0 %v1295
    %v3008 = vpop.f32.mrf.mxu0
    %v3009 = vadd.f32 %v2800, %v3008
    %3010 = vmatmul.f32.gmra.mxu0 %v1304
    %v3011 = vpop.f32.mrf.mxu0
    %v3012 = vadd.f32 %v2803, %v3011
    %3013 = vmatmul.f32.gmra.mxu0 %v1313
    %v3014 = vpop.f32.mrf.mxu0
    %v3015 = vadd.f32 %v2806, %v3014
    %3016 = vmatmul.f32.gmra.mxu0 %v1322
    %v3017 = vpop.f32.mrf.mxu0
    %v3018 = vadd.f32 %v2809, %v3017
    %3019 = vmatmul.f32.gmra.mxu0 %v1331
    %v3020 = vpop.f32.mrf.mxu0
    %v3021 = vadd.f32 %v2812, %v3020
    %3022 = vmatmul.f32.gmra.mxu0 %v1340
    %v3023 = vpop.f32.mrf.mxu0
    %v3024 = vadd.f32 %v2815, %v3023
    %3025 = vmatmul.f32.gmra.mxu0 %v1349
    %v3026 = vpop.f32.mrf.mxu0
    %v3027 = vadd.f32 %v2818, %v3026
    %3028 = vmatmul.f32.gmra.mxu0 %v1358
    %v3029 = vpop.f32.mrf.mxu0
    %v3030 = vadd.f32 %v2821, %v3029
    %3031 = vmatmul.f32.gmra.mxu0 %v1367
    %v3032 = vpop.f32.mrf.mxu0
    %v3033 = vadd.f32 %v2824, %v3032
    %3034 = vmatmul.f32.gmra.mxu0 %v1376
    %v3035 = vpop.f32.mrf.mxu0
    %v3036 = vadd.f32 %v2827, %v3035
    %3037 = vmatmul.f32.gmra.mxu0 %v1385
    %v3038 = vpop.f32.mrf.mxu0
    %v3039 = vadd.f32 %v2830, %v3038
    %3040 = vmatmul.f32.gmra.mxu0 %v1394
    %v3041 = vpop.f32.mrf.mxu0
    %v3042 = vadd.f32 %v2833, %v3041
    %3043 = vmatmul.f32.gmra.mxu0 %v1403
    %v3044 = vpop.f32.mrf.mxu0
    %v3045 = vadd.f32 %v2836, %v3044
    %3046 = vmatmul.f32.gmra.mxu0 %v1412
    %v3047 = vpop.f32.mrf.mxu0
    %v3048 = vadd.f32 %v2839, %v3047
    %3049 = vmatmul.f32.gmra.mxu0 %v1421
    %v3050 = vpop.f32.mrf.mxu0
    %v3051 = vadd.f32 %v2842, %v3050
    %3052 = vmatmul.f32.gmra.mxu0 %v1430
    %v3053 = vpop.f32.mrf.mxu0
    %v3054 = vadd.f32 %v2845, %v3053
    %3055 = vmatmul.f32.gmra.mxu0 %v1439
    %v3056 = vpop.f32.mrf.mxu0
    %v3057 = vadd.f32 %v2848, %v3056
    %3058 = vmatmul.f32.gmra.mxu0 %v1448
    %v3059 = vpop.f32.mrf.mxu0
    %v3060 = vadd.f32 %v2851, %v3059
    %3061 = vmatmul.f32.gmra.mxu0 %v1457
    %v3062 = vpop.f32.mrf.mxu0
    %v3063 = vadd.f32 %v2854, %v3062
    %3064 = vmatmul.f32.gmra.mxu0 %v1466
    %v3065 = vpop.f32.mrf.mxu0
    %v3066 = vadd.f32 %v2857, %v3065
    %3067 = vmatmul.f32.gmra.mxu0 %v1475
    %v3068 = vpop.f32.mrf.mxu0
    %v3069 = vadd.f32 %v2860, %v3068
    %3070 = vmatmul.f32.gmra.mxu0 %v1484
    %v3071 = vpop.f32.mrf.mxu0
    %v3072 = vadd.f32 %v2863, %v3071
    %3073 = vmatmul.f32.gmra.mxu0 %v1493
    %v3074 = vpop.f32.mrf.mxu0
    %v3075 = vadd.f32 %v2866, %v3074
    %3076 = vmatmul.f32.gmra.mxu0 %v1502
    %v3077 = vpop.f32.mrf.mxu0
    %v3078 = vadd.f32 %v2869, %v3077
    %3079 = vmatmul.f32.gmra.mxu0 %v1511
    %v3080 = vpop.f32.mrf.mxu0
    %v3081 = vadd.f32 %v2872, %v3080
    %3082 = vmatmul.f32.gmra.mxu0 %v1520
    %v3083 = vpop.f32.mrf.mxu0
    %v3084 = vadd.f32 %v2875, %v3083
    %3085 = vmatmul.f32.gmra.mxu0 %v1529
    %v3086 = vpop.f32.mrf.mxu0
    %v3087 = vadd.f32 %v2878, %v3086
    %3088 = vmatmul.f32.gmra.mxu0 %v1538
    %v3089 = vpop.f32.mrf.mxu0
    %v3090 = vadd.f32 %v2881, %v3089
    %3091 = vmatmul.f32.gmra.mxu0 %v1547
    %v3092 = vpop.f32.mrf.mxu0
    %v3093 = vadd.f32 %v2884, %v3092
    %3094 = vmatmul.f32.gmra.mxu0 %v1556
    %v3095 = vpop.f32.mrf.mxu0
    %v3096 = vadd.f32 %v2887, %v3095
    %3097 = vmatmul.f32.gmra.mxu0 %v1565
    %v3098 = vpop.f32.mrf.mxu0
    %v3099 = vadd.f32 %v2890, %v3098
    %3100 = vmatmul.f32.gmra.mxu0 %v1574
    %v3101 = vpop.f32.mrf.mxu0
    %v3102 = vadd.f32 %v2893, %v3101
    %3103 = vmatmul.f32.gmra.mxu0 %v1583
    %v3104 = vpop.f32.mrf.mxu0
    %v3105 = vadd.f32 %v2896, %v3104
    %3106 = vmatmul.f32.gmra.mxu0 %v1592
    %v3107 = vpop.f32.mrf.mxu0
    %v3108 = vadd.f32 %v2899, %v3107
    %3109 = vmatmul.f32.gmra.mxu0 %v1601
    %v3110 = vpop.f32.mrf.mxu0
    %v3111 = vadd.f32 %v2902, %v3110
    %3112 = vmatmul.f32.gmra.mxu0 %v1610
    %v3113 = vpop.f32.mrf.mxu0
    %v3114 = vadd.f32 %v2905, %v3113
    %3115 = vmatmul.f32.gmra.mxu0 %v1619
    %v3116 = vpop.f32.mrf.mxu0
    %v3117 = vadd.f32 %v2908, %v3116
    %3118 = vmatmul.f32.gmra.mxu0 %v1628
    %v3119 = vpop.f32.mrf.mxu0
    %v3120 = vadd.f32 %v2911, %v3119
    %3121 = vmatmul.f32.gmra.mxu0 %v1637
    %v3122 = vpop.f32.mrf.mxu0
    %v3123 = vadd.f32 %v2914, %v3122
    %3124 = vmatmul.f32.gmra.mxu0 %v1646
    %v3125 = vpop.f32.mrf.mxu0
    %v3126 = vadd.f32 %v2917, %v3125
    %3127 = vmatmul.f32.gmra.mxu0 %v1655
    %v3128 = vpop.f32.mrf.mxu0
    %v3129 = vadd.f32 %v2920, %v3128
    %3130 = vmatmul.f32.gmra.mxu0 %v1664
    %v3131 = vpop.f32.mrf.mxu0
    %v3132 = vadd.f32 %v2923, %v3131
    %3133 = vmatmul.f32.gmra.mxu0 %v1673
    %v3134 = vpop.f32.mrf.mxu0
    %v3135 = vadd.f32 %v2926, %v3134
    %3136 = vmatmul.f32.gmra.mxu0 %v1682
    %v3137 = vpop.f32.mrf.mxu0
    %v3138 = vadd.f32 %v2929, %v3137
    %3139 = vmatmul.f32.gmra.mxu0 %v1691
    %v3140 = vpop.f32.mrf.mxu0
    %v3141 = vadd.f32 %v2932, %v3140
    %3142 = vmatmul.f32.gmra.mxu0 %v1700
    %v3143 = vpop.f32.mrf.mxu0
    %v3144 = vadd.f32 %v2935, %v3143
    %3145 = vmatmul.f32.gmra.mxu0 %v1709
    %v3146 = vpop.f32.mrf.mxu0
    %v3147 = vadd.f32 %v2938, %v3146
    %3148 = vmatmul.f32.gmra.mxu0 %v1718
    %v3149 = vpop.f32.mrf.mxu0
    %v3150 = vadd.f32 %v2941, %v3149
    %3151 = vmatmul.f32.gmra.mxu0 %v1727
    %v3152 = vpop.f32.mrf.mxu0
    %v3153 = vadd.f32 %v2944, %v3152
    %3154 = vmatmul.f32.gmra.mxu0 %v1736
    %v3155 = vpop.f32.mrf.mxu0
    %v3156 = vadd.f32 %v2947, %v3155
    %3157 = vmatmul.f32.gmra.mxu0 %v1745
    %v3158 = vpop.f32.mrf.mxu0
    %v3159 = vadd.f32 %v2950, %v3158
    %3160 = vmatmul.f32.gmra.mxu0 %v1754
    %v3161 = vpop.f32.mrf.mxu0
    %v3162 = vadd.f32 %v2953, %v3161
    %3163 = vmatmul.f32.gmra.mxu0 %v1763
    %v3164 = vpop.f32.mrf.mxu0
    %v3165 = vadd.f32 %v2956, %v3164
    %3166 = vdwg.mxu0
    %3167 = vmatpush.msra.mxu0 %v1878
    %3168 = vmatpush.msra.mxu0 %v1877
    %3169 = vmatpush.msra.mxu0 %v1876
    %3170 = vmatpush.msra.mxu0 %v1875
    %3171 = vmatpush.msra.mxu0 %v1874
    %3172 = vmatpush.msra.mxu0 %v1873
    %3173 = vmatpush.msra.mxu0 %v1872
    %3174 = vmatpush.msra.mxu0 %v1871
    %3175 = vmatpush.msra.mxu0 %v1870
    %3176 = vmatpush.msra.mxu0 %v1869
    %3177 = vmatpush.msra.mxu0 %v1868
    %3178 = vmatpush.msra.mxu0 %v1867
    %3179 = vmatpush.msra.mxu0 %v1866
    %3180 = vmatpush.msra.mxu0 %v1865
    %3181 = vmatpush.msra.mxu0 %v1864
    %3182 = vmatpush.msra.mxu0 %v1863
    %3183 = vmatmul.f32.gmra.mxu0 %v1197
    %v3184 = vpop.f32.mrf.mxu0
    %v3185 = vadd.f32 %v2976, %v3184
    %3186 = vmatmul.f32.gmra.mxu0 %v1206
    %v3187 = vpop.f32.mrf.mxu0
    %v3188 = vadd.f32 %v2979, %v3187
    %3189 = vmatmul.f32.gmra.mxu0 %v1215
    %v3190 = vpop.f32.mrf.mxu0
    %v3191 = vadd.f32 %v2982, %v3190
    %3192 = vmatmul.f32.gmra.mxu0 %v1224
    %v3193 = vpop.f32.mrf.mxu0
    %v3194 = vadd.f32 %v2985, %v3193
    %3195 = vmatmul.f32.gmra.mxu0 %v1233
    %v3196 = vpop.f32.mrf.mxu0
    %v3197 = vadd.f32 %v2988, %v3196
    %3198 = vmatmul.f32.gmra.mxu0 %v1242
    %v3199 = vpop.f32.mrf.mxu0
    %v3200 = vadd.f32 %v2991, %v3199
    %3201 = vmatmul.f32.gmra.mxu0 %v1251
    %v3202 = vpop.f32.mrf.mxu0
    %v3203 = vadd.f32 %v2994, %v3202
    %3204 = vmatmul.f32.gmra.mxu0 %v1260
    %v3205 = vpop.f32.mrf.mxu0
    %v3206 = vadd.f32 %v2997, %v3205
    %3207 = vmatmul.f32.gmra.mxu0 %v1269
    %v3208 = vpop.f32.mrf.mxu0
    %v3209 = vadd.f32 %v3000, %v3208
    %3210 = vmatmul.f32.gmra.mxu0 %v1278
    %v3211 = vpop.f32.mrf.mxu0
    %v3212 = vadd.f32 %v3003, %v3211
    %3213 = vmatmul.f32.gmra.mxu0 %v1287
    %v3214 = vpop.f32.mrf.mxu0
    %v3215 = vadd.f32 %v3006, %v3214
    %3216 = vmatmul.f32.gmra.mxu0 %v1296
    %v3217 = vpop.f32.mrf.mxu0
    %v3218 = vadd.f32 %v3009, %v3217
    %3219 = vmatmul.f32.gmra.mxu0 %v1305
    %v3220 = vpop.f32.mrf.mxu0
    %v3221 = vadd.f32 %v3012, %v3220
    %3222 = vmatmul.f32.gmra.mxu0 %v1314
    %v3223 = vpop.f32.mrf.mxu0
    %v3224 = vadd.f32 %v3015, %v3223
    %3225 = vmatmul.f32.gmra.mxu0 %v1323
    %v3226 = vpop.f32.mrf.mxu0
    %v3227 = vadd.f32 %v3018, %v3226
    %3228 = vmatmul.f32.gmra.mxu0 %v1332
    %v3229 = vpop.f32.mrf.mxu0
    %v3230 = vadd.f32 %v3021, %v3229
    %3231 = vmatmul.f32.gmra.mxu0 %v1341
    %v3232 = vpop.f32.mrf.mxu0
    %v3233 = vadd.f32 %v3024, %v3232
    %3234 = vmatmul.f32.gmra.mxu0 %v1350
    %v3235 = vpop.f32.mrf.mxu0
    %v3236 = vadd.f32 %v3027, %v3235
    %3237 = vmatmul.f32.gmra.mxu0 %v1359
    %v3238 = vpop.f32.mrf.mxu0
    %v3239 = vadd.f32 %v3030, %v3238
    %3240 = vmatmul.f32.gmra.mxu0 %v1368
    %v3241 = vpop.f32.mrf.mxu0
    %v3242 = vadd.f32 %v3033, %v3241
    %3243 = vmatmul.f32.gmra.mxu0 %v1377
    %v3244 = vpop.f32.mrf.mxu0
    %v3245 = vadd.f32 %v3036, %v3244
    %3246 = vmatmul.f32.gmra.mxu0 %v1386
    %v3247 = vpop.f32.mrf.mxu0
    %v3248 = vadd.f32 %v3039, %v3247
    %3249 = vmatmul.f32.gmra.mxu0 %v1395
    %v3250 = vpop.f32.mrf.mxu0
    %v3251 = vadd.f32 %v3042, %v3250
    %3252 = vmatmul.f32.gmra.mxu0 %v1404
    %v3253 = vpop.f32.mrf.mxu0
    %v3254 = vadd.f32 %v3045, %v3253
    %3255 = vmatmul.f32.gmra.mxu0 %v1413
    %v3256 = vpop.f32.mrf.mxu0
    %v3257 = vadd.f32 %v3048, %v3256
    %3258 = vmatmul.f32.gmra.mxu0 %v1422
    %v3259 = vpop.f32.mrf.mxu0
    %v3260 = vadd.f32 %v3051, %v3259
    %3261 = vmatmul.f32.gmra.mxu0 %v1431
    %v3262 = vpop.f32.mrf.mxu0
    %v3263 = vadd.f32 %v3054, %v3262
    %3264 = vmatmul.f32.gmra.mxu0 %v1440
    %v3265 = vpop.f32.mrf.mxu0
    %v3266 = vadd.f32 %v3057, %v3265
    %3267 = vmatmul.f32.gmra.mxu0 %v1449
    %v3268 = vpop.f32.mrf.mxu0
    %v3269 = vadd.f32 %v3060, %v3268
    %3270 = vmatmul.f32.gmra.mxu0 %v1458
    %v3271 = vpop.f32.mrf.mxu0
    %v3272 = vadd.f32 %v3063, %v3271
    %3273 = vmatmul.f32.gmra.mxu0 %v1467
    %v3274 = vpop.f32.mrf.mxu0
    %v3275 = vadd.f32 %v3066, %v3274
    %3276 = vmatmul.f32.gmra.mxu0 %v1476
    %v3277 = vpop.f32.mrf.mxu0
    %v3278 = vadd.f32 %v3069, %v3277
    %3279 = vmatmul.f32.gmra.mxu0 %v1485
    %v3280 = vpop.f32.mrf.mxu0
    %v3281 = vadd.f32 %v3072, %v3280
    %3282 = vmatmul.f32.gmra.mxu0 %v1494
    %v3283 = vpop.f32.mrf.mxu0
    %v3284 = vadd.f32 %v3075, %v3283
    %3285 = vmatmul.f32.gmra.mxu0 %v1503
    %v3286 = vpop.f32.mrf.mxu0
    %v3287 = vadd.f32 %v3078, %v3286
    %3288 = vmatmul.f32.gmra.mxu0 %v1512
    %v3289 = vpop.f32.mrf.mxu0
    %v3290 = vadd.f32 %v3081, %v3289
    %3291 = vmatmul.f32.gmra.mxu0 %v1521
    %v3292 = vpop.f32.mrf.mxu0
    %v3293 = vadd.f32 %v3084, %v3292
    %3294 = vmatmul.f32.gmra.mxu0 %v1530
    %v3295 = vpop.f32.mrf.mxu0
    %v3296 = vadd.f32 %v3087, %v3295
    %3297 = vmatmul.f32.gmra.mxu0 %v1539
    %v3298 = vpop.f32.mrf.mxu0
    %v3299 = vadd.f32 %v3090, %v3298
    %3300 = vmatmul.f32.gmra.mxu0 %v1548
    %v3301 = vpop.f32.mrf.mxu0
    %v3302 = vadd.f32 %v3093, %v3301
    %3303 = vmatmul.f32.gmra.mxu0 %v1557
    %v3304 = vpop.f32.mrf.mxu0
    %v3305 = vadd.f32 %v3096, %v3304
    %3306 = vmatmul.f32.gmra.mxu0 %v1566
    %v3307 = vpop.f32.mrf.mxu0
    %v3308 = vadd.f32 %v3099, %v3307
    %3309 = vmatmul.f32.gmra.mxu0 %v1575
    %v3310 = vpop.f32.mrf.mxu0
    %v3311 = vadd.f32 %v3102, %v3310
    %3312 = vmatmul.f32.gmra.mxu0 %v1584
    %v3313 = vpop.f32.mrf.mxu0
    %v3314 = vadd.f32 %v3105, %v3313
    %3315 = vmatmul.f32.gmra.mxu0 %v1593
    %v3316 = vpop.f32.mrf.mxu0
    %v3317 = vadd.f32 %v3108, %v3316
    %3318 = vmatmul.f32.gmra.mxu0 %v1602
    %v3319 = vpop.f32.mrf.mxu0
    %v3320 = vadd.f32 %v3111, %v3319
    %3321 = vmatmul.f32.gmra.mxu0 %v1611
    %v3322 = vpop.f32.mrf.mxu0
    %v3323 = vadd.f32 %v3114, %v3322
    %3324 = vmatmul.f32.gmra.mxu0 %v1620
    %v3325 = vpop.f32.mrf.mxu0
    %v3326 = vadd.f32 %v3117, %v3325
    %3327 = vmatmul.f32.gmra.mxu0 %v1629
    %v3328 = vpop.f32.mrf.mxu0
    %v3329 = vadd.f32 %v3120, %v3328
    %3330 = vmatmul.f32.gmra.mxu0 %v1638
    %v3331 = vpop.f32.mrf.mxu0
    %v3332 = vadd.f32 %v3123, %v3331
    %3333 = vmatmul.f32.gmra.mxu0 %v1647
    %v3334 = vpop.f32.mrf.mxu0
    %v3335 = vadd.f32 %v3126, %v3334
    %3336 = vmatmul.f32.gmra.mxu0 %v1656
    %v3337 = vpop.f32.mrf.mxu0
    %v3338 = vadd.f32 %v3129, %v3337
    %3339 = vmatmul.f32.gmra.mxu0 %v1665
    %v3340 = vpop.f32.mrf.mxu0
    %v3341 = vadd.f32 %v3132, %v3340
    %3342 = vmatmul.f32.gmra.mxu0 %v1674
    %v3343 = vpop.f32.mrf.mxu0
    %v3344 = vadd.f32 %v3135, %v3343
    %3345 = vmatmul.f32.gmra.mxu0 %v1683
    %v3346 = vpop.f32.mrf.mxu0
    %v3347 = vadd.f32 %v3138, %v3346
    %3348 = vmatmul.f32.gmra.mxu0 %v1692
    %v3349 = vpop.f32.mrf.mxu0
    %v3350 = vadd.f32 %v3141, %v3349
    %3351 = vmatmul.f32.gmra.mxu0 %v1701
    %v3352 = vpop.f32.mrf.mxu0
    %v3353 = vadd.f32 %v3144, %v3352
    %3354 = vmatmul.f32.gmra.mxu0 %v1710
    %v3355 = vpop.f32.mrf.mxu0
    %v3356 = vadd.f32 %v3147, %v3355
    %3357 = vmatmul.f32.gmra.mxu0 %v1719
    %v3358 = vpop.f32.mrf.mxu0
    %v3359 = vadd.f32 %v3150, %v3358
    %3360 = vmatmul.f32.gmra.mxu0 %v1728
    %v3361 = vpop.f32.mrf.mxu0
    %v3362 = vadd.f32 %v3153, %v3361
    %3363 = vmatmul.f32.gmra.mxu0 %v1737
    %v3364 = vpop.f32.mrf.mxu0
    %v3365 = vadd.f32 %v3156, %v3364
    %3366 = vmatmul.f32.gmra.mxu0 %v1746
    %v3367 = vpop.f32.mrf.mxu0
    %v3368 = vadd.f32 %v3159, %v3367
    %3369 = vmatmul.f32.gmra.mxu0 %v1755
    %v3370 = vpop.f32.mrf.mxu0
    %v3371 = vadd.f32 %v3162, %v3370
    %3372 = vmatmul.f32.gmra.mxu0 %v1764
    %v3373 = vpop.f32.mrf.mxu0
    %v3374 = vadd.f32 %v3165, %v3373
    %3375 = vdwg.mxu0
    %3376 = vmatpush.msra.mxu0 %v1894
    %3377 = vmatpush.msra.mxu0 %v1893
    %3378 = vmatpush.msra.mxu0 %v1892
    %3379 = vmatpush.msra.mxu0 %v1891
    %3380 = vmatpush.msra.mxu0 %v1890
    %3381 = vmatpush.msra.mxu0 %v1889
    %3382 = vmatpush.msra.mxu0 %v1888
    %3383 = vmatpush.msra.mxu0 %v1887
    %3384 = vmatpush.msra.mxu0 %v1886
    %3385 = vmatpush.msra.mxu0 %v1885
    %3386 = vmatpush.msra.mxu0 %v1884
    %3387 = vmatpush.msra.mxu0 %v1883
    %3388 = vmatpush.msra.mxu0 %v1882
    %3389 = vmatpush.msra.mxu0 %v1881
    %3390 = vmatpush.msra.mxu0 %v1880
    %3391 = vmatpush.msra.mxu0 %v1879
    %3392 = vmatmul.f32.gmra.mxu0 %v1198
    %v3393 = vpop.f32.mrf.mxu0
    %v3394 = vadd.f32 %v3185, %v3393
    %3395 = vmatmul.f32.gmra.mxu0 %v1207
    %v3396 = vpop.f32.mrf.mxu0
    %v3397 = vadd.f32 %v3188, %v3396
    %3398 = vmatmul.f32.gmra.mxu0 %v1216
    %v3399 = vpop.f32.mrf.mxu0
    %v3400 = vadd.f32 %v3191, %v3399
    %3401 = vmatmul.f32.gmra.mxu0 %v1225
    %v3402 = vpop.f32.mrf.mxu0
    %v3403 = vadd.f32 %v3194, %v3402
    %3404 = vmatmul.f32.gmra.mxu0 %v1234
    %v3405 = vpop.f32.mrf.mxu0
    %v3406 = vadd.f32 %v3197, %v3405
    %3407 = vmatmul.f32.gmra.mxu0 %v1243
    %v3408 = vpop.f32.mrf.mxu0
    %v3409 = vadd.f32 %v3200, %v3408
    %3410 = vmatmul.f32.gmra.mxu0 %v1252
    %v3411 = vpop.f32.mrf.mxu0
    %v3412 = vadd.f32 %v3203, %v3411
    %3413 = vmatmul.f32.gmra.mxu0 %v1261
    %v3414 = vpop.f32.mrf.mxu0
    %v3415 = vadd.f32 %v3206, %v3414
    %3416 = vmatmul.f32.gmra.mxu0 %v1270
    %v3417 = vpop.f32.mrf.mxu0
    %v3418 = vadd.f32 %v3209, %v3417
    %3419 = vmatmul.f32.gmra.mxu0 %v1279
    %v3420 = vpop.f32.mrf.mxu0
    %v3421 = vadd.f32 %v3212, %v3420
    %3422 = vmatmul.f32.gmra.mxu0 %v1288
    %v3423 = vpop.f32.mrf.mxu0
    %v3424 = vadd.f32 %v3215, %v3423
    %3425 = vmatmul.f32.gmra.mxu0 %v1297
    %v3426 = vpop.f32.mrf.mxu0
    %v3427 = vadd.f32 %v3218, %v3426
    %3428 = vmatmul.f32.gmra.mxu0 %v1306
    %v3429 = vpop.f32.mrf.mxu0
    %v3430 = vadd.f32 %v3221, %v3429
    %3431 = vmatmul.f32.gmra.mxu0 %v1315
    %v3432 = vpop.f32.mrf.mxu0
    %v3433 = vadd.f32 %v3224, %v3432
    %3434 = vmatmul.f32.gmra.mxu0 %v1324
    %v3435 = vpop.f32.mrf.mxu0
    %v3436 = vadd.f32 %v3227, %v3435
    %3437 = vmatmul.f32.gmra.mxu0 %v1333
    %v3438 = vpop.f32.mrf.mxu0
    %v3439 = vadd.f32 %v3230, %v3438
    %3440 = vmatmul.f32.gmra.mxu0 %v1342
    %v3441 = vpop.f32.mrf.mxu0
    %v3442 = vadd.f32 %v3233, %v3441
    %3443 = vmatmul.f32.gmra.mxu0 %v1351
    %v3444 = vpop.f32.mrf.mxu0
    %v3445 = vadd.f32 %v3236, %v3444
    %3446 = vmatmul.f32.gmra.mxu0 %v1360
    %v3447 = vpop.f32.mrf.mxu0
    %v3448 = vadd.f32 %v3239, %v3447
    %3449 = vmatmul.f32.gmra.mxu0 %v1369
    %v3450 = vpop.f32.mrf.mxu0
    %v3451 = vadd.f32 %v3242, %v3450
    %3452 = vmatmul.f32.gmra.mxu0 %v1378
    %v3453 = vpop.f32.mrf.mxu0
    %v3454 = vadd.f32 %v3245, %v3453
    %3455 = vmatmul.f32.gmra.mxu0 %v1387
    %v3456 = vpop.f32.mrf.mxu0
    %v3457 = vadd.f32 %v3248, %v3456
    %3458 = vmatmul.f32.gmra.mxu0 %v1396
    %v3459 = vpop.f32.mrf.mxu0
    %v3460 = vadd.f32 %v3251, %v3459
    %3461 = vmatmul.f32.gmra.mxu0 %v1405
    %v3462 = vpop.f32.mrf.mxu0
    %v3463 = vadd.f32 %v3254, %v3462
    %3464 = vmatmul.f32.gmra.mxu0 %v1414
    %v3465 = vpop.f32.mrf.mxu0
    %v3466 = vadd.f32 %v3257, %v3465
    %3467 = vmatmul.f32.gmra.mxu0 %v1423
    %v3468 = vpop.f32.mrf.mxu0
    %v3469 = vadd.f32 %v3260, %v3468
    %3470 = vmatmul.f32.gmra.mxu0 %v1432
    %v3471 = vpop.f32.mrf.mxu0
    %v3472 = vadd.f32 %v3263, %v3471
    %3473 = vmatmul.f32.gmra.mxu0 %v1441
    %v3474 = vpop.f32.mrf.mxu0
    %v3475 = vadd.f32 %v3266, %v3474
    %3476 = vmatmul.f32.gmra.mxu0 %v1450
    %v3477 = vpop.f32.mrf.mxu0
    %v3478 = vadd.f32 %v3269, %v3477
    %3479 = vmatmul.f32.gmra.mxu0 %v1459
    %v3480 = vpop.f32.mrf.mxu0
    %v3481 = vadd.f32 %v3272, %v3480
    %3482 = vmatmul.f32.gmra.mxu0 %v1468
    %v3483 = vpop.f32.mrf.mxu0
    %v3484 = vadd.f32 %v3275, %v3483
    %3485 = vmatmul.f32.gmra.mxu0 %v1477
    %v3486 = vpop.f32.mrf.mxu0
    %v3487 = vadd.f32 %v3278, %v3486
    %3488 = vmatmul.f32.gmra.mxu0 %v1486
    %v3489 = vpop.f32.mrf.mxu0
    %v3490 = vadd.f32 %v3281, %v3489
    %3491 = vmatmul.f32.gmra.mxu0 %v1495
    %v3492 = vpop.f32.mrf.mxu0
    %v3493 = vadd.f32 %v3284, %v3492
    %3494 = vmatmul.f32.gmra.mxu0 %v1504
    %v3495 = vpop.f32.mrf.mxu0
    %v3496 = vadd.f32 %v3287, %v3495
    %3497 = vmatmul.f32.gmra.mxu0 %v1513
    %v3498 = vpop.f32.mrf.mxu0
    %v3499 = vadd.f32 %v3290, %v3498
    %3500 = vmatmul.f32.gmra.mxu0 %v1522
    %v3501 = vpop.f32.mrf.mxu0
    %v3502 = vadd.f32 %v3293, %v3501
    %3503 = vmatmul.f32.gmra.mxu0 %v1531
    %v3504 = vpop.f32.mrf.mxu0
    %v3505 = vadd.f32 %v3296, %v3504
    %3506 = vmatmul.f32.gmra.mxu0 %v1540
    %v3507 = vpop.f32.mrf.mxu0
    %v3508 = vadd.f32 %v3299, %v3507
    %3509 = vmatmul.f32.gmra.mxu0 %v1549
    %v3510 = vpop.f32.mrf.mxu0
    %v3511 = vadd.f32 %v3302, %v3510
    %3512 = vmatmul.f32.gmra.mxu0 %v1558
    %v3513 = vpop.f32.mrf.mxu0
    %v3514 = vadd.f32 %v3305, %v3513
    %3515 = vmatmul.f32.gmra.mxu0 %v1567
    %v3516 = vpop.f32.mrf.mxu0
    %v3517 = vadd.f32 %v3308, %v3516
    %3518 = vmatmul.f32.gmra.mxu0 %v1576
    %v3519 = vpop.f32.mrf.mxu0
    %v3520 = vadd.f32 %v3311, %v3519
    %3521 = vmatmul.f32.gmra.mxu0 %v1585
    %v3522 = vpop.f32.mrf.mxu0
    %v3523 = vadd.f32 %v3314, %v3522
    %3524 = vmatmul.f32.gmra.mxu0 %v1594
    %v3525 = vpop.f32.mrf.mxu0
    %v3526 = vadd.f32 %v3317, %v3525
    %3527 = vmatmul.f32.gmra.mxu0 %v1603
    %v3528 = vpop.f32.mrf.mxu0
    %v3529 = vadd.f32 %v3320, %v3528
    %3530 = vmatmul.f32.gmra.mxu0 %v1612
    %v3531 = vpop.f32.mrf.mxu0
    %v3532 = vadd.f32 %v3323, %v3531
    %3533 = vmatmul.f32.gmra.mxu0 %v1621
    %v3534 = vpop.f32.mrf.mxu0
    %v3535 = vadd.f32 %v3326, %v3534
    %3536 = vmatmul.f32.gmra.mxu0 %v1630
    %v3537 = vpop.f32.mrf.mxu0
    %v3538 = vadd.f32 %v3329, %v3537
    %3539 = vmatmul.f32.gmra.mxu0 %v1639
    %v3540 = vpop.f32.mrf.mxu0
    %v3541 = vadd.f32 %v3332, %v3540
    %3542 = vmatmul.f32.gmra.mxu0 %v1648
    %v3543 = vpop.f32.mrf.mxu0
    %v3544 = vadd.f32 %v3335, %v3543
    %3545 = vmatmul.f32.gmra.mxu0 %v1657
    %v3546 = vpop.f32.mrf.mxu0
    %v3547 = vadd.f32 %v3338, %v3546
    %3548 = vmatmul.f32.gmra.mxu0 %v1666
    %v3549 = vpop.f32.mrf.mxu0
    %v3550 = vadd.f32 %v3341, %v3549
    %3551 = vmatmul.f32.gmra.mxu0 %v1675
    %v3552 = vpop.f32.mrf.mxu0
    %v3553 = vadd.f32 %v3344, %v3552
    %3554 = vmatmul.f32.gmra.mxu0 %v1684
    %v3555 = vpop.f32.mrf.mxu0
    %v3556 = vadd.f32 %v3347, %v3555
    %3557 = vmatmul.f32.gmra.mxu0 %v1693
    %v3558 = vpop.f32.mrf.mxu0
    %v3559 = vadd.f32 %v3350, %v3558
    %3560 = vmatmul.f32.gmra.mxu0 %v1702
    %v3561 = vpop.f32.mrf.mxu0
    %v3562 = vadd.f32 %v3353, %v3561
    %3563 = vmatmul.f32.gmra.mxu0 %v1711
    %v3564 = vpop.f32.mrf.mxu0
    %v3565 = vadd.f32 %v3356, %v3564
    %3566 = vmatmul.f32.gmra.mxu0 %v1720
    %v3567 = vpop.f32.mrf.mxu0
    %v3568 = vadd.f32 %v3359, %v3567
    %3569 = vmatmul.f32.gmra.mxu0 %v1729
    %v3570 = vpop.f32.mrf.mxu0
    %v3571 = vadd.f32 %v3362, %v3570
    %3572 = vmatmul.f32.gmra.mxu0 %v1738
    %v3573 = vpop.f32.mrf.mxu0
    %v3574 = vadd.f32 %v3365, %v3573
    %3575 = vmatmul.f32.gmra.mxu0 %v1747
    %v3576 = vpop.f32.mrf.mxu0
    %v3577 = vadd.f32 %v3368, %v3576
    %3578 = vmatmul.f32.gmra.mxu0 %v1756
    %v3579 = vpop.f32.mrf.mxu0
    %v3580 = vadd.f32 %v3371, %v3579
    %3581 = vmatmul.f32.gmra.mxu0 %v1765
    %v3582 = vpop.f32.mrf.mxu0
    %v3583 = vadd.f32 %v3374, %v3582
    %3584 = vdwg.mxu0
    %3585 = vmatpush.msra.mxu0 %v1910
    %3586 = vmatpush.msra.mxu0 %v1909
    %3587 = vmatpush.msra.mxu0 %v1908
    %3588 = vmatpush.msra.mxu0 %v1907
    %3589 = vmatpush.msra.mxu0 %v1906
    %3590 = vmatpush.msra.mxu0 %v1905
    %3591 = vmatpush.msra.mxu0 %v1904
    %3592 = vmatpush.msra.mxu0 %v1903
    %3593 = vmatpush.msra.mxu0 %v1902
    %3594 = vmatpush.msra.mxu0 %v1901
    %3595 = vmatpush.msra.mxu0 %v1900
    %3596 = vmatpush.msra.mxu0 %v1899
    %3597 = vmatpush.msra.mxu0 %v1898
    %3598 = vmatpush.msra.mxu0 %v1897
    %3599 = vmatpush.msra.mxu0 %v1896
    %3600 = vmatpush.msra.mxu0 %v1895
    %3601 = vmatmul.f32.gmra.mxu0 %v1199
    %v3602 = vpop.f32.mrf.mxu0
    %v3603 = vadd.f32 %v3394, %v3602
    %3604 = vmatmul.f32.gmra.mxu0 %v1208
    %v3605 = vpop.f32.mrf.mxu0
    %v3606 = vadd.f32 %v3397, %v3605
    %3607 = vmatmul.f32.gmra.mxu0 %v1217
    %v3608 = vpop.f32.mrf.mxu0
    %v3609 = vadd.f32 %v3400, %v3608
    %3610 = vmatmul.f32.gmra.mxu0 %v1226
    %v3611 = vpop.f32.mrf.mxu0
    %v3612 = vadd.f32 %v3403, %v3611
    %3613 = vmatmul.f32.gmra.mxu0 %v1235
    %v3614 = vpop.f32.mrf.mxu0
    %v3615 = vadd.f32 %v3406, %v3614
    %3616 = vmatmul.f32.gmra.mxu0 %v1244
    %v3617 = vpop.f32.mrf.mxu0
    %v3618 = vadd.f32 %v3409, %v3617
    %3619 = vmatmul.f32.gmra.mxu0 %v1253
    %v3620 = vpop.f32.mrf.mxu0
    %v3621 = vadd.f32 %v3412, %v3620
    %3622 = vmatmul.f32.gmra.mxu0 %v1262
    %v3623 = vpop.f32.mrf.mxu0
    %v3624 = vadd.f32 %v3415, %v3623
    %3625 = vmatmul.f32.gmra.mxu0 %v1271
    %v3626 = vpop.f32.mrf.mxu0
    %v3627 = vadd.f32 %v3418, %v3626
    %3628 = vmatmul.f32.gmra.mxu0 %v1280
    %v3629 = vpop.f32.mrf.mxu0
    %v3630 = vadd.f32 %v3421, %v3629
    %3631 = vmatmul.f32.gmra.mxu0 %v1289
    %v3632 = vpop.f32.mrf.mxu0
    %v3633 = vadd.f32 %v3424, %v3632
    %3634 = vmatmul.f32.gmra.mxu0 %v1298
    %v3635 = vpop.f32.mrf.mxu0
    %v3636 = vadd.f32 %v3427, %v3635
    %3637 = vmatmul.f32.gmra.mxu0 %v1307
    %v3638 = vpop.f32.mrf.mxu0
    %v3639 = vadd.f32 %v3430, %v3638
    %3640 = vmatmul.f32.gmra.mxu0 %v1316
    %v3641 = vpop.f32.mrf.mxu0
    %v3642 = vadd.f32 %v3433, %v3641
    %3643 = vmatmul.f32.gmra.mxu0 %v1325
    %v3644 = vpop.f32.mrf.mxu0
    %v3645 = vadd.f32 %v3436, %v3644
    %3646 = vmatmul.f32.gmra.mxu0 %v1334
    %v3647 = vpop.f32.mrf.mxu0
    %v3648 = vadd.f32 %v3439, %v3647
    %3649 = vmatmul.f32.gmra.mxu0 %v1343
    %v3650 = vpop.f32.mrf.mxu0
    %v3651 = vadd.f32 %v3442, %v3650
    %3652 = vmatmul.f32.gmra.mxu0 %v1352
    %v3653 = vpop.f32.mrf.mxu0
    %v3654 = vadd.f32 %v3445, %v3653
    %3655 = vmatmul.f32.gmra.mxu0 %v1361
    %v3656 = vpop.f32.mrf.mxu0
    %v3657 = vadd.f32 %v3448, %v3656
    %3658 = vmatmul.f32.gmra.mxu0 %v1370
    %v3659 = vpop.f32.mrf.mxu0
    %v3660 = vadd.f32 %v3451, %v3659
    %3661 = vmatmul.f32.gmra.mxu0 %v1379
    %v3662 = vpop.f32.mrf.mxu0
    %v3663 = vadd.f32 %v3454, %v3662
    %3664 = vmatmul.f32.gmra.mxu0 %v1388
    %v3665 = vpop.f32.mrf.mxu0
    %v3666 = vadd.f32 %v3457, %v3665
    %3667 = vmatmul.f32.gmra.mxu0 %v1397
    %v3668 = vpop.f32.mrf.mxu0
    %v3669 = vadd.f32 %v3460, %v3668
    %3670 = vmatmul.f32.gmra.mxu0 %v1406
    %v3671 = vpop.f32.mrf.mxu0
    %v3672 = vadd.f32 %v3463, %v3671
    %3673 = vmatmul.f32.gmra.mxu0 %v1415
    %v3674 = vpop.f32.mrf.mxu0
    %v3675 = vadd.f32 %v3466, %v3674
    %3676 = vmatmul.f32.gmra.mxu0 %v1424
    %v3677 = vpop.f32.mrf.mxu0
    %v3678 = vadd.f32 %v3469, %v3677
    %3679 = vmatmul.f32.gmra.mxu0 %v1433
    %v3680 = vpop.f32.mrf.mxu0
    %v3681 = vadd.f32 %v3472, %v3680
    %3682 = vmatmul.f32.gmra.mxu0 %v1442
    %v3683 = vpop.f32.mrf.mxu0
    %v3684 = vadd.f32 %v3475, %v3683
    %3685 = vmatmul.f32.gmra.mxu0 %v1451
    %v3686 = vpop.f32.mrf.mxu0
    %v3687 = vadd.f32 %v3478, %v3686
    %3688 = vmatmul.f32.gmra.mxu0 %v1460
    %v3689 = vpop.f32.mrf.mxu0
    %v3690 = vadd.f32 %v3481, %v3689
    %3691 = vmatmul.f32.gmra.mxu0 %v1469
    %v3692 = vpop.f32.mrf.mxu0
    %v3693 = vadd.f32 %v3484, %v3692
    %3694 = vmatmul.f32.gmra.mxu0 %v1478
    %v3695 = vpop.f32.mrf.mxu0
    %v3696 = vadd.f32 %v3487, %v3695
    %3697 = vmatmul.f32.gmra.mxu0 %v1487
    %v3698 = vpop.f32.mrf.mxu0
    %v3699 = vadd.f32 %v3490, %v3698
    %3700 = vmatmul.f32.gmra.mxu0 %v1496
    %v3701 = vpop.f32.mrf.mxu0
    %v3702 = vadd.f32 %v3493, %v3701
    %3703 = vmatmul.f32.gmra.mxu0 %v1505
    %v3704 = vpop.f32.mrf.mxu0
    %v3705 = vadd.f32 %v3496, %v3704
    %3706 = vmatmul.f32.gmra.mxu0 %v1514
    %v3707 = vpop.f32.mrf.mxu0
    %v3708 = vadd.f32 %v3499, %v3707
    %3709 = vmatmul.f32.gmra.mxu0 %v1523
    %v3710 = vpop.f32.mrf.mxu0
    %v3711 = vadd.f32 %v3502, %v3710
    %3712 = vmatmul.f32.gmra.mxu0 %v1532
    %v3713 = vpop.f32.mrf.mxu0
    %v3714 = vadd.f32 %v3505, %v3713
    %3715 = vmatmul.f32.gmra.mxu0 %v1541
    %v3716 = vpop.f32.mrf.mxu0
    %v3717 = vadd.f32 %v3508, %v3716
    %3718 = vmatmul.f32.gmra.mxu0 %v1550
    %v3719 = vpop.f32.mrf.mxu0
    %v3720 = vadd.f32 %v3511, %v3719
    %3721 = vmatmul.f32.gmra.mxu0 %v1559
    %v3722 = vpop.f32.mrf.mxu0
    %v3723 = vadd.f32 %v3514, %v3722
    %3724 = vmatmul.f32.gmra.mxu0 %v1568
    %v3725 = vpop.f32.mrf.mxu0
    %v3726 = vadd.f32 %v3517, %v3725
    %3727 = vmatmul.f32.gmra.mxu0 %v1577
    %v3728 = vpop.f32.mrf.mxu0
    %v3729 = vadd.f32 %v3520, %v3728
    %3730 = vmatmul.f32.gmra.mxu0 %v1586
    %v3731 = vpop.f32.mrf.mxu0
    %v3732 = vadd.f32 %v3523, %v3731
    %3733 = vmatmul.f32.gmra.mxu0 %v1595
    %v3734 = vpop.f32.mrf.mxu0
    %v3735 = vadd.f32 %v3526, %v3734
    %3736 = vmatmul.f32.gmra.mxu0 %v1604
    %v3737 = vpop.f32.mrf.mxu0
    %v3738 = vadd.f32 %v3529, %v3737
    %3739 = vmatmul.f32.gmra.mxu0 %v1613
    %v3740 = vpop.f32.mrf.mxu0
    %v3741 = vadd.f32 %v3532, %v3740
    %3742 = vmatmul.f32.gmra.mxu0 %v1622
    %v3743 = vpop.f32.mrf.mxu0
    %v3744 = vadd.f32 %v3535, %v3743
    %3745 = vmatmul.f32.gmra.mxu0 %v1631
    %v3746 = vpop.f32.mrf.mxu0
    %v3747 = vadd.f32 %v3538, %v3746
    %3748 = vmatmul.f32.gmra.mxu0 %v1640
    %v3749 = vpop.f32.mrf.mxu0
    %v3750 = vadd.f32 %v3541, %v3749
    %3751 = vmatmul.f32.gmra.mxu0 %v1649
    %v3752 = vpop.f32.mrf.mxu0
    %v3753 = vadd.f32 %v3544, %v3752
    %3754 = vmatmul.f32.gmra.mxu0 %v1658
    %v3755 = vpop.f32.mrf.mxu0
    %v3756 = vadd.f32 %v3547, %v3755
    %3757 = vmatmul.f32.gmra.mxu0 %v1667
    %v3758 = vpop.f32.mrf.mxu0
    %v3759 = vadd.f32 %v3550, %v3758
    %3760 = vmatmul.f32.gmra.mxu0 %v1676
    %v3761 = vpop.f32.mrf.mxu0
    %v3762 = vadd.f32 %v3553, %v3761
    %3763 = vmatmul.f32.gmra.mxu0 %v1685
    %v3764 = vpop.f32.mrf.mxu0
    %v3765 = vadd.f32 %v3556, %v3764
    %3766 = vmatmul.f32.gmra.mxu0 %v1694
    %v3767 = vpop.f32.mrf.mxu0
    %v3768 = vadd.f32 %v3559, %v3767
    %3769 = vmatmul.f32.gmra.mxu0 %v1703
    %v3770 = vpop.f32.mrf.mxu0
    %v3771 = vadd.f32 %v3562, %v3770
    %3772 = vmatmul.f32.gmra.mxu0 %v1712
    %v3773 = vpop.f32.mrf.mxu0
    %v3774 = vadd.f32 %v3565, %v3773
    %3775 = vmatmul.f32.gmra.mxu0 %v1721
    %v3776 = vpop.f32.mrf.mxu0
    %v3777 = vadd.f32 %v3568, %v3776
    %3778 = vmatmul.f32.gmra.mxu0 %v1730
    %v3779 = vpop.f32.mrf.mxu0
    %v3780 = vadd.f32 %v3571, %v3779
    %3781 = vmatmul.f32.gmra.mxu0 %v1739
    %v3782 = vpop.f32.mrf.mxu0
    %v3783 = vadd.f32 %v3574, %v3782
    %3784 = vmatmul.f32.gmra.mxu0 %v1748
    %v3785 = vpop.f32.mrf.mxu0
    %v3786 = vadd.f32 %v3577, %v3785
    %3787 = vmatmul.f32.gmra.mxu0 %v1757
    %v3788 = vpop.f32.mrf.mxu0
    %v3789 = vadd.f32 %v3580, %v3788
    %3790 = vmatmul.f32.gmra.mxu0 %v1766
    %v3791 = vpop.f32.mrf.mxu0
    %v3792 = vadd.f32 %v3583, %v3791
    %3793 = vdwg.mxu0
    %3794 = vst [vmem:[%s3] sm:$0xff] %v3603
    %3795 = vst [vmem:[%s3 + $0x8] sm:$0xff] %v3606
    %3796 = vst [vmem:[%s3 + $0x10] sm:$0xff] %v3609
    %3797 = vst [vmem:[%s3 + $0x18] sm:$0xff] %v3612
    %3798 = vst [vmem:[%s3 + $0x20] sm:$0xff] %v3615
    %3799 = vst [vmem:[%s3 + $0x28] sm:$0xff] %v3618
    %3800 = vst [vmem:[%s3 + $0x30] sm:$0xff] %v3621
    %3801 = vst [vmem:[%s3 + $0x38] sm:$0xff] %v3624
    %3802 = vst [vmem:[%s3 + $0x40] sm:$0xff] %v3627
    %3803 = vst [vmem:[%s3 + $0x48] sm:$0xff] %v3630
    %3804 = vst [vmem:[%s3 + $0x50] sm:$0xff] %v3633
    %3805 = vst [vmem:[%s3 + $0x58] sm:$0xff] %v3636
    %3806 = vst [vmem:[%s3 + $0x60] sm:$0xff] %v3639
    %3807 = vst [vmem:[%s3 + $0x68] sm:$0xff] %v3642
    %3808 = vst [vmem:[%s3 + $0x70] sm:$0xff] %v3645
    %3809 = vst [vmem:[%s3 + $0x78] sm:$0xff] %v3648
    %3810 = vst [vmem:[%s3 + $0x80] sm:$0xff] %v3651
    %3811 = vst [vmem:[%s3 + $0x88] sm:$0xff] %v3654
    %3812 = vst [vmem:[%s3 + $0x90] sm:$0xff] %v3657
    %3813 = vst [vmem:[%s3 + $0x98] sm:$0xff] %v3660
    %3814 = vst [vmem:[%s3 + $0xa0] sm:$0xff] %v3663
    %3815 = vst [vmem:[%s3 + $0xa8] sm:$0xff] %v3666
    %3816 = vst [vmem:[%s3 + $0xb0] sm:$0xff] %v3669
    %3817 = vst [vmem:[%s3 + $0xb8] sm:$0xff] %v3672
    %3818 = vst [vmem:[%s3 + $0xc0] sm:$0xff] %v3675
    %3819 = vst [vmem:[%s3 + $0xc8] sm:$0xff] %v3678
    %3820 = vst [vmem:[%s3 + $0xd0] sm:$0xff] %v3681
    %3821 = vst [vmem:[%s3 + $0xd8] sm:$0xff] %v3684
    %3822 = vst [vmem:[%s3 + $0xe0] sm:$0xff] %v3687
    %3823 = vst [vmem:[%s3 + $0xe8] sm:$0xff] %v3690
    %3824 = vst [vmem:[%s3 + $0xf0] sm:$0xff] %v3693
    %3825 = vst [vmem:[%s3 + $0xf8] sm:$0xff] %v3696
    %3826 = vst [vmem:[%s3 + $0x100] sm:$0xff] %v3699
    %3827 = vst [vmem:[%s3 + $0x108] sm:$0xff] %v3702
    %3828 = vst [vmem:[%s3 + $0x110] sm:$0xff] %v3705
    %3829 = vst [vmem:[%s3 + $0x118] sm:$0xff] %v3708
    %3830 = vst [vmem:[%s3 + $0x120] sm:$0xff] %v3711
    %3831 = vst [vmem:[%s3 + $0x128] sm:$0xff] %v3714
    %3832 = vst [vmem:[%s3 + $0x130] sm:$0xff] %v3717
    %3833 = vst [vmem:[%s3 + $0x138] sm:$0xff] %v3720
    %3834 = vst [vmem:[%s3 + $0x140] sm:$0xff] %v3723
    %3835 = vst [vmem:[%s3 + $0x148] sm:$0xff] %v3726
    %3836 = vst [vmem:[%s3 + $0x150] sm:$0xff] %v3729
    %3837 = vst [vmem:[%s3 + $0x158] sm:$0xff] %v3732
    %3838 = vst [vmem:[%s3 + $0x160] sm:$0xff] %v3735
    %3839 = vst [vmem:[%s3 + $0x168] sm:$0xff] %v3738
    %3840 = vst [vmem:[%s3 + $0x170] sm:$0xff] %v3741
    %3841 = vst [vmem:[%s3 + $0x178] sm:$0xff] %v3744
    %3842 = vst [vmem:[%s3 + $0x180] sm:$0xff] %v3747
    %3843 = vst [vmem:[%s3 + $0x188] sm:$0xff] %v3750
    %3844 = vst [vmem:[%s3 + $0x190] sm:$0xff] %v3753
    %3845 = vst [vmem:[%s3 + $0x198] sm:$0xff] %v3756
    %3846 = vst [vmem:[%s3 + $0x1a0] sm:$0xff] %v3759
    %3847 = vst [vmem:[%s3 + $0x1a8] sm:$0xff] %v3762
    %3848 = vst [vmem:[%s3 + $0x1b0] sm:$0xff] %v3765
    %3849 = vst [vmem:[%s3 + $0x1b8] sm:$0xff] %v3768
    %3850 = vst [vmem:[%s3 + $0x1c0] sm:$0xff] %v3771
    %3851 = vst [vmem:[%s3 + $0x1c8] sm:$0xff] %v3774
    %3852 = vst [vmem:[%s3 + $0x1d0] sm:$0xff] %v3777
    %3853 = vst [vmem:[%s3 + $0x1d8] sm:$0xff] %v3780
    %3854 = vst [vmem:[%s3 + $0x1e0] sm:$0xff] %v3783
    %3855 = vst [vmem:[%s3 + $0x1e8] sm:$0xff] %v3786
    %3856 = vst [vmem:[%s3 + $0x1f0] sm:$0xff] %v3789
    %3857 = vst [vmem:[%s3 + $0x1f8] sm:$0xff] %v3792
    %v3858 = vadd.f32 %v3603, %v3606
    %v3859 = vadd.f32 %v3858, %v3609
    %v3860 = vadd.f32 %v3859, %v3612
    %v3861 = vadd.f32 %v3860, %v3615
    %v3862 = vadd.f32 %v3861, %v3618
    %v3863 = vadd.f32 %v3862, %v3621
    %v3864 = vadd.f32 %v3863, %v3624
    %v3865 = vadd.f32 %v3864, %v3627
    %v3866 = vadd.f32 %v3865, %v3630
    %v3867 = vadd.f32 %v3866, %v3633
    %v3868 = vadd.f32 %v3867, %v3636
    %v3869 = vadd.f32 %v3868, %v3639
    %v3870 = vadd.f32 %v3869, %v3642
    %v3871 = vadd.f32 %v3870, %v3645
    %v3872 = vadd.f32 %v3871, %v3648
    %v3873 = vadd.f32 %v3872, %v3651
    %v3874 = vadd.f32 %v3873, %v3654
    %v3875 = vadd.f32 %v3874, %v3657
    %v3876 = vadd.f32 %v3875, %v3660
    %v3877 = vadd.f32 %v3876, %v3663
    %v3878 = vadd.f32 %v3877, %v3666
    %v3879 = vadd.f32 %v3878, %v3669
    %v3880 = vadd.f32 %v3879, %v3672
    %v3881 = vadd.f32 %v3880, %v3675
    %v3882 = vadd.f32 %v3881, %v3678
    %v3883 = vadd.f32 %v3882, %v3681
    %v3884 = vadd.f32 %v3883, %v3684
    %v3885 = vadd.f32 %v3884, %v3687
    %v3886 = vadd.f32 %v3885, %v3690
    %v3887 = vadd.f32 %v3886, %v3693
    %v3888 = vadd.f32 %v3887, %v3696
    %v3889 = vadd.f32 %v3888, %v3699
    %v3890 = vadd.f32 %v3889, %v3702
    %v3891 = vadd.f32 %v3890, %v3705
    %v3892 = vadd.f32 %v3891, %v3708
    %v3893 = vadd.f32 %v3892, %v3711
    %v3894 = vadd.f32 %v3893, %v3714
    %v3895 = vadd.f32 %v3894, %v3717
    %v3896 = vadd.f32 %v3895, %v3720
    %v3897 = vadd.f32 %v3896, %v3723
    %v3898 = vadd.f32 %v3897, %v3726
    %v3899 = vadd.f32 %v3898, %v3729
    %v3900 = vadd.f32 %v3899, %v3732
    %v3901 = vadd.f32 %v3900, %v3735
    %v3902 = vadd.f32 %v3901, %v3738
    %v3903 = vadd.f32 %v3902, %v3741
    %v3904 = vadd.f32 %v3903, %v3744
    %v3905 = vadd.f32 %v3904, %v3747
    %v3906 = vadd.f32 %v3905, %v3750
    %v3907 = vadd.f32 %v3906, %v3753
    %v3908 = vadd.f32 %v3907, %v3756
    %v3909 = vadd.f32 %v3908, %v3759
    %v3910 = vadd.f32 %v3909, %v3762
    %v3911 = vadd.f32 %v3910, %v3765
    %v3912 = vadd.f32 %v3911, %v3768
    %v3913 = vadd.f32 %v3912, %v3771
    %v3914 = vadd.f32 %v3913, %v3774
    %v3915 = vadd.f32 %v3914, %v3777
    %v3916 = vadd.f32 %v3915, %v3780
    %v3917 = vadd.f32 %v3916, %v3783
    %v3918 = vadd.f32 %v3917, %v3786
    %v3919 = vadd.f32 %v3918, %v3789
    %v3920 = vadd.f32 %v3919, %v3792
    %v3921 = vrot.slane %v3920, 4
    %v3922 = vadd.f32 %v3920, %v3921
    %v3923 = vrot.slane %v3922, 2
    %v3924 = vadd.f32 %v3922, %v3923
    %v3925 = vrot.slane %v3924, 1
    %v3926 = vadd.f32 %v3924, %v3925
    %v3927 = vmul.f32 %v3926, 0.001953125
    %v3928 = vsub.f32 %v3603, %v3927
    %v3929 = vsub.f32 %v3606, %v3927
    %v3930 = vsub.f32 %v3609, %v3927
    %v3931 = vsub.f32 %v3612, %v3927
    %v3932 = vsub.f32 %v3615, %v3927
    %v3933 = vsub.f32 %v3618, %v3927
    %v3934 = vsub.f32 %v3621, %v3927
    %v3935 = vsub.f32 %v3624, %v3927
    %v3936 = vsub.f32 %v3627, %v3927
    %v3937 = vsub.f32 %v3630, %v3927
    %v3938 = vsub.f32 %v3633, %v3927
    %v3939 = vsub.f32 %v3636, %v3927
    %v3940 = vsub.f32 %v3639, %v3927
    %v3941 = vsub.f32 %v3642, %v3927
    %v3942 = vsub.f32 %v3645, %v3927
    %v3943 = vsub.f32 %v3648, %v3927
    %v3944 = vsub.f32 %v3651, %v3927
    %v3945 = vsub.f32 %v3654, %v3927
    %v3946 = vsub.f32 %v3657, %v3927
    %v3947 = vsub.f32 %v3660, %v3927
    %v3948 = vsub.f32 %v3663, %v3927
    %v3949 = vsub.f32 %v3666, %v3927
    %v3950 = vsub.f32 %v3669, %v3927
    %v3951 = vsub.f32 %v3672, %v3927
    %v3952 = vsub.f32 %v3675, %v3927
    %v3953 = vsub.f32 %v3678, %v3927
    %v3954 = vsub.f32 %v3681, %v3927
    %v3955 = vsub.f32 %v3684, %v3927
    %v3956 = vsub.f32 %v3687, %v3927
    %v3957 = vsub.f32 %v3690, %v3927
    %v3958 = vsub.f32 %v3693, %v3927
    %v3959 = vsub.f32 %v3696, %v3927
    %v3960 = vsub.f32 %v3699, %v3927
    %v3961 = vsub.f32 %v3702, %v3927
    %v3962 = vsub.f32 %v3705, %v3927
    %v3963 = vsub.f32 %v3708, %v3927
    %v3964 = vsub.f32 %v3711, %v3927
    %v3965 = vsub.f32 %v3714, %v3927
    %v3966 = vsub.f32 %v3717, %v3927
    %v3967 = vsub.f32 %v3720, %v3927
    %v3968 = vsub.f32 %v3723, %v3927
    %v3969 = vsub.f32 %v3726, %v3927
    %v3970 = vsub.f32 %v3729, %v3927
    %v3971 = vsub.f32 %v3732, %v3927
    %v3972 = vsub.f32 %v3735, %v3927
    %v3973 = vsub.f32 %v3738, %v3927
    %v3974 = vsub.f32 %v3741, %v3927
    %v3975 = vsub.f32 %v3744, %v3927
    %v3976 = vsub.f32 %v3747, %v3927
    %v3977 = vsub.f32 %v3750, %v3927
    %v3978 = vsub.f32 %v3753, %v3927
    %v3979 = vsub.f32 %v3756, %v3927
    %v3980 = vsub.f32 %v3759, %v3927
    %v3981 = vsub.f32 %v3762, %v3927
    %v3982 = vsub.f32 %v3765, %v3927
    %v3983 = vsub.f32 %v3768, %v3927
    %v3984 = vsub.f32 %v3771, %v3927
    %v3985 = vsub.f32 %v3774, %v3927
    %v3986 = vsub.f32 %v3777, %v3927
    %v3987 = vsub.f32 %v3780, %v3927
    %v3988 = vsub.f32 %v3783, %v3927
    %v3989 = vsub.f32 %v3786, %v3927
    %v3990 = vsub.f32 %v3789, %v3927
    %v3991 = vsub.f32 %v3792, %v3927
    %v3992 = vmul.f32 %v3928, %v3928
    %v3993 = vmul.f32 %v3929, %v3929
    %v3994 = vmul.f32 %v3930, %v3930
    %v3995 = vmul.f32 %v3931, %v3931
    %v3996 = vmul.f32 %v3932, %v3932
    %v3997 = vmul.f32 %v3933, %v3933
    %v3998 = vmul.f32 %v3934, %v3934
    %v3999 = vmul.f32 %v3935, %v3935
    %v4000 = vmul.f32 %v3936, %v3936
    %v4001 = vmul.f32 %v3937, %v3937
    %v4002 = vmul.f32 %v3938, %v3938
    %v4003 = vmul.f32 %v3939, %v3939
    %v4004 = vmul.f32 %v3940, %v3940
    %v4005 = vmul.f32 %v3941, %v3941
    %v4006 = vmul.f32 %v3942, %v3942
    %v4007 = vmul.f32 %v3943, %v3943
    %v4008 = vmul.f32 %v3944, %v3944
    %v4009 = vmul.f32 %v3945, %v3945
    %v4010 = vmul.f32 %v3946, %v3946
    %v4011 = vmul.f32 %v3947, %v3947
    %v4012 = vmul.f32 %v3948, %v3948
    %v4013 = vmul.f32 %v3949, %v3949
    %v4014 = vmul.f32 %v3950, %v3950
    %v4015 = vmul.f32 %v3951, %v3951
    %v4016 = vmul.f32 %v3952, %v3952
    %v4017 = vmul.f32 %v3953, %v3953
    %v4018 = vmul.f32 %v3954, %v3954
    %v4019 = vmul.f32 %v3955, %v3955
    %v4020 = vmul.f32 %v3956, %v3956
    %v4021 = vmul.f32 %v3957, %v3957
    %v4022 = vmul.f32 %v3958, %v3958
    %v4023 = vmul.f32 %v3959, %v3959
    %v4024 = vmul.f32 %v3960, %v3960
    %v4025 = vmul.f32 %v3961, %v3961
    %v4026 = vmul.f32 %v3962, %v3962
    %v4027 = vmul.f32 %v3963, %v3963
    %v4028 = vmul.f32 %v3964, %v3964
    %v4029 = vmul.f32 %v3965, %v3965
    %v4030 = vmul.f32 %v3966, %v3966
    %v4031 = vmul.f32 %v3967, %v3967
    %v4032 = vmul.f32 %v3968, %v3968
    %v4033 = vmul.f32 %v3969, %v3969
    %v4034 = vmul.f32 %v3970, %v3970
    %v4035 = vmul.f32 %v3971, %v3971
    %v4036 = vmul.f32 %v3972, %v3972
    %v4037 = vmul.f32 %v3973, %v3973
    %v4038 = vmul.f32 %v3974, %v3974
    %v4039 = vmul.f32 %v3975, %v3975
    %v4040 = vmul.f32 %v3976, %v3976
    %v4041 = vmul.f32 %v3977, %v3977
    %v4042 = vmul.f32 %v3978, %v3978
    %v4043 = vmul.f32 %v3979, %v3979
    %v4044 = vmul.f32 %v3980, %v3980
    %v4045 = vmul.f32 %v3981, %v3981
    %v4046 = vmul.f32 %v3982, %v3982
    %v4047 = vmul.f32 %v3983, %v3983
    %v4048 = vmul.f32 %v3984, %v3984
    %v4049 = vmul.f32 %v3985, %v3985
    %v4050 = vmul.f32 %v3986, %v3986
    %v4051 = vmul.f32 %v3987, %v3987
    %v4052 = vmul.f32 %v3988, %v3988
    %v4053 = vmul.f32 %v3989, %v3989
    %v4054 = vmul.f32 %v3990, %v3990
    %v4055 = vmul.f32 %v3991, %v3991
    %v4056 = vadd.f32 %v3992, %v3993
    %v4057 = vadd.f32 %v4056, %v3994
    %v4058 = vadd.f32 %v4057, %v3995
    %v4059 = vadd.f32 %v4058, %v3996
    %v4060 = vadd.f32 %v4059, %v3997
    %v4061 = vadd.f32 %v4060, %v3998
    %v4062 = vadd.f32 %v4061, %v3999
    %v4063 = vadd.f32 %v4062, %v4000
    %v4064 = vadd.f32 %v4063, %v4001
    %v4065 = vadd.f32 %v4064, %v4002
    %v4066 = vadd.f32 %v4065, %v4003
    %v4067 = vadd.f32 %v4066, %v4004
    %v4068 = vadd.f32 %v4067, %v4005
    %v4069 = vadd.f32 %v4068, %v4006
    %v4070 = vadd.f32 %v4069, %v4007
    %v4071 = vadd.f32 %v4070, %v4008
    %v4072 = vadd.f32 %v4071, %v4009
    %v4073 = vadd.f32 %v4072, %v4010
    %v4074 = vadd.f32 %v4073, %v4011
    %v4075 = vadd.f32 %v4074, %v4012
    %v4076 = vadd.f32 %v4075, %v4013
    %v4077 = vadd.f32 %v4076, %v4014
    %v4078 = vadd.f32 %v4077, %v4015
    %v4079 = vadd.f32 %v4078, %v4016
    %v4080 = vadd.f32 %v4079, %v4017
    %v4081 = vadd.f32 %v4080, %v4018
    %v4082 = vadd.f32 %v4081, %v4019
    %v4083 = vadd.f32 %v4082, %v4020
    %v4084 = vadd.f32 %v4083, %v4021
    %v4085 = vadd.f32 %v4084, %v4022
    %v4086 = vadd.f32 %v4085, %v4023
    %v4087 = vadd.f32 %v4086, %v4024
    %v4088 = vadd.f32 %v4087, %v4025
    %v4089 = vadd.f32 %v4088, %v4026
    %v4090 = vadd.f32 %v4089, %v4027
    %v4091 = vadd.f32 %v4090, %v4028
    %v4092 = vadd.f32 %v4091, %v4029
    %v4093 = vadd.f32 %v4092, %v4030
    %v4094 = vadd.f32 %v4093, %v4031
    %v4095 = vadd.f32 %v4094, %v4032
    %v4096 = vadd.f32 %v4095, %v4033
    %v4097 = vadd.f32 %v4096, %v4034
    %v4098 = vadd.f32 %v4097, %v4035
    %v4099 = vadd.f32 %v4098, %v4036
    %v4100 = vadd.f32 %v4099, %v4037
    %v4101 = vadd.f32 %v4100, %v4038
    %v4102 = vadd.f32 %v4101, %v4039
    %v4103 = vadd.f32 %v4102, %v4040
    %v4104 = vadd.f32 %v4103, %v4041
    %v4105 = vadd.f32 %v4104, %v4042
    %v4106 = vadd.f32 %v4105, %v4043
    %v4107 = vadd.f32 %v4106, %v4044
    %v4108 = vadd.f32 %v4107, %v4045
    %v4109 = vadd.f32 %v4108, %v4046
    %v4110 = vadd.f32 %v4109, %v4047
    %v4111 = vadd.f32 %v4110, %v4048
    %v4112 = vadd.f32 %v4111, %v4049
    %v4113 = vadd.f32 %v4112, %v4050
    %v4114 = vadd.f32 %v4113, %v4051
    %v4115 = vadd.f32 %v4114, %v4052
    %v4116 = vadd.f32 %v4115, %v4053
    %v4117 = vadd.f32 %v4116, %v4054
    %v4118 = vadd.f32 %v4117, %v4055
    %v4119 = vrot.slane %v4118, 4
    %v4120 = vadd.f32 %v4118, %v4119
    %v4121 = vrot.slane %v4120, 2
    %v4122 = vadd.f32 %v4120, %v4121
    %v4123 = vrot.slane %v4122, 1
    %v4124 = vadd.f32 %v4122, %v4123
    %s4125 = scvt.s32.f32 0
    %s4126 = smul.f32 %s4125, 512.0
    %s4127 = sadd.f32 %s4126, 512.0
    %v4128 = vld [vmem:[%s4] sm:$0x1]
    %v4129 = vsub.f32 %v3927, %v4128
    %v4130 = vstv %s4127
    %v4131 = vrcp.pop %v4130
    %v4132 = vmul.f32 %v4130, %v4131
    %v4133 = vsub.f32 1.0, %v4132
    %v4134 = vmul.f32 %v4131, %v4133
    %v4135 = vadd.f32 %v4131, %v4134
    %vm4136 = vweird.f32 %v4130
    %vm4137 = vweird.f32 %v4131
    %vm4138 = vmor %vm4136, %vm4137
    %v4139 = vsel %vm4138, %v4131, %v4135
    %v4140 = vand.u32 2147483647, %v4130
    %vm4141 = vcmp.eq.f32.partialorder %v4140, 8.507059e+37
    %v4142 = vand.u32 %v4130, 2147483648
    %v4143 = vor.u32 1.1754944e-38, %v4142
    %v4144 = vsel %vm4141, %v4143, %v4139
    %s4145 = vtos %v4144
    %s4146 = smul.f32 512.0, %s4145
    %v4147 = vstv %s4146
    %v4148 = vmul.f32 %v4129, %v4147
    %v4149 = vadd.f32 %v4128, %v4148
    %4150 = vst [vmem:[%s4] sm:$0x1] %v4149
    %v4151 = vld [vmem:[%s4 + $0x1] sm:$0x1]
    %v4152 = vmul.f32 %v4129, %v4129
    %s4153 = smul.f32 %s4126, %s4146
    %v4154 = vstv %s4153
    %v4155 = vmul.f32 %v4152, %v4154
    %v4156 = vadd.f32 %v4124, %v4155
    %v4157 = vadd.f32 %v4151, %v4156
    %4158 = vst [vmem:[%s4 + $0x1] sm:$0x1] %v4157
    // Predicated region
    $region22: #{forward.3} parent=1 // pred_check
      _
    $region23: #{forward.3} parent=1 // pred_check_branch
      %4160 = sbr.rel (0) target = $region25
    $region24: #{forward.3} parent=1 // pred_region
      _
    $region25: #{forward.3} parent=1 // pred_fallthru
      _
    // Predicated region
    $region26: #{forward.3} parent=1 // pred_check
      _
    $region27: #{forward.3} parent=1 // pred_check_branch
      %4162 = sbr.rel (0) target = $region29
    $region28: #{forward.3} parent=1 // pred_region
      _
    $region29: #{forward.3} parent=1 // pred_fallthru
      _
    // Predicated region
    $region30: #{forward.3} parent=1 // pred_check
      _
    $region31: #{forward.3} parent=1 // pred_check_branch
      %4164 = sbr.rel (0) target = $region33
    $region32: #{forward.3} parent=1 // pred_region
      _
    $region33: #{forward.3} parent=1 // pred_fallthru
      _
    // Predicated region
    $region34: #{forward.3} parent=1 // pred_check
      _
    $region35: #{forward.3} parent=1 // pred_check_branch
      %4166 = sbr.rel (0) target = $region37
    $region36: #{forward.3} parent=1 // pred_region
      _
    $region37: #{forward.3} parent=1 // pred_fallthru
      _
    %4167 = vsyncpa [#allocation4], 1

// kernel: forward.4
$region0: #{forward.4}
  #allocation0 [shape = 'u32[]', space=smem, size = 0x4, offset = 0x4, fixed_abs, tag = 'smem constant byte address 0x4 - core index']
  #allocation1 [shape = 'u32[72,128]{1,0:T(1,128)}', space=vmem, size = 0x9000, scoped, tag = 'internal scratch']
  #allocation2 [shape = 'f32[2,18,18,128]{3,2,1,0:T(8,128)}', space=vmem, size = 0x6c000, scoped, tag = 'scratch operand']
  #allocation3 [shape = 'f32[512,1152]{1,0:T(8,128)}', space=vmem, size = 0x240000, scoped, tag = 'scratch operand']
  %s0 = inlined_call_operand.vmem [shape: f32[512,128], index: 0, kind: input, shape index: {}]
  %s1 = inlined_call_operand.vmem [shape: f32[8,128], index: 1, kind: input, shape index: {}]
  %s2 = inlined_call_operand.vmem [shape: f32[1152,128], index: 2, kind: input, shape index: {}]
  %s3 = inlined_call_operand.vmem [shape: f32[8,128], index: 3, kind: input, shape index: {}]
  %s4 = inlined_call_operand.vmem [shape: f32[512,128], index: 4, kind: output, shape index: {0}]
  %s5 = inlined_call_operand.vmem [shape: f32[8,128], index: 5, kind: output, shape index: {1}]
  %6 = xla_tuple %s4, %s5
  %s7 = sld [smem:[#allocation0]]
  $region38: #{forward.4} parent=0
    _
  %s9 = ssub.s32 1, %s7
  %s10 = scalar_select 0, %s9, %s7
  // Predicated region
  $region2: #{forward.4} parent=0 // pred_check
    _
  $region3: #{forward.4} parent=0 // pred_check_branch
    %12 = sbr.rel (0) target = $region5
  $region4: #{forward.4} parent=0 // pred_region
    _
  $region5: #{forward.4} parent=0 // pred_fallthru
    _
  // Predicated region
  $region6: #{forward.4} parent=0 // pred_check
    _
  $region7: #{forward.4} parent=0 // pred_check_branch
    %14 = sbr.rel (0) target = $region9
  $region8: #{forward.4} parent=0 // pred_region
    _
  $region9: #{forward.4} parent=0 // pred_fallthru
    _
  // Predicated region
  $region10: #{forward.4} parent=0 // pred_check
    _
  $region11: #{forward.4} parent=0 // pred_check_branch
    %16 = sbr.rel (0) target = $region13
  $region12: #{forward.4} parent=0 // pred_region
    _
  $region13: #{forward.4} parent=0 // pred_fallthru
    _
  // Predicated region
  $region14: #{forward.4} parent=0 // pred_check
    _
  $region15: #{forward.4} parent=0 // pred_check_branch
    %18 = sbr.rel (0) target = $region17
  $region16: #{forward.4} parent=0 // pred_region
    _
  $region17: #{forward.4} parent=0 // pred_fallthru
    _
  %p19 = scmp.eq.s32.totalorder 0, 0
  // Predicated region
  $region18: #{forward.4} parent=0 // pred_check
    %p20 = pneg %p19
  $region19: #{forward.4} parent=0 // pred_check_branch
    %22 = sbr.rel (%p20) target = $region21
  $region20: #{forward.4} parent=0 // pred_region
    %23 = vst [vmem:[%s5] sm:$0xff] 0.0
    %24 = vst [vmem:[#allocation2] sm:$0xff] 0.0
    %25 = vst [vmem:[#allocation2 + $0x8] sm:$0xff] 0.0
    %26 = vst [vmem:[#allocation2 + $0x10] sm:$0x3] 0.0
    %27 = vst [vmem:[#allocation2 + $0x18] sm:$0xff] 0.0
    %28 = vst [vmem:[#allocation2 + $0x20] sm:$0xff] 0.0
    %29 = vst [vmem:[#allocation2 + $0x28] sm:$0x3] 0.0
    %30 = vst [vmem:[#allocation2 + $0x30] sm:$0xff] 0.0
    %31 = vst [vmem:[#allocation2 + $0x38] sm:$0xff] 0.0
    %32 = vst [vmem:[#allocation2 + $0x40] sm:$0x3] 0.0
    %33 = vst [vmem:[#allocation2 + $0x48] sm:$0xff] 0.0
    %34 = vst [vmem:[#allocation2 + $0x50] sm:$0xff] 0.0
    %35 = vst [vmem:[#allocation2 + $0x58] sm:$0x3] 0.0
    %36 = vst [vmem:[#allocation2 + $0x60] sm:$0xff] 0.0
    %37 = vst [vmem:[#allocation2 + $0x68] sm:$0xff] 0.0
    %38 = vst [vmem:[#allocation2 + $0x70] sm:$0x3] 0.0
    %39 = vst [vmem:[#allocation2 + $0x78] sm:$0xff] 0.0
    %40 = vst [vmem:[#allocation2 + $0x80] sm:$0xff] 0.0
    %41 = vst [vmem:[#allocation2 + $0x88] sm:$0x3] 0.0
    %42 = vst [vmem:[#allocation2 + $0x90] sm:$0xff] 0.0
    %43 = vst [vmem:[#allocation2 + $0x98] sm:$0xff] 0.0
    %44 = vst [vmem:[#allocation2 + $0xa0] sm:$0x3] 0.0
    %45 = vst [vmem:[#allocation2 + $0xa8] sm:$0xff] 0.0
    %46 = vst [vmem:[#allocation2 + $0xb0] sm:$0xff] 0.0
    %47 = vst [vmem:[#allocation2 + $0xb8] sm:$0x3] 0.0
    %48 = vst [vmem:[#allocation2 + $0xc0] sm:$0xff] 0.0
    %49 = vst [vmem:[#allocation2 + $0xc8] sm:$0xff] 0.0
    %50 = vst [vmem:[#allocation2 + $0xd0] sm:$0x3] 0.0
    %51 = vst [vmem:[#allocation2 + $0xd8] sm:$0xff] 0.0
    %52 = vst [vmem:[#allocation2 + $0xe0] sm:$0xff] 0.0
    %53 = vst [vmem:[#allocation2 + $0xe8] sm:$0x3] 0.0
    %54 = vst [vmem:[#allocation2 + $0xf0] sm:$0xff] 0.0
    %55 = vst [vmem:[#allocation2 + $0xf8] sm:$0xff] 0.0
    %56 = vst [vmem:[#allocation2 + $0x100] sm:$0x3] 0.0
    %57 = vst [vmem:[#allocation2 + $0x108] sm:$0xff] 0.0
    %58 = vst [vmem:[#allocation2 + $0x110] sm:$0xff] 0.0
    %59 = vst [vmem:[#allocation2 + $0x118] sm:$0x3] 0.0
    %60 = vst [vmem:[#allocation2 + $0x120] sm:$0xff] 0.0
    %61 = vst [vmem:[#allocation2 + $0x128] sm:$0xff] 0.0
    %62 = vst [vmem:[#allocation2 + $0x130] sm:$0x3] 0.0
    %63 = vst [vmem:[#allocation2 + $0x138] sm:$0xff] 0.0
    %64 = vst [vmem:[#allocation2 + $0x140] sm:$0xff] 0.0
    %65 = vst [vmem:[#allocation2 + $0x148] sm:$0x3] 0.0
    %66 = vst [vmem:[#allocation2 + $0x150] sm:$0xff] 0.0
    %67 = vst [vmem:[#allocation2 + $0x158] sm:$0xff] 0.0
    %68 = vst [vmem:[#allocation2 + $0x160] sm:$0x3] 0.0
    %69 = vst [vmem:[#allocation2 + $0x168] sm:$0xff] 0.0
    %70 = vst [vmem:[#allocation2 + $0x170] sm:$0xff] 0.0
    %71 = vst [vmem:[#allocation2 + $0x178] sm:$0x3] 0.0
    %72 = vst [vmem:[#allocation2 + $0x180] sm:$0xff] 0.0
    %73 = vst [vmem:[#allocation2 + $0x188] sm:$0xff] 0.0
    %74 = vst [vmem:[#allocation2 + $0x190] sm:$0x3] 0.0
    %75 = vst [vmem:[#allocation2 + $0x198] sm:$0xff] 0.0
    %76 = vst [vmem:[#allocation2 + $0x1a0] sm:$0xff] 0.0
    %77 = vst [vmem:[#allocation2 + $0x1a8] sm:$0x3] 0.0
    %78 = vst [vmem:[#allocation2 + $0x1b0] sm:$0xff] 0.0
    %79 = vst [vmem:[#allocation2 + $0x1b8] sm:$0xff] 0.0
    %80 = vst [vmem:[#allocation2 + $0x1c0] sm:$0x3] 0.0
    %81 = vst [vmem:[#allocation2 + $0x1c8] sm:$0xff] 0.0
    %82 = vst [vmem:[#allocation2 + $0x1d0] sm:$0xff] 0.0
    %83 = vst [vmem:[#allocation2 + $0x1d8] sm:$0x3] 0.0
    %84 = vst [vmem:[#allocation2 + $0x1e0] sm:$0xff] 0.0
    %85 = vst [vmem:[#allocation2 + $0x1e8] sm:$0xff] 0.0
    %86 = vst [vmem:[#allocation2 + $0x1f0] sm:$0x3] 0.0
    %87 = vst [vmem:[#allocation2 + $0x1f8] sm:$0xff] 0.0
    %88 = vst [vmem:[#allocation2 + $0x200] sm:$0xff] 0.0
    %89 = vst [vmem:[#allocation2 + $0x208] sm:$0x3] 0.0
    %90 = vst [vmem:[#allocation2 + $0x210] sm:$0xff] 0.0
    %91 = vst [vmem:[#allocation2 + $0x218] sm:$0xff] 0.0
    %92 = vst [vmem:[#allocation2 + $0x220] sm:$0x3] 0.0
    %93 = vst [vmem:[#allocation2 + $0x228] sm:$0xff] 0.0
    %94 = vst [vmem:[#allocation2 + $0x230] sm:$0xff] 0.0
    %95 = vst [vmem:[#allocation2 + $0x238] sm:$0x3] 0.0
    %96 = vst [vmem:[#allocation2 + $0x240] sm:$0xff] 0.0
    %97 = vst [vmem:[#allocation2 + $0x248] sm:$0xff] 0.0
    %98 = vst [vmem:[#allocation2 + $0x250] sm:$0x3] 0.0
    %99 = vst [vmem:[#allocation2 + $0x258] sm:$0xff] 0.0
    %100 = vst [vmem:[#allocation2 + $0x260] sm:$0xff] 0.0
    %101 = vst [vmem:[#allocation2 + $0x268] sm:$0x3] 0.0
    %102 = vst [vmem:[#allocation2 + $0x270] sm:$0xff] 0.0
    %103 = vst [vmem:[#allocation2 + $0x278] sm:$0xff] 0.0
    %104 = vst [vmem:[#allocation2 + $0x280] sm:$0x3] 0.0
    %105 = vst [vmem:[#allocation2 + $0x288] sm:$0xff] 0.0
    %106 = vst [vmem:[#allocation2 + $0x290] sm:$0xff] 0.0
    %107 = vst [vmem:[#allocation2 + $0x298] sm:$0x3] 0.0
    %108 = vst [vmem:[#allocation2 + $0x2a0] sm:$0xff] 0.0
    %109 = vst [vmem:[#allocation2 + $0x2a8] sm:$0xff] 0.0
    %110 = vst [vmem:[#allocation2 + $0x2b0] sm:$0x3] 0.0
    %111 = vst [vmem:[#allocation2 + $0x2b8] sm:$0xff] 0.0
    %112 = vst [vmem:[#allocation2 + $0x2c0] sm:$0xff] 0.0
    %113 = vst [vmem:[#allocation2 + $0x2c8] sm:$0x3] 0.0
    %114 = vst [vmem:[#allocation2 + $0x2d0] sm:$0xff] 0.0
    %115 = vst [vmem:[#allocation2 + $0x2d8] sm:$0xff] 0.0
    %116 = vst [vmem:[#allocation2 + $0x2e0] sm:$0x3] 0.0
    %117 = vst [vmem:[#allocation2 + $0x2e8] sm:$0xff] 0.0
    %118 = vst [vmem:[#allocation2 + $0x2f0] sm:$0xff] 0.0
    %119 = vst [vmem:[#allocation2 + $0x2f8] sm:$0x3] 0.0
    %120 = vst [vmem:[#allocation2 + $0x300] sm:$0xff] 0.0
    %121 = vst [vmem:[#allocation2 + $0x308] sm:$0xff] 0.0
    %122 = vst [vmem:[#allocation2 + $0x310] sm:$0x3] 0.0
    %123 = vst [vmem:[#allocation2 + $0x318] sm:$0xff] 0.0
    %124 = vst [vmem:[#allocation2 + $0x320] sm:$0xff] 0.0
    %125 = vst [vmem:[#allocation2 + $0x328] sm:$0x3] 0.0
    %126 = vst [vmem:[#allocation2 + $0x330] sm:$0xff] 0.0
    %127 = vst [vmem:[#allocation2 + $0x338] sm:$0xff] 0.0
    %128 = vst [vmem:[#allocation2 + $0x340] sm:$0x3] 0.0
    %129 = vst [vmem:[#allocation2 + $0x348] sm:$0xff] 0.0
    %130 = vst [vmem:[#allocation2 + $0x350] sm:$0xff] 0.0
    %131 = vst [vmem:[#allocation2 + $0x358] sm:$0x3] 0.0
  $region21: #{forward.4} parent=0 // pred_fallthru
    _
  %v132 = vld [vmem:[%s0] sm:$0xff]
  %v133 = vld [vmem:[%s0 + $0x8] sm:$0xff]
  %v134 = vld [vmem:[%s0 + $0x10] sm:$0xff]
  %v135 = vld [vmem:[%s0 + $0x18] sm:$0xff]
  %v136 = vld [vmem:[%s0 + $0x20] sm:$0xff]
  %v137 = vld [vmem:[%s0 + $0x28] sm:$0xff]
  %v138 = vld [vmem:[%s0 + $0x30] sm:$0xff]
  %v139 = vld [vmem:[%s0 + $0x38] sm:$0xff]
  %v140 = vld [vmem:[%s0 + $0x40] sm:$0xff]
  %v141 = vld [vmem:[%s0 + $0x48] sm:$0xff]
  %v142 = vld [vmem:[%s0 + $0x50] sm:$0xff]
  %v143 = vld [vmem:[%s0 + $0x58] sm:$0xff]
  %v144 = vld [vmem:[%s0 + $0x60] sm:$0xff]
  %v145 = vld [vmem:[%s0 + $0x68] sm:$0xff]
  %v146 = vld [vmem:[%s0 + $0x70] sm:$0xff]
  %v147 = vld [vmem:[%s0 + $0x78] sm:$0xff]
  %v148 = vld [vmem:[%s0 + $0x80] sm:$0xff]
  %v149 = vld [vmem:[%s0 + $0x88] sm:$0xff]
  %v150 = vld [vmem:[%s0 + $0x90] sm:$0xff]
  %v151 = vld [vmem:[%s0 + $0x98] sm:$0xff]
  %v152 = vld [vmem:[%s0 + $0xa0] sm:$0xff]
  %v153 = vld [vmem:[%s0 + $0xa8] sm:$0xff]
  %v154 = vld [vmem:[%s0 + $0xb0] sm:$0xff]
  %v155 = vld [vmem:[%s0 + $0xb8] sm:$0xff]
  %v156 = vld [vmem:[%s0 + $0xc0] sm:$0xff]
  %v157 = vld [vmem:[%s0 + $0xc8] sm:$0xff]
  %v158 = vld [vmem:[%s0 + $0xd0] sm:$0xff]
  %v159 = vld [vmem:[%s0 + $0xd8] sm:$0xff]
  %v160 = vld [vmem:[%s0 + $0xe0] sm:$0xff]
  %v161 = vld [vmem:[%s0 + $0xe8] sm:$0xff]
  %v162 = vld [vmem:[%s0 + $0xf0] sm:$0xff]
  %v163 = vld [vmem:[%s0 + $0xf8] sm:$0xff]
  %v164 = vld [vmem:[%s0 + $0x100] sm:$0xff]
  %v165 = vld [vmem:[%s0 + $0x108] sm:$0xff]
  %v166 = vld [vmem:[%s0 + $0x110] sm:$0xff]
  %v167 = vld [vmem:[%s0 + $0x118] sm:$0xff]
  %v168 = vld [vmem:[%s0 + $0x120] sm:$0xff]
  %v169 = vld [vmem:[%s0 + $0x128] sm:$0xff]
  %v170 = vld [vmem:[%s0 + $0x130] sm:$0xff]
  %v171 = vld [vmem:[%s0 + $0x138] sm:$0xff]
  %v172 = vld [vmem:[%s0 + $0x140] sm:$0xff]
  %v173 = vld [vmem:[%s0 + $0x148] sm:$0xff]
  %v174 = vld [vmem:[%s0 + $0x150] sm:$0xff]
  %v175 = vld [vmem:[%s0 + $0x158] sm:$0xff]
  %v176 = vld [vmem:[%s0 + $0x160] sm:$0xff]
  %v177 = vld [vmem:[%s0 + $0x168] sm:$0xff]
  %v178 = vld [vmem:[%s0 + $0x170] sm:$0xff]
  %v179 = vld [vmem:[%s0 + $0x178] sm:$0xff]
  %v180 = vld [vmem:[%s0 + $0x180] sm:$0xff]
  %v181 = vld [vmem:[%s0 + $0x188] sm:$0xff]
  %v182 = vld [vmem:[%s0 + $0x190] sm:$0xff]
  %v183 = vld [vmem:[%s0 + $0x198] sm:$0xff]
  %v184 = vld [vmem:[%s0 + $0x1a0] sm:$0xff]
  %v185 = vld [vmem:[%s0 + $0x1a8] sm:$0xff]
  %v186 = vld [vmem:[%s0 + $0x1b0] sm:$0xff]
  %v187 = vld [vmem:[%s0 + $0x1b8] sm:$0xff]
  %v188 = vld [vmem:[%s0 + $0x1c0] sm:$0xff]
  %v189 = vld [vmem:[%s0 + $0x1c8] sm:$0xff]
  %v190 = vld [vmem:[%s0 + $0x1d0] sm:$0xff]
  %v191 = vld [vmem:[%s0 + $0x1d8] sm:$0xff]
  %v192 = vld [vmem:[%s0 + $0x1e0] sm:$0xff]
  %v193 = vld [vmem:[%s0 + $0x1e8] sm:$0xff]
  %v194 = vld [vmem:[%s0 + $0x1f0] sm:$0xff]
  %v195 = vld [vmem:[%s0 + $0x1f8] sm:$0xff]
  %v196 = vld [vmem:[%s1] sm:$0x1]
  %v197 = vld [vmem:[%s1 + $0x1] sm:$0x1]
  %v198 = vmul.f32 %v197, 0.001953125
  %v199 = vadd.f32 %v198, 1e-05
  %v200 = vrsqrt.pop %v199
  %v201 = vmul.f32 %v200, %v199
  %v202 = vmul.f32 %v201, %v200
  %v203 = vmul.f32 0.5, %v202
  %v204 = vsub.f32 1.5, %v203
  %v205 = vmul.f32 %v200, %v204
  %vm206 = vweird.f32 %v199
  %vm207 = vweird.f32 %v200
  %vm208 = vmor %vm206, %vm207
  %v209 = vsel %vm208, %v200, %v205
  %v210 = vperm.slane %v196, 0
  %v211 = vsub.f32 %v132, %v210
  %v212 = vsub.f32 %v133, %v210
  %v213 = vsub.f32 %v134, %v210
  %v214 = vsub.f32 %v135, %v210
  %v215 = vsub.f32 %v136, %v210
  %v216 = vsub.f32 %v137, %v210
  %v217 = vsub.f32 %v138, %v210
  %v218 = vsub.f32 %v139, %v210
  %v219 = vsub.f32 %v140, %v210
  %v220 = vsub.f32 %v141, %v210
  %v221 = vsub.f32 %v142, %v210
  %v222 = vsub.f32 %v143, %v210
  %v223 = vsub.f32 %v144, %v210
  %v224 = vsub.f32 %v145, %v210
  %v225 = vsub.f32 %v146, %v210
  %v226 = vsub.f32 %v147, %v210
  %v227 = vsub.f32 %v148, %v210
  %v228 = vsub.f32 %v149, %v210
  %v229 = vsub.f32 %v150, %v210
  %v230 = vsub.f32 %v151, %v210
  %v231 = vsub.f32 %v152, %v210
  %v232 = vsub.f32 %v153, %v210
  %v233 = vsub.f32 %v154, %v210
  %v234 = vsub.f32 %v155, %v210
  %v235 = vsub.f32 %v156, %v210
  %v236 = vsub.f32 %v157, %v210
  %v237 = vsub.f32 %v158, %v210
  %v238 = vsub.f32 %v159, %v210
  %v239 = vsub.f32 %v160, %v210
  %v240 = vsub.f32 %v161, %v210
  %v241 = vsub.f32 %v162, %v210
  %v242 = vsub.f32 %v163, %v210
  %v243 = vsub.f32 %v164, %v210
  %v244 = vsub.f32 %v165, %v210
  %v245 = vsub.f32 %v166, %v210
  %v246 = vsub.f32 %v167, %v210
  %v247 = vsub.f32 %v168, %v210
  %v248 = vsub.f32 %v169, %v210
  %v249 = vsub.f32 %v170, %v210
  %v250 = vsub.f32 %v171, %v210
  %v251 = vsub.f32 %v172, %v210
  %v252 = vsub.f32 %v173, %v210
  %v253 = vsub.f32 %v174, %v210
  %v254 = vsub.f32 %v175, %v210
  %v255 = vsub.f32 %v176, %v210
  %v256 = vsub.f32 %v177, %v210
  %v257 = vsub.f32 %v178, %v210
  %v258 = vsub.f32 %v179, %v210
  %v259 = vsub.f32 %v180, %v210
  %v260 = vsub.f32 %v181, %v210
  %v261 = vsub.f32 %v182, %v210
  %v262 = vsub.f32 %v183, %v210
  %v263 = vsub.f32 %v184, %v210
  %v264 = vsub.f32 %v185, %v210
  %v265 = vsub.f32 %v186, %v210
  %v266 = vsub.f32 %v187, %v210
  %v267 = vsub.f32 %v188, %v210
  %v268 = vsub.f32 %v189, %v210
  %v269 = vsub.f32 %v190, %v210
  %v270 = vsub.f32 %v191, %v210
  %v271 = vsub.f32 %v192, %v210
  %v272 = vsub.f32 %v193, %v210
  %v273 = vsub.f32 %v194, %v210
  %v274 = vsub.f32 %v195, %v210
  %v275 = vld [vmem:[%s3 + $0x1] sm:$0x1]
  %v276 = vmul.f32 %v209, %v275
  %v277 = vperm.slane %v276, 0
  %v278 = vmul.f32 %v211, %v277
  %v279 = vmul.f32 %v212, %v277
  %v280 = vmul.f32 %v213, %v277
  %v281 = vmul.f32 %v214, %v277
  %v282 = vmul.f32 %v215, %v277
  %v283 = vmul.f32 %v216, %v277
  %v284 = vmul.f32 %v217, %v277
  %v285 = vmul.f32 %v218, %v277
  %v286 = vmul.f32 %v219, %v277
  %v287 = vmul.f32 %v220, %v277
  %v288 = vmul.f32 %v221, %v277
  %v289 = vmul.f32 %v222, %v277
  %v290 = vmul.f32 %v223, %v277
  %v291 = vmul.f32 %v224, %v277
  %v292 = vmul.f32 %v225, %v277
  %v293 = vmul.f32 %v226, %v277
  %v294 = vmul.f32 %v227, %v277
  %v295 = vmul.f32 %v228, %v277
  %v296 = vmul.f32 %v229, %v277
  %v297 = vmul.f32 %v230, %v277
  %v298 = vmul.f32 %v231, %v277
  %v299 = vmul.f32 %v232, %v277
  %v300 = vmul.f32 %v233, %v277
  %v301 = vmul.f32 %v234, %v277
  %v302 = vmul.f32 %v235, %v277
  %v303 = vmul.f32 %v236, %v277
  %v304 = vmul.f32 %v237, %v277
  %v305 = vmul.f32 %v238, %v277
  %v306 = vmul.f32 %v239, %v277
  %v307 = vmul.f32 %v240, %v277
  %v308 = vmul.f32 %v241, %v277
  %v309 = vmul.f32 %v242, %v277
  %v310 = vmul.f32 %v243, %v277
  %v311 = vmul.f32 %v244, %v277
  %v312 = vmul.f32 %v245, %v277
  %v313 = vmul.f32 %v246, %v277
  %v314 = vmul.f32 %v247, %v277
  %v315 = vmul.f32 %v248, %v277
  %v316 = vmul.f32 %v249, %v277
  %v317 = vmul.f32 %v250, %v277
  %v318 = vmul.f32 %v251, %v277
  %v319 = vmul.f32 %v252, %v277
  %v320 = vmul.f32 %v253, %v277
  %v321 = vmul.f32 %v254, %v277
  %v322 = vmul.f32 %v255, %v277
  %v323 = vmul.f32 %v256, %v277
  %v324 = vmul.f32 %v257, %v277
  %v325 = vmul.f32 %v258, %v277
  %v326 = vmul.f32 %v259, %v277
  %v327 = vmul.f32 %v260, %v277
  %v328 = vmul.f32 %v261, %v277
  %v329 = vmul.f32 %v262, %v277
  %v330 = vmul.f32 %v263, %v277
  %v331 = vmul.f32 %v264, %v277
  %v332 = vmul.f32 %v265, %v277
  %v333 = vmul.f32 %v266, %v277
  %v334 = vmul.f32 %v267, %v277
  %v335 = vmul.f32 %v268, %v277
  %v336 = vmul.f32 %v269, %v277
  %v337 = vmul.f32 %v270, %v277
  %v338 = vmul.f32 %v271, %v277
  %v339 = vmul.f32 %v272, %v277
  %v340 = vmul.f32 %v273, %v277
  %v341 = vmul.f32 %v274, %v277
  %v342 = vld [vmem:[%s3 + $0x2] sm:$0x1]
  %v343 = vperm.slane %v342, 0
  %v344 = vadd.f32 %v278, %v343
  %v345 = vadd.f32 %v279, %v343
  %v346 = vadd.f32 %v280, %v343
  %v347 = vadd.f32 %v281, %v343
  %v348 = vadd.f32 %v282, %v343
  %v349 = vadd.f32 %v283, %v343
  %v350 = vadd.f32 %v284, %v343
  %v351 = vadd.f32 %v285, %v343
  %v352 = vadd.f32 %v286, %v343
  %v353 = vadd.f32 %v287, %v343
  %v354 = vadd.f32 %v288, %v343
  %v355 = vadd.f32 %v289, %v343
  %v356 = vadd.f32 %v290, %v343
  %v357 = vadd.f32 %v291, %v343
  %v358 = vadd.f32 %v292, %v343
  %v359 = vadd.f32 %v293, %v343
  %v360 = vadd.f32 %v294, %v343
  %v361 = vadd.f32 %v295, %v343
  %v362 = vadd.f32 %v296, %v343
  %v363 = vadd.f32 %v297, %v343
  %v364 = vadd.f32 %v298, %v343
  %v365 = vadd.f32 %v299, %v343
  %v366 = vadd.f32 %v300, %v343
  %v367 = vadd.f32 %v301, %v343
  %v368 = vadd.f32 %v302, %v343
  %v369 = vadd.f32 %v303, %v343
  %v370 = vadd.f32 %v304, %v343
  %v371 = vadd.f32 %v305, %v343
  %v372 = vadd.f32 %v306, %v343
  %v373 = vadd.f32 %v307, %v343
  %v374 = vadd.f32 %v308, %v343
  %v375 = vadd.f32 %v309, %v343
  %v376 = vadd.f32 %v310, %v343
  %v377 = vadd.f32 %v311, %v343
  %v378 = vadd.f32 %v312, %v343
  %v379 = vadd.f32 %v313, %v343
  %v380 = vadd.f32 %v314, %v343
  %v381 = vadd.f32 %v315, %v343
  %v382 = vadd.f32 %v316, %v343
  %v383 = vadd.f32 %v317, %v343
  %v384 = vadd.f32 %v318, %v343
  %v385 = vadd.f32 %v319, %v343
  %v386 = vadd.f32 %v320, %v343
  %v387 = vadd.f32 %v321, %v343
  %v388 = vadd.f32 %v322, %v343
  %v389 = vadd.f32 %v323, %v343
  %v390 = vadd.f32 %v324, %v343
  %v391 = vadd.f32 %v325, %v343
  %v392 = vadd.f32 %v326, %v343
  %v393 = vadd.f32 %v327, %v343
  %v394 = vadd.f32 %v328, %v343
  %v395 = vadd.f32 %v329, %v343
  %v396 = vadd.f32 %v330, %v343
  %v397 = vadd.f32 %v331, %v343
  %v398 = vadd.f32 %v332, %v343
  %v399 = vadd.f32 %v333, %v343
  %v400 = vadd.f32 %v334, %v343
  %v401 = vadd.f32 %v335, %v343
  %v402 = vadd.f32 %v336, %v343
  %v403 = vadd.f32 %v337, %v343
  %v404 = vadd.f32 %v338, %v343
  %v405 = vadd.f32 %v339, %v343
  %v406 = vadd.f32 %v340, %v343
  %v407 = vadd.f32 %v341, %v343
  %v408 = vmax.f32 %v344, 0.0
  %v409 = vmax.f32 %v345, 0.0
  %v410 = vmax.f32 %v346, 0.0
  %v411 = vmax.f32 %v347, 0.0
  %v412 = vmax.f32 %v348, 0.0
  %v413 = vmax.f32 %v349, 0.0
  %v414 = vmax.f32 %v350, 0.0
  %v415 = vmax.f32 %v351, 0.0
  %v416 = vmax.f32 %v352, 0.0
  %v417 = vmax.f32 %v353, 0.0
  %v418 = vmax.f32 %v354, 0.0
  %v419 = vmax.f32 %v355, 0.0
  %v420 = vmax.f32 %v356, 0.0
  %v421 = vmax.f32 %v357, 0.0
  %v422 = vmax.f32 %v358, 0.0
  %v423 = vmax.f32 %v359, 0.0
  %v424 = vmax.f32 %v360, 0.0
  %v425 = vmax.f32 %v361, 0.0
  %v426 = vmax.f32 %v362, 0.0
  %v427 = vmax.f32 %v363, 0.0
  %v428 = vmax.f32 %v364, 0.0
  %v429 = vmax.f32 %v365, 0.0
  %v430 = vmax.f32 %v366, 0.0
  %v431 = vmax.f32 %v367, 0.0
  %v432 = vmax.f32 %v368, 0.0
  %v433 = vmax.f32 %v369, 0.0
  %v434 = vmax.f32 %v370, 0.0
  %v435 = vmax.f32 %v371, 0.0
  %v436 = vmax.f32 %v372, 0.0
  %v437 = vmax.f32 %v373, 0.0
  %v438 = vmax.f32 %v374, 0.0
  %v439 = vmax.f32 %v375, 0.0
  %v440 = vmax.f32 %v376, 0.0
  %v441 = vmax.f32 %v377, 0.0
  %v442 = vmax.f32 %v378, 0.0
  %v443 = vmax.f32 %v379, 0.0
  %v444 = vmax.f32 %v380, 0.0
  %v445 = vmax.f32 %v381, 0.0
  %v446 = vmax.f32 %v382, 0.0
  %v447 = vmax.f32 %v383, 0.0
  %v448 = vmax.f32 %v384, 0.0
  %v449 = vmax.f32 %v385, 0.0
  %v450 = vmax.f32 %v386, 0.0
  %v451 = vmax.f32 %v387, 0.0
  %v452 = vmax.f32 %v388, 0.0
  %v453 = vmax.f32 %v389, 0.0
  %v454 = vmax.f32 %v390, 0.0
  %v455 = vmax.f32 %v391, 0.0
  %v456 = vmax.f32 %v392, 0.0
  %v457 = vmax.f32 %v393, 0.0
  %v458 = vmax.f32 %v394, 0.0
  %v459 = vmax.f32 %v395, 0.0
  %v460 = vmax.f32 %v396, 0.0
  %v461 = vmax.f32 %v397, 0.0
  %v462 = vmax.f32 %v398, 0.0
  %v463 = vmax.f32 %v399, 0.0
  %v464 = vmax.f32 %v400, 0.0
  %v465 = vmax.f32 %v401, 0.0
  %v466 = vmax.f32 %v402, 0.0
  %v467 = vmax.f32 %v403, 0.0
  %v468 = vmax.f32 %v404, 0.0
  %v469 = vmax.f32 %v405, 0.0
  %v470 = vmax.f32 %v406, 0.0
  %v471 = vmax.f32 %v407, 0.0
  %s472 = scalar_lea.vmem [#allocation2], 24
  %473 = vst [vmem:[%s472 + $0x1] sm:$0xff] %v408
  %474 = vst [vmem:[%s472 + $0x9] sm:$0xff] %v409
  %475 = vst [vmem:[%s472 + $0x19] sm:$0xff] %v410
  %476 = vst [vmem:[%s472 + $0x21] sm:$0xff] %v411
  %477 = vst [vmem:[%s472 + $0x31] sm:$0xff] %v412
  %478 = vst [vmem:[%s472 + $0x39] sm:$0xff] %v413
  %479 = vst [vmem:[%s472 + $0x49] sm:$0xff] %v414
  %480 = vst [vmem:[%s472 + $0x51] sm:$0xff] %v415
  %481 = vst [vmem:[%s472 + $0x61] sm:$0xff] %v416
  %482 = vst [vmem:[%s472 + $0x69] sm:$0xff] %v417
  %483 = vst [vmem:[%s472 + $0x79] sm:$0xff] %v418
  %484 = vst [vmem:[%s472 + $0x81] sm:$0xff] %v419
  %485 = vst [vmem:[%s472 + $0x91] sm:$0xff] %v420
  %486 = vst [vmem:[%s472 + $0x99] sm:$0xff] %v421
  %487 = vst [vmem:[%s472 + $0xa9] sm:$0xff] %v422
  %488 = vst [vmem:[%s472 + $0xb1] sm:$0xff] %v423
  %489 = vst [vmem:[%s472 + $0xc1] sm:$0xff] %v424
  %490 = vst [vmem:[%s472 + $0xc9] sm:$0xff] %v425
  %491 = vst [vmem:[%s472 + $0xd9] sm:$0xff] %v426
  %492 = vst [vmem:[%s472 + $0xe1] sm:$0xff] %v427
  %493 = vst [vmem:[%s472 + $0xf1] sm:$0xff] %v428
  %494 = vst [vmem:[%s472 + $0xf9] sm:$0xff] %v429
  %495 = vst [vmem:[%s472 + $0x109] sm:$0xff] %v430
  %496 = vst [vmem:[%s472 + $0x111] sm:$0xff] %v431
  %497 = vst [vmem:[%s472 + $0x121] sm:$0xff] %v432
  %498 = vst [vmem:[%s472 + $0x129] sm:$0xff] %v433
  %499 = vst [vmem:[%s472 + $0x139] sm:$0xff] %v434
  %500 = vst [vmem:[%s472 + $0x141] sm:$0xff] %v435
  %501 = vst [vmem:[%s472 + $0x151] sm:$0xff] %v436
  %502 = vst [vmem:[%s472 + $0x159] sm:$0xff] %v437
  %503 = vst [vmem:[%s472 + $0x169] sm:$0xff] %v438
  %504 = vst [vmem:[%s472 + $0x171] sm:$0xff] %v439
  %505 = vst [vmem:[%s472 + $0x1b1] sm:$0xff] %v440
  %506 = vst [vmem:[%s472 + $0x1b9] sm:$0xff] %v441
  %507 = vst [vmem:[%s472 + $0x1c9] sm:$0xff] %v442
  %508 = vst [vmem:[%s472 + $0x1d1] sm:$0xff] %v443
  %509 = vst [vmem:[%s472 + $0x1e1] sm:$0xff] %v444
  %510 = vst [vmem:[%s472 + $0x1e9] sm:$0xff] %v445
  %511 = vst [vmem:[%s472 + $0x1f9] sm:$0xff] %v446
  %512 = vst [vmem:[%s472 + $0x201] sm:$0xff] %v447
  %513 = vst [vmem:[%s472 + $0x211] sm:$0xff] %v448
  %514 = vst [vmem:[%s472 + $0x219] sm:$0xff] %v449
  %515 = vst [vmem:[%s472 + $0x229] sm:$0xff] %v450
  %516 = vst [vmem:[%s472 + $0x231] sm:$0xff] %v451
  %517 = vst [vmem:[%s472 + $0x241] sm:$0xff] %v452
  %518 = vst [vmem:[%s472 + $0x249] sm:$0xff] %v453
  %519 = vst [vmem:[%s472 + $0x259] sm:$0xff] %v454
  %520 = vst [vmem:[%s472 + $0x261] sm:$0xff] %v455
  %521 = vst [vmem:[%s472 + $0x271] sm:$0xff] %v456
  %522 = vst [vmem:[%s472 + $0x279] sm:$0xff] %v457
  %523 = vst [vmem:[%s472 + $0x289] sm:$0xff] %v458
  %524 = vst [vmem:[%s472 + $0x291] sm:$0xff] %v459
  %525 = vst [vmem:[%s472 + $0x2a1] sm:$0xff] %v460
  %526 = vst [vmem:[%s472 + $0x2a9] sm:$0xff] %v461
  %527 = vst [vmem:[%s472 + $0x2b9] sm:$0xff] %v462
  %528 = vst [vmem:[%s472 + $0x2c1] sm:$0xff] %v463
  %529 = vst [vmem:[%s472 + $0x2d1] sm:$0xff] %v464
  %530 = vst [vmem:[%s472 + $0x2d9] sm:$0xff] %v465
  %531 = vst [vmem:[%s472 + $0x2e9] sm:$0xff] %v466
  %532 = vst [vmem:[%s472 + $0x2f1] sm:$0xff] %v467
  %533 = vst [vmem:[%s472 + $0x301] sm:$0xff] %v468
  %534 = vst [vmem:[%s472 + $0x309] sm:$0xff] %v469
  %535 = vst [vmem:[%s472 + $0x319] sm:$0xff] %v470
  %536 = vst [vmem:[%s472 + $0x321] sm:$0xff] %v471
  %v537 = vld [vmem:[#allocation2] sm:$0xff]
  %v538 = vld [vmem:[#allocation2 + $0x8] sm:$0xff]
  %v539 = vld [vmem:[#allocation2 + $0x18] sm:$0xff]
  %v540 = vld [vmem:[#allocation2 + $0x20] sm:$0xff]
  %v541 = vld [vmem:[#allocation2 + $0x30] sm:$0xff]
  %v542 = vld [vmem:[#allocation2 + $0x38] sm:$0xff]
  %v543 = vld [vmem:[#allocation2 + $0x48] sm:$0xff]
  %v544 = vld [vmem:[#allocation2 + $0x50] sm:$0xff]
  %v545 = vld [vmem:[#allocation2 + $0x60] sm:$0xff]
  %v546 = vld [vmem:[#allocation2 + $0x68] sm:$0xff]
  %v547 = vld [vmem:[#allocation2 + $0x78] sm:$0xff]
  %v548 = vld [vmem:[#allocation2 + $0x80] sm:$0xff]
  %v549 = vld [vmem:[#allocation2 + $0x90] sm:$0xff]
  %v550 = vld [vmem:[#allocation2 + $0x98] sm:$0xff]
  %v551 = vld [vmem:[#allocation2 + $0xa8] sm:$0xff]
  %v552 = vld [vmem:[#allocation2 + $0xb0] sm:$0xff]
  %v553 = vld [vmem:[#allocation2 + $0xc0] sm:$0xff]
  %v554 = vld [vmem:[#allocation2 + $0xc8] sm:$0xff]
  %v555 = vld [vmem:[#allocation2 + $0xd8] sm:$0xff]
  %v556 = vld [vmem:[#allocation2 + $0xe0] sm:$0xff]
  %v557 = vld [vmem:[#allocation2 + $0xf0] sm:$0xff]
  %v558 = vld [vmem:[#allocation2 + $0xf8] sm:$0xff]
  %v559 = vld [vmem:[#allocation2 + $0x108] sm:$0xff]
  %v560 = vld [vmem:[#allocation2 + $0x110] sm:$0xff]
  %v561 = vld [vmem:[#allocation2 + $0x120] sm:$0xff]
  %v562 = vld [vmem:[#allocation2 + $0x128] sm:$0xff]
  %v563 = vld [vmem:[#allocation2 + $0x138] sm:$0xff]
  %v564 = vld [vmem:[#allocation2 + $0x140] sm:$0xff]
  %v565 = vld [vmem:[#allocation2 + $0x150] sm:$0xff]
  %v566 = vld [vmem:[#allocation2 + $0x158] sm:$0xff]
  %v567 = vld [vmem:[#allocation2 + $0x168] sm:$0xff]
  %v568 = vld [vmem:[#allocation2 + $0x170] sm:$0xff]
  %v569 = vld [vmem:[#allocation2 + $0x1b0] sm:$0xff]
  %v570 = vld [vmem:[#allocation2 + $0x1b8] sm:$0xff]
  %v571 = vld [vmem:[#allocation2 + $0x1c8] sm:$0xff]
  %v572 = vld [vmem:[#allocation2 + $0x1d0] sm:$0xff]
  %v573 = vld [vmem:[#allocation2 + $0x1e0] sm:$0xff]
  %v574 = vld [vmem:[#allocation2 + $0x1e8] sm:$0xff]
  %v575 = vld [vmem:[#allocation2 + $0x1f8] sm:$0xff]
  %v576 = vld [vmem:[#allocation2 + $0x200] sm:$0xff]
  %v577 = vld [vmem:[#allocation2 + $0x210] sm:$0xff]
  %v578 = vld [vmem:[#allocation2 + $0x218] sm:$0xff]
  %v579 = vld [vmem:[#allocation2 + $0x228] sm:$0xff]
  %v580 = vld [vmem:[#allocation2 + $0x230] sm:$0xff]
  %v581 = vld [vmem:[#allocation2 + $0x240] sm:$0xff]
  %v582 = vld [vmem:[#allocation2 + $0x248] sm:$0xff]
  %v583 = vld [vmem:[#allocation2 + $0x258] sm:$0xff]
  %v584 = vld [vmem:[#allocation2 + $0x260] sm:$0xff]
  %v585 = vld [vmem:[#allocation2 + $0x270] sm:$0xff]
  %v586 = vld [vmem:[#allocation2 + $0x278] sm:$0xff]
  %v587 = vld [vmem:[#allocation2 + $0x288] sm:$0xff]
  %v588 = vld [vmem:[#allocation2 + $0x290] sm:$0xff]
  %v589 = vld [vmem:[#allocation2 + $0x2a0] sm:$0xff]
  %v590 = vld [vmem:[#allocation2 + $0x2a8] sm:$0xff]
  %v591 = vld [vmem:[#allocation2 + $0x2b8] sm:$0xff]
  %v592 = vld [vmem:[#allocation2 + $0x2c0] sm:$0xff]
  %v593 = vld [vmem:[#allocation2 + $0x2d0] sm:$0xff]
  %v594 = vld [vmem:[#allocation2 + $0x2d8] sm:$0xff]
  %v595 = vld [vmem:[#allocation2 + $0x2e8] sm:$0xff]
  %v596 = vld [vmem:[#allocation2 + $0x2f0] sm:$0xff]
  %v597 = vld [vmem:[#allocation2 + $0x300] sm:$0xff]
  %v598 = vld [vmem:[#allocation2 + $0x308] sm:$0xff]
  %v599 = vld [vmem:[#allocation2 + $0x318] sm:$0xff]
  %v600 = vld [vmem:[#allocation2 + $0x320] sm:$0xff]
  %601 = vst [vmem:[#allocation3] sm:$0xff] %v537
  %602 = vst [vmem:[#allocation3 + $0x48] sm:$0xff] %v538
  %603 = vst [vmem:[#allocation3 + $0x90] sm:$0xff] %v539
  %604 = vst [vmem:[#allocation3 + $0xd8] sm:$0xff] %v540
  %605 = vst [vmem:[#allocation3 + $0x120] sm:$0xff] %v541
  %606 = vst [vmem:[#allocation3 + $0x168] sm:$0xff] %v542
  %607 = vst [vmem:[#allocation3 + $0x1b0] sm:$0xff] %v543
  %608 = vst [vmem:[#allocation3 + $0x1f8] sm:$0xff] %v544
  %609 = vst [vmem:[#allocation3 + $0x240] sm:$0xff] %v545
  %610 = vst [vmem:[#allocation3 + $0x288] sm:$0xff] %v546
  %611 = vst [vmem:[#allocation3 + $0x2d0] sm:$0xff] %v547
  %612 = vst [vmem:[#allocation3 + $0x318] sm:$0xff] %v548
  %613 = vst [vmem:[#allocation3 + $0x360] sm:$0xff] %v549
  %614 = vst [vmem:[#allocation3 + $0x3a8] sm:$0xff] %v550
  %615 = vst [vmem:[#allocation3 + $0x3f0] sm:$0xff] %v551
  %616 = vst [vmem:[#allocation3 + $0x438] sm:$0xff] %v552
  %617 = vst [vmem:[#allocation3 + $0x480] sm:$0xff] %v553
  %618 = vst [vmem:[#allocation3 + $0x4c8] sm:$0xff] %v554
  %619 = vst [vmem:[#allocation3 + $0x510] sm:$0xff] %v555
  %620 = vst [vmem:[#allocation3 + $0x558] sm:$0xff] %v556
  %621 = vst [vmem:[#allocation3 + $0x5a0] sm:$0xff] %v557
  %622 = vst [vmem:[#allocation3 + $0x5e8] sm:$0xff] %v558
  %623 = vst [vmem:[#allocation3 + $0x630] sm:$0xff] %v559
  %624 = vst [vmem:[#allocation3 + $0x678] sm:$0xff] %v560
  %625 = vst [vmem:[#allocation3 + $0x6c0] sm:$0xff] %v561
  %626 = vst [vmem:[#allocation3 + $0x708] sm:$0xff] %v562
  %627 = vst [vmem:[#allocation3 + $0x750] sm:$0xff] %v563
  %628 = vst [vmem:[#allocation3 + $0x798] sm:$0xff] %v564
  %629 = vst [vmem:[#allocation3 + $0x7e0] sm:$0xff] %v565
  %630 = vst [vmem:[#allocation3 + $0x828] sm:$0xff] %v566
  %631 = vst [vmem:[#allocation3 + $0x870] sm:$0xff] %v567
  %632 = vst [vmem:[#allocation3 + $0x8b8] sm:$0xff] %v568
  %633 = vst [vmem:[#allocation3 + $0x900] sm:$0xff] %v569
  %634 = vst [vmem:[#allocation3 + $0x948] sm:$0xff] %v570
  %635 = vst [vmem:[#allocation3 + $0x990] sm:$0xff] %v571
  %636 = vst [vmem:[#allocation3 + $0x9d8] sm:$0xff] %v572
  %637 = vst [vmem:[#allocation3 + $0xa20] sm:$0xff] %v573
  %638 = vst [vmem:[#allocation3 + $0xa68] sm:$0xff] %v574
  %639 = vst [vmem:[#allocation3 + $0xab0] sm:$0xff] %v575
  %640 = vst [vmem:[#allocation3 + $0xaf8] sm:$0xff] %v576
  %641 = vst [vmem:[#allocation3 + $0xb40] sm:$0xff] %v577
  %642 = vst [vmem:[#allocation3 + $0xb88] sm:$0xff] %v578
  %643 = vst [vmem:[#allocation3 + $0xbd0] sm:$0xff] %v579
  %644 = vst [vmem:[#allocation3 + $0xc18] sm:$0xff] %v580
  %645 = vst [vmem:[#allocation3 + $0xc60] sm:$0xff] %v581
  %646 = vst [vmem:[#allocation3 + $0xca8] sm:$0xff] %v582
  %647 = vst [vmem:[#allocation3 + $0xcf0] sm:$0xff] %v583
  %648 = vst [vmem:[#allocation3 + $0xd38] sm:$0xff] %v584
  %649 = vst [vmem:[#allocation3 + $0xd80] sm:$0xff] %v585
  %650 = vst [vmem:[#allocation3 + $0xdc8] sm:$0xff] %v586
  %651 = vst [vmem:[#allocation3 + $0xe10] sm:$0xff] %v587
  %652 = vst [vmem:[#allocation3 + $0xe58] sm:$0xff] %v588
  %653 = vst [vmem:[#allocation3 + $0xea0] sm:$0xff] %v589
  %654 = vst [vmem:[#allocation3 + $0xee8] sm:$0xff] %v590
  %655 = vst [vmem:[#allocation3 + $0xf30] sm:$0xff] %v591
  %656 = vst [vmem:[#allocation3 + $0xf78] sm:$0xff] %v592
  %657 = vst [vmem:[#allocation3 + $0xfc0] sm:$0xff] %v593
  %658 = vst [vmem:[#allocation3 + $0x1008] sm:$0xff] %v594
  %659 = vst [vmem:[#allocation3 + $0x1050] sm:$0xff] %v595
  %660 = vst [vmem:[#allocation3 + $0x1098] sm:$0xff] %v596
  %661 = vst [vmem:[#allocation3 + $0x10e0] sm:$0xff] %v597
  %662 = vst [vmem:[#allocation3 + $0x1128] sm:$0xff] %v598
  %663 = vst [vmem:[#allocation3 + $0x1170] sm:$0xff] %v599
  %664 = vst [vmem:[#allocation3 + $0x11b8] sm:$0xff] %v600
  %v665 = vld [vmem:[#allocation2 + $0x1] sm:$0xff]
  %v666 = vld [vmem:[#allocation2 + $0x9] sm:$0xff]
  %v667 = vld [vmem:[#allocation2 + $0x19] sm:$0xff]
  %v668 = vld [vmem:[#allocation2 + $0x21] sm:$0xff]
  %v669 = vld [vmem:[#allocation2 + $0x31] sm:$0xff]
  %v670 = vld [vmem:[#allocation2 + $0x39] sm:$0xff]
  %v671 = vld [vmem:[#allocation2 + $0x49] sm:$0xff]
  %v672 = vld [vmem:[#allocation2 + $0x51] sm:$0xff]
  %v673 = vld [vmem:[#allocation2 + $0x61] sm:$0xff]
  %v674 = vld [vmem:[#allocation2 + $0x69] sm:$0xff]
  %v675 = vld [vmem:[#allocation2 + $0x79] sm:$0xff]
  %v676 = vld [vmem:[#allocation2 + $0x81] sm:$0xff]
  %v677 = vld [vmem:[#allocation2 + $0x91] sm:$0xff]
  %v678 = vld [vmem:[#allocation2 + $0x99] sm:$0xff]
  %v679 = vld [vmem:[#allocation2 + $0xa9] sm:$0xff]
  %v680 = vld [vmem:[#allocation2 + $0xb1] sm:$0xff]
  %v681 = vld [vmem:[#allocation2 + $0xc1] sm:$0xff]
  %v682 = vld [vmem:[#allocation2 + $0xc9] sm:$0xff]
  %v683 = vld [vmem:[#allocation2 + $0xd9] sm:$0xff]
  %v684 = vld [vmem:[#allocation2 + $0xe1] sm:$0xff]
  %v685 = vld [vmem:[#allocation2 + $0xf1] sm:$0xff]
  %v686 = vld [vmem:[#allocation2 + $0xf9] sm:$0xff]
  %v687 = vld [vmem:[#allocation2 + $0x109] sm:$0xff]
  %v688 = vld [vmem:[#allocation2 + $0x111] sm:$0xff]
  %v689 = vld [vmem:[#allocation2 + $0x121] sm:$0xff]
  %v690 = vld [vmem:[#allocation2 + $0x129] sm:$0xff]
  %v691 = vld [vmem:[#allocation2 + $0x139] sm:$0xff]
  %v692 = vld [vmem:[#allocation2 + $0x141] sm:$0xff]
  %v693 = vld [vmem:[#allocation2 + $0x151] sm:$0xff]
  %v694 = vld [vmem:[#allocation2 + $0x159] sm:$0xff]
  %v695 = vld [vmem:[#allocation2 + $0x169] sm:$0xff]
  %v696 = vld [vmem:[#allocation2 + $0x171] sm:$0xff]
  %v697 = vld [vmem:[#allocation2 + $0x1b1] sm:$0xff]
  %v698 = vld [vmem:[#allocation2 + $0x1b9] sm:$0xff]
  %v699 = vld [vmem:[#allocation2 + $0x1c9] sm:$0xff]
  %v700 = vld [vmem:[#allocation2 + $0x1d1] sm:$0xff]
  %v701 = vld [vmem:[#allocation2 + $0x1e1] sm:$0xff]
  %v702 = vld [vmem:[#allocation2 + $0x1e9] sm:$0xff]
  %v703 = vld [vmem:[#allocation2 + $0x1f9] sm:$0xff]
  %v704 = vld [vmem:[#allocation2 + $0x201] sm:$0xff]
  %v705 = vld [vmem:[#allocation2 + $0x211] sm:$0xff]
  %v706 = vld [vmem:[#allocation2 + $0x219] sm:$0xff]
  %v707 = vld [vmem:[#allocation2 + $0x229] sm:$0xff]
  %v708 = vld [vmem:[#allocation2 + $0x231] sm:$0xff]
  %v709 = vld [vmem:[#allocation2 + $0x241] sm:$0xff]
  %v710 = vld [vmem:[#allocation2 + $0x249] sm:$0xff]
  %v711 = vld [vmem:[#allocation2 + $0x259] sm:$0xff]
  %v712 = vld [vmem:[#allocation2 + $0x261] sm:$0xff]
  %v713 = vld [vmem:[#allocation2 + $0x271] sm:$0xff]
  %v714 = vld [vmem:[#allocation2 + $0x279] sm:$0xff]
  %v715 = vld [vmem:[#allocation2 + $0x289] sm:$0xff]
  %v716 = vld [vmem:[#allocation2 + $0x291] sm:$0xff]
  %v717 = vld [vmem:[#allocation2 + $0x2a1] sm:$0xff]
  %v718 = vld [vmem:[#allocation2 + $0x2a9] sm:$0xff]
  %v719 = vld [vmem:[#allocation2 + $0x2b9] sm:$0xff]
  %v720 = vld [vmem:[#allocation2 + $0x2c1] sm:$0xff]
  %v721 = vld [vmem:[#allocation2 + $0x2d1] sm:$0xff]
  %v722 = vld [vmem:[#allocation2 + $0x2d9] sm:$0xff]
  %v723 = vld [vmem:[#allocation2 + $0x2e9] sm:$0xff]
  %v724 = vld [vmem:[#allocation2 + $0x2f1] sm:$0xff]
  %v725 = vld [vmem:[#allocation2 + $0x301] sm:$0xff]
  %v726 = vld [vmem:[#allocation2 + $0x309] sm:$0xff]
  %v727 = vld [vmem:[#allocation2 + $0x319] sm:$0xff]
  %v728 = vld [vmem:[#allocation2 + $0x321] sm:$0xff]
  %729 = vst [vmem:[#allocation3 + $0x8] sm:$0xff] %v665
  %730 = vst [vmem:[#allocation3 + $0x50] sm:$0xff] %v666
  %731 = vst [vmem:[#allocation3 + $0x98] sm:$0xff] %v667
  %732 = vst [vmem:[#allocation3 + $0xe0] sm:$0xff] %v668
  %733 = vst [vmem:[#allocation3 + $0x128] sm:$0xff] %v669
  %734 = vst [vmem:[#allocation3 + $0x170] sm:$0xff] %v670
  %735 = vst [vmem:[#allocation3 + $0x1b8] sm:$0xff] %v671
  %736 = vst [vmem:[#allocation3 + $0x200] sm:$0xff] %v672
  %737 = vst [vmem:[#allocation3 + $0x248] sm:$0xff] %v673
  %738 = vst [vmem:[#allocation3 + $0x290] sm:$0xff] %v674
  %739 = vst [vmem:[#allocation3 + $0x2d8] sm:$0xff] %v675
  %740 = vst [vmem:[#allocation3 + $0x320] sm:$0xff] %v676
  %741 = vst [vmem:[#allocation3 + $0x368] sm:$0xff] %v677
  %742 = vst [vmem:[#allocation3 + $0x3b0] sm:$0xff] %v678
  %743 = vst [vmem:[#allocation3 + $0x3f8] sm:$0xff] %v679
  %744 = vst [vmem:[#allocation3 + $0x440] sm:$0xff] %v680
  %745 = vst [vmem:[#allocation3 + $0x488] sm:$0xff] %v681
  %746 = vst [vmem:[#allocation3 + $0x4d0] sm:$0xff] %v682
  %747 = vst [vmem:[#allocation3 + $0x518] sm:$0xff] %v683
  %748 = vst [vmem:[#allocation3 + $0x560] sm:$0xff] %v684
  %749 = vst [vmem:[#allocation3 + $0x5a8] sm:$0xff] %v685
  %750 = vst [vmem:[#allocation3 + $0x5f0] sm:$0xff] %v686
  %751 = vst [vmem:[#allocation3 + $0x638] sm:$0xff] %v687
  %752 = vst [vmem:[#allocation3 + $0x680] sm:$0xff] %v688
  %753 = vst [vmem:[#allocation3 + $0x6c8] sm:$0xff] %v689
  %754 = vst [vmem:[#allocation3 + $0x710] sm:$0xff] %v690
  %755 = vst [vmem:[#allocation3 + $0x758] sm:$0xff] %v691
  %756 = vst [vmem:[#allocation3 + $0x7a0] sm:$0xff] %v692
  %757 = vst [vmem:[#allocation3 + $0x7e8] sm:$0xff] %v693
  %758 = vst [vmem:[#allocation3 + $0x830] sm:$0xff] %v694
  %759 = vst [vmem:[#allocation3 + $0x878] sm:$0xff] %v695
  %760 = vst [vmem:[#allocation3 + $0x8c0] sm:$0xff] %v696
  %761 = vst [vmem:[#allocation3 + $0x908] sm:$0xff] %v697
  %762 = vst [vmem:[#allocation3 + $0x950] sm:$0xff] %v698
  %763 = vst [vmem:[#allocation3 + $0x998] sm:$0xff] %v699
  %764 = vst [vmem:[#allocation3 + $0x9e0] sm:$0xff] %v700
  %765 = vst [vmem:[#allocation3 + $0xa28] sm:$0xff] %v701
  %766 = vst [vmem:[#allocation3 + $0xa70] sm:$0xff] %v702
  %767 = vst [vmem:[#allocation3 + $0xab8] sm:$0xff] %v703
  %768 = vst [vmem:[#allocation3 + $0xb00] sm:$0xff] %v704
  %769 = vst [vmem:[#allocation3 + $0xb48] sm:$0xff] %v705
  %770 = vst [vmem:[#allocation3 + $0xb90] sm:$0xff] %v706
  %771 = vst [vmem:[#allocation3 + $0xbd8] sm:$0xff] %v707
  %772 = vst [vmem:[#allocation3 + $0xc20] sm:$0xff] %v708
  %773 = vst [vmem:[#allocation3 + $0xc68] sm:$0xff] %v709
  %774 = vst [vmem:[#allocation3 + $0xcb0] sm:$0xff] %v710
  %775 = vst [vmem:[#allocation3 + $0xcf8] sm:$0xff] %v711
  %776 = vst [vmem:[#allocation3 + $0xd40] sm:$0xff] %v712
  %777 = vst [vmem:[#allocation3 + $0xd88] sm:$0xff] %v713
  %778 = vst [vmem:[#allocation3 + $0xdd0] sm:$0xff] %v714
  %779 = vst [vmem:[#allocation3 + $0xe18] sm:$0xff] %v715
  %780 = vst [vmem:[#allocation3 + $0xe60] sm:$0xff] %v716
  %781 = vst [vmem:[#allocation3 + $0xea8] sm:$0xff] %v717
  %782 = vst [vmem:[#allocation3 + $0xef0] sm:$0xff] %v718
  %783 = vst [vmem:[#allocation3 + $0xf38] sm:$0xff] %v719
  %784 = vst [vmem:[#allocation3 + $0xf80] sm:$0xff] %v720
  %785 = vst [vmem:[#allocation3 + $0xfc8] sm:$0xff] %v721
  %786 = vst [vmem:[#allocation3 + $0x1010] sm:$0xff] %v722
  %787 = vst [vmem:[#allocation3 + $0x1058] sm:$0xff] %v723
  %788 = vst [vmem:[#allocation3 + $0x10a0] sm:$0xff] %v724
  %789 = vst [vmem:[#allocation3 + $0x10e8] sm:$0xff] %v725
  %790 = vst [vmem:[#allocation3 + $0x1130] sm:$0xff] %v726
  %791 = vst [vmem:[#allocation3 + $0x1178] sm:$0xff] %v727
  %792 = vst [vmem:[#allocation3 + $0x11c0] sm:$0xff] %v728
  %v793 = vld [vmem:[#allocation2 + $0x2] sm:$0xff]
  %v794 = vld [vmem:[#allocation2 + $0xa] sm:$0xff]
  %v795 = vld [vmem:[#allocation2 + $0x1a] sm:$0xff]
  %v796 = vld [vmem:[#allocation2 + $0x22] sm:$0xff]
  %v797 = vld [vmem:[#allocation2 + $0x32] sm:$0xff]
  %v798 = vld [vmem:[#allocation2 + $0x3a] sm:$0xff]
  %v799 = vld [vmem:[#allocation2 + $0x4a] sm:$0xff]
  %v800 = vld [vmem:[#allocation2 + $0x52] sm:$0xff]
  %v801 = vld [vmem:[#allocation2 + $0x62] sm:$0xff]
  %v802 = vld [vmem:[#allocation2 + $0x6a] sm:$0xff]
  %v803 = vld [vmem:[#allocation2 + $0x7a] sm:$0xff]
  %v804 = vld [vmem:[#allocation2 + $0x82] sm:$0xff]
  %v805 = vld [vmem:[#allocation2 + $0x92] sm:$0xff]
  %v806 = vld [vmem:[#allocation2 + $0x9a] sm:$0xff]
  %v807 = vld [vmem:[#allocation2 + $0xaa] sm:$0xff]
  %v808 = vld [vmem:[#allocation2 + $0xb2] sm:$0xff]
  %v809 = vld [vmem:[#allocation2 + $0xc2] sm:$0xff]
  %v810 = vld [vmem:[#allocation2 + $0xca] sm:$0xff]
  %v811 = vld [vmem:[#allocation2 + $0xda] sm:$0xff]
  %v812 = vld [vmem:[#allocation2 + $0xe2] sm:$0xff]
  %v813 = vld [vmem:[#allocation2 + $0xf2] sm:$0xff]
  %v814 = vld [vmem:[#allocation2 + $0xfa] sm:$0xff]
  %v815 = vld [vmem:[#allocation2 + $0x10a] sm:$0xff]
  %v816 = vld [vmem:[#allocation2 + $0x112] sm:$0xff]
  %v817 = vld [vmem:[#allocation2 + $0x122] sm:$0xff]
  %v818 = vld [vmem:[#allocation2 + $0x12a] sm:$0xff]
  %v819 = vld [vmem:[#allocation2 + $0x13a] sm:$0xff]
  %v820 = vld [vmem:[#allocation2 + $0x142] sm:$0xff]
  %v821 = vld [vmem:[#allocation2 + $0x152] sm:$0xff]
  %v822 = vld [vmem:[#allocation2 + $0x15a] sm:$0xff]
  %v823 = vld [vmem:[#allocation2 + $0x16a] sm:$0xff]
  %v824 = vld [vmem:[#allocation2 + $0x172] sm:$0xff]
  %v825 = vld [vmem:[#allocation2 + $0x1b2] sm:$0xff]
  %v826 = vld [vmem:[#allocation2 + $0x1ba] sm:$0xff]
  %v827 = vld [vmem:[#allocation2 + $0x1ca] sm:$0xff]
  %v828 = vld [vmem:[#allocation2 + $0x1d2] sm:$0xff]
  %v829 = vld [vmem:[#allocation2 + $0x1e2] sm:$0xff]
  %v830 = vld [vmem:[#allocation2 + $0x1ea] sm:$0xff]
  %v831 = vld [vmem:[#allocation2 + $0x1fa] sm:$0xff]
  %v832 = vld [vmem:[#allocation2 + $0x202] sm:$0xff]
  %v833 = vld [vmem:[#allocation2 + $0x212] sm:$0xff]
  %v834 = vld [vmem:[#allocation2 + $0x21a] sm:$0xff]
  %v835 = vld [vmem:[#allocation2 + $0x22a] sm:$0xff]
  %v836 = vld [vmem:[#allocation2 + $0x232] sm:$0xff]
  %v837 = vld [vmem:[#allocation2 + $0x242] sm:$0xff]
  %v838 = vld [vmem:[#allocation2 + $0x24a] sm:$0xff]
  %v839 = vld [vmem:[#allocation2 + $0x25a] sm:$0xff]
  %v840 = vld [vmem:[#allocation2 + $0x262] sm:$0xff]
  %v841 = vld [vmem:[#allocation2 + $0x272] sm:$0xff]
  %v842 = vld [vmem:[#allocation2 + $0x27a] sm:$0xff]
  %v843 = vld [vmem:[#allocation2 + $0x28a] sm:$0xff]
  %v844 = vld [vmem:[#allocation2 + $0x292] sm:$0xff]
  %v845 = vld [vmem:[#allocation2 + $0x2a2] sm:$0xff]
  %v846 = vld [vmem:[#allocation2 + $0x2aa] sm:$0xff]
  %v847 = vld [vmem:[#allocation2 + $0x2ba] sm:$0xff]
  %v848 = vld [vmem:[#allocation2 + $0x2c2] sm:$0xff]
  %v849 = vld [vmem:[#allocation2 + $0x2d2] sm:$0xff]
  %v850 = vld [vmem:[#allocation2 + $0x2da] sm:$0xff]
  %v851 = vld [vmem:[#allocation2 + $0x2ea] sm:$0xff]
  %v852 = vld [vmem:[#allocation2 + $0x2f2] sm:$0xff]
  %v853 = vld [vmem:[#allocation2 + $0x302] sm:$0xff]
  %v854 = vld [vmem:[#allocation2 + $0x30a] sm:$0xff]
  %v855 = vld [vmem:[#allocation2 + $0x31a] sm:$0xff]
  %v856 = vld [vmem:[#allocation2 + $0x322] sm:$0xff]
  %857 = vst [vmem:[#allocation3 + $0x10] sm:$0xff] %v793
  %858 = vst [vmem:[#allocation3 + $0x58] sm:$0xff] %v794
  %859 = vst [vmem:[#allocation3 + $0xa0] sm:$0xff] %v795
  %860 = vst [vmem:[#allocation3 + $0xe8] sm:$0xff] %v796
  %861 = vst [vmem:[#allocation3 + $0x130] sm:$0xff] %v797
  %862 = vst [vmem:[#allocation3 + $0x178] sm:$0xff] %v798
  %863 = vst [vmem:[#allocation3 + $0x1c0] sm:$0xff] %v799
  %864 = vst [vmem:[#allocation3 + $0x208] sm:$0xff] %v800
  %865 = vst [vmem:[#allocation3 + $0x250] sm:$0xff] %v801
  %866 = vst [vmem:[#allocation3 + $0x298] sm:$0xff] %v802
  %867 = vst [vmem:[#allocation3 + $0x2e0] sm:$0xff] %v803
  %868 = vst [vmem:[#allocation3 + $0x328] sm:$0xff] %v804
  %869 = vst [vmem:[#allocation3 + $0x370] sm:$0xff] %v805
  %870 = vst [vmem:[#allocation3 + $0x3b8] sm:$0xff] %v806
  %871 = vst [vmem:[#allocation3 + $0x400] sm:$0xff] %v807
  %872 = vst [vmem:[#allocation3 + $0x448] sm:$0xff] %v808
  %873 = vst [vmem:[#allocation3 + $0x490] sm:$0xff] %v809
  %874 = vst [vmem:[#allocation3 + $0x4d8] sm:$0xff] %v810
  %875 = vst [vmem:[#allocation3 + $0x520] sm:$0xff] %v811
  %876 = vst [vmem:[#allocation3 + $0x568] sm:$0xff] %v812
  %877 = vst [vmem:[#allocation3 + $0x5b0] sm:$0xff] %v813
  %878 = vst [vmem:[#allocation3 + $0x5f8] sm:$0xff] %v814
  %879 = vst [vmem:[#allocation3 + $0x640] sm:$0xff] %v815
  %880 = vst [vmem:[#allocation3 + $0x688] sm:$0xff] %v816
  %881 = vst [vmem:[#allocation3 + $0x6d0] sm:$0xff] %v817
  %882 = vst [vmem:[#allocation3 + $0x718] sm:$0xff] %v818
  %883 = vst [vmem:[#allocation3 + $0x760] sm:$0xff] %v819
  %884 = vst [vmem:[#allocation3 + $0x7a8] sm:$0xff] %v820
  %885 = vst [vmem:[#allocation3 + $0x7f0] sm:$0xff] %v821
  %886 = vst [vmem:[#allocation3 + $0x838] sm:$0xff] %v822
  %887 = vst [vmem:[#allocation3 + $0x880] sm:$0xff] %v823
  %888 = vst [vmem:[#allocation3 + $0x8c8] sm:$0xff] %v824
  %889 = vst [vmem:[#allocation3 + $0x910] sm:$0xff] %v825
  %890 = vst [vmem:[#allocation3 + $0x958] sm:$0xff] %v826
  %891 = vst [vmem:[#allocation3 + $0x9a0] sm:$0xff] %v827
  %892 = vst [vmem:[#allocation3 + $0x9e8] sm:$0xff] %v828
  %893 = vst [vmem:[#allocation3 + $0xa30] sm:$0xff] %v829
  %894 = vst [vmem:[#allocation3 + $0xa78] sm:$0xff] %v830
  %895 = vst [vmem:[#allocation3 + $0xac0] sm:$0xff] %v831
  %896 = vst [vmem:[#allocation3 + $0xb08] sm:$0xff] %v832
  %897 = vst [vmem:[#allocation3 + $0xb50] sm:$0xff] %v833
  %898 = vst [vmem:[#allocation3 + $0xb98] sm:$0xff] %v834
  %899 = vst [vmem:[#allocation3 + $0xbe0] sm:$0xff] %v835
  %900 = vst [vmem:[#allocation3 + $0xc28] sm:$0xff] %v836
  %901 = vst [vmem:[#allocation3 + $0xc70] sm:$0xff] %v837
  %902 = vst [vmem:[#allocation3 + $0xcb8] sm:$0xff] %v838
  %903 = vst [vmem:[#allocation3 + $0xd00] sm:$0xff] %v839
  %904 = vst [vmem:[#allocation3 + $0xd48] sm:$0xff] %v840
  %905 = vst [vmem:[#allocation3 + $0xd90] sm:$0xff] %v841
  %906 = vst [vmem:[#allocation3 + $0xdd8] sm:$0xff] %v842
  %907 = vst [vmem:[#allocation3 + $0xe20] sm:$0xff] %v843
  %908 = vst [vmem:[#allocation3 + $0xe68] sm:$0xff] %v844
  %909 = vst [vmem:[#allocation3 + $0xeb0] sm:$0xff] %v845
  %910 = vst [vmem:[#allocation3 + $0xef8] sm:$0xff] %v846
  %911 = vst [vmem:[#allocation3 + $0xf40] sm:$0xff] %v847
  %912 = vst [vmem:[#allocation3 + $0xf88] sm:$0xff] %v848
  %913 = vst [vmem:[#allocation3 + $0xfd0] sm:$0xff] %v849
  %914 = vst [vmem:[#allocation3 + $0x1018] sm:$0xff] %v850
  %915 = vst [vmem:[#allocation3 + $0x1060] sm:$0xff] %v851
  %916 = vst [vmem:[#allocation3 + $0x10a8] sm:$0xff] %v852
  %917 = vst [vmem:[#allocation3 + $0x10f0] sm:$0xff] %v853
  %918 = vst [vmem:[#allocation3 + $0x1138] sm:$0xff] %v854
  %919 = vst [vmem:[#allocation3 + $0x1180] sm:$0xff] %v855
  %920 = vst [vmem:[#allocation3 + $0x11c8] sm:$0xff] %v856
  %v921 = vld [vmem:[%s472] sm:$0xff]
  %v922 = vld [vmem:[%s472 + $0x8] sm:$0xff]
  %v923 = vld [vmem:[%s472 + $0x18] sm:$0xff]
  %v924 = vld [vmem:[%s472 + $0x20] sm:$0xff]
  %v925 = vld [vmem:[%s472 + $0x30] sm:$0xff]
  %v926 = vld [vmem:[%s472 + $0x38] sm:$0xff]
  %v927 = vld [vmem:[%s472 + $0x48] sm:$0xff]
  %v928 = vld [vmem:[%s472 + $0x50] sm:$0xff]
  %v929 = vld [vmem:[%s472 + $0x60] sm:$0xff]
  %v930 = vld [vmem:[%s472 + $0x68] sm:$0xff]
  %v931 = vld [vmem:[%s472 + $0x78] sm:$0xff]
  %v932 = vld [vmem:[%s472 + $0x80] sm:$0xff]
  %v933 = vld [vmem:[%s472 + $0x90] sm:$0xff]
  %v934 = vld [vmem:[%s472 + $0x98] sm:$0xff]
  %v935 = vld [vmem:[%s472 + $0xa8] sm:$0xff]
  %v936 = vld [vmem:[%s472 + $0xb0] sm:$0xff]
  %v937 = vld [vmem:[%s472 + $0xc0] sm:$0xff]
  %v938 = vld [vmem:[%s472 + $0xc8] sm:$0xff]
  %v939 = vld [vmem:[%s472 + $0xd8] sm:$0xff]
  %v940 = vld [vmem:[%s472 + $0xe0] sm:$0xff]
  %v941 = vld [vmem:[%s472 + $0xf0] sm:$0xff]
  %v942 = vld [vmem:[%s472 + $0xf8] sm:$0xff]
  %v943 = vld [vmem:[%s472 + $0x108] sm:$0xff]
  %v944 = vld [vmem:[%s472 + $0x110] sm:$0xff]
  %v945 = vld [vmem:[%s472 + $0x120] sm:$0xff]
  %v946 = vld [vmem:[%s472 + $0x128] sm:$0xff]
  %v947 = vld [vmem:[%s472 + $0x138] sm:$0xff]
  %v948 = vld [vmem:[%s472 + $0x140] sm:$0xff]
  %v949 = vld [vmem:[%s472 + $0x150] sm:$0xff]
  %v950 = vld [vmem:[%s472 + $0x158] sm:$0xff]
  %v951 = vld [vmem:[%s472 + $0x168] sm:$0xff]
  %v952 = vld [vmem:[%s472 + $0x170] sm:$0xff]
  %v953 = vld [vmem:[%s472 + $0x1b0] sm:$0xff]
  %v954 = vld [vmem:[%s472 + $0x1b8] sm:$0xff]
  %v955 = vld [vmem:[%s472 + $0x1c8] sm:$0xff]
  %v956 = vld [vmem:[%s472 + $0x1d0] sm:$0xff]
  %v957 = vld [vmem:[%s472 + $0x1e0] sm:$0xff]
  %v958 = vld [vmem:[%s472 + $0x1e8] sm:$0xff]
  %v959 = vld [vmem:[%s472 + $0x1f8] sm:$0xff]
  %v960 = vld [vmem:[%s472 + $0x200] sm:$0xff]
  %v961 = vld [vmem:[%s472 + $0x210] sm:$0xff]
  %v962 = vld [vmem:[%s472 + $0x218] sm:$0xff]
  %v963 = vld [vmem:[%s472 + $0x228] sm:$0xff]
  %v964 = vld [vmem:[%s472 + $0x230] sm:$0xff]
  %v965 = vld [vmem:[%s472 + $0x240] sm:$0xff]
  %v966 = vld [vmem:[%s472 + $0x248] sm:$0xff]
  %v967 = vld [vmem:[%s472 + $0x258] sm:$0xff]
  %v968 = vld [vmem:[%s472 + $0x260] sm:$0xff]
  %v969 = vld [vmem:[%s472 + $0x270] sm:$0xff]
  %v970 = vld [vmem:[%s472 + $0x278] sm:$0xff]
  %v971 = vld [vmem:[%s472 + $0x288] sm:$0xff]
  %v972 = vld [vmem:[%s472 + $0x290] sm:$0xff]
  %v973 = vld [vmem:[%s472 + $0x2a0] sm:$0xff]
  %v974 = vld [vmem:[%s472 + $0x2a8] sm:$0xff]
  %v975 = vld [vmem:[%s472 + $0x2b8] sm:$0xff]
  %v976 = vld [vmem:[%s472 + $0x2c0] sm:$0xff]
  %v977 = vld [vmem:[%s472 + $0x2d0] sm:$0xff]
  %v978 = vld [vmem:[%s472 + $0x2d8] sm:$0xff]
  %v979 = vld [vmem:[%s472 + $0x2e8] sm:$0xff]
  %v980 = vld [vmem:[%s472 + $0x2f0] sm:$0xff]
  %v981 = vld [vmem:[%s472 + $0x300] sm:$0xff]
  %v982 = vld [vmem:[%s472 + $0x308] sm:$0xff]
  %v983 = vld [vmem:[%s472 + $0x318] sm:$0xff]
  %v984 = vld [vmem:[%s472 + $0x320] sm:$0xff]
  %985 = vst [vmem:[#allocation3 + $0x18] sm:$0xff] %v921
  %986 = vst [vmem:[#allocation3 + $0x60] sm:$0xff] %v922
  %987 = vst [vmem:[#allocation3 + $0xa8] sm:$0xff] %v923
  %988 = vst [vmem:[#allocation3 + $0xf0] sm:$0xff] %v924
  %989 = vst [vmem:[#allocation3 + $0x138] sm:$0xff] %v925
  %990 = vst [vmem:[#allocation3 + $0x180] sm:$0xff] %v926
  %991 = vst [vmem:[#allocation3 + $0x1c8] sm:$0xff] %v927
  %992 = vst [vmem:[#allocation3 + $0x210] sm:$0xff] %v928
  %993 = vst [vmem:[#allocation3 + $0x258] sm:$0xff] %v929
  %994 = vst [vmem:[#allocation3 + $0x2a0] sm:$0xff] %v930
  %995 = vst [vmem:[#allocation3 + $0x2e8] sm:$0xff] %v931
  %996 = vst [vmem:[#allocation3 + $0x330] sm:$0xff] %v932
  %997 = vst [vmem:[#allocation3 + $0x378] sm:$0xff] %v933
  %998 = vst [vmem:[#allocation3 + $0x3c0] sm:$0xff] %v934
  %999 = vst [vmem:[#allocation3 + $0x408] sm:$0xff] %v935
  %1000 = vst [vmem:[#allocation3 + $0x450] sm:$0xff] %v936
  %1001 = vst [vmem:[#allocation3 + $0x498] sm:$0xff] %v937
  %1002 = vst [vmem:[#allocation3 + $0x4e0] sm:$0xff] %v938
  %1003 = vst [vmem:[#allocation3 + $0x528] sm:$0xff] %v939
  %1004 = vst [vmem:[#allocation3 + $0x570] sm:$0xff] %v940
  %1005 = vst [vmem:[#allocation3 + $0x5b8] sm:$0xff] %v941
  %1006 = vst [vmem:[#allocation3 + $0x600] sm:$0xff] %v942
  %1007 = vst [vmem:[#allocation3 + $0x648] sm:$0xff] %v943
  %1008 = vst [vmem:[#allocation3 + $0x690] sm:$0xff] %v944
  %1009 = vst [vmem:[#allocation3 + $0x6d8] sm:$0xff] %v945
  %1010 = vst [vmem:[#allocation3 + $0x720] sm:$0xff] %v946
  %1011 = vst [vmem:[#allocation3 + $0x768] sm:$0xff] %v947
  %1012 = vst [vmem:[#allocation3 + $0x7b0] sm:$0xff] %v948
  %1013 = vst [vmem:[#allocation3 + $0x7f8] sm:$0xff] %v949
  %1014 = vst [vmem:[#allocation3 + $0x840] sm:$0xff] %v950
  %1015 = vst [vmem:[#allocation3 + $0x888] sm:$0xff] %v951
  %1016 = vst [vmem:[#allocation3 + $0x8d0] sm:$0xff] %v952
  %1017 = vst [vmem:[#allocation3 + $0x918] sm:$0xff] %v953
  %1018 = vst [vmem:[#allocation3 + $0x960] sm:$0xff] %v954
  %1019 = vst [vmem:[#allocation3 + $0x9a8] sm:$0xff] %v955
  %1020 = vst [vmem:[#allocation3 + $0x9f0] sm:$0xff] %v956
  %1021 = vst [vmem:[#allocation3 + $0xa38] sm:$0xff] %v957
  %1022 = vst [vmem:[#allocation3 + $0xa80] sm:$0xff] %v958
  %1023 = vst [vmem:[#allocation3 + $0xac8] sm:$0xff] %v959
  %1024 = vst [vmem:[#allocation3 + $0xb10] sm:$0xff] %v960
  %1025 = vst [vmem:[#allocation3 + $0xb58] sm:$0xff] %v961
  %1026 = vst [vmem:[#allocation3 + $0xba0] sm:$0xff] %v962
  %1027 = vst [vmem:[#allocation3 + $0xbe8] sm:$0xff] %v963
  %1028 = vst [vmem:[#allocation3 + $0xc30] sm:$0xff] %v964
  %1029 = vst [vmem:[#allocation3 + $0xc78] sm:$0xff] %v965
  %1030 = vst [vmem:[#allocation3 + $0xcc0] sm:$0xff] %v966
  %1031 = vst [vmem:[#allocation3 + $0xd08] sm:$0xff] %v967
  %1032 = vst [vmem:[#allocation3 + $0xd50] sm:$0xff] %v968
  %1033 = vst [vmem:[#allocation3 + $0xd98] sm:$0xff] %v969
  %1034 = vst [vmem:[#allocation3 + $0xde0] sm:$0xff] %v970
  %1035 = vst [vmem:[#allocation3 + $0xe28] sm:$0xff] %v971
  %1036 = vst [vmem:[#allocation3 + $0xe70] sm:$0xff] %v972
  %1037 = vst [vmem:[#allocation3 + $0xeb8] sm:$0xff] %v973
  %1038 = vst [vmem:[#allocation3 + $0xf00] sm:$0xff] %v974
  %1039 = vst [vmem:[#allocation3 + $0xf48] sm:$0xff] %v975
  %1040 = vst [vmem:[#allocation3 + $0xf90] sm:$0xff] %v976
  %1041 = vst [vmem:[#allocation3 + $0xfd8] sm:$0xff] %v977
  %1042 = vst [vmem:[#allocation3 + $0x1020] sm:$0xff] %v978
  %1043 = vst [vmem:[#allocation3 + $0x1068] sm:$0xff] %v979
  %1044 = vst [vmem:[#allocation3 + $0x10b0] sm:$0xff] %v980
  %1045 = vst [vmem:[#allocation3 + $0x10f8] sm:$0xff] %v981
  %1046 = vst [vmem:[#allocation3 + $0x1140] sm:$0xff] %v982
  %1047 = vst [vmem:[#allocation3 + $0x1188] sm:$0xff] %v983
  %1048 = vst [vmem:[#allocation3 + $0x11d0] sm:$0xff] %v984
  %v1049 = vld [vmem:[%s472 + $0x1] sm:$0xff]
  %v1050 = vld [vmem:[%s472 + $0x9] sm:$0xff]
  %v1051 = vld [vmem:[%s472 + $0x19] sm:$0xff]
  %v1052 = vld [vmem:[%s472 + $0x21] sm:$0xff]
  %v1053 = vld [vmem:[%s472 + $0x31] sm:$0xff]
  %v1054 = vld [vmem:[%s472 + $0x39] sm:$0xff]
  %v1055 = vld [vmem:[%s472 + $0x49] sm:$0xff]
  %v1056 = vld [vmem:[%s472 + $0x51] sm:$0xff]
  %v1057 = vld [vmem:[%s472 + $0x61] sm:$0xff]
  %v1058 = vld [vmem:[%s472 + $0x69] sm:$0xff]
  %v1059 = vld [vmem:[%s472 + $0x79] sm:$0xff]
  %v1060 = vld [vmem:[%s472 + $0x81] sm:$0xff]
  %v1061 = vld [vmem:[%s472 + $0x91] sm:$0xff]
  %v1062 = vld [vmem:[%s472 + $0x99] sm:$0xff]
  %v1063 = vld [vmem:[%s472 + $0xa9] sm:$0xff]
  %v1064 = vld [vmem:[%s472 + $0xb1] sm:$0xff]
  %v1065 = vld [vmem:[%s472 + $0xc1] sm:$0xff]
  %v1066 = vld [vmem:[%s472 + $0xc9] sm:$0xff]
  %v1067 = vld [vmem:[%s472 + $0xd9] sm:$0xff]
  %v1068 = vld [vmem:[%s472 + $0xe1] sm:$0xff]
  %v1069 = vld [vmem:[%s472 + $0xf1] sm:$0xff]
  %v1070 = vld [vmem:[%s472 + $0xf9] sm:$0xff]
  %v1071 = vld [vmem:[%s472 + $0x109] sm:$0xff]
  %v1072 = vld [vmem:[%s472 + $0x111] sm:$0xff]
  %v1073 = vld [vmem:[%s472 + $0x121] sm:$0xff]
  %v1074 = vld [vmem:[%s472 + $0x129] sm:$0xff]
  %v1075 = vld [vmem:[%s472 + $0x139] sm:$0xff]
  %v1076 = vld [vmem:[%s472 + $0x141] sm:$0xff]
  %v1077 = vld [vmem:[%s472 + $0x151] sm:$0xff]
  %v1078 = vld [vmem:[%s472 + $0x159] sm:$0xff]
  %v1079 = vld [vmem:[%s472 + $0x169] sm:$0xff]
  %v1080 = vld [vmem:[%s472 + $0x171] sm:$0xff]
  %v1081 = vld [vmem:[%s472 + $0x1b1] sm:$0xff]
  %v1082 = vld [vmem:[%s472 + $0x1b9] sm:$0xff]
  %v1083 = vld [vmem:[%s472 + $0x1c9] sm:$0xff]
  %v1084 = vld [vmem:[%s472 + $0x1d1] sm:$0xff]
  %v1085 = vld [vmem:[%s472 + $0x1e1] sm:$0xff]
  %v1086 = vld [vmem:[%s472 + $0x1e9] sm:$0xff]
  %v1087 = vld [vmem:[%s472 + $0x1f9] sm:$0xff]
  %v1088 = vld [vmem:[%s472 + $0x201] sm:$0xff]
  %v1089 = vld [vmem:[%s472 + $0x211] sm:$0xff]
  %v1090 = vld [vmem:[%s472 + $0x219] sm:$0xff]
  %v1091 = vld [vmem:[%s472 + $0x229] sm:$0xff]
  %v1092 = vld [vmem:[%s472 + $0x231] sm:$0xff]
  %v1093 = vld [vmem:[%s472 + $0x241] sm:$0xff]
  %v1094 = vld [vmem:[%s472 + $0x249] sm:$0xff]
  %v1095 = vld [vmem:[%s472 + $0x259] sm:$0xff]
  %v1096 = vld [vmem:[%s472 + $0x261] sm:$0xff]
  %v1097 = vld [vmem:[%s472 + $0x271] sm:$0xff]
  %v1098 = vld [vmem:[%s472 + $0x279] sm:$0xff]
  %v1099 = vld [vmem:[%s472 + $0x289] sm:$0xff]
  %v1100 = vld [vmem:[%s472 + $0x291] sm:$0xff]
  %v1101 = vld [vmem:[%s472 + $0x2a1] sm:$0xff]
  %v1102 = vld [vmem:[%s472 + $0x2a9] sm:$0xff]
  %v1103 = vld [vmem:[%s472 + $0x2b9] sm:$0xff]
  %v1104 = vld [vmem:[%s472 + $0x2c1] sm:$0xff]
  %v1105 = vld [vmem:[%s472 + $0x2d1] sm:$0xff]
  %v1106 = vld [vmem:[%s472 + $0x2d9] sm:$0xff]
  %v1107 = vld [vmem:[%s472 + $0x2e9] sm:$0xff]
  %v1108 = vld [vmem:[%s472 + $0x2f1] sm:$0xff]
  %v1109 = vld [vmem:[%s472 + $0x301] sm:$0xff]
  %v1110 = vld [vmem:[%s472 + $0x309] sm:$0xff]
  %v1111 = vld [vmem:[%s472 + $0x319] sm:$0xff]
  %v1112 = vld [vmem:[%s472 + $0x321] sm:$0xff]
  %1113 = vst [vmem:[#allocation3 + $0x20] sm:$0xff] %v1049
  %1114 = vst [vmem:[#allocation3 + $0x68] sm:$0xff] %v1050
  %1115 = vst [vmem:[#allocation3 + $0xb0] sm:$0xff] %v1051
  %1116 = vst [vmem:[#allocation3 + $0xf8] sm:$0xff] %v1052
  %1117 = vst [vmem:[#allocation3 + $0x140] sm:$0xff] %v1053
  %1118 = vst [vmem:[#allocation3 + $0x188] sm:$0xff] %v1054
  %1119 = vst [vmem:[#allocation3 + $0x1d0] sm:$0xff] %v1055
  %1120 = vst [vmem:[#allocation3 + $0x218] sm:$0xff] %v1056
  %1121 = vst [vmem:[#allocation3 + $0x260] sm:$0xff] %v1057
  %1122 = vst [vmem:[#allocation3 + $0x2a8] sm:$0xff] %v1058
  %1123 = vst [vmem:[#allocation3 + $0x2f0] sm:$0xff] %v1059
  %1124 = vst [vmem:[#allocation3 + $0x338] sm:$0xff] %v1060
  %1125 = vst [vmem:[#allocation3 + $0x380] sm:$0xff] %v1061
  %1126 = vst [vmem:[#allocation3 + $0x3c8] sm:$0xff] %v1062
  %1127 = vst [vmem:[#allocation3 + $0x410] sm:$0xff] %v1063
  %1128 = vst [vmem:[#allocation3 + $0x458] sm:$0xff] %v1064
  %1129 = vst [vmem:[#allocation3 + $0x4a0] sm:$0xff] %v1065
  %1130 = vst [vmem:[#allocation3 + $0x4e8] sm:$0xff] %v1066
  %1131 = vst [vmem:[#allocation3 + $0x530] sm:$0xff] %v1067
  %1132 = vst [vmem:[#allocation3 + $0x578] sm:$0xff] %v1068
  %1133 = vst [vmem:[#allocation3 + $0x5c0] sm:$0xff] %v1069
  %1134 = vst [vmem:[#allocation3 + $0x608] sm:$0xff] %v1070
  %1135 = vst [vmem:[#allocation3 + $0x650] sm:$0xff] %v1071
  %1136 = vst [vmem:[#allocation3 + $0x698] sm:$0xff] %v1072
  %1137 = vst [vmem:[#allocation3 + $0x6e0] sm:$0xff] %v1073
  %1138 = vst [vmem:[#allocation3 + $0x728] sm:$0xff] %v1074
  %1139 = vst [vmem:[#allocation3 + $0x770] sm:$0xff] %v1075
  %1140 = vst [vmem:[#allocation3 + $0x7b8] sm:$0xff] %v1076
  %1141 = vst [vmem:[#allocation3 + $0x800] sm:$0xff] %v1077
  %1142 = vst [vmem:[#allocation3 + $0x848] sm:$0xff] %v1078
  %1143 = vst [vmem:[#allocation3 + $0x890] sm:$0xff] %v1079
  %1144 = vst [vmem:[#allocation3 + $0x8d8] sm:$0xff] %v1080
  %1145 = vst [vmem:[#allocation3 + $0x920] sm:$0xff] %v1081
  %1146 = vst [vmem:[#allocation3 + $0x968] sm:$0xff] %v1082
  %1147 = vst [vmem:[#allocation3 + $0x9b0] sm:$0xff] %v1083
  %1148 = vst [vmem:[#allocation3 + $0x9f8] sm:$0xff] %v1084
  %1149 = vst [vmem:[#allocation3 + $0xa40] sm:$0xff] %v1085
  %1150 = vst [vmem:[#allocation3 + $0xa88] sm:$0xff] %v1086
  %1151 = vst [vmem:[#allocation3 + $0xad0] sm:$0xff] %v1087
  %1152 = vst [vmem:[#allocation3 + $0xb18] sm:$0xff] %v1088
  %1153 = vst [vmem:[#allocation3 + $0xb60] sm:$0xff] %v1089
  %1154 = vst [vmem:[#allocation3 + $0xba8] sm:$0xff] %v1090
  %1155 = vst [vmem:[#allocation3 + $0xbf0] sm:$0xff] %v1091
  %1156 = vst [vmem:[#allocation3 + $0xc38] sm:$0xff] %v1092
  %1157 = vst [vmem:[#allocation3 + $0xc80] sm:$0xff] %v1093
  %1158 = vst [vmem:[#allocation3 + $0xcc8] sm:$0xff] %v1094
  %1159 = vst [vmem:[#allocation3 + $0xd10] sm:$0xff] %v1095
  %1160 = vst [vmem:[#allocation3 + $0xd58] sm:$0xff] %v1096
  %1161 = vst [vmem:[#allocation3 + $0xda0] sm:$0xff] %v1097
  %1162 = vst [vmem:[#allocation3 + $0xde8] sm:$0xff] %v1098
  %1163 = vst [vmem:[#allocation3 + $0xe30] sm:$0xff] %v1099
  %1164 = vst [vmem:[#allocation3 + $0xe78] sm:$0xff] %v1100
  %1165 = vst [vmem:[#allocation3 + $0xec0] sm:$0xff] %v1101
  %1166 = vst [vmem:[#allocation3 + $0xf08] sm:$0xff] %v1102
  %1167 = vst [vmem:[#allocation3 + $0xf50] sm:$0xff] %v1103
  %1168 = vst [vmem:[#allocation3 + $0xf98] sm:$0xff] %v1104
  %1169 = vst [vmem:[#allocation3 + $0xfe0] sm:$0xff] %v1105
  %1170 = vst [vmem:[#allocation3 + $0x1028] sm:$0xff] %v1106
  %1171 = vst [vmem:[#allocation3 + $0x1070] sm:$0xff] %v1107
  %1172 = vst [vmem:[#allocation3 + $0x10b8] sm:$0xff] %v1108
  %1173 = vst [vmem:[#allocation3 + $0x1100] sm:$0xff] %v1109
  %1174 = vst [vmem:[#allocation3 + $0x1148] sm:$0xff] %v1110
  %1175 = vst [vmem:[#allocation3 + $0x1190] sm:$0xff] %v1111
  %1176 = vst [vmem:[#allocation3 + $0x11d8] sm:$0xff] %v1112
  %v1177 = vld [vmem:[%s472 + $0x2] sm:$0xff]
  %v1178 = vld [vmem:[%s472 + $0xa] sm:$0xff]
  %v1179 = vld [vmem:[%s472 + $0x1a] sm:$0xff]
  %v1180 = vld [vmem:[%s472 + $0x22] sm:$0xff]
  %v1181 = vld [vmem:[%s472 + $0x32] sm:$0xff]
  %v1182 = vld [vmem:[%s472 + $0x3a] sm:$0xff]
  %v1183 = vld [vmem:[%s472 + $0x4a] sm:$0xff]
  %v1184 = vld [vmem:[%s472 + $0x52] sm:$0xff]
  %v1185 = vld [vmem:[%s472 + $0x62] sm:$0xff]
  %v1186 = vld [vmem:[%s472 + $0x6a] sm:$0xff]
  %v1187 = vld [vmem:[%s472 + $0x7a] sm:$0xff]
  %v1188 = vld [vmem:[%s472 + $0x82] sm:$0xff]
  %v1189 = vld [vmem:[%s472 + $0x92] sm:$0xff]
  %v1190 = vld [vmem:[%s472 + $0x9a] sm:$0xff]
  %v1191 = vld [vmem:[%s472 + $0xaa] sm:$0xff]
  %v1192 = vld [vmem:[%s472 + $0xb2] sm:$0xff]
  %v1193 = vld [vmem:[%s472 + $0xc2] sm:$0xff]
  %v1194 = vld [vmem:[%s472 + $0xca] sm:$0xff]
  %v1195 = vld [vmem:[%s472 + $0xda] sm:$0xff]
  %v1196 = vld [vmem:[%s472 + $0xe2] sm:$0xff]
  %v1197 = vld [vmem:[%s472 + $0xf2] sm:$0xff]
  %v1198 = vld [vmem:[%s472 + $0xfa] sm:$0xff]
  %v1199 = vld [vmem:[%s472 + $0x10a] sm:$0xff]
  %v1200 = vld [vmem:[%s472 + $0x112] sm:$0xff]
  %v1201 = vld [vmem:[%s472 + $0x122] sm:$0xff]
  %v1202 = vld [vmem:[%s472 + $0x12a] sm:$0xff]
  %v1203 = vld [vmem:[%s472 + $0x13a] sm:$0xff]
  %v1204 = vld [vmem:[%s472 + $0x142] sm:$0xff]
  %v1205 = vld [vmem:[%s472 + $0x152] sm:$0xff]
  %v1206 = vld [vmem:[%s472 + $0x15a] sm:$0xff]
  %v1207 = vld [vmem:[%s472 + $0x16a] sm:$0xff]
  %v1208 = vld [vmem:[%s472 + $0x172] sm:$0xff]
  %v1209 = vld [vmem:[%s472 + $0x1b2] sm:$0xff]
  %v1210 = vld [vmem:[%s472 + $0x1ba] sm:$0xff]
  %v1211 = vld [vmem:[%s472 + $0x1ca] sm:$0xff]
  %v1212 = vld [vmem:[%s472 + $0x1d2] sm:$0xff]
  %v1213 = vld [vmem:[%s472 + $0x1e2] sm:$0xff]
  %v1214 = vld [vmem:[%s472 + $0x1ea] sm:$0xff]
  %v1215 = vld [vmem:[%s472 + $0x1fa] sm:$0xff]
  %v1216 = vld [vmem:[%s472 + $0x202] sm:$0xff]
  %v1217 = vld [vmem:[%s472 + $0x212] sm:$0xff]
  %v1218 = vld [vmem:[%s472 + $0x21a] sm:$0xff]
  %v1219 = vld [vmem:[%s472 + $0x22a] sm:$0xff]
  %v1220 = vld [vmem:[%s472 + $0x232] sm:$0xff]
  %v1221 = vld [vmem:[%s472 + $0x242] sm:$0xff]
  %v1222 = vld [vmem:[%s472 + $0x24a] sm:$0xff]
  %v1223 = vld [vmem:[%s472 + $0x25a] sm:$0xff]
  %v1224 = vld [vmem:[%s472 + $0x262] sm:$0xff]
  %v1225 = vld [vmem:[%s472 + $0x272] sm:$0xff]
  %v1226 = vld [vmem:[%s472 + $0x27a] sm:$0xff]
  %v1227 = vld [vmem:[%s472 + $0x28a] sm:$0xff]
  %v1228 = vld [vmem:[%s472 + $0x292] sm:$0xff]
  %v1229 = vld [vmem:[%s472 + $0x2a2] sm:$0xff]
  %v1230 = vld [vmem:[%s472 + $0x2aa] sm:$0xff]
  %v1231 = vld [vmem:[%s472 + $0x2ba] sm:$0xff]
  %v1232 = vld [vmem:[%s472 + $0x2c2] sm:$0xff]
  %v1233 = vld [vmem:[%s472 + $0x2d2] sm:$0xff]
  %v1234 = vld [vmem:[%s472 + $0x2da] sm:$0xff]
  %v1235 = vld [vmem:[%s472 + $0x2ea] sm:$0xff]
  %v1236 = vld [vmem:[%s472 + $0x2f2] sm:$0xff]
  %v1237 = vld [vmem:[%s472 + $0x302] sm:$0xff]
  %v1238 = vld [vmem:[%s472 + $0x30a] sm:$0xff]
  %v1239 = vld [vmem:[%s472 + $0x31a] sm:$0xff]
  %v1240 = vld [vmem:[%s472 + $0x322] sm:$0xff]
  %1241 = vst [vmem:[#allocation3 + $0x28] sm:$0xff] %v1177
  %1242 = vst [vmem:[#allocation3 + $0x70] sm:$0xff] %v1178
  %1243 = vst [vmem:[#allocation3 + $0xb8] sm:$0xff] %v1179
  %1244 = vst [vmem:[#allocation3 + $0x100] sm:$0xff] %v1180
  %1245 = vst [vmem:[#allocation3 + $0x148] sm:$0xff] %v1181
  %1246 = vst [vmem:[#allocation3 + $0x190] sm:$0xff] %v1182
  %1247 = vst [vmem:[#allocation3 + $0x1d8] sm:$0xff] %v1183
  %1248 = vst [vmem:[#allocation3 + $0x220] sm:$0xff] %v1184
  %1249 = vst [vmem:[#allocation3 + $0x268] sm:$0xff] %v1185
  %1250 = vst [vmem:[#allocation3 + $0x2b0] sm:$0xff] %v1186
  %1251 = vst [vmem:[#allocation3 + $0x2f8] sm:$0xff] %v1187
  %1252 = vst [vmem:[#allocation3 + $0x340] sm:$0xff] %v1188
  %1253 = vst [vmem:[#allocation3 + $0x388] sm:$0xff] %v1189
  %1254 = vst [vmem:[#allocation3 + $0x3d0] sm:$0xff] %v1190
  %1255 = vst [vmem:[#allocation3 + $0x418] sm:$0xff] %v1191
  %1256 = vst [vmem:[#allocation3 + $0x460] sm:$0xff] %v1192
  %1257 = vst [vmem:[#allocation3 + $0x4a8] sm:$0xff] %v1193
  %1258 = vst [vmem:[#allocation3 + $0x4f0] sm:$0xff] %v1194
  %1259 = vst [vmem:[#allocation3 + $0x538] sm:$0xff] %v1195
  %1260 = vst [vmem:[#allocation3 + $0x580] sm:$0xff] %v1196
  %1261 = vst [vmem:[#allocation3 + $0x5c8] sm:$0xff] %v1197
  %1262 = vst [vmem:[#allocation3 + $0x610] sm:$0xff] %v1198
  %1263 = vst [vmem:[#allocation3 + $0x658] sm:$0xff] %v1199
  %1264 = vst [vmem:[#allocation3 + $0x6a0] sm:$0xff] %v1200
  %1265 = vst [vmem:[#allocation3 + $0x6e8] sm:$0xff] %v1201
  %1266 = vst [vmem:[#allocation3 + $0x730] sm:$0xff] %v1202
  %1267 = vst [vmem:[#allocation3 + $0x778] sm:$0xff] %v1203
  %1268 = vst [vmem:[#allocation3 + $0x7c0] sm:$0xff] %v1204
  %1269 = vst [vmem:[#allocation3 + $0x808] sm:$0xff] %v1205
  %1270 = vst [vmem:[#allocation3 + $0x850] sm:$0xff] %v1206
  %1271 = vst [vmem:[#allocation3 + $0x898] sm:$0xff] %v1207
  %1272 = vst [vmem:[#allocation3 + $0x8e0] sm:$0xff] %v1208
  %1273 = vst [vmem:[#allocation3 + $0x928] sm:$0xff] %v1209
  %1274 = vst [vmem:[#allocation3 + $0x970] sm:$0xff] %v1210
  %1275 = vst [vmem:[#allocation3 + $0x9b8] sm:$0xff] %v1211
  %1276 = vst [vmem:[#allocation3 + $0xa00] sm:$0xff] %v1212
  %1277 = vst [vmem:[#allocation3 + $0xa48] sm:$0xff] %v1213
  %1278 = vst [vmem:[#allocation3 + $0xa90] sm:$0xff] %v1214
  %1279 = vst [vmem:[#allocation3 + $0xad8] sm:$0xff] %v1215
  %1280 = vst [vmem:[#allocation3 + $0xb20] sm:$0xff] %v1216
  %1281 = vst [vmem:[#allocation3 + $0xb68] sm:$0xff] %v1217
  %1282 = vst [vmem:[#allocation3 + $0xbb0] sm:$0xff] %v1218
  %1283 = vst [vmem:[#allocation3 + $0xbf8] sm:$0xff] %v1219
  %1284 = vst [vmem:[#allocation3 + $0xc40] sm:$0xff] %v1220
  %1285 = vst [vmem:[#allocation3 + $0xc88] sm:$0xff] %v1221
  %1286 = vst [vmem:[#allocation3 + $0xcd0] sm:$0xff] %v1222
  %1287 = vst [vmem:[#allocation3 + $0xd18] sm:$0xff] %v1223
  %1288 = vst [vmem:[#allocation3 + $0xd60] sm:$0xff] %v1224
  %1289 = vst [vmem:[#allocation3 + $0xda8] sm:$0xff] %v1225
  %1290 = vst [vmem:[#allocation3 + $0xdf0] sm:$0xff] %v1226
  %1291 = vst [vmem:[#allocation3 + $0xe38] sm:$0xff] %v1227
  %1292 = vst [vmem:[#allocation3 + $0xe80] sm:$0xff] %v1228
  %1293 = vst [vmem:[#allocation3 + $0xec8] sm:$0xff] %v1229
  %1294 = vst [vmem:[#allocation3 + $0xf10] sm:$0xff] %v1230
  %1295 = vst [vmem:[#allocation3 + $0xf58] sm:$0xff] %v1231
  %1296 = vst [vmem:[#allocation3 + $0xfa0] sm:$0xff] %v1232
  %1297 = vst [vmem:[#allocation3 + $0xfe8] sm:$0xff] %v1233
  %1298 = vst [vmem:[#allocation3 + $0x1030] sm:$0xff] %v1234
  %1299 = vst [vmem:[#allocation3 + $0x1078] sm:$0xff] %v1235
  %1300 = vst [vmem:[#allocation3 + $0x10c0] sm:$0xff] %v1236
  %1301 = vst [vmem:[#allocation3 + $0x1108] sm:$0xff] %v1237
  %1302 = vst [vmem:[#allocation3 + $0x1150] sm:$0xff] %v1238
  %1303 = vst [vmem:[#allocation3 + $0x1198] sm:$0xff] %v1239
  %1304 = vst [vmem:[#allocation3 + $0x11e0] sm:$0xff] %v1240
  %s1305 = scalar_lea.vmem [#allocation2], 48
  %v1306 = vld [vmem:[%s1305] sm:$0xff]
  %v1307 = vld [vmem:[%s1305 + $0x8] sm:$0xff]
  %v1308 = vld [vmem:[%s1305 + $0x18] sm:$0xff]
  %v1309 = vld [vmem:[%s1305 + $0x20] sm:$0xff]
  %v1310 = vld [vmem:[%s1305 + $0x30] sm:$0xff]
  %v1311 = vld [vmem:[%s1305 + $0x38] sm:$0xff]
  %v1312 = vld [vmem:[%s1305 + $0x48] sm:$0xff]
  %v1313 = vld [vmem:[%s1305 + $0x50] sm:$0xff]
  %v1314 = vld [vmem:[%s1305 + $0x60] sm:$0xff]
  %v1315 = vld [vmem:[%s1305 + $0x68] sm:$0xff]
  %v1316 = vld [vmem:[%s1305 + $0x78] sm:$0xff]
  %v1317 = vld [vmem:[%s1305 + $0x80] sm:$0xff]
  %v1318 = vld [vmem:[%s1305 + $0x90] sm:$0xff]
  %v1319 = vld [vmem:[%s1305 + $0x98] sm:$0xff]
  %v1320 = vld [vmem:[%s1305 + $0xa8] sm:$0xff]
  %v1321 = vld [vmem:[%s1305 + $0xb0] sm:$0xff]
  %v1322 = vld [vmem:[%s1305 + $0xc0] sm:$0xff]
  %v1323 = vld [vmem:[%s1305 + $0xc8] sm:$0xff]
  %v1324 = vld [vmem:[%s1305 + $0xd8] sm:$0xff]
  %v1325 = vld [vmem:[%s1305 + $0xe0] sm:$0xff]
  %v1326 = vld [vmem:[%s1305 + $0xf0] sm:$0xff]
  %v1327 = vld [vmem:[%s1305 + $0xf8] sm:$0xff]
  %v1328 = vld [vmem:[%s1305 + $0x108] sm:$0xff]
  %v1329 = vld [vmem:[%s1305 + $0x110] sm:$0xff]
  %v1330 = vld [vmem:[%s1305 + $0x120] sm:$0xff]
  %v1331 = vld [vmem:[%s1305 + $0x128] sm:$0xff]
  %v1332 = vld [vmem:[%s1305 + $0x138] sm:$0xff]
  %v1333 = vld [vmem:[%s1305 + $0x140] sm:$0xff]
  %v1334 = vld [vmem:[%s1305 + $0x150] sm:$0xff]
  %v1335 = vld [vmem:[%s1305 + $0x158] sm:$0xff]
  %v1336 = vld [vmem:[%s1305 + $0x168] sm:$0xff]
  %v1337 = vld [vmem:[%s1305 + $0x170] sm:$0xff]
  %v1338 = vld [vmem:[%s1305 + $0x1b0] sm:$0xff]
  %v1339 = vld [vmem:[%s1305 + $0x1b8] sm:$0xff]
  %v1340 = vld [vmem:[%s1305 + $0x1c8] sm:$0xff]
  %v1341 = vld [vmem:[%s1305 + $0x1d0] sm:$0xff]
  %v1342 = vld [vmem:[%s1305 + $0x1e0] sm:$0xff]
  %v1343 = vld [vmem:[%s1305 + $0x1e8] sm:$0xff]
  %v1344 = vld [vmem:[%s1305 + $0x1f8] sm:$0xff]
  %v1345 = vld [vmem:[%s1305 + $0x200] sm:$0xff]
  %v1346 = vld [vmem:[%s1305 + $0x210] sm:$0xff]
  %v1347 = vld [vmem:[%s1305 + $0x218] sm:$0xff]
  %v1348 = vld [vmem:[%s1305 + $0x228] sm:$0xff]
  %v1349 = vld [vmem:[%s1305 + $0x230] sm:$0xff]
  %v1350 = vld [vmem:[%s1305 + $0x240] sm:$0xff]
  %v1351 = vld [vmem:[%s1305 + $0x248] sm:$0xff]
  %v1352 = vld [vmem:[%s1305 + $0x258] sm:$0xff]
  %v1353 = vld [vmem:[%s1305 + $0x260] sm:$0xff]
  %v1354 = vld [vmem:[%s1305 + $0x270] sm:$0xff]
  %v1355 = vld [vmem:[%s1305 + $0x278] sm:$0xff]
  %v1356 = vld [vmem:[%s1305 + $0x288] sm:$0xff]
  %v1357 = vld [vmem:[%s1305 + $0x290] sm:$0xff]
  %v1358 = vld [vmem:[%s1305 + $0x2a0] sm:$0xff]
  %v1359 = vld [vmem:[%s1305 + $0x2a8] sm:$0xff]
  %v1360 = vld [vmem:[%s1305 + $0x2b8] sm:$0xff]
  %v1361 = vld [vmem:[%s1305 + $0x2c0] sm:$0xff]
  %v1362 = vld [vmem:[%s1305 + $0x2d0] sm:$0xff]
  %v1363 = vld [vmem:[%s1305 + $0x2d8] sm:$0xff]
  %v1364 = vld [vmem:[%s1305 + $0x2e8] sm:$0xff]
  %v1365 = vld [vmem:[%s1305 + $0x2f0] sm:$0xff]
  %v1366 = vld [vmem:[%s1305 + $0x300] sm:$0xff]
  %v1367 = vld [vmem:[%s1305 + $0x308] sm:$0xff]
  %v1368 = vld [vmem:[%s1305 + $0x318] sm:$0xff]
  %v1369 = vld [vmem:[%s1305 + $0x320] sm:$0xff]
  %1370 = vst [vmem:[#allocation3 + $0x30] sm:$0xff] %v1306
  %1371 = vst [vmem:[#allocation3 + $0x78] sm:$0xff] %v1307
  %1372 = vst [vmem:[#allocation3 + $0xc0] sm:$0xff] %v1308
  %1373 = vst [vmem:[#allocation3 + $0x108] sm:$0xff] %v1309
  %1374 = vst [vmem:[#allocation3 + $0x150] sm:$0xff] %v1310
  %1375 = vst [vmem:[#allocation3 + $0x198] sm:$0xff] %v1311
  %1376 = vst [vmem:[#allocation3 + $0x1e0] sm:$0xff] %v1312
  %1377 = vst [vmem:[#allocation3 + $0x228] sm:$0xff] %v1313
  %1378 = vst [vmem:[#allocation3 + $0x270] sm:$0xff] %v1314
  %1379 = vst [vmem:[#allocation3 + $0x2b8] sm:$0xff] %v1315
  %1380 = vst [vmem:[#allocation3 + $0x300] sm:$0xff] %v1316
  %1381 = vst [vmem:[#allocation3 + $0x348] sm:$0xff] %v1317
  %1382 = vst [vmem:[#allocation3 + $0x390] sm:$0xff] %v1318
  %1383 = vst [vmem:[#allocation3 + $0x3d8] sm:$0xff] %v1319
  %1384 = vst [vmem:[#allocation3 + $0x420] sm:$0xff] %v1320
  %1385 = vst [vmem:[#allocation3 + $0x468] sm:$0xff] %v1321
  %1386 = vst [vmem:[#allocation3 + $0x4b0] sm:$0xff] %v1322
  %1387 = vst [vmem:[#allocation3 + $0x4f8] sm:$0xff] %v1323
  %1388 = vst [vmem:[#allocation3 + $0x540] sm:$0xff] %v1324
  %1389 = vst [vmem:[#allocation3 + $0x588] sm:$0xff] %v1325
  %1390 = vst [vmem:[#allocation3 + $0x5d0] sm:$0xff] %v1326
  %1391 = vst [vmem:[#allocation3 + $0x618] sm:$0xff] %v1327
  %1392 = vst [vmem:[#allocation3 + $0x660] sm:$0xff] %v1328
  %1393 = vst [vmem:[#allocation3 + $0x6a8] sm:$0xff] %v1329
  %1394 = vst [vmem:[#allocation3 + $0x6f0] sm:$0xff] %v1330
  %1395 = vst [vmem:[#allocation3 + $0x738] sm:$0xff] %v1331
  %1396 = vst [vmem:[#allocation3 + $0x780] sm:$0xff] %v1332
  %1397 = vst [vmem:[#allocation3 + $0x7c8] sm:$0xff] %v1333
  %1398 = vst [vmem:[#allocation3 + $0x810] sm:$0xff] %v1334
  %1399 = vst [vmem:[#allocation3 + $0x858] sm:$0xff] %v1335
  %1400 = vst [vmem:[#allocation3 + $0x8a0] sm:$0xff] %v1336
  %1401 = vst [vmem:[#allocation3 + $0x8e8] sm:$0xff] %v1337
  %1402 = vst [vmem:[#allocation3 + $0x930] sm:$0xff] %v1338
  %1403 = vst [vmem:[#allocation3 + $0x978] sm:$0xff] %v1339
  %1404 = vst [vmem:[#allocation3 + $0x9c0] sm:$0xff] %v1340
  %1405 = vst [vmem:[#allocation3 + $0xa08] sm:$0xff] %v1341
  %1406 = vst [vmem:[#allocation3 + $0xa50] sm:$0xff] %v1342
  %1407 = vst [vmem:[#allocation3 + $0xa98] sm:$0xff] %v1343
  %1408 = vst [vmem:[#allocation3 + $0xae0] sm:$0xff] %v1344
  %1409 = vst [vmem:[#allocation3 + $0xb28] sm:$0xff] %v1345
  %1410 = vst [vmem:[#allocation3 + $0xb70] sm:$0xff] %v1346
  %1411 = vst [vmem:[#allocation3 + $0xbb8] sm:$0xff] %v1347
  %1412 = vst [vmem:[#allocation3 + $0xc00] sm:$0xff] %v1348
  %1413 = vst [vmem:[#allocation3 + $0xc48] sm:$0xff] %v1349
  %1414 = vst [vmem:[#allocation3 + $0xc90] sm:$0xff] %v1350
  %1415 = vst [vmem:[#allocation3 + $0xcd8] sm:$0xff] %v1351
  %1416 = vst [vmem:[#allocation3 + $0xd20] sm:$0xff] %v1352
  %1417 = vst [vmem:[#allocation3 + $0xd68] sm:$0xff] %v1353
  %1418 = vst [vmem:[#allocation3 + $0xdb0] sm:$0xff] %v1354
  %1419 = vst [vmem:[#allocation3 + $0xdf8] sm:$0xff] %v1355
  %1420 = vst [vmem:[#allocation3 + $0xe40] sm:$0xff] %v1356
  %1421 = vst [vmem:[#allocation3 + $0xe88] sm:$0xff] %v1357
  %1422 = vst [vmem:[#allocation3 + $0xed0] sm:$0xff] %v1358
  %1423 = vst [vmem:[#allocation3 + $0xf18] sm:$0xff] %v1359
  %1424 = vst [vmem:[#allocation3 + $0xf60] sm:$0xff] %v1360
  %1425 = vst [vmem:[#allocation3 + $0xfa8] sm:$0xff] %v1361
  %1426 = vst [vmem:[#allocation3 + $0xff0] sm:$0xff] %v1362
  %1427 = vst [vmem:[#allocation3 + $0x1038] sm:$0xff] %v1363
  %1428 = vst [vmem:[#allocation3 + $0x1080] sm:$0xff] %v1364
  %1429 = vst [vmem:[#allocation3 + $0x10c8] sm:$0xff] %v1365
  %1430 = vst [vmem:[#allocation3 + $0x1110] sm:$0xff] %v1366
  %1431 = vst [vmem:[#allocation3 + $0x1158] sm:$0xff] %v1367
  %1432 = vst [vmem:[#allocation3 + $0x11a0] sm:$0xff] %v1368
  %1433 = vst [vmem:[#allocation3 + $0x11e8] sm:$0xff] %v1369
  %v1434 = vld [vmem:[%s1305 + $0x1] sm:$0xff]
  %v1435 = vld [vmem:[%s1305 + $0x9] sm:$0xff]
  %v1436 = vld [vmem:[%s1305 + $0x19] sm:$0xff]
  %v1437 = vld [vmem:[%s1305 + $0x21] sm:$0xff]
  %v1438 = vld [vmem:[%s1305 + $0x31] sm:$0xff]
  %v1439 = vld [vmem:[%s1305 + $0x39] sm:$0xff]
  %v1440 = vld [vmem:[%s1305 + $0x49] sm:$0xff]
  %v1441 = vld [vmem:[%s1305 + $0x51] sm:$0xff]
  %v1442 = vld [vmem:[%s1305 + $0x61] sm:$0xff]
  %v1443 = vld [vmem:[%s1305 + $0x69] sm:$0xff]
  %v1444 = vld [vmem:[%s1305 + $0x79] sm:$0xff]
  %v1445 = vld [vmem:[%s1305 + $0x81] sm:$0xff]
  %v1446 = vld [vmem:[%s1305 + $0x91] sm:$0xff]
  %v1447 = vld [vmem:[%s1305 + $0x99] sm:$0xff]
  %v1448 = vld [vmem:[%s1305 + $0xa9] sm:$0xff]
  %v1449 = vld [vmem:[%s1305 + $0xb1] sm:$0xff]
  %v1450 = vld [vmem:[%s1305 + $0xc1] sm:$0xff]
  %v1451 = vld [vmem:[%s1305 + $0xc9] sm:$0xff]
  %v1452 = vld [vmem:[%s1305 + $0xd9] sm:$0xff]
  %v1453 = vld [vmem:[%s1305 + $0xe1] sm:$0xff]
  %v1454 = vld [vmem:[%s1305 + $0xf1] sm:$0xff]
  %v1455 = vld [vmem:[%s1305 + $0xf9] sm:$0xff]
  %v1456 = vld [vmem:[%s1305 + $0x109] sm:$0xff]
  %v1457 = vld [vmem:[%s1305 + $0x111] sm:$0xff]
  %v1458 = vld [vmem:[%s1305 + $0x121] sm:$0xff]
  %v1459 = vld [vmem:[%s1305 + $0x129] sm:$0xff]
  %v1460 = vld [vmem:[%s1305 + $0x139] sm:$0xff]
  %v1461 = vld [vmem:[%s1305 + $0x141] sm:$0xff]
  %v1462 = vld [vmem:[%s1305 + $0x151] sm:$0xff]
  %v1463 = vld [vmem:[%s1305 + $0x159] sm:$0xff]
  %v1464 = vld [vmem:[%s1305 + $0x169] sm:$0xff]
  %v1465 = vld [vmem:[%s1305 + $0x171] sm:$0xff]
  %v1466 = vld [vmem:[%s1305 + $0x1b1] sm:$0xff]
  %v1467 = vld [vmem:[%s1305 + $0x1b9] sm:$0xff]
  %v1468 = vld [vmem:[%s1305 + $0x1c9] sm:$0xff]
  %v1469 = vld [vmem:[%s1305 + $0x1d1] sm:$0xff]
  %v1470 = vld [vmem:[%s1305 + $0x1e1] sm:$0xff]
  %v1471 = vld [vmem:[%s1305 + $0x1e9] sm:$0xff]
  %v1472 = vld [vmem:[%s1305 + $0x1f9] sm:$0xff]
  %v1473 = vld [vmem:[%s1305 + $0x201] sm:$0xff]
  %v1474 = vld [vmem:[%s1305 + $0x211] sm:$0xff]
  %v1475 = vld [vmem:[%s1305 + $0x219] sm:$0xff]
  %v1476 = vld [vmem:[%s1305 + $0x229] sm:$0xff]
  %v1477 = vld [vmem:[%s1305 + $0x231] sm:$0xff]
  %v1478 = vld [vmem:[%s1305 + $0x241] sm:$0xff]
  %v1479 = vld [vmem:[%s1305 + $0x249] sm:$0xff]
  %v1480 = vld [vmem:[%s1305 + $0x259] sm:$0xff]
  %v1481 = vld [vmem:[%s1305 + $0x261] sm:$0xff]
  %v1482 = vld [vmem:[%s1305 + $0x271] sm:$0xff]
  %v1483 = vld [vmem:[%s1305 + $0x279] sm:$0xff]
  %v1484 = vld [vmem:[%s1305 + $0x289] sm:$0xff]
  %v1485 = vld [vmem:[%s1305 + $0x291] sm:$0xff]
  %v1486 = vld [vmem:[%s1305 + $0x2a1] sm:$0xff]
  %v1487 = vld [vmem:[%s1305 + $0x2a9] sm:$0xff]
  %v1488 = vld [vmem:[%s1305 + $0x2b9] sm:$0xff]
  %v1489 = vld [vmem:[%s1305 + $0x2c1] sm:$0xff]
  %v1490 = vld [vmem:[%s1305 + $0x2d1] sm:$0xff]
  %v1491 = vld [vmem:[%s1305 + $0x2d9] sm:$0xff]
  %v1492 = vld [vmem:[%s1305 + $0x2e9] sm:$0xff]
  %v1493 = vld [vmem:[%s1305 + $0x2f1] sm:$0xff]
  %v1494 = vld [vmem:[%s1305 + $0x301] sm:$0xff]
  %v1495 = vld [vmem:[%s1305 + $0x309] sm:$0xff]
  %v1496 = vld [vmem:[%s1305 + $0x319] sm:$0xff]
  %v1497 = vld [vmem:[%s1305 + $0x321] sm:$0xff]
  %1498 = vst [vmem:[#allocation3 + $0x38] sm:$0xff] %v1434
  %1499 = vst [vmem:[#allocation3 + $0x80] sm:$0xff] %v1435
  %1500 = vst [vmem:[#allocation3 + $0xc8] sm:$0xff] %v1436
  %1501 = vst [vmem:[#allocation3 + $0x110] sm:$0xff] %v1437
  %1502 = vst [vmem:[#allocation3 + $0x158] sm:$0xff] %v1438
  %1503 = vst [vmem:[#allocation3 + $0x1a0] sm:$0xff] %v1439
  %1504 = vst [vmem:[#allocation3 + $0x1e8] sm:$0xff] %v1440
  %1505 = vst [vmem:[#allocation3 + $0x230] sm:$0xff] %v1441
  %1506 = vst [vmem:[#allocation3 + $0x278] sm:$0xff] %v1442
  %1507 = vst [vmem:[#allocation3 + $0x2c0] sm:$0xff] %v1443
  %1508 = vst [vmem:[#allocation3 + $0x308] sm:$0xff] %v1444
  %1509 = vst [vmem:[#allocation3 + $0x350] sm:$0xff] %v1445
  %1510 = vst [vmem:[#allocation3 + $0x398] sm:$0xff] %v1446
  %1511 = vst [vmem:[#allocation3 + $0x3e0] sm:$0xff] %v1447
  %1512 = vst [vmem:[#allocation3 + $0x428] sm:$0xff] %v1448
  %1513 = vst [vmem:[#allocation3 + $0x470] sm:$0xff] %v1449
  %1514 = vst [vmem:[#allocation3 + $0x4b8] sm:$0xff] %v1450
  %1515 = vst [vmem:[#allocation3 + $0x500] sm:$0xff] %v1451
  %1516 = vst [vmem:[#allocation3 + $0x548] sm:$0xff] %v1452
  %1517 = vst [vmem:[#allocation3 + $0x590] sm:$0xff] %v1453
  %1518 = vst [vmem:[#allocation3 + $0x5d8] sm:$0xff] %v1454
  %1519 = vst [vmem:[#allocation3 + $0x620] sm:$0xff] %v1455
  %1520 = vst [vmem:[#allocation3 + $0x668] sm:$0xff] %v1456
  %1521 = vst [vmem:[#allocation3 + $0x6b0] sm:$0xff] %v1457
  %1522 = vst [vmem:[#allocation3 + $0x6f8] sm:$0xff] %v1458
  %1523 = vst [vmem:[#allocation3 + $0x740] sm:$0xff] %v1459
  %1524 = vst [vmem:[#allocation3 + $0x788] sm:$0xff] %v1460
  %1525 = vst [vmem:[#allocation3 + $0x7d0] sm:$0xff] %v1461
  %1526 = vst [vmem:[#allocation3 + $0x818] sm:$0xff] %v1462
  %1527 = vst [vmem:[#allocation3 + $0x860] sm:$0xff] %v1463
  %1528 = vst [vmem:[#allocation3 + $0x8a8] sm:$0xff] %v1464
  %1529 = vst [vmem:[#allocation3 + $0x8f0] sm:$0xff] %v1465
  %1530 = vst [vmem:[#allocation3 + $0x938] sm:$0xff] %v1466
  %1531 = vst [vmem:[#allocation3 + $0x980] sm:$0xff] %v1467
  %1532 = vst [vmem:[#allocation3 + $0x9c8] sm:$0xff] %v1468
  %1533 = vst [vmem:[#allocation3 + $0xa10] sm:$0xff] %v1469
  %1534 = vst [vmem:[#allocation3 + $0xa58] sm:$0xff] %v1470
  %1535 = vst [vmem:[#allocation3 + $0xaa0] sm:$0xff] %v1471
  %1536 = vst [vmem:[#allocation3 + $0xae8] sm:$0xff] %v1472
  %1537 = vst [vmem:[#allocation3 + $0xb30] sm:$0xff] %v1473
  %1538 = vst [vmem:[#allocation3 + $0xb78] sm:$0xff] %v1474
  %1539 = vst [vmem:[#allocation3 + $0xbc0] sm:$0xff] %v1475
  %1540 = vst [vmem:[#allocation3 + $0xc08] sm:$0xff] %v1476
  %1541 = vst [vmem:[#allocation3 + $0xc50] sm:$0xff] %v1477
  %1542 = vst [vmem:[#allocation3 + $0xc98] sm:$0xff] %v1478
  %1543 = vst [vmem:[#allocation3 + $0xce0] sm:$0xff] %v1479
  %1544 = vst [vmem:[#allocation3 + $0xd28] sm:$0xff] %v1480
  %1545 = vst [vmem:[#allocation3 + $0xd70] sm:$0xff] %v1481
  %1546 = vst [vmem:[#allocation3 + $0xdb8] sm:$0xff] %v1482
  %1547 = vst [vmem:[#allocation3 + $0xe00] sm:$0xff] %v1483
  %1548 = vst [vmem:[#allocation3 + $0xe48] sm:$0xff] %v1484
  %1549 = vst [vmem:[#allocation3 + $0xe90] sm:$0xff] %v1485
  %1550 = vst [vmem:[#allocation3 + $0xed8] sm:$0xff] %v1486
  %1551 = vst [vmem:[#allocation3 + $0xf20] sm:$0xff] %v1487
  %1552 = vst [vmem:[#allocation3 + $0xf68] sm:$0xff] %v1488
  %1553 = vst [vmem:[#allocation3 + $0xfb0] sm:$0xff] %v1489
  %1554 = vst [vmem:[#allocation3 + $0xff8] sm:$0xff] %v1490
  %1555 = vst [vmem:[#allocation3 + $0x1040] sm:$0xff] %v1491
  %1556 = vst [vmem:[#allocation3 + $0x1088] sm:$0xff] %v1492
  %1557 = vst [vmem:[#allocation3 + $0x10d0] sm:$0xff] %v1493
  %1558 = vst [vmem:[#allocation3 + $0x1118] sm:$0xff] %v1494
  %1559 = vst [vmem:[#allocation3 + $0x1160] sm:$0xff] %v1495
  %1560 = vst [vmem:[#allocation3 + $0x11a8] sm:$0xff] %v1496
  %1561 = vst [vmem:[#allocation3 + $0x11f0] sm:$0xff] %v1497
  %v1562 = vld [vmem:[%s1305 + $0x2] sm:$0xff]
  %v1563 = vld [vmem:[%s1305 + $0xa] sm:$0xff]
  %v1564 = vld [vmem:[%s1305 + $0x1a] sm:$0xff]
  %v1565 = vld [vmem:[%s1305 + $0x22] sm:$0xff]
  %v1566 = vld [vmem:[%s1305 + $0x32] sm:$0xff]
  %v1567 = vld [vmem:[%s1305 + $0x3a] sm:$0xff]
  %v1568 = vld [vmem:[%s1305 + $0x4a] sm:$0xff]
  %v1569 = vld [vmem:[%s1305 + $0x52] sm:$0xff]
  %v1570 = vld [vmem:[%s1305 + $0x62] sm:$0xff]
  %v1571 = vld [vmem:[%s1305 + $0x6a] sm:$0xff]
  %v1572 = vld [vmem:[%s1305 + $0x7a] sm:$0xff]
  %v1573 = vld [vmem:[%s1305 + $0x82] sm:$0xff]
  %v1574 = vld [vmem:[%s1305 + $0x92] sm:$0xff]
  %v1575 = vld [vmem:[%s1305 + $0x9a] sm:$0xff]
  %v1576 = vld [vmem:[%s1305 + $0xaa] sm:$0xff]
  %v1577 = vld [vmem:[%s1305 + $0xb2] sm:$0xff]
  %v1578 = vld [vmem:[%s1305 + $0xc2] sm:$0xff]
  %v1579 = vld [vmem:[%s1305 + $0xca] sm:$0xff]
  %v1580 = vld [vmem:[%s1305 + $0xda] sm:$0xff]
  %v1581 = vld [vmem:[%s1305 + $0xe2] sm:$0xff]
  %v1582 = vld [vmem:[%s1305 + $0xf2] sm:$0xff]
  %v1583 = vld [vmem:[%s1305 + $0xfa] sm:$0xff]
  %v1584 = vld [vmem:[%s1305 + $0x10a] sm:$0xff]
  %v1585 = vld [vmem:[%s1305 + $0x112] sm:$0xff]
  %v1586 = vld [vmem:[%s1305 + $0x122] sm:$0xff]
  %v1587 = vld [vmem:[%s1305 + $0x12a] sm:$0xff]
  %v1588 = vld [vmem:[%s1305 + $0x13a] sm:$0xff]
  %v1589 = vld [vmem:[%s1305 + $0x142] sm:$0xff]
  %v1590 = vld [vmem:[%s1305 + $0x152] sm:$0xff]
  %v1591 = vld [vmem:[%s1305 + $0x15a] sm:$0xff]
  %v1592 = vld [vmem:[%s1305 + $0x16a] sm:$0xff]
  %v1593 = vld [vmem:[%s1305 + $0x172] sm:$0xff]
  %v1594 = vld [vmem:[%s1305 + $0x1b2] sm:$0xff]
  %v1595 = vld [vmem:[%s1305 + $0x1ba] sm:$0xff]
  %v1596 = vld [vmem:[%s1305 + $0x1ca] sm:$0xff]
  %v1597 = vld [vmem:[%s1305 + $0x1d2] sm:$0xff]
  %v1598 = vld [vmem:[%s1305 + $0x1e2] sm:$0xff]
  %v1599 = vld [vmem:[%s1305 + $0x1ea] sm:$0xff]
  %v1600 = vld [vmem:[%s1305 + $0x1fa] sm:$0xff]
  %v1601 = vld [vmem:[%s1305 + $0x202] sm:$0xff]
  %v1602 = vld [vmem:[%s1305 + $0x212] sm:$0xff]
  %v1603 = vld [vmem:[%s1305 + $0x21a] sm:$0xff]
  %v1604 = vld [vmem:[%s1305 + $0x22a] sm:$0xff]
  %v1605 = vld [vmem:[%s1305 + $0x232] sm:$0xff]
  %v1606 = vld [vmem:[%s1305 + $0x242] sm:$0xff]
  %v1607 = vld [vmem:[%s1305 + $0x24a] sm:$0xff]
  %v1608 = vld [vmem:[%s1305 + $0x25a] sm:$0xff]
  %v1609 = vld [vmem:[%s1305 + $0x262] sm:$0xff]
  %v1610 = vld [vmem:[%s1305 + $0x272] sm:$0xff]
  %v1611 = vld [vmem:[%s1305 + $0x27a] sm:$0xff]
  %v1612 = vld [vmem:[%s1305 + $0x28a] sm:$0xff]
  %v1613 = vld [vmem:[%s1305 + $0x292] sm:$0xff]
  %v1614 = vld [vmem:[%s1305 + $0x2a2] sm:$0xff]
  %v1615 = vld [vmem:[%s1305 + $0x2aa] sm:$0xff]
  %v1616 = vld [vmem:[%s1305 + $0x2ba] sm:$0xff]
  %v1617 = vld [vmem:[%s1305 + $0x2c2] sm:$0xff]
  %v1618 = vld [vmem:[%s1305 + $0x2d2] sm:$0xff]
  %v1619 = vld [vmem:[%s1305 + $0x2da] sm:$0xff]
  %v1620 = vld [vmem:[%s1305 + $0x2ea] sm:$0xff]
  %v1621 = vld [vmem:[%s1305 + $0x2f2] sm:$0xff]
  %v1622 = vld [vmem:[%s1305 + $0x302] sm:$0xff]
  %v1623 = vld [vmem:[%s1305 + $0x30a] sm:$0xff]
  %v1624 = vld [vmem:[%s1305 + $0x31a] sm:$0xff]
  %v1625 = vld [vmem:[%s1305 + $0x322] sm:$0xff]
  %1626 = vst [vmem:[#allocation3 + $0x40] sm:$0xff] %v1562
  %1627 = vst [vmem:[#allocation3 + $0x88] sm:$0xff] %v1563
  %1628 = vst [vmem:[#allocation3 + $0xd0] sm:$0xff] %v1564
  %1629 = vst [vmem:[#allocation3 + $0x118] sm:$0xff] %v1565
  %1630 = vst [vmem:[#allocation3 + $0x160] sm:$0xff] %v1566
  %1631 = vst [vmem:[#allocation3 + $0x1a8] sm:$0xff] %v1567
  %1632 = vst [vmem:[#allocation3 + $0x1f0] sm:$0xff] %v1568
  %1633 = vst [vmem:[#allocation3 + $0x238] sm:$0xff] %v1569
  %1634 = vst [vmem:[#allocation3 + $0x280] sm:$0xff] %v1570
  %1635 = vst [vmem:[#allocation3 + $0x2c8] sm:$0xff] %v1571
  %1636 = vst [vmem:[#allocation3 + $0x310] sm:$0xff] %v1572
  %1637 = vst [vmem:[#allocation3 + $0x358] sm:$0xff] %v1573
  %1638 = vst [vmem:[#allocation3 + $0x3a0] sm:$0xff] %v1574
  %1639 = vst [vmem:[#allocation3 + $0x3e8] sm:$0xff] %v1575
  %1640 = vst [vmem:[#allocation3 + $0x430] sm:$0xff] %v1576
  %1641 = vst [vmem:[#allocation3 + $0x478] sm:$0xff] %v1577
  %1642 = vst [vmem:[#allocation3 + $0x4c0] sm:$0xff] %v1578
  %1643 = vst [vmem:[#allocation3 + $0x508] sm:$0xff] %v1579
  %1644 = vst [vmem:[#allocation3 + $0x550] sm:$0xff] %v1580
  %1645 = vst [vmem:[#allocation3 + $0x598] sm:$0xff] %v1581
  %1646 = vst [vmem:[#allocation3 + $0x5e0] sm:$0xff] %v1582
  %1647 = vst [vmem:[#allocation3 + $0x628] sm:$0xff] %v1583
  %1648 = vst [vmem:[#allocation3 + $0x670] sm:$0xff] %v1584
  %1649 = vst [vmem:[#allocation3 + $0x6b8] sm:$0xff] %v1585
  %1650 = vst [vmem:[#allocation3 + $0x700] sm:$0xff] %v1586
  %1651 = vst [vmem:[#allocation3 + $0x748] sm:$0xff] %v1587
  %1652 = vst [vmem:[#allocation3 + $0x790] sm:$0xff] %v1588
  %1653 = vst [vmem:[#allocation3 + $0x7d8] sm:$0xff] %v1589
  %1654 = vst [vmem:[#allocation3 + $0x820] sm:$0xff] %v1590
  %1655 = vst [vmem:[#allocation3 + $0x868] sm:$0xff] %v1591
  %1656 = vst [vmem:[#allocation3 + $0x8b0] sm:$0xff] %v1592
  %1657 = vst [vmem:[#allocation3 + $0x8f8] sm:$0xff] %v1593
  %1658 = vst [vmem:[#allocation3 + $0x940] sm:$0xff] %v1594
  %1659 = vst [vmem:[#allocation3 + $0x988] sm:$0xff] %v1595
  %1660 = vst [vmem:[#allocation3 + $0x9d0] sm:$0xff] %v1596
  %1661 = vst [vmem:[#allocation3 + $0xa18] sm:$0xff] %v1597
  %1662 = vst [vmem:[#allocation3 + $0xa60] sm:$0xff] %v1598
  %1663 = vst [vmem:[#allocation3 + $0xaa8] sm:$0xff] %v1599
  %1664 = vst [vmem:[#allocation3 + $0xaf0] sm:$0xff] %v1600
  %1665 = vst [vmem:[#allocation3 + $0xb38] sm:$0xff] %v1601
  %1666 = vst [vmem:[#allocation3 + $0xb80] sm:$0xff] %v1602
  %1667 = vst [vmem:[#allocation3 + $0xbc8] sm:$0xff] %v1603
  %1668 = vst [vmem:[#allocation3 + $0xc10] sm:$0xff] %v1604
  %1669 = vst [vmem:[#allocation3 + $0xc58] sm:$0xff] %v1605
  %1670 = vst [vmem:[#allocation3 + $0xca0] sm:$0xff] %v1606
  %1671 = vst [vmem:[#allocation3 + $0xce8] sm:$0xff] %v1607
  %1672 = vst [vmem:[#allocation3 + $0xd30] sm:$0xff] %v1608
  %1673 = vst [vmem:[#allocation3 + $0xd78] sm:$0xff] %v1609
  %1674 = vst [vmem:[#allocation3 + $0xdc0] sm:$0xff] %v1610
  %1675 = vst [vmem:[#allocation3 + $0xe08] sm:$0xff] %v1611
  %1676 = vst [vmem:[#allocation3 + $0xe50] sm:$0xff] %v1612
  %1677 = vst [vmem:[#allocation3 + $0xe98] sm:$0xff] %v1613
  %1678 = vst [vmem:[#allocation3 + $0xee0] sm:$0xff] %v1614
  %1679 = vst [vmem:[#allocation3 + $0xf28] sm:$0xff] %v1615
  %1680 = vst [vmem:[#allocation3 + $0xf70] sm:$0xff] %v1616
  %1681 = vst [vmem:[#allocation3 + $0xfb8] sm:$0xff] %v1617
  %1682 = vst [vmem:[#allocation3 + $0x1000] sm:$0xff] %v1618
  %1683 = vst [vmem:[#allocation3 + $0x1048] sm:$0xff] %v1619
  %1684 = vst [vmem:[#allocation3 + $0x1090] sm:$0xff] %v1620
  %1685 = vst [vmem:[#allocation3 + $0x10d8] sm:$0xff] %v1621
  %1686 = vst [vmem:[#allocation3 + $0x1120] sm:$0xff] %v1622
  %1687 = vst [vmem:[#allocation3 + $0x1168] sm:$0xff] %v1623
  %1688 = vst [vmem:[#allocation3 + $0x11b0] sm:$0xff] %v1624
  %1689 = vst [vmem:[#allocation3 + $0x11f8] sm:$0xff] %v1625
  %v1690 = vld [vmem:[#allocation3] sm:$0xff]
  %v1691 = vld [vmem:[#allocation3 + $0x8] sm:$0xff]
  %v1692 = vld [vmem:[#allocation3 + $0x10] sm:$0xff]
  %v1693 = vld [vmem:[#allocation3 + $0x18] sm:$0xff]
  %v1694 = vld [vmem:[#allocation3 + $0x20] sm:$0xff]
  %v1695 = vld [vmem:[#allocation3 + $0x28] sm:$0xff]
  %v1696 = vld [vmem:[#allocation3 + $0x30] sm:$0xff]
  %v1697 = vld [vmem:[#allocation3 + $0x38] sm:$0xff]
  %v1698 = vld [vmem:[#allocation3 + $0x40] sm:$0xff]
  %v1699 = vld [vmem:[#allocation3 + $0x48] sm:$0xff]
  %v1700 = vld [vmem:[#allocation3 + $0x50] sm:$0xff]
  %v1701 = vld [vmem:[#allocation3 + $0x58] sm:$0xff]
  %v1702 = vld [vmem:[#allocation3 + $0x60] sm:$0xff]
  %v1703 = vld [vmem:[#allocation3 + $0x68] sm:$0xff]
  %v1704 = vld [vmem:[#allocation3 + $0x70] sm:$0xff]
  %v1705 = vld [vmem:[#allocation3 + $0x78] sm:$0xff]
  %v1706 = vld [vmem:[#allocation3 + $0x80] sm:$0xff]
  %v1707 = vld [vmem:[#allocation3 + $0x88] sm:$0xff]
  %v1708 = vld [vmem:[#allocation3 + $0x90] sm:$0xff]
  %v1709 = vld [vmem:[#allocation3 + $0x98] sm:$0xff]
  %v1710 = vld [vmem:[#allocation3 + $0xa0] sm:$0xff]
  %v1711 = vld [vmem:[#allocation3 + $0xa8] sm:$0xff]
  %v1712 = vld [vmem:[#allocation3 + $0xb0] sm:$0xff]
  %v1713 = vld [vmem:[#allocation3 + $0xb8] sm:$0xff]
  %v1714 = vld [vmem:[#allocation3 + $0xc0] sm:$0xff]
  %v1715 = vld [vmem:[#allocation3 + $0xc8] sm:$0xff]
  %v1716 = vld [vmem:[#allocation3 + $0xd0] sm:$0xff]
  %v1717 = vld [vmem:[#allocation3 + $0xd8] sm:$0xff]
  %v1718 = vld [vmem:[#allocation3 + $0xe0] sm:$0xff]
  %v1719 = vld [vmem:[#allocation3 + $0xe8] sm:$0xff]
  %v1720 = vld [vmem:[#allocation3 + $0xf0] sm:$0xff]
  %v1721 = vld [vmem:[#allocation3 + $0xf8] sm:$0xff]
  %v1722 = vld [vmem:[#allocation3 + $0x100] sm:$0xff]
  %v1723 = vld [vmem:[#allocation3 + $0x108] sm:$0xff]
  %v1724 = vld [vmem:[#allocation3 + $0x110] sm:$0xff]
  %v1725 = vld [vmem:[#allocation3 + $0x118] sm:$0xff]
  %v1726 = vld [vmem:[#allocation3 + $0x120] sm:$0xff]
  %v1727 = vld [vmem:[#allocation3 + $0x128] sm:$0xff]
  %v1728 = vld [vmem:[#allocation3 + $0x130] sm:$0xff]
  %v1729 = vld [vmem:[#allocation3 + $0x138] sm:$0xff]
  %v1730 = vld [vmem:[#allocation3 + $0x140] sm:$0xff]
  %v1731 = vld [vmem:[#allocation3 + $0x148] sm:$0xff]
  %v1732 = vld [vmem:[#allocation3 + $0x150] sm:$0xff]
  %v1733 = vld [vmem:[#allocation3 + $0x158] sm:$0xff]
  %v1734 = vld [vmem:[#allocation3 + $0x160] sm:$0xff]
  %v1735 = vld [vmem:[#allocation3 + $0x168] sm:$0xff]
  %v1736 = vld [vmem:[#allocation3 + $0x170] sm:$0xff]
  %v1737 = vld [vmem:[#allocation3 + $0x178] sm:$0xff]
  %v1738 = vld [vmem:[#allocation3 + $0x180] sm:$0xff]
  %v1739 = vld [vmem:[#allocation3 + $0x188] sm:$0xff]
  %v1740 = vld [vmem:[#allocation3 + $0x190] sm:$0xff]
  %v1741 = vld [vmem:[#allocation3 + $0x198] sm:$0xff]
  %v1742 = vld [vmem:[#allocation3 + $0x1a0] sm:$0xff]
  %v1743 = vld [vmem:[#allocation3 + $0x1a8] sm:$0xff]
  %v1744 = vld [vmem:[#allocation3 + $0x1b0] sm:$0xff]
  %v1745 = vld [vmem:[#allocation3 + $0x1b8] sm:$0xff]
  %v1746 = vld [vmem:[#allocation3 + $0x1c0] sm:$0xff]
  %v1747 = vld [vmem:[#allocation3 + $0x1c8] sm:$0xff]
  %v1748 = vld [vmem:[#allocation3 + $0x1d0] sm:$0xff]
  %v1749 = vld [vmem:[#allocation3 + $0x1d8] sm:$0xff]
  %v1750 = vld [vmem:[#allocation3 + $0x1e0] sm:$0xff]
  %v1751 = vld [vmem:[#allocation3 + $0x1e8] sm:$0xff]
  %v1752 = vld [vmem:[#allocation3 + $0x1f0] sm:$0xff]
  %v1753 = vld [vmem:[#allocation3 + $0x1f8] sm:$0xff]
  %v1754 = vld [vmem:[#allocation3 + $0x200] sm:$0xff]
  %v1755 = vld [vmem:[#allocation3 + $0x208] sm:$0xff]
  %v1756 = vld [vmem:[#allocation3 + $0x210] sm:$0xff]
  %v1757 = vld [vmem:[#allocation3 + $0x218] sm:$0xff]
  %v1758 = vld [vmem:[#allocation3 + $0x220] sm:$0xff]
  %v1759 = vld [vmem:[#allocation3 + $0x228] sm:$0xff]
  %v1760 = vld [vmem:[#allocation3 + $0x230] sm:$0xff]
  %v1761 = vld [vmem:[#allocation3 + $0x238] sm:$0xff]
  %v1762 = vld [vmem:[#allocation3 + $0x240] sm:$0xff]
  %v1763 = vld [vmem:[#allocation3 + $0x248] sm:$0xff]
  %v1764 = vld [vmem:[#allocation3 + $0x250] sm:$0xff]
  %v1765 = vld [vmem:[#allocation3 + $0x258] sm:$0xff]
  %v1766 = vld [vmem:[#allocation3 + $0x260] sm:$0xff]
  %v1767 = vld [vmem:[#allocation3 + $0x268] sm:$0xff]
  %v1768 = vld [vmem:[#allocation3 + $0x270] sm:$0xff]
  %v1769 = vld [vmem:[#allocation3 + $0x278] sm:$0xff]
  %v1770 = vld [vmem:[#allocation3 + $0x280] sm:$0xff]
  %v1771 = vld [vmem:[#allocation3 + $0x288] sm:$0xff]
  %v1772 = vld [vmem:[#allocation3 + $0x290] sm:$0xff]
  %v1773 = vld [vmem:[#allocation3 + $0x298] sm:$0xff]
  %v1774 = vld [vmem:[#allocation3 + $0x2a0] sm:$0xff]
  %v1775 = vld [vmem:[#allocation3 + $0x2a8] sm:$0xff]
  %v1776 = vld [vmem:[#allocation3 + $0x2b0] sm:$0xff]
  %v1777 = vld [vmem:[#allocation3 + $0x2b8] sm:$0xff]
  %v1778 = vld [vmem:[#allocation3 + $0x2c0] sm:$0xff]
  %v1779 = vld [vmem:[#allocation3 + $0x2c8] sm:$0xff]
  %v1780 = vld [vmem:[#allocation3 + $0x2d0] sm:$0xff]
  %v1781 = vld [vmem:[#allocation3 + $0x2d8] sm:$0xff]
  %v1782 = vld [vmem:[#allocation3 + $0x2e0] sm:$0xff]
  %v1783 = vld [vmem:[#allocation3 + $0x2e8] sm:$0xff]
  %v1784 = vld [vmem:[#allocation3 + $0x2f0] sm:$0xff]
  %v1785 = vld [vmem:[#allocation3 + $0x2f8] sm:$0xff]
  %v1786 = vld [vmem:[#allocation3 + $0x300] sm:$0xff]
  %v1787 = vld [vmem:[#allocation3 + $0x308] sm:$0xff]
  %v1788 = vld [vmem:[#allocation3 + $0x310] sm:$0xff]
  %v1789 = vld [vmem:[#allocation3 + $0x318] sm:$0xff]
  %v1790 = vld [vmem:[#allocation3 + $0x320] sm:$0xff]
  %v1791 = vld [vmem:[#allocation3 + $0x328] sm:$0xff]
  %v1792 = vld [vmem:[#allocation3 + $0x330] sm:$0xff]
  %v1793 = vld [vmem:[#allocation3 + $0x338] sm:$0xff]
  %v1794 = vld [vmem:[#allocation3 + $0x340] sm:$0xff]
  %v1795 = vld [vmem:[#allocation3 + $0x348] sm:$0xff]
  %v1796 = vld [vmem:[#allocation3 + $0x350] sm:$0xff]
  %v1797 = vld [vmem:[#allocation3 + $0x358] sm:$0xff]
  %v1798 = vld [vmem:[#allocation3 + $0x360] sm:$0xff]
  %v1799 = vld [vmem:[#allocation3 + $0x368] sm:$0xff]
  %v1800 = vld [vmem:[#allocation3 + $0x370] sm:$0xff]
  %v1801 = vld [vmem:[#allocation3 + $0x378] sm:$0xff]
  %v1802 = vld [vmem:[#allocation3 + $0x380] sm:$0xff]
  %v1803 = vld [vmem:[#allocation3 + $0x388] sm:$0xff]
  %v1804 = vld [vmem:[#allocation3 + $0x390] sm:$0xff]
  %v1805 = vld [vmem:[#allocation3 + $0x398] sm:$0xff]
  %v1806 = vld [vmem:[#allocation3 + $0x3a0] sm:$0xff]
  %v1807 = vld [vmem:[#allocation3 + $0x3a8] sm:$0xff]
  %v1808 = vld [vmem:[#allocation3 + $0x3b0] sm:$0xff]
  %v1809 = vld [vmem:[#allocation3 + $0x3b8] sm:$0xff]
  %v1810 = vld [vmem:[#allocation3 + $0x3c0] sm:$0xff]
  %v1811 = vld [vmem:[#allocation3 + $0x3c8] sm:$0xff]
  %v1812 = vld [vmem:[#allocation3 + $0x3d0] sm:$0xff]
  %v1813 = vld [vmem:[#allocation3 + $0x3d8] sm:$0xff]
  %v1814 = vld [vmem:[#allocation3 + $0x3e0] sm:$0xff]
  %v1815 = vld [vmem:[#allocation3 + $0x3e8] sm:$0xff]
  %v1816 = vld [vmem:[#allocation3 + $0x3f0] sm:$0xff]
  %v1817 = vld [vmem:[#allocation3 + $0x3f8] sm:$0xff]
  %v1818 = vld [vmem:[#allocation3 + $0x400] sm:$0xff]
  %v1819 = vld [vmem:[#allocation3 + $0x408] sm:$0xff]
  %v1820 = vld [vmem:[#allocation3 + $0x410] sm:$0xff]
  %v1821 = vld [vmem:[#allocation3 + $0x418] sm:$0xff]
  %v1822 = vld [vmem:[#allocation3 + $0x420] sm:$0xff]
  %v1823 = vld [vmem:[#allocation3 + $0x428] sm:$0xff]
  %v1824 = vld [vmem:[#allocation3 + $0x430] sm:$0xff]
  %v1825 = vld [vmem:[#allocation3 + $0x438] sm:$0xff]
  %v1826 = vld [vmem:[#allocation3 + $0x440] sm:$0xff]
  %v1827 = vld [vmem:[#allocation3 + $0x448] sm:$0xff]
  %v1828 = vld [vmem:[#allocation3 + $0x450] sm:$0xff]
  %v1829 = vld [vmem:[#allocation3 + $0x458] sm:$0xff]
  %v1830 = vld [vmem:[#allocation3 + $0x460] sm:$0xff]
  %v1831 = vld [vmem:[#allocation3 + $0x468] sm:$0xff]
  %v1832 = vld [vmem:[#allocation3 + $0x470] sm:$0xff]
  %v1833 = vld [vmem:[#allocation3 + $0x478] sm:$0xff]
  %v1834 = vld [vmem:[#allocation3 + $0x480] sm:$0xff]
  %v1835 = vld [vmem:[#allocation3 + $0x488] sm:$0xff]
  %v1836 = vld [vmem:[#allocation3 + $0x490] sm:$0xff]
  %v1837 = vld [vmem:[#allocation3 + $0x498] sm:$0xff]
  %v1838 = vld [vmem:[#allocation3 + $0x4a0] sm:$0xff]
  %v1839 = vld [vmem:[#allocation3 + $0x4a8] sm:$0xff]
  %v1840 = vld [vmem:[#allocation3 + $0x4b0] sm:$0xff]
  %v1841 = vld [vmem:[#allocation3 + $0x4b8] sm:$0xff]
  %v1842 = vld [vmem:[#allocation3 + $0x4c0] sm:$0xff]
  %v1843 = vld [vmem:[#allocation3 + $0x4c8] sm:$0xff]
  %v1844 = vld [vmem:[#allocation3 + $0x4d0] sm:$0xff]
  %v1845 = vld [vmem:[#allocation3 + $0x4d8] sm:$0xff]
  %v1846 = vld [vmem:[#allocation3 + $0x4e0] sm:$0xff]
  %v1847 = vld [vmem:[#allocation3 + $0x4e8] sm:$0xff]
  %v1848 = vld [vmem:[#allocation3 + $0x4f0] sm:$0xff]
  %v1849 = vld [vmem:[#allocation3 + $0x4f8] sm:$0xff]
  %v1850 = vld [vmem:[#allocation3 + $0x500] sm:$0xff]
  %v1851 = vld [vmem:[#allocation3 + $0x508] sm:$0xff]
  %v1852 = vld [vmem:[#allocation3 + $0x510] sm:$0xff]
  %v1853 = vld [vmem:[#allocation3 + $0x518] sm:$0xff]
  %v1854 = vld [vmem:[#allocation3 + $0x520] sm:$0xff]
  %v1855 = vld [vmem:[#allocation3 + $0x528] sm:$0xff]
  %v1856 = vld [vmem:[#allocation3 + $0x530] sm:$0xff]
  %v1857 = vld [vmem:[#allocation3 + $0x538] sm:$0xff]
  %v1858 = vld [vmem:[#allocation3 + $0x540] sm:$0xff]
  %v1859 = vld [vmem:[#allocation3 + $0x548] sm:$0xff]
  %v1860 = vld [vmem:[#allocation3 + $0x550] sm:$0xff]
  %v1861 = vld [vmem:[#allocation3 + $0x558] sm:$0xff]
  %v1862 = vld [vmem:[#allocation3 + $0x560] sm:$0xff]
  %v1863 = vld [vmem:[#allocation3 + $0x568] sm:$0xff]
  %v1864 = vld [vmem:[#allocation3 + $0x570] sm:$0xff]
  %v1865 = vld [vmem:[#allocation3 + $0x578] sm:$0xff]
  %v1866 = vld [vmem:[#allocation3 + $0x580] sm:$0xff]
  %v1867 = vld [vmem:[#allocation3 + $0x588] sm:$0xff]
  %v1868 = vld [vmem:[#allocation3 + $0x590] sm:$0xff]
  %v1869 = vld [vmem:[#allocation3 + $0x598] sm:$0xff]
  %v1870 = vld [vmem:[#allocation3 + $0x5a0] sm:$0xff]
  %v1871 = vld [vmem:[#allocation3 + $0x5a8] sm:$0xff]
  %v1872 = vld [vmem:[#allocation3 + $0x5b0] sm:$0xff]
  %v1873 = vld [vmem:[#allocation3 + $0x5b8] sm:$0xff]
  %v1874 = vld [vmem:[#allocation3 + $0x5c0] sm:$0xff]
  %v1875 = vld [vmem:[#allocation3 + $0x5c8] sm:$0xff]
  %v1876 = vld [vmem:[#allocation3 + $0x5d0] sm:$0xff]
  %v1877 = vld [vmem:[#allocation3 + $0x5d8] sm:$0xff]
  %v1878 = vld [vmem:[#allocation3 + $0x5e0] sm:$0xff]
  %v1879 = vld [vmem:[#allocation3 + $0x5e8] sm:$0xff]
  %v1880 = vld [vmem:[#allocation3 + $0x5f0] sm:$0xff]
  %v1881 = vld [vmem:[#allocation3 + $0x5f8] sm:$0xff]
  %v1882 = vld [vmem:[#allocation3 + $0x600] sm:$0xff]
  %v1883 = vld [vmem:[#allocation3 + $0x608] sm:$0xff]
  %v1884 = vld [vmem:[#allocation3 + $0x610] sm:$0xff]
  %v1885 = vld [vmem:[#allocation3 + $0x618] sm:$0xff]
  %v1886 = vld [vmem:[#allocation3 + $0x620] sm:$0xff]
  %v1887 = vld [vmem:[#allocation3 + $0x628] sm:$0xff]
  %v1888 = vld [vmem:[#allocation3 + $0x630] sm:$0xff]
  %v1889 = vld [vmem:[#allocation3 + $0x638] sm:$0xff]
  %v1890 = vld [vmem:[#allocation3 + $0x640] sm:$0xff]
  %v1891 = vld [vmem:[#allocation3 + $0x648] sm:$0xff]
  %v1892 = vld [vmem:[#allocation3 + $0x650] sm:$0xff]
  %v1893 = vld [vmem:[#allocation3 + $0x658] sm:$0xff]
  %v1894 = vld [vmem:[#allocation3 + $0x660] sm:$0xff]
  %v1895 = vld [vmem:[#allocation3 + $0x668] sm:$0xff]
  %v1896 = vld [vmem:[#allocation3 + $0x670] sm:$0xff]
  %v1897 = vld [vmem:[#allocation3 + $0x678] sm:$0xff]
  %v1898 = vld [vmem:[#allocation3 + $0x680] sm:$0xff]
  %v1899 = vld [vmem:[#allocation3 + $0x688] sm:$0xff]
  %v1900 = vld [vmem:[#allocation3 + $0x690] sm:$0xff]
  %v1901 = vld [vmem:[#allocation3 + $0x698] sm:$0xff]
  %v1902 = vld [vmem:[#allocation3 + $0x6a0] sm:$0xff]
  %v1903 = vld [vmem:[#allocation3 + $0x6a8] sm:$0xff]
  %v1904 = vld [vmem:[#allocation3 + $0x6b0] sm:$0xff]
  %v1905 = vld [vmem:[#allocation3 + $0x6b8] sm:$0xff]
  %v1906 = vld [vmem:[#allocation3 + $0x6c0] sm:$0xff]
  %v1907 = vld [vmem:[#allocation3 + $0x6c8] sm:$0xff]
  %v1908 = vld [vmem:[#allocation3 + $0x6d0] sm:$0xff]
  %v1909 = vld [vmem:[#allocation3 + $0x6d8] sm:$0xff]
  %v1910 = vld [vmem:[#allocation3 + $0x6e0] sm:$0xff]
  %v1911 = vld [vmem:[#allocation3 + $0x6e8] sm:$0xff]
  %v1912 = vld [vmem:[#allocation3 + $0x6f0] sm:$0xff]
  %v1913 = vld [vmem:[#allocation3 + $0x6f8] sm:$0xff]
  %v1914 = vld [vmem:[#allocation3 + $0x700] sm:$0xff]
  %v1915 = vld [vmem:[#allocation3 + $0x708] sm:$0xff]
  %v1916 = vld [vmem:[#allocation3 + $0x710] sm:$0xff]
  %v1917 = vld [vmem:[#allocation3 + $0x718] sm:$0xff]
  %v1918 = vld [vmem:[#allocation3 + $0x720] sm:$0xff]
  %v1919 = vld [vmem:[#allocation3 + $0x728] sm:$0xff]
  %v1920 = vld [vmem:[#allocation3 + $0x730] sm:$0xff]
  %v1921 = vld [vmem:[#allocation3 + $0x738] sm:$0xff]
  %v1922 = vld [vmem:[#allocation3 + $0x740] sm:$0xff]
  %v1923 = vld [vmem:[#allocation3 + $0x748] sm:$0xff]
  %v1924 = vld [vmem:[#allocation3 + $0x750] sm:$0xff]
  %v1925 = vld [vmem:[#allocation3 + $0x758] sm:$0xff]
  %v1926 = vld [vmem:[#allocation3 + $0x760] sm:$0xff]
  %v1927 = vld [vmem:[#allocation3 + $0x768] sm:$0xff]
  %v1928 = vld [vmem:[#allocation3 + $0x770] sm:$0xff]
  %v1929 = vld [vmem:[#allocation3 + $0x778] sm:$0xff]
  %v1930 = vld [vmem:[#allocation3 + $0x780] sm:$0xff]
  %v1931 = vld [vmem:[#allocation3 + $0x788] sm:$0xff]
  %v1932 = vld [vmem:[#allocation3 + $0x790] sm:$0xff]
  %v1933 = vld [vmem:[#allocation3 + $0x798] sm:$0xff]
  %v1934 = vld [vmem:[#allocation3 + $0x7a0] sm:$0xff]
  %v1935 = vld [vmem:[#allocation3 + $0x7a8] sm:$0xff]
  %v1936 = vld [vmem:[#allocation3 + $0x7b0] sm:$0xff]
  %v1937 = vld [vmem:[#allocation3 + $0x7b8] sm:$0xff]
  %v1938 = vld [vmem:[#allocation3 + $0x7c0] sm:$0xff]
  %v1939 = vld [vmem:[#allocation3 + $0x7c8] sm:$0xff]
  %v1940 = vld [vmem:[#allocation3 + $0x7d0] sm:$0xff]
  %v1941 = vld [vmem:[#allocation3 + $0x7d8] sm:$0xff]
  %v1942 = vld [vmem:[#allocation3 + $0x7e0] sm:$0xff]
  %v1943 = vld [vmem:[#allocation3 + $0x7e8] sm:$0xff]
  %v1944 = vld [vmem:[#allocation3 + $0x7f0] sm:$0xff]
  %v1945 = vld [vmem:[#allocation3 + $0x7f8] sm:$0xff]
  %v1946 = vld [vmem:[#allocation3 + $0x800] sm:$0xff]
  %v1947 = vld [vmem:[#allocation3 + $0x808] sm:$0xff]
  %v1948 = vld [vmem:[#allocation3 + $0x810] sm:$0xff]
  %v1949 = vld [vmem:[#allocation3 + $0x818] sm:$0xff]
  %v1950 = vld [vmem:[#allocation3 + $0x820] sm:$0xff]
  %v1951 = vld [vmem:[#allocation3 + $0x828] sm:$0xff]
  %v1952 = vld [vmem:[#allocation3 + $0x830] sm:$0xff]
  %v1953 = vld [vmem:[#allocation3 + $0x838] sm:$0xff]
  %v1954 = vld [vmem:[#allocation3 + $0x840] sm:$0xff]
  %v1955 = vld [vmem:[#allocation3 + $0x848] sm:$0xff]
  %v1956 = vld [vmem:[#allocation3 + $0x850] sm:$0xff]
  %v1957 = vld [vmem:[#allocation3 + $0x858] sm:$0xff]
  %v1958 = vld [vmem:[#allocation3 + $0x860] sm:$0xff]
  %v1959 = vld [vmem:[#allocation3 + $0x868] sm:$0xff]
  %v1960 = vld [vmem:[#allocation3 + $0x870] sm:$0xff]
  %v1961 = vld [vmem:[#allocation3 + $0x878] sm:$0xff]
  %v1962 = vld [vmem:[#allocation3 + $0x880] sm:$0xff]
  %v1963 = vld [vmem:[#allocation3 + $0x888] sm:$0xff]
  %v1964 = vld [vmem:[#allocation3 + $0x890] sm:$0xff]
  %v1965 = vld [vmem:[#allocation3 + $0x898] sm:$0xff]
  %v1966 = vld [vmem:[#allocation3 + $0x8a0] sm:$0xff]
  %v1967 = vld [vmem:[#allocation3 + $0x8a8] sm:$0xff]
  %v1968 = vld [vmem:[#allocation3 + $0x8b0] sm:$0xff]
  %v1969 = vld [vmem:[#allocation3 + $0x8b8] sm:$0xff]
  %v1970 = vld [vmem:[#allocation3 + $0x8c0] sm:$0xff]
  %v1971 = vld [vmem:[#allocation3 + $0x8c8] sm:$0xff]
  %v1972 = vld [vmem:[#allocation3 + $0x8d0] sm:$0xff]
  %v1973 = vld [vmem:[#allocation3 + $0x8d8] sm:$0xff]
  %v1974 = vld [vmem:[#allocation3 + $0x8e0] sm:$0xff]
  %v1975 = vld [vmem:[#allocation3 + $0x8e8] sm:$0xff]
  %v1976 = vld [vmem:[#allocation3 + $0x8f0] sm:$0xff]
  %v1977 = vld [vmem:[#allocation3 + $0x8f8] sm:$0xff]
  %v1978 = vld [vmem:[#allocation3 + $0x900] sm:$0xff]
  %v1979 = vld [vmem:[#allocation3 + $0x908] sm:$0xff]
  %v1980 = vld [vmem:[#allocation3 + $0x910] sm:$0xff]
  %v1981 = vld [vmem:[#allocation3 + $0x918] sm:$0xff]
  %v1982 = vld [vmem:[#allocation3 + $0x920] sm:$0xff]
  %v1983 = vld [vmem:[#allocation3 + $0x928] sm:$0xff]
  %v1984 = vld [vmem:[#allocation3 + $0x930] sm:$0xff]
  %v1985 = vld [vmem:[#allocation3 + $0x938] sm:$0xff]
  %v1986 = vld [vmem:[#allocation3 + $0x940] sm:$0xff]
  %v1987 = vld [vmem:[#allocation3 + $0x948] sm:$0xff]
  %v1988 = vld [vmem:[#allocation3 + $0x950] sm:$0xff]
  %v1989 = vld [vmem:[#allocation3 + $0x958] sm:$0xff]
  %v1990 = vld [vmem:[#allocation3 + $0x960] sm:$0xff]
  %v1991 = vld [vmem:[#allocation3 + $0x968] sm:$0xff]
  %v1992 = vld [vmem:[#allocation3 + $0x970] sm:$0xff]
  %v1993 = vld [vmem:[#allocation3 + $0x978] sm:$0xff]
  %v1994 = vld [vmem:[#allocation3 + $0x980] sm:$0xff]
  %v1995 = vld [vmem:[#allocation3 + $0x988] sm:$0xff]
  %v1996 = vld [vmem:[#allocation3 + $0x990] sm:$0xff]
  %v1997 = vld [vmem:[#allocation3 + $0x998] sm:$0xff]
  %v1998 = vld [vmem:[#allocation3 + $0x9a0] sm:$0xff]
  %v1999 = vld [vmem:[#allocation3 + $0x9a8] sm:$0xff]
  %v2000 = vld [vmem:[#allocation3 + $0x9b0] sm:$0xff]
  %v2001 = vld [vmem:[#allocation3 + $0x9b8] sm:$0xff]
  %v2002 = vld [vmem:[#allocation3 + $0x9c0] sm:$0xff]
  %v2003 = vld [vmem:[#allocation3 + $0x9c8] sm:$0xff]
  %v2004 = vld [vmem:[#allocation3 + $0x9d0] sm:$0xff]
  %v2005 = vld [vmem:[#allocation3 + $0x9d8] sm:$0xff]
  %v2006 = vld [vmem:[#allocation3 + $0x9e0] sm:$0xff]
  %v2007 = vld [vmem:[#allocation3 + $0x9e8] sm:$0xff]
  %v2008 = vld [vmem:[#allocation3 + $0x9f0] sm:$0xff]
  %v2009 = vld [vmem:[#allocation3 + $0x9f8] sm:$0xff]
  %v2010 = vld [vmem:[#allocation3 + $0xa00] sm:$0xff]
  %v2011 = vld [vmem:[#allocation3 + $0xa08] sm:$0xff]
  %v2012 = vld [vmem:[#allocation3 + $0xa10] sm:$0xff]
  %v2013 = vld [vmem:[#allocation3 + $0xa18] sm:$0xff]
  %v2014 = vld [vmem:[#allocation3 + $0xa20] sm:$0xff]
  %v2015 = vld [vmem:[#allocation3 + $0xa28] sm:$0xff]
  %v2016 = vld [vmem:[#allocation3 + $0xa30] sm:$0xff]
  %v2017 = vld [vmem:[#allocation3 + $0xa38] sm:$0xff]
  %v2018 = vld [vmem:[#allocation3 + $0xa40] sm:$0xff]
  %v2019 = vld [vmem:[#allocation3 + $0xa48] sm:$0xff]
  %v2020 = vld [vmem:[#allocation3 + $0xa50] sm:$0xff]
  %v2021 = vld [vmem:[#allocation3 + $0xa58] sm:$0xff]
  %v2022 = vld [vmem:[#allocation3 + $0xa60] sm:$0xff]
  %v2023 = vld [vmem:[#allocation3 + $0xa68] sm:$0xff]
  %v2024 = vld [vmem:[#allocation3 + $0xa70] sm:$0xff]
  %v2025 = vld [vmem:[#allocation3 + $0xa78] sm:$0xff]
  %v2026 = vld [vmem:[#allocation3 + $0xa80] sm:$0xff]
  %v2027 = vld [vmem:[#allocation3 + $0xa88] sm:$0xff]
  %v2028 = vld [vmem:[#allocation3 + $0xa90] sm:$0xff]
  %v2029 = vld [vmem:[#allocation3 + $0xa98] sm:$0xff]
  %v2030 = vld [vmem:[#allocation3 + $0xaa0] sm:$0xff]
  %v2031 = vld [vmem:[#allocation3 + $0xaa8] sm:$0xff]
  %v2032 = vld [vmem:[#allocation3 + $0xab0] sm:$0xff]
  %v2033 = vld [vmem:[#allocation3 + $0xab8] sm:$0xff]
  %v2034 = vld [vmem:[#allocation3 + $0xac0] sm:$0xff]
  %v2035 = vld [vmem:[#allocation3 + $0xac8] sm:$0xff]
  %v2036 = vld [vmem:[#allocation3 + $0xad0] sm:$0xff]
  %v2037 = vld [vmem:[#allocation3 + $0xad8] sm:$0xff]
  %v2038 = vld [vmem:[#allocation3 + $0xae0] sm:$0xff]
  %v2039 = vld [vmem:[#allocation3 + $0xae8] sm:$0xff]
  %v2040 = vld [vmem:[#allocation3 + $0xaf0] sm:$0xff]
  %v2041 = vld [vmem:[#allocation3 + $0xaf8] sm:$0xff]
  %v2042 = vld [vmem:[#allocation3 + $0xb00] sm:$0xff]
  %v2043 = vld [vmem:[#allocation3 + $0xb08] sm:$0xff]
  %v2044 = vld [vmem:[#allocation3 + $0xb10] sm:$0xff]
  %v2045 = vld [vmem:[#allocation3 + $0xb18] sm:$0xff]
  %v2046 = vld [vmem:[#allocation3 + $0xb20] sm:$0xff]
  %v2047 = vld [vmem:[#allocation3 + $0xb28] sm:$0xff]
  %v2048 = vld [vmem:[#allocation3 + $0xb30] sm:$0xff]
  %v2049 = vld [vmem:[#allocation3 + $0xb38] sm:$0xff]
  %v2050 = vld [vmem:[#allocation3 + $0xb40] sm:$0xff]
  %v2051 = vld [vmem:[#allocation3 + $0xb48] sm:$0xff]
  %v2052 = vld [vmem:[#allocation3 + $0xb50] sm:$0xff]
  %v2053 = vld [vmem:[#allocation3 + $0xb58] sm:$0xff]
  %v2054 = vld [vmem:[#allocation3 + $0xb60] sm:$0xff]
  %v2055 = vld [vmem:[#allocation3 + $0xb68] sm:$0xff]
  %v2056 = vld [vmem:[#allocation3 + $0xb70] sm:$0xff]
  %v2057 = vld [vmem:[#allocation3 + $0xb78] sm:$0xff]
  %v2058 = vld [vmem:[#allocation3 + $0xb80] sm:$0xff]
  %v2059 = vld [vmem:[#allocation3 + $0xb88] sm:$0xff]
  %v2060 = vld [vmem:[#allocation3 + $0xb90] sm:$0xff]
  %v2061 = vld [vmem:[#allocation3 + $0xb98] sm:$0xff]
  %v2062 = vld [vmem:[#allocation3 + $0xba0] sm:$0xff]
  %v2063 = vld [vmem:[#allocation3 + $0xba8] sm:$0xff]
  %v2064 = vld [vmem:[#allocation3 + $0xbb0] sm:$0xff]
  %v2065 = vld [vmem:[#allocation3 + $0xbb8] sm:$0xff]
  %v2066 = vld [vmem:[#allocation3 + $0xbc0] sm:$0xff]
  %v2067 = vld [vmem:[#allocation3 + $0xbc8] sm:$0xff]
  %v2068 = vld [vmem:[#allocation3 + $0xbd0] sm:$0xff]
  %v2069 = vld [vmem:[#allocation3 + $0xbd8] sm:$0xff]
  %v2070 = vld [vmem:[#allocation3 + $0xbe0] sm:$0xff]
  %v2071 = vld [vmem:[#allocation3 + $0xbe8] sm:$0xff]
  %v2072 = vld [vmem:[#allocation3 + $0xbf0] sm:$0xff]
  %v2073 = vld [vmem:[#allocation3 + $0xbf8] sm:$0xff]
  %v2074 = vld [vmem:[#allocation3 + $0xc00] sm:$0xff]
  %v2075 = vld [vmem:[#allocation3 + $0xc08] sm:$0xff]
  %v2076 = vld [vmem:[#allocation3 + $0xc10] sm:$0xff]
  %v2077 = vld [vmem:[#allocation3 + $0xc18] sm:$0xff]
  %v2078 = vld [vmem:[#allocation3 + $0xc20] sm:$0xff]
  %v2079 = vld [vmem:[#allocation3 + $0xc28] sm:$0xff]
  %v2080 = vld [vmem:[#allocation3 + $0xc30] sm:$0xff]
  %v2081 = vld [vmem:[#allocation3 + $0xc38] sm:$0xff]
  %v2082 = vld [vmem:[#allocation3 + $0xc40] sm:$0xff]
  %v2083 = vld [vmem:[#allocation3 + $0xc48] sm:$0xff]
  %v2084 = vld [vmem:[#allocation3 + $0xc50] sm:$0xff]
  %v2085 = vld [vmem:[#allocation3 + $0xc58] sm:$0xff]
  %v2086 = vld [vmem:[#allocation3 + $0xc60] sm:$0xff]
  %v2087 = vld [vmem:[#allocation3 + $0xc68] sm:$0xff]
  %v2088 = vld [vmem:[#allocation3 + $0xc70] sm:$0xff]
  %v2089 = vld [vmem:[#allocation3 + $0xc78] sm:$0xff]
  %v2090 = vld [vmem:[#allocation3 + $0xc80] sm:$0xff]
  %v2091 = vld [vmem:[#allocation3 + $0xc88] sm:$0xff]
  %v2092 = vld [vmem:[#allocation3 + $0xc90] sm:$0xff]
  %v2093 = vld [vmem:[#allocation3 + $0xc98] sm:$0xff]
  %v2094 = vld [vmem:[#allocation3 + $0xca0] sm:$0xff]
  %v2095 = vld [vmem:[#allocation3 + $0xca8] sm:$0xff]
  %v2096 = vld [vmem:[#allocation3 + $0xcb0] sm:$0xff]
  %v2097 = vld [vmem:[#allocation3 + $0xcb8] sm:$0xff]
  %v2098 = vld [vmem:[#allocation3 + $0xcc0] sm:$0xff]
  %v2099 = vld [vmem:[#allocation3 + $0xcc8] sm:$0xff]
  %v2100 = vld [vmem:[#allocation3 + $0xcd0] sm:$0xff]
  %v2101 = vld [vmem:[#allocation3 + $0xcd8] sm:$0xff]
  %v2102 = vld [vmem:[#allocation3 + $0xce0] sm:$0xff]
  %v2103 = vld [vmem:[#allocation3 + $0xce8] sm:$0xff]
  %v2104 = vld [vmem:[#allocation3 + $0xcf0] sm:$0xff]
  %v2105 = vld [vmem:[#allocation3 + $0xcf8] sm:$0xff]
  %v2106 = vld [vmem:[#allocation3 + $0xd00] sm:$0xff]
  %v2107 = vld [vmem:[#allocation3 + $0xd08] sm:$0xff]
  %v2108 = vld [vmem:[#allocation3 + $0xd10] sm:$0xff]
  %v2109 = vld [vmem:[#allocation3 + $0xd18] sm:$0xff]
  %v2110 = vld [vmem:[#allocation3 + $0xd20] sm:$0xff]
  %v2111 = vld [vmem:[#allocation3 + $0xd28] sm:$0xff]
  %v2112 = vld [vmem:[#allocation3 + $0xd30] sm:$0xff]
  %v2113 = vld [vmem:[#allocation3 + $0xd38] sm:$0xff]
  %v2114 = vld [vmem:[#allocation3 + $0xd40] sm:$0xff]
  %v2115 = vld [vmem:[#allocation3 + $0xd48] sm:$0xff]
  %v2116 = vld [vmem:[#allocation3 + $0xd50] sm:$0xff]
  %v2117 = vld [vmem:[#allocation3 + $0xd58] sm:$0xff]
  %v2118 = vld [vmem:[#allocation3 + $0xd60] sm:$0xff]
  %v2119 = vld [vmem:[#allocation3 + $0xd68] sm:$0xff]
  %v2120 = vld [vmem:[#allocation3 + $0xd70] sm:$0xff]
  %v2121 = vld [vmem:[#allocation3 + $0xd78] sm:$0xff]
  %v2122 = vld [vmem:[#allocation3 + $0xd80] sm:$0xff]
  %v2123 = vld [vmem:[#allocation3 + $0xd88] sm:$0xff]
  %v2124 = vld [vmem:[#allocation3 + $0xd90] sm:$0xff]
  %v2125 = vld [vmem:[#allocation3 + $0xd98] sm:$0xff]
  %v2126 = vld [vmem:[#allocation3 + $0xda0] sm:$0xff]
  %v2127 = vld [vmem:[#allocation3 + $0xda8] sm:$0xff]
  %v2128 = vld [vmem:[#allocation3 + $0xdb0] sm:$0xff]
  %v2129 = vld [vmem:[#allocation3 + $0xdb8] sm:$0xff]
  %v2130 = vld [vmem:[#allocation3 + $0xdc0] sm:$0xff]
  %v2131 = vld [vmem:[#allocation3 + $0xdc8] sm:$0xff]
  %v2132 = vld [vmem:[#allocation3 + $0xdd0] sm:$0xff]
  %v2133 = vld [vmem:[#allocation3 + $0xdd8] sm:$0xff]
  %v2134 = vld [vmem:[#allocation3 + $0xde0] sm:$0xff]
  %v2135 = vld [vmem:[#allocation3 + $0xde8] sm:$0xff]
  %v2136 = vld [vmem:[#allocation3 + $0xdf0] sm:$0xff]
  %v2137 = vld [vmem:[#allocation3 + $0xdf8] sm:$0xff]
  %v2138 = vld [vmem:[#allocation3 + $0xe00] sm:$0xff]
  %v2139 = vld [vmem:[#allocation3 + $0xe08] sm:$0xff]
  %v2140 = vld [vmem:[#allocation3 + $0xe10] sm:$0xff]
  %v2141 = vld [vmem:[#allocation3 + $0xe18] sm:$0xff]
  %v2142 = vld [vmem:[#allocation3 + $0xe20] sm:$0xff]
  %v2143 = vld [vmem:[#allocation3 + $0xe28] sm:$0xff]
  %v2144 = vld [vmem:[#allocation3 + $0xe30] sm:$0xff]
  %v2145 = vld [vmem:[#allocation3 + $0xe38] sm:$0xff]
  %v2146 = vld [vmem:[#allocation3 + $0xe40] sm:$0xff]
  %v2147 = vld [vmem:[#allocation3 + $0xe48] sm:$0xff]
  %v2148 = vld [vmem:[#allocation3 + $0xe50] sm:$0xff]
  %v2149 = vld [vmem:[#allocation3 + $0xe58] sm:$0xff]
  %v2150 = vld [vmem:[#allocation3 + $0xe60] sm:$0xff]
  %v2151 = vld [vmem:[#allocation3 + $0xe68] sm:$0xff]
  %v2152 = vld [vmem:[#allocation3 + $0xe70] sm:$0xff]
  %v2153 = vld [vmem:[#allocation3 + $0xe78] sm:$0xff]
  %v2154 = vld [vmem:[#allocation3 + $0xe80] sm:$0xff]
  %v2155 = vld [vmem:[#allocation3 + $0xe88] sm:$0xff]
  %v2156 = vld [vmem:[#allocation3 + $0xe90] sm:$0xff]
  %v2157 = vld [vmem:[#allocation3 + $0xe98] sm:$0xff]
  %v2158 = vld [vmem:[#allocation3 + $0xea0] sm:$0xff]
  %v2159 = vld [vmem:[#allocation3 + $0xea8] sm:$0xff]
  %v2160 = vld [vmem:[#allocation3 + $0xeb0] sm:$0xff]
  %v2161 = vld [vmem:[#allocation3 + $0xeb8] sm:$0xff]
  %v2162 = vld [vmem:[#allocation3 + $0xec0] sm:$0xff]
  %v2163 = vld [vmem:[#allocation3 + $0xec8] sm:$0xff]
  %v2164 = vld [vmem:[#allocation3 + $0xed0] sm:$0xff]
  %v2165 = vld [vmem:[#allocation3 + $0xed8] sm:$0xff]
  %v2166 = vld [vmem:[#allocation3 + $0xee0] sm:$0xff]
  %v2167 = vld [vmem:[#allocation3 + $0xee8] sm:$0xff]
  %v2168 = vld [vmem:[#allocation3 + $0xef0] sm:$0xff]
  %v2169 = vld [vmem:[#allocation3 + $0xef8] sm:$0xff]
  %v2170 = vld [vmem:[#allocation3 + $0xf00] sm:$0xff]
  %v2171 = vld [vmem:[#allocation3 + $0xf08] sm:$0xff]
  %v2172 = vld [vmem:[#allocation3 + $0xf10] sm:$0xff]
  %v2173 = vld [vmem:[#allocation3 + $0xf18] sm:$0xff]
  %v2174 = vld [vmem:[#allocation3 + $0xf20] sm:$0xff]
  %v2175 = vld [vmem:[#allocation3 + $0xf28] sm:$0xff]
  %v2176 = vld [vmem:[#allocation3 + $0xf30] sm:$0xff]
  %v2177 = vld [vmem:[#allocation3 + $0xf38] sm:$0xff]
  %v2178 = vld [vmem:[#allocation3 + $0xf40] sm:$0xff]
  %v2179 = vld [vmem:[#allocation3 + $0xf48] sm:$0xff]
  %v2180 = vld [vmem:[#allocation3 + $0xf50] sm:$0xff]
  %v2181 = vld [vmem:[#allocation3 + $0xf58] sm:$0xff]
  %v2182 = vld [vmem:[#allocation3 + $0xf60] sm:$0xff]
  %v2183 = vld [vmem:[#allocation3 + $0xf68] sm:$0xff]
  %v2184 = vld [vmem:[#allocation3 + $0xf70] sm:$0xff]
  %v2185 = vld [vmem:[#allocation3 + $0xf78] sm:$0xff]
  %v2186 = vld [vmem:[#allocation3 + $0xf80] sm:$0xff]
  %v2187 = vld [vmem:[#allocation3 + $0xf88] sm:$0xff]
  %v2188 = vld [vmem:[#allocation3 + $0xf90] sm:$0xff]
  %v2189 = vld [vmem:[#allocation3 + $0xf98] sm:$0xff]
  %v2190 = vld [vmem:[#allocation3 + $0xfa0] sm:$0xff]
  %v2191 = vld [vmem:[#allocation3 + $0xfa8] sm:$0xff]
  %v2192 = vld [vmem:[#allocation3 + $0xfb0] sm:$0xff]
  %v2193 = vld [vmem:[#allocation3 + $0xfb8] sm:$0xff]
  %v2194 = vld [vmem:[#allocation3 + $0xfc0] sm:$0xff]
  %v2195 = vld [vmem:[#allocation3 + $0xfc8] sm:$0xff]
  %v2196 = vld [vmem:[#allocation3 + $0xfd0] sm:$0xff]
  %v2197 = vld [vmem:[#allocation3 + $0xfd8] sm:$0xff]
  %v2198 = vld [vmem:[#allocation3 + $0xfe0] sm:$0xff]
  %v2199 = vld [vmem:[#allocation3 + $0xfe8] sm:$0xff]
  %v2200 = vld [vmem:[#allocation3 + $0xff0] sm:$0xff]
  %v2201 = vld [vmem:[#allocation3 + $0xff8] sm:$0xff]
  %v2202 = vld [vmem:[#allocation3 + $0x1000] sm:$0xff]
  %v2203 = vld [vmem:[#allocation3 + $0x1008] sm:$0xff]
  %v2204 = vld [vmem:[#allocation3 + $0x1010] sm:$0xff]
  %v2205 = vld [vmem:[#allocation3 + $0x1018] sm:$0xff]
  %v2206 = vld [vmem:[#allocation3 + $0x1020] sm:$0xff]
  %v2207 = vld [vmem:[#allocation3 + $0x1028] sm:$0xff]
  %v2208 = vld [vmem:[#allocation3 + $0x1030] sm:$0xff]
  %v2209 = vld [vmem:[#allocation3 + $0x1038] sm:$0xff]
  %v2210 = vld [vmem:[#allocation3 + $0x1040] sm:$0xff]
  %v2211 = vld [vmem:[#allocation3 + $0x1048] sm:$0xff]
  %v2212 = vld [vmem:[#allocation3 + $0x1050] sm:$0xff]
  %v2213 = vld [vmem:[#allocation3 + $0x1058] sm:$0xff]
  %v2214 = vld [vmem:[#allocation3 + $0x1060] sm:$0xff]
  %v2215 = vld [vmem:[#allocation3 + $0x1068] sm:$0xff]
  %v2216 = vld [vmem:[#allocation3 + $0x1070] sm:$0xff]
  %v2217 = vld [vmem:[#allocation3 + $0x1078] sm:$0xff]
  %v2218 = vld [vmem:[#allocation3 + $0x1080] sm:$0xff]
  %v2219 = vld [vmem:[#allocation3 + $0x1088] sm:$0xff]
  %v2220 = vld [vmem:[#allocation3 + $0x1090] sm:$0xff]
  %v2221 = vld [vmem:[#allocation3 + $0x1098] sm:$0xff]
  %v2222 = vld [vmem:[#allocation3 + $0x10a0] sm:$0xff]
  %v2223 = vld [vmem:[#allocation3 + $0x10a8] sm:$0xff]
  %v2224 = vld [vmem:[#allocation3 + $0x10b0] sm:$0xff]
  %v2225 = vld [vmem:[#allocation3 + $0x10b8] sm:$0xff]
  %v2226 = vld [vmem:[#allocation3 + $0x10c0] sm:$0xff]
  %v2227 = vld [vmem:[#allocation3 + $0x10c8] sm:$0xff]
  %v2228 = vld [vmem:[#allocation3 + $0x10d0] sm:$0xff]
  %v2229 = vld [vmem:[#allocation3 + $0x10d8] sm:$0xff]
  %v2230 = vld [vmem:[#allocation3 + $0x10e0] sm:$0xff]
  %v2231 = vld [vmem:[#allocation3 + $0x10e8] sm:$0xff]
  %v2232 = vld [vmem:[#allocation3 + $0x10f0] sm:$0xff]
  %v2233 = vld [vmem:[#allocation3 + $0x10f8] sm:$0xff]
  %v2234 = vld [vmem:[#allocation3 + $0x1100] sm:$0xff]
  %v2235 = vld [vmem:[#allocation3 + $0x1108] sm:$0xff]
  %v2236 = vld [vmem:[#allocation3 + $0x1110] sm:$0xff]
  %v2237 = vld [vmem:[#allocation3 + $0x1118] sm:$0xff]
  %v2238 = vld [vmem:[#allocation3 + $0x1120] sm:$0xff]
  %v2239 = vld [vmem:[#allocation3 + $0x1128] sm:$0xff]
  %v2240 = vld [vmem:[#allocation3 + $0x1130] sm:$0xff]
  %v2241 = vld [vmem:[#allocation3 + $0x1138] sm:$0xff]
  %v2242 = vld [vmem:[#allocation3 + $0x1140] sm:$0xff]
  %v2243 = vld [vmem:[#allocation3 + $0x1148] sm:$0xff]
  %v2244 = vld [vmem:[#allocation3 + $0x1150] sm:$0xff]
  %v2245 = vld [vmem:[#allocation3 + $0x1158] sm:$0xff]
  %v2246 = vld [vmem:[#allocation3 + $0x1160] sm:$0xff]
  %v2247 = vld [vmem:[#allocation3 + $0x1168] sm:$0xff]
  %v2248 = vld [vmem:[#allocation3 + $0x1170] sm:$0xff]
  %v2249 = vld [vmem:[#allocation3 + $0x1178] sm:$0xff]
  %v2250 = vld [vmem:[#allocation3 + $0x1180] sm:$0xff]
  %v2251 = vld [vmem:[#allocation3 + $0x1188] sm:$0xff]
  %v2252 = vld [vmem:[#allocation3 + $0x1190] sm:$0xff]
  %v2253 = vld [vmem:[#allocation3 + $0x1198] sm:$0xff]
  %v2254 = vld [vmem:[#allocation3 + $0x11a0] sm:$0xff]
  %v2255 = vld [vmem:[#allocation3 + $0x11a8] sm:$0xff]
  %v2256 = vld [vmem:[#allocation3 + $0x11b0] sm:$0xff]
  %v2257 = vld [vmem:[#allocation3 + $0x11b8] sm:$0xff]
  %v2258 = vld [vmem:[#allocation3 + $0x11c0] sm:$0xff]
  %v2259 = vld [vmem:[#allocation3 + $0x11c8] sm:$0xff]
  %v2260 = vld [vmem:[#allocation3 + $0x11d0] sm:$0xff]
  %v2261 = vld [vmem:[#allocation3 + $0x11d8] sm:$0xff]
  %v2262 = vld [vmem:[#allocation3 + $0x11e0] sm:$0xff]
  %v2263 = vld [vmem:[#allocation3 + $0x11e8] sm:$0xff]
  %v2264 = vld [vmem:[#allocation3 + $0x11f0] sm:$0xff]
  %v2265 = vld [vmem:[#allocation3 + $0x11f8] sm:$0xff]
  %v2266 = vld [vmem:[%s2] sm:$0xff]
  %v2267 = vld [vmem:[%s2 + $0x8] sm:$0xff]
  %v2268 = vld [vmem:[%s2 + $0x10] sm:$0xff]
  %v2269 = vld [vmem:[%s2 + $0x18] sm:$0xff]
  %v2270 = vld [vmem:[%s2 + $0x20] sm:$0xff]
  %v2271 = vld [vmem:[%s2 + $0x28] sm:$0xff]
  %v2272 = vld [vmem:[%s2 + $0x30] sm:$0xff]
  %v2273 = vld [vmem:[%s2 + $0x38] sm:$0xff]
  %v2274 = vld [vmem:[%s2 + $0x40] sm:$0xff]
  %v2275 = vld [vmem:[%s2 + $0x48] sm:$0xff]
  %v2276 = vld [vmem:[%s2 + $0x50] sm:$0xff]
  %v2277 = vld [vmem:[%s2 + $0x58] sm:$0xff]
  %v2278 = vld [vmem:[%s2 + $0x60] sm:$0xff]
  %v2279 = vld [vmem:[%s2 + $0x68] sm:$0xff]
  %v2280 = vld [vmem:[%s2 + $0x70] sm:$0xff]
  %v2281 = vld [vmem:[%s2 + $0x78] sm:$0xff]
  %v2282 = vld [vmem:[%s2 + $0x80] sm:$0xff]
  %v2283 = vld [vmem:[%s2 + $0x88] sm:$0xff]
  %v2284 = vld [vmem:[%s2 + $0x90] sm:$0xff]
  %v2285 = vld [vmem:[%s2 + $0x98] sm:$0xff]
  %v2286 = vld [vmem:[%s2 + $0xa0] sm:$0xff]
  %v2287 = vld [vmem:[%s2 + $0xa8] sm:$0xff]
  %v2288 = vld [vmem:[%s2 + $0xb0] sm:$0xff]
  %v2289 = vld [vmem:[%s2 + $0xb8] sm:$0xff]
  %v2290 = vld [vmem:[%s2 + $0xc0] sm:$0xff]
  %v2291 = vld [vmem:[%s2 + $0xc8] sm:$0xff]
  %v2292 = vld [vmem:[%s2 + $0xd0] sm:$0xff]
  %v2293 = vld [vmem:[%s2 + $0xd8] sm:$0xff]
  %v2294 = vld [vmem:[%s2 + $0xe0] sm:$0xff]
  %v2295 = vld [vmem:[%s2 + $0xe8] sm:$0xff]
  %v2296 = vld [vmem:[%s2 + $0xf0] sm:$0xff]
  %v2297 = vld [vmem:[%s2 + $0xf8] sm:$0xff]
  %v2298 = vld [vmem:[%s2 + $0x100] sm:$0xff]
  %v2299 = vld [vmem:[%s2 + $0x108] sm:$0xff]
  %v2300 = vld [vmem:[%s2 + $0x110] sm:$0xff]
  %v2301 = vld [vmem:[%s2 + $0x118] sm:$0xff]
  %v2302 = vld [vmem:[%s2 + $0x120] sm:$0xff]
  %v2303 = vld [vmem:[%s2 + $0x128] sm:$0xff]
  %v2304 = vld [vmem:[%s2 + $0x130] sm:$0xff]
  %v2305 = vld [vmem:[%s2 + $0x138] sm:$0xff]
  %v2306 = vld [vmem:[%s2 + $0x140] sm:$0xff]
  %v2307 = vld [vmem:[%s2 + $0x148] sm:$0xff]
  %v2308 = vld [vmem:[%s2 + $0x150] sm:$0xff]
  %v2309 = vld [vmem:[%s2 + $0x158] sm:$0xff]
  %v2310 = vld [vmem:[%s2 + $0x160] sm:$0xff]
  %v2311 = vld [vmem:[%s2 + $0x168] sm:$0xff]
  %v2312 = vld [vmem:[%s2 + $0x170] sm:$0xff]
  %v2313 = vld [vmem:[%s2 + $0x178] sm:$0xff]
  %v2314 = vld [vmem:[%s2 + $0x180] sm:$0xff]
  %v2315 = vld [vmem:[%s2 + $0x188] sm:$0xff]
  %v2316 = vld [vmem:[%s2 + $0x190] sm:$0xff]
  %v2317 = vld [vmem:[%s2 + $0x198] sm:$0xff]
  %v2318 = vld [vmem:[%s2 + $0x1a0] sm:$0xff]
  %v2319 = vld [vmem:[%s2 + $0x1a8] sm:$0xff]
  %v2320 = vld [vmem:[%s2 + $0x1b0] sm:$0xff]
  %v2321 = vld [vmem:[%s2 + $0x1b8] sm:$0xff]
  %v2322 = vld [vmem:[%s2 + $0x1c0] sm:$0xff]
  %v2323 = vld [vmem:[%s2 + $0x1c8] sm:$0xff]
  %v2324 = vld [vmem:[%s2 + $0x1d0] sm:$0xff]
  %v2325 = vld [vmem:[%s2 + $0x1d8] sm:$0xff]
  %v2326 = vld [vmem:[%s2 + $0x1e0] sm:$0xff]
  %v2327 = vld [vmem:[%s2 + $0x1e8] sm:$0xff]
  %v2328 = vld [vmem:[%s2 + $0x1f0] sm:$0xff]
  %v2329 = vld [vmem:[%s2 + $0x1f8] sm:$0xff]
  %v2330 = vld [vmem:[%s2 + $0x200] sm:$0xff]
  %v2331 = vld [vmem:[%s2 + $0x208] sm:$0xff]
  %v2332 = vld [vmem:[%s2 + $0x210] sm:$0xff]
  %v2333 = vld [vmem:[%s2 + $0x218] sm:$0xff]
  %v2334 = vld [vmem:[%s2 + $0x220] sm:$0xff]
  %v2335 = vld [vmem:[%s2 + $0x228] sm:$0xff]
  %v2336 = vld [vmem:[%s2 + $0x230] sm:$0xff]
  %v2337 = vld [vmem:[%s2 + $0x238] sm:$0xff]
  %v2338 = vld [vmem:[%s2 + $0x240] sm:$0xff]
  %v2339 = vld [vmem:[%s2 + $0x248] sm:$0xff]
  %v2340 = vld [vmem:[%s2 + $0x250] sm:$0xff]
  %v2341 = vld [vmem:[%s2 + $0x258] sm:$0xff]
  %v2342 = vld [vmem:[%s2 + $0x260] sm:$0xff]
  %v2343 = vld [vmem:[%s2 + $0x268] sm:$0xff]
  %v2344 = vld [vmem:[%s2 + $0x270] sm:$0xff]
  %v2345 = vld [vmem:[%s2 + $0x278] sm:$0xff]
  %v2346 = vld [vmem:[%s2 + $0x280] sm:$0xff]
  %v2347 = vld [vmem:[%s2 + $0x288] sm:$0xff]
  %v2348 = vld [vmem:[%s2 + $0x290] sm:$0xff]
  %v2349 = vld [vmem:[%s2 + $0x298] sm:$0xff]
  %v2350 = vld [vmem:[%s2 + $0x2a0] sm:$0xff]
  %v2351 = vld [vmem:[%s2 + $0x2a8] sm:$0xff]
  %v2352 = vld [vmem:[%s2 + $0x2b0] sm:$0xff]
  %v2353 = vld [vmem:[%s2 + $0x2b8] sm:$0xff]
  %v2354 = vld [vmem:[%s2 + $0x2c0] sm:$0xff]
  %v2355 = vld [vmem:[%s2 + $0x2c8] sm:$0xff]
  %v2356 = vld [vmem:[%s2 + $0x2d0] sm:$0xff]
  %v2357 = vld [vmem:[%s2 + $0x2d8] sm:$0xff]
  %v2358 = vld [vmem:[%s2 + $0x2e0] sm:$0xff]
  %v2359 = vld [vmem:[%s2 + $0x2e8] sm:$0xff]
  %v2360 = vld [vmem:[%s2 + $0x2f0] sm:$0xff]
  %v2361 = vld [vmem:[%s2 + $0x2f8] sm:$0xff]
  %v2362 = vld [vmem:[%s2 + $0x300] sm:$0xff]
  %v2363 = vld [vmem:[%s2 + $0x308] sm:$0xff]
  %v2364 = vld [vmem:[%s2 + $0x310] sm:$0xff]
  %v2365 = vld [vmem:[%s2 + $0x318] sm:$0xff]
  %v2366 = vld [vmem:[%s2 + $0x320] sm:$0xff]
  %v2367 = vld [vmem:[%s2 + $0x328] sm:$0xff]
  %v2368 = vld [vmem:[%s2 + $0x330] sm:$0xff]
  %v2369 = vld [vmem:[%s2 + $0x338] sm:$0xff]
  %v2370 = vld [vmem:[%s2 + $0x340] sm:$0xff]
  %v2371 = vld [vmem:[%s2 + $0x348] sm:$0xff]
  %v2372 = vld [vmem:[%s2 + $0x350] sm:$0xff]
  %v2373 = vld [vmem:[%s2 + $0x358] sm:$0xff]
  %v2374 = vld [vmem:[%s2 + $0x360] sm:$0xff]
  %v2375 = vld [vmem:[%s2 + $0x368] sm:$0xff]
  %v2376 = vld [vmem:[%s2 + $0x370] sm:$0xff]
  %v2377 = vld [vmem:[%s2 + $0x378] sm:$0xff]
  %v2378 = vld [vmem:[%s2 + $0x380] sm:$0xff]
  %v2379 = vld [vmem:[%s2 + $0x388] sm:$0xff]
  %v2380 = vld [vmem:[%s2 + $0x390] sm:$0xff]
  %v2381 = vld [vmem:[%s2 + $0x398] sm:$0xff]
  %v2382 = vld [vmem:[%s2 + $0x3a0] sm:$0xff]
  %v2383 = vld [vmem:[%s2 + $0x3a8] sm:$0xff]
  %v2384 = vld [vmem:[%s2 + $0x3b0] sm:$0xff]
  %v2385 = vld [vmem:[%s2 + $0x3b8] sm:$0xff]
  %v2386 = vld [vmem:[%s2 + $0x3c0] sm:$0xff]
  %v2387 = vld [vmem:[%s2 + $0x3c8] sm:$0xff]
  %v2388 = vld [vmem:[%s2 + $0x3d0] sm:$0xff]
  %v2389 = vld [vmem:[%s2 + $0x3d8] sm:$0xff]
  %v2390 = vld [vmem:[%s2 + $0x3e0] sm:$0xff]
  %v2391 = vld [vmem:[%s2 + $0x3e8] sm:$0xff]
  %v2392 = vld [vmem:[%s2 + $0x3f0] sm:$0xff]
  %v2393 = vld [vmem:[%s2 + $0x3f8] sm:$0xff]
  %v2394 = vld [vmem:[%s2 + $0x400] sm:$0xff]
  %v2395 = vld [vmem:[%s2 + $0x408] sm:$0xff]
  %v2396 = vld [vmem:[%s2 + $0x410] sm:$0xff]
  %v2397 = vld [vmem:[%s2 + $0x418] sm:$0xff]
  %v2398 = vld [vmem:[%s2 + $0x420] sm:$0xff]
  %v2399 = vld [vmem:[%s2 + $0x428] sm:$0xff]
  %v2400 = vld [vmem:[%s2 + $0x430] sm:$0xff]
  %v2401 = vld [vmem:[%s2 + $0x438] sm:$0xff]
  %v2402 = vld [vmem:[%s2 + $0x440] sm:$0xff]
  %v2403 = vld [vmem:[%s2 + $0x448] sm:$0xff]
  %v2404 = vld [vmem:[%s2 + $0x450] sm:$0xff]
  %v2405 = vld [vmem:[%s2 + $0x458] sm:$0xff]
  %v2406 = vld [vmem:[%s2 + $0x460] sm:$0xff]
  %v2407 = vld [vmem:[%s2 + $0x468] sm:$0xff]
  %v2408 = vld [vmem:[%s2 + $0x470] sm:$0xff]
  %v2409 = vld [vmem:[%s2 + $0x478] sm:$0xff]
  %v2410 = vld [vmem:[%s3 + $0x3] sm:$0x1]
  %v2411 = vperm.slane %v2410, 0
  %2412 = vmatpush.msra.mxu0 %v2281
  %2413 = vmatpush.msra.mxu0 %v2280
  %2414 = vmatpush.msra.mxu0 %v2279
  %2415 = vmatpush.msra.mxu0 %v2278
  %2416 = vmatpush.msra.mxu0 %v2277
  %2417 = vmatpush.msra.mxu0 %v2276
  %2418 = vmatpush.msra.mxu0 %v2275
  %2419 = vmatpush.msra.mxu0 %v2274
  %2420 = vmatpush.msra.mxu0 %v2273
  %2421 = vmatpush.msra.mxu0 %v2272
  %2422 = vmatpush.msra.mxu0 %v2271
  %2423 = vmatpush.msra.mxu0 %v2270
  %2424 = vmatpush.msra.mxu0 %v2269
  %2425 = vmatpush.msra.mxu0 %v2268
  %2426 = vmatpush.msra.mxu0 %v2267
  %2427 = vmatpush.msra.mxu0 %v2266
  %2428 = vmatmul.f32.gmra.mxu0 %v1690
  %v2429 = vpop.f32.mrf.mxu0
  %v2430 = vadd.f32 %v2411, %v2429
  %2431 = vmatmul.f32.gmra.mxu0 %v1699
  %v2432 = vpop.f32.mrf.mxu0
  %v2433 = vadd.f32 %v2411, %v2432
  %2434 = vmatmul.f32.gmra.mxu0 %v1708
  %v2435 = vpop.f32.mrf.mxu0
  %v2436 = vadd.f32 %v2411, %v2435
  %2437 = vmatmul.f32.gmra.mxu0 %v1717
  %v2438 = vpop.f32.mrf.mxu0
  %v2439 = vadd.f32 %v2411, %v2438
  %2440 = vmatmul.f32.gmra.mxu0 %v1726
  %v2441 = vpop.f32.mrf.mxu0
  %v2442 = vadd.f32 %v2411, %v2441
  %2443 = vmatmul.f32.gmra.mxu0 %v1735
  %v2444 = vpop.f32.mrf.mxu0
  %v2445 = vadd.f32 %v2411, %v2444
  %2446 = vmatmul.f32.gmra.mxu0 %v1744
  %v2447 = vpop.f32.mrf.mxu0
  %v2448 = vadd.f32 %v2411, %v2447
  %2449 = vmatmul.f32.gmra.mxu0 %v1753
  %v2450 = vpop.f32.mrf.mxu0
  %v2451 = vadd.f32 %v2411, %v2450
  %2452 = vmatmul.f32.gmra.mxu0 %v1762
  %v2453 = vpop.f32.mrf.mxu0
  %v2454 = vadd.f32 %v2411, %v2453
  %2455 = vmatmul.f32.gmra.mxu0 %v1771
  %v2456 = vpop.f32.mrf.mxu0
  %v2457 = vadd.f32 %v2411, %v2456
  %2458 = vmatmul.f32.gmra.mxu0 %v1780
  %v2459 = vpop.f32.mrf.mxu0
  %v2460 = vadd.f32 %v2411, %v2459
  %2461 = vmatmul.f32.gmra.mxu0 %v1789
  %v2462 = vpop.f32.mrf.mxu0
  %v2463 = vadd.f32 %v2411, %v2462
  %2464 = vmatmul.f32.gmra.mxu0 %v1798
  %v2465 = vpop.f32.mrf.mxu0
  %v2466 = vadd.f32 %v2411, %v2465
  %2467 = vmatmul.f32.gmra.mxu0 %v1807
  %v2468 = vpop.f32.mrf.mxu0
  %v2469 = vadd.f32 %v2411, %v2468
  %2470 = vmatmul.f32.gmra.mxu0 %v1816
  %v2471 = vpop.f32.mrf.mxu0
  %v2472 = vadd.f32 %v2411, %v2471
  %2473 = vmatmul.f32.gmra.mxu0 %v1825
  %v2474 = vpop.f32.mrf.mxu0
  %v2475 = vadd.f32 %v2411, %v2474
  %2476 = vmatmul.f32.gmra.mxu0 %v1834
  %v2477 = vpop.f32.mrf.mxu0
  %v2478 = vadd.f32 %v2411, %v2477
  %2479 = vmatmul.f32.gmra.mxu0 %v1843
  %v2480 = vpop.f32.mrf.mxu0
  %v2481 = vadd.f32 %v2411, %v2480
  %2482 = vmatmul.f32.gmra.mxu0 %v1852
  %v2483 = vpop.f32.mrf.mxu0
  %v2484 = vadd.f32 %v2411, %v2483
  %2485 = vmatmul.f32.gmra.mxu0 %v1861
  %v2486 = vpop.f32.mrf.mxu0
  %v2487 = vadd.f32 %v2411, %v2486
  %2488 = vmatmul.f32.gmra.mxu0 %v1870
  %v2489 = vpop.f32.mrf.mxu0
  %v2490 = vadd.f32 %v2411, %v2489
  %2491 = vmatmul.f32.gmra.mxu0 %v1879
  %v2492 = vpop.f32.mrf.mxu0
  %v2493 = vadd.f32 %v2411, %v2492
  %2494 = vmatmul.f32.gmra.mxu0 %v1888
  %v2495 = vpop.f32.mrf.mxu0
  %v2496 = vadd.f32 %v2411, %v2495
  %2497 = vmatmul.f32.gmra.mxu0 %v1897
  %v2498 = vpop.f32.mrf.mxu0
  %v2499 = vadd.f32 %v2411, %v2498
  %2500 = vmatmul.f32.gmra.mxu0 %v1906
  %v2501 = vpop.f32.mrf.mxu0
  %v2502 = vadd.f32 %v2411, %v2501
  %2503 = vmatmul.f32.gmra.mxu0 %v1915
  %v2504 = vpop.f32.mrf.mxu0
  %v2505 = vadd.f32 %v2411, %v2504
  %2506 = vmatmul.f32.gmra.mxu0 %v1924
  %v2507 = vpop.f32.mrf.mxu0
  %v2508 = vadd.f32 %v2411, %v2507
  %2509 = vmatmul.f32.gmra.mxu0 %v1933
  %v2510 = vpop.f32.mrf.mxu0
  %v2511 = vadd.f32 %v2411, %v2510
  %2512 = vmatmul.f32.gmra.mxu0 %v1942
  %v2513 = vpop.f32.mrf.mxu0
  %v2514 = vadd.f32 %v2411, %v2513
  %2515 = vmatmul.f32.gmra.mxu0 %v1951
  %v2516 = vpop.f32.mrf.mxu0
  %v2517 = vadd.f32 %v2411, %v2516
  %2518 = vmatmul.f32.gmra.mxu0 %v1960
  %v2519 = vpop.f32.mrf.mxu0
  %v2520 = vadd.f32 %v2411, %v2519
  %2521 = vmatmul.f32.gmra.mxu0 %v1969
  %v2522 = vpop.f32.mrf.mxu0
  %v2523 = vadd.f32 %v2411, %v2522
  %2524 = vmatmul.f32.gmra.mxu0 %v1978
  %v2525 = vpop.f32.mrf.mxu0
  %v2526 = vadd.f32 %v2411, %v2525
  %2527 = vmatmul.f32.gmra.mxu0 %v1987
  %v2528 = vpop.f32.mrf.mxu0
  %v2529 = vadd.f32 %v2411, %v2528
  %2530 = vmatmul.f32.gmra.mxu0 %v1996
  %v2531 = vpop.f32.mrf.mxu0
  %v2532 = vadd.f32 %v2411, %v2531
  %2533 = vmatmul.f32.gmra.mxu0 %v2005
  %v2534 = vpop.f32.mrf.mxu0
  %v2535 = vadd.f32 %v2411, %v2534
  %2536 = vmatmul.f32.gmra.mxu0 %v2014
  %v2537 = vpop.f32.mrf.mxu0
  %v2538 = vadd.f32 %v2411, %v2537
  %2539 = vmatmul.f32.gmra.mxu0 %v2023
  %v2540 = vpop.f32.mrf.mxu0
  %v2541 = vadd.f32 %v2411, %v2540
  %2542 = vmatmul.f32.gmra.mxu0 %v2032
  %v2543 = vpop.f32.mrf.mxu0
  %v2544 = vadd.f32 %v2411, %v2543
  %2545 = vmatmul.f32.gmra.mxu0 %v2041
  %v2546 = vpop.f32.mrf.mxu0
  %v2547 = vadd.f32 %v2411, %v2546
  %2548 = vmatmul.f32.gmra.mxu0 %v2050
  %v2549 = vpop.f32.mrf.mxu0
  %v2550 = vadd.f32 %v2411, %v2549
  %2551 = vmatmul.f32.gmra.mxu0 %v2059
  %v2552 = vpop.f32.mrf.mxu0
  %v2553 = vadd.f32 %v2411, %v2552
  %2554 = vmatmul.f32.gmra.mxu0 %v2068
  %v2555 = vpop.f32.mrf.mxu0
  %v2556 = vadd.f32 %v2411, %v2555
  %2557 = vmatmul.f32.gmra.mxu0 %v2077
  %v2558 = vpop.f32.mrf.mxu0
  %v2559 = vadd.f32 %v2411, %v2558
  %2560 = vmatmul.f32.gmra.mxu0 %v2086
  %v2561 = vpop.f32.mrf.mxu0
  %v2562 = vadd.f32 %v2411, %v2561
  %2563 = vmatmul.f32.gmra.mxu0 %v2095
  %v2564 = vpop.f32.mrf.mxu0
  %v2565 = vadd.f32 %v2411, %v2564
  %2566 = vmatmul.f32.gmra.mxu0 %v2104
  %v2567 = vpop.f32.mrf.mxu0
  %v2568 = vadd.f32 %v2411, %v2567
  %2569 = vmatmul.f32.gmra.mxu0 %v2113
  %v2570 = vpop.f32.mrf.mxu0
  %v2571 = vadd.f32 %v2411, %v2570
  %2572 = vmatmul.f32.gmra.mxu0 %v2122
  %v2573 = vpop.f32.mrf.mxu0
  %v2574 = vadd.f32 %v2411, %v2573
  %2575 = vmatmul.f32.gmra.mxu0 %v2131
  %v2576 = vpop.f32.mrf.mxu0
  %v2577 = vadd.f32 %v2411, %v2576
  %2578 = vmatmul.f32.gmra.mxu0 %v2140
  %v2579 = vpop.f32.mrf.mxu0
  %v2580 = vadd.f32 %v2411, %v2579
  %2581 = vmatmul.f32.gmra.mxu0 %v2149
  %v2582 = vpop.f32.mrf.mxu0
  %v2583 = vadd.f32 %v2411, %v2582
  %2584 = vmatmul.f32.gmra.mxu0 %v2158
  %v2585 = vpop.f32.mrf.mxu0
  %v2586 = vadd.f32 %v2411, %v2585
  %2587 = vmatmul.f32.gmra.mxu0 %v2167
  %v2588 = vpop.f32.mrf.mxu0
  %v2589 = vadd.f32 %v2411, %v2588
  %2590 = vmatmul.f32.gmra.mxu0 %v2176
  %v2591 = vpop.f32.mrf.mxu0
  %v2592 = vadd.f32 %v2411, %v2591
  %2593 = vmatmul.f32.gmra.mxu0 %v2185
  %v2594 = vpop.f32.mrf.mxu0
  %v2595 = vadd.f32 %v2411, %v2594
  %2596 = vmatmul.f32.gmra.mxu0 %v2194
  %v2597 = vpop.f32.mrf.mxu0
  %v2598 = vadd.f32 %v2411, %v2597
  %2599 = vmatmul.f32.gmra.mxu0 %v2203
  %v2600 = vpop.f32.mrf.mxu0
  %v2601 = vadd.f32 %v2411, %v2600
  %2602 = vmatmul.f32.gmra.mxu0 %v2212
  %v2603 = vpop.f32.mrf.mxu0
  %v2604 = vadd.f32 %v2411, %v2603
  %2605 = vmatmul.f32.gmra.mxu0 %v2221
  %v2606 = vpop.f32.mrf.mxu0
  %v2607 = vadd.f32 %v2411, %v2606
  %2608 = vmatmul.f32.gmra.mxu0 %v2230
  %v2609 = vpop.f32.mrf.mxu0
  %v2610 = vadd.f32 %v2411, %v2609
  %2611 = vmatmul.f32.gmra.mxu0 %v2239
  %v2612 = vpop.f32.mrf.mxu0
  %v2613 = vadd.f32 %v2411, %v2612
  %2614 = vmatmul.f32.gmra.mxu0 %v2248
  %v2615 = vpop.f32.mrf.mxu0
  %v2616 = vadd.f32 %v2411, %v2615
  %2617 = vmatmul.f32.gmra.mxu0 %v2257
  %v2618 = vpop.f32.mrf.mxu0
  %v2619 = vadd.f32 %v2411, %v2618
  %2620 = vdwg.mxu0
  %2621 = vmatpush.msra.mxu0 %v2297
  %2622 = vmatpush.msra.mxu0 %v2296
  %2623 = vmatpush.msra.mxu0 %v2295
  %2624 = vmatpush.msra.mxu0 %v2294
  %2625 = vmatpush.msra.mxu0 %v2293
  %2626 = vmatpush.msra.mxu0 %v2292
  %2627 = vmatpush.msra.mxu0 %v2291
  %2628 = vmatpush.msra.mxu0 %v2290
  %2629 = vmatpush.msra.mxu0 %v2289
  %2630 = vmatpush.msra.mxu0 %v2288
  %2631 = vmatpush.msra.mxu0 %v2287
  %2632 = vmatpush.msra.mxu0 %v2286
  %2633 = vmatpush.msra.mxu0 %v2285
  %2634 = vmatpush.msra.mxu0 %v2284
  %2635 = vmatpush.msra.mxu0 %v2283
  %2636 = vmatpush.msra.mxu0 %v2282
  %2637 = vmatmul.f32.gmra.mxu0 %v1691
  %v2638 = vpop.f32.mrf.mxu0
  %v2639 = vadd.f32 %v2430, %v2638
  %2640 = vmatmul.f32.gmra.mxu0 %v1700
  %v2641 = vpop.f32.mrf.mxu0
  %v2642 = vadd.f32 %v2433, %v2641
  %2643 = vmatmul.f32.gmra.mxu0 %v1709
  %v2644 = vpop.f32.mrf.mxu0
  %v2645 = vadd.f32 %v2436, %v2644
  %2646 = vmatmul.f32.gmra.mxu0 %v1718
  %v2647 = vpop.f32.mrf.mxu0
  %v2648 = vadd.f32 %v2439, %v2647
  %2649 = vmatmul.f32.gmra.mxu0 %v1727
  %v2650 = vpop.f32.mrf.mxu0
  %v2651 = vadd.f32 %v2442, %v2650
  %2652 = vmatmul.f32.gmra.mxu0 %v1736
  %v2653 = vpop.f32.mrf.mxu0
  %v2654 = vadd.f32 %v2445, %v2653
  %2655 = vmatmul.f32.gmra.mxu0 %v1745
  %v2656 = vpop.f32.mrf.mxu0
  %v2657 = vadd.f32 %v2448, %v2656
  %2658 = vmatmul.f32.gmra.mxu0 %v1754
  %v2659 = vpop.f32.mrf.mxu0
  %v2660 = vadd.f32 %v2451, %v2659
  %2661 = vmatmul.f32.gmra.mxu0 %v1763
  %v2662 = vpop.f32.mrf.mxu0
  %v2663 = vadd.f32 %v2454, %v2662
  %2664 = vmatmul.f32.gmra.mxu0 %v1772
  %v2665 = vpop.f32.mrf.mxu0
  %v2666 = vadd.f32 %v2457, %v2665
  %2667 = vmatmul.f32.gmra.mxu0 %v1781
  %v2668 = vpop.f32.mrf.mxu0
  %v2669 = vadd.f32 %v2460, %v2668
  %2670 = vmatmul.f32.gmra.mxu0 %v1790
  %v2671 = vpop.f32.mrf.mxu0
  %v2672 = vadd.f32 %v2463, %v2671
  %2673 = vmatmul.f32.gmra.mxu0 %v1799
  %v2674 = vpop.f32.mrf.mxu0
  %v2675 = vadd.f32 %v2466, %v2674
  %2676 = vmatmul.f32.gmra.mxu0 %v1808
  %v2677 = vpop.f32.mrf.mxu0
  %v2678 = vadd.f32 %v2469, %v2677
  %2679 = vmatmul.f32.gmra.mxu0 %v1817
  %v2680 = vpop.f32.mrf.mxu0
  %v2681 = vadd.f32 %v2472, %v2680
  %2682 = vmatmul.f32.gmra.mxu0 %v1826
  %v2683 = vpop.f32.mrf.mxu0
  %v2684 = vadd.f32 %v2475, %v2683
  %2685 = vmatmul.f32.gmra.mxu0 %v1835
  %v2686 = vpop.f32.mrf.mxu0
  %v2687 = vadd.f32 %v2478, %v2686
  %2688 = vmatmul.f32.gmra.mxu0 %v1844
  %v2689 = vpop.f32.mrf.mxu0
  %v2690 = vadd.f32 %v2481, %v2689
  %2691 = vmatmul.f32.gmra.mxu0 %v1853
  %v2692 = vpop.f32.mrf.mxu0
  %v2693 = vadd.f32 %v2484, %v2692
  %2694 = vmatmul.f32.gmra.mxu0 %v1862
  %v2695 = vpop.f32.mrf.mxu0
  %v2696 = vadd.f32 %v2487, %v2695
  %2697 = vmatmul.f32.gmra.mxu0 %v1871
  %v2698 = vpop.f32.mrf.mxu0
  %v2699 = vadd.f32 %v2490, %v2698
  %2700 = vmatmul.f32.gmra.mxu0 %v1880
  %v2701 = vpop.f32.mrf.mxu0
  %v2702 = vadd.f32 %v2493, %v2701
  %2703 = vmatmul.f32.gmra.mxu0 %v1889
  %v2704 = vpop.f32.mrf.mxu0
  %v2705 = vadd.f32 %v2496, %v2704
  %2706 = vmatmul.f32.gmra.mxu0 %v1898
  %v2707 = vpop.f32.mrf.mxu0
  %v2708 = vadd.f32 %v2499, %v2707
  %2709 = vmatmul.f32.gmra.mxu0 %v1907
  %v2710 = vpop.f32.mrf.mxu0
  %v2711 = vadd.f32 %v2502, %v2710
  %2712 = vmatmul.f32.gmra.mxu0 %v1916
  %v2713 = vpop.f32.mrf.mxu0
  %v2714 = vadd.f32 %v2505, %v2713
  %2715 = vmatmul.f32.gmra.mxu0 %v1925
  %v2716 = vpop.f32.mrf.mxu0
  %v2717 = vadd.f32 %v2508, %v2716
  %2718 = vmatmul.f32.gmra.mxu0 %v1934
  %v2719 = vpop.f32.mrf.mxu0
  %v2720 = vadd.f32 %v2511, %v2719
  %2721 = vmatmul.f32.gmra.mxu0 %v1943
  %v2722 = vpop.f32.mrf.mxu0
  %v2723 = vadd.f32 %v2514, %v2722
  %2724 = vmatmul.f32.gmra.mxu0 %v1952
  %v2725 = vpop.f32.mrf.mxu0
  %v2726 = vadd.f32 %v2517, %v2725
  %2727 = vmatmul.f32.gmra.mxu0 %v1961
  %v2728 = vpop.f32.mrf.mxu0
  %v2729 = vadd.f32 %v2520, %v2728
  %2730 = vmatmul.f32.gmra.mxu0 %v1970
  %v2731 = vpop.f32.mrf.mxu0
  %v2732 = vadd.f32 %v2523, %v2731
  %2733 = vmatmul.f32.gmra.mxu0 %v1979
  %v2734 = vpop.f32.mrf.mxu0
  %v2735 = vadd.f32 %v2526, %v2734
  %2736 = vmatmul.f32.gmra.mxu0 %v1988
  %v2737 = vpop.f32.mrf.mxu0
  %v2738 = vadd.f32 %v2529, %v2737
  %2739 = vmatmul.f32.gmra.mxu0 %v1997
  %v2740 = vpop.f32.mrf.mxu0
  %v2741 = vadd.f32 %v2532, %v2740
  %2742 = vmatmul.f32.gmra.mxu0 %v2006
  %v2743 = vpop.f32.mrf.mxu0
  %v2744 = vadd.f32 %v2535, %v2743
  %2745 = vmatmul.f32.gmra.mxu0 %v2015
  %v2746 = vpop.f32.mrf.mxu0
  %v2747 = vadd.f32 %v2538, %v2746
  %2748 = vmatmul.f32.gmra.mxu0 %v2024
  %v2749 = vpop.f32.mrf.mxu0
  %v2750 = vadd.f32 %v2541, %v2749
  %2751 = vmatmul.f32.gmra.mxu0 %v2033
  %v2752 = vpop.f32.mrf.mxu0
  %v2753 = vadd.f32 %v2544, %v2752
  %2754 = vmatmul.f32.gmra.mxu0 %v2042
  %v2755 = vpop.f32.mrf.mxu0
  %v2756 = vadd.f32 %v2547, %v2755
  %2757 = vmatmul.f32.gmra.mxu0 %v2051
  %v2758 = vpop.f32.mrf.mxu0
  %v2759 = vadd.f32 %v2550, %v2758
  %2760 = vmatmul.f32.gmra.mxu0 %v2060
  %v2761 = vpop.f32.mrf.mxu0
  %v2762 = vadd.f32 %v2553, %v2761
  %2763 = vmatmul.f32.gmra.mxu0 %v2069
  %v2764 = vpop.f32.mrf.mxu0
  %v2765 = vadd.f32 %v2556, %v2764
  %2766 = vmatmul.f32.gmra.mxu0 %v2078
  %v2767 = vpop.f32.mrf.mxu0
  %v2768 = vadd.f32 %v2559, %v2767
  %2769 = vmatmul.f32.gmra.mxu0 %v2087
  %v2770 = vpop.f32.mrf.mxu0
  %v2771 = vadd.f32 %v2562, %v2770
  %2772 = vmatmul.f32.gmra.mxu0 %v2096
  %v2773 = vpop.f32.mrf.mxu0
  %v2774 = vadd.f32 %v2565, %v2773
  %2775 = vmatmul.f32.gmra.mxu0 %v2105
  %v2776 = vpop.f32.mrf.mxu0
  %v2777 = vadd.f32 %v2568, %v2776
  %2778 = vmatmul.f32.gmra.mxu0 %v2114
  %v2779 = vpop.f32.mrf.mxu0
  %v2780 = vadd.f32 %v2571, %v2779
  %2781 = vmatmul.f32.gmra.mxu0 %v2123
  %v2782 = vpop.f32.mrf.mxu0
  %v2783 = vadd.f32 %v2574, %v2782
  %2784 = vmatmul.f32.gmra.mxu0 %v2132
  %v2785 = vpop.f32.mrf.mxu0
  %v2786 = vadd.f32 %v2577, %v2785
  %2787 = vmatmul.f32.gmra.mxu0 %v2141
  %v2788 = vpop.f32.mrf.mxu0
  %v2789 = vadd.f32 %v2580, %v2788
  %2790 = vmatmul.f32.gmra.mxu0 %v2150
  %v2791 = vpop.f32.mrf.mxu0
  %v2792 = vadd.f32 %v2583, %v2791
  %2793 = vmatmul.f32.gmra.mxu0 %v2159
  %v2794 = vpop.f32.mrf.mxu0
  %v2795 = vadd.f32 %v2586, %v2794
  %2796 = vmatmul.f32.gmra.mxu0 %v2168
  %v2797 = vpop.f32.mrf.mxu0
  %v2798 = vadd.f32 %v2589, %v2797
  %2799 = vmatmul.f32.gmra.mxu0 %v2177
  %v2800 = vpop.f32.mrf.mxu0
  %v2801 = vadd.f32 %v2592, %v2800
  %2802 = vmatmul.f32.gmra.mxu0 %v2186
  %v2803 = vpop.f32.mrf.mxu0
  %v2804 = vadd.f32 %v2595, %v2803
  %2805 = vmatmul.f32.gmra.mxu0 %v2195
  %v2806 = vpop.f32.mrf.mxu0
  %v2807 = vadd.f32 %v2598, %v2806
  %2808 = vmatmul.f32.gmra.mxu0 %v2204
  %v2809 = vpop.f32.mrf.mxu0
  %v2810 = vadd.f32 %v2601, %v2809
  %2811 = vmatmul.f32.gmra.mxu0 %v2213
  %v2812 = vpop.f32.mrf.mxu0
  %v2813 = vadd.f32 %v2604, %v2812
  %2814 = vmatmul.f32.gmra.mxu0 %v2222
  %v2815 = vpop.f32.mrf.mxu0
  %v2816 = vadd.f32 %v2607, %v2815
  %2817 = vmatmul.f32.gmra.mxu0 %v2231
  %v2818 = vpop.f32.mrf.mxu0
  %v2819 = vadd.f32 %v2610, %v2818
  %2820 = vmatmul.f32.gmra.mxu0 %v2240
  %v2821 = vpop.f32.mrf.mxu0
  %v2822 = vadd.f32 %v2613, %v2821
  %2823 = vmatmul.f32.gmra.mxu0 %v2249
  %v2824 = vpop.f32.mrf.mxu0
  %v2825 = vadd.f32 %v2616, %v2824
  %2826 = vmatmul.f32.gmra.mxu0 %v2258
  %v2827 = vpop.f32.mrf.mxu0
  %v2828 = vadd.f32 %v2619, %v2827
  %2829 = vdwg.mxu0
  %2830 = vmatpush.msra.mxu0 %v2313
  %2831 = vmatpush.msra.mxu0 %v2312
  %2832 = vmatpush.msra.mxu0 %v2311
  %2833 = vmatpush.msra.mxu0 %v2310
  %2834 = vmatpush.msra.mxu0 %v2309
  %2835 = vmatpush.msra.mxu0 %v2308
  %2836 = vmatpush.msra.mxu0 %v2307
  %2837 = vmatpush.msra.mxu0 %v2306
  %2838 = vmatpush.msra.mxu0 %v2305
  %2839 = vmatpush.msra.mxu0 %v2304
  %2840 = vmatpush.msra.mxu0 %v2303
  %2841 = vmatpush.msra.mxu0 %v2302
  %2842 = vmatpush.msra.mxu0 %v2301
  %2843 = vmatpush.msra.mxu0 %v2300
  %2844 = vmatpush.msra.mxu0 %v2299
  %2845 = vmatpush.msra.mxu0 %v2298
  %2846 = vmatmul.f32.gmra.mxu0 %v1692
  %v2847 = vpop.f32.mrf.mxu0
  %v2848 = vadd.f32 %v2639, %v2847
  %2849 = vmatmul.f32.gmra.mxu0 %v1701
  %v2850 = vpop.f32.mrf.mxu0
  %v2851 = vadd.f32 %v2642, %v2850
  %2852 = vmatmul.f32.gmra.mxu0 %v1710
  %v2853 = vpop.f32.mrf.mxu0
  %v2854 = vadd.f32 %v2645, %v2853
  %2855 = vmatmul.f32.gmra.mxu0 %v1719
  %v2856 = vpop.f32.mrf.mxu0
  %v2857 = vadd.f32 %v2648, %v2856
  %2858 = vmatmul.f32.gmra.mxu0 %v1728
  %v2859 = vpop.f32.mrf.mxu0
  %v2860 = vadd.f32 %v2651, %v2859
  %2861 = vmatmul.f32.gmra.mxu0 %v1737
  %v2862 = vpop.f32.mrf.mxu0
  %v2863 = vadd.f32 %v2654, %v2862
  %2864 = vmatmul.f32.gmra.mxu0 %v1746
  %v2865 = vpop.f32.mrf.mxu0
  %v2866 = vadd.f32 %v2657, %v2865
  %2867 = vmatmul.f32.gmra.mxu0 %v1755
  %v2868 = vpop.f32.mrf.mxu0
  %v2869 = vadd.f32 %v2660, %v2868
  %2870 = vmatmul.f32.gmra.mxu0 %v1764
  %v2871 = vpop.f32.mrf.mxu0
  %v2872 = vadd.f32 %v2663, %v2871
  %2873 = vmatmul.f32.gmra.mxu0 %v1773
  %v2874 = vpop.f32.mrf.mxu0
  %v2875 = vadd.f32 %v2666, %v2874
  %2876 = vmatmul.f32.gmra.mxu0 %v1782
  %v2877 = vpop.f32.mrf.mxu0
  %v2878 = vadd.f32 %v2669, %v2877
  %2879 = vmatmul.f32.gmra.mxu0 %v1791
  %v2880 = vpop.f32.mrf.mxu0
  %v2881 = vadd.f32 %v2672, %v2880
  %2882 = vmatmul.f32.gmra.mxu0 %v1800
  %v2883 = vpop.f32.mrf.mxu0
  %v2884 = vadd.f32 %v2675, %v2883
  %2885 = vmatmul.f32.gmra.mxu0 %v1809
  %v2886 = vpop.f32.mrf.mxu0
  %v2887 = vadd.f32 %v2678, %v2886
  %2888 = vmatmul.f32.gmra.mxu0 %v1818
  %v2889 = vpop.f32.mrf.mxu0
  %v2890 = vadd.f32 %v2681, %v2889
  %2891 = vmatmul.f32.gmra.mxu0 %v1827
  %v2892 = vpop.f32.mrf.mxu0
  %v2893 = vadd.f32 %v2684, %v2892
  %2894 = vmatmul.f32.gmra.mxu0 %v1836
  %v2895 = vpop.f32.mrf.mxu0
  %v2896 = vadd.f32 %v2687, %v2895
  %2897 = vmatmul.f32.gmra.mxu0 %v1845
  %v2898 = vpop.f32.mrf.mxu0
  %v2899 = vadd.f32 %v2690, %v2898
  %2900 = vmatmul.f32.gmra.mxu0 %v1854
  %v2901 = vpop.f32.mrf.mxu0
  %v2902 = vadd.f32 %v2693, %v2901
  %2903 = vmatmul.f32.gmra.mxu0 %v1863
  %v2904 = vpop.f32.mrf.mxu0
  %v2905 = vadd.f32 %v2696, %v2904
  %2906 = vmatmul.f32.gmra.mxu0 %v1872
  %v2907 = vpop.f32.mrf.mxu0
  %v2908 = vadd.f32 %v2699, %v2907
  %2909 = vmatmul.f32.gmra.mxu0 %v1881
  %v2910 = vpop.f32.mrf.mxu0
  %v2911 = vadd.f32 %v2702, %v2910
  %2912 = vmatmul.f32.gmra.mxu0 %v1890
  %v2913 = vpop.f32.mrf.mxu0
  %v2914 = vadd.f32 %v2705, %v2913
  %2915 = vmatmul.f32.gmra.mxu0 %v1899
  %v2916 = vpop.f32.mrf.mxu0
  %v2917 = vadd.f32 %v2708, %v2916
  %2918 = vmatmul.f32.gmra.mxu0 %v1908
  %v2919 = vpop.f32.mrf.mxu0
  %v2920 = vadd.f32 %v2711, %v2919
  %2921 = vmatmul.f32.gmra.mxu0 %v1917
  %v2922 = vpop.f32.mrf.mxu0
  %v2923 = vadd.f32 %v2714, %v2922
  %2924 = vmatmul.f32.gmra.mxu0 %v1926
  %v2925 = vpop.f32.mrf.mxu0
  %v2926 = vadd.f32 %v2717, %v2925
  %2927 = vmatmul.f32.gmra.mxu0 %v1935
  %v2928 = vpop.f32.mrf.mxu0
  %v2929 = vadd.f32 %v2720, %v2928
  %2930 = vmatmul.f32.gmra.mxu0 %v1944
  %v2931 = vpop.f32.mrf.mxu0
  %v2932 = vadd.f32 %v2723, %v2931
  %2933 = vmatmul.f32.gmra.mxu0 %v1953
  %v2934 = vpop.f32.mrf.mxu0
  %v2935 = vadd.f32 %v2726, %v2934
  %2936 = vmatmul.f32.gmra.mxu0 %v1962
  %v2937 = vpop.f32.mrf.mxu0
  %v2938 = vadd.f32 %v2729, %v2937
  %2939 = vmatmul.f32.gmra.mxu0 %v1971
  %v2940 = vpop.f32.mrf.mxu0
  %v2941 = vadd.f32 %v2732, %v2940
  %2942 = vmatmul.f32.gmra.mxu0 %v1980
  %v2943 = vpop.f32.mrf.mxu0
  %v2944 = vadd.f32 %v2735, %v2943
  %2945 = vmatmul.f32.gmra.mxu0 %v1989
  %v2946 = vpop.f32.mrf.mxu0
  %v2947 = vadd.f32 %v2738, %v2946
  %2948 = vmatmul.f32.gmra.mxu0 %v1998
  %v2949 = vpop.f32.mrf.mxu0
  %v2950 = vadd.f32 %v2741, %v2949
  %2951 = vmatmul.f32.gmra.mxu0 %v2007
  %v2952 = vpop.f32.mrf.mxu0
  %v2953 = vadd.f32 %v2744, %v2952
  %2954 = vmatmul.f32.gmra.mxu0 %v2016
  %v2955 = vpop.f32.mrf.mxu0
  %v2956 = vadd.f32 %v2747, %v2955
  %2957 = vmatmul.f32.gmra.mxu0 %v2025
  %v2958 = vpop.f32.mrf.mxu0
  %v2959 = vadd.f32 %v2750, %v2958
  %2960 = vmatmul.f32.gmra.mxu0 %v2034
  %v2961 = vpop.f32.mrf.mxu0
  %v2962 = vadd.f32 %v2753, %v2961
  %2963 = vmatmul.f32.gmra.mxu0 %v2043
  %v2964 = vpop.f32.mrf.mxu0
  %v2965 = vadd.f32 %v2756, %v2964
  %2966 = vmatmul.f32.gmra.mxu0 %v2052
  %v2967 = vpop.f32.mrf.mxu0
  %v2968 = vadd.f32 %v2759, %v2967
  %2969 = vmatmul.f32.gmra.mxu0 %v2061
  %v2970 = vpop.f32.mrf.mxu0
  %v2971 = vadd.f32 %v2762, %v2970
  %2972 = vmatmul.f32.gmra.mxu0 %v2070
  %v2973 = vpop.f32.mrf.mxu0
  %v2974 = vadd.f32 %v2765, %v2973
  %2975 = vmatmul.f32.gmra.mxu0 %v2079
  %v2976 = vpop.f32.mrf.mxu0
  %v2977 = vadd.f32 %v2768, %v2976
  %2978 = vmatmul.f32.gmra.mxu0 %v2088
  %v2979 = vpop.f32.mrf.mxu0
  %v2980 = vadd.f32 %v2771, %v2979
  %2981 = vmatmul.f32.gmra.mxu0 %v2097
  %v2982 = vpop.f32.mrf.mxu0
  %v2983 = vadd.f32 %v2774, %v2982
  %2984 = vmatmul.f32.gmra.mxu0 %v2106
  %v2985 = vpop.f32.mrf.mxu0
  %v2986 = vadd.f32 %v2777, %v2985
  %2987 = vmatmul.f32.gmra.mxu0 %v2115
  %v2988 = vpop.f32.mrf.mxu0
  %v2989 = vadd.f32 %v2780, %v2988
  %2990 = vmatmul.f32.gmra.mxu0 %v2124
  %v2991 = vpop.f32.mrf.mxu0
  %v2992 = vadd.f32 %v2783, %v2991
  %2993 = vmatmul.f32.gmra.mxu0 %v2133
  %v2994 = vpop.f32.mrf.mxu0
  %v2995 = vadd.f32 %v2786, %v2994
  %2996 = vmatmul.f32.gmra.mxu0 %v2142
  %v2997 = vpop.f32.mrf.mxu0
  %v2998 = vadd.f32 %v2789, %v2997
  %2999 = vmatmul.f32.gmra.mxu0 %v2151
  %v3000 = vpop.f32.mrf.mxu0
  %v3001 = vadd.f32 %v2792, %v3000
  %3002 = vmatmul.f32.gmra.mxu0 %v2160
  %v3003 = vpop.f32.mrf.mxu0
  %v3004 = vadd.f32 %v2795, %v3003
  %3005 = vmatmul.f32.gmra.mxu0 %v2169
  %v3006 = vpop.f32.mrf.mxu0
  %v3007 = vadd.f32 %v2798, %v3006
  %3008 = vmatmul.f32.gmra.mxu0 %v2178
  %v3009 = vpop.f32.mrf.mxu0
  %v3010 = vadd.f32 %v2801, %v3009
  %3011 = vmatmul.f32.gmra.mxu0 %v2187
  %v3012 = vpop.f32.mrf.mxu0
  %v3013 = vadd.f32 %v2804, %v3012
  %3014 = vmatmul.f32.gmra.mxu0 %v2196
  %v3015 = vpop.f32.mrf.mxu0
  %v3016 = vadd.f32 %v2807, %v3015
  %3017 = vmatmul.f32.gmra.mxu0 %v2205
  %v3018 = vpop.f32.mrf.mxu0
  %v3019 = vadd.f32 %v2810, %v3018
  %3020 = vmatmul.f32.gmra.mxu0 %v2214
  %v3021 = vpop.f32.mrf.mxu0
  %v3022 = vadd.f32 %v2813, %v3021
  %3023 = vmatmul.f32.gmra.mxu0 %v2223
  %v3024 = vpop.f32.mrf.mxu0
  %v3025 = vadd.f32 %v2816, %v3024
  %3026 = vmatmul.f32.gmra.mxu0 %v2232
  %v3027 = vpop.f32.mrf.mxu0
  %v3028 = vadd.f32 %v2819, %v3027
  %3029 = vmatmul.f32.gmra.mxu0 %v2241
  %v3030 = vpop.f32.mrf.mxu0
  %v3031 = vadd.f32 %v2822, %v3030
  %3032 = vmatmul.f32.gmra.mxu0 %v2250
  %v3033 = vpop.f32.mrf.mxu0
  %v3034 = vadd.f32 %v2825, %v3033
  %3035 = vmatmul.f32.gmra.mxu0 %v2259
  %v3036 = vpop.f32.mrf.mxu0
  %v3037 = vadd.f32 %v2828, %v3036
  %3038 = vdwg.mxu0
  %3039 = vmatpush.msra.mxu0 %v2329
  %3040 = vmatpush.msra.mxu0 %v2328
  %3041 = vmatpush.msra.mxu0 %v2327
  %3042 = vmatpush.msra.mxu0 %v2326
  %3043 = vmatpush.msra.mxu0 %v2325
  %3044 = vmatpush.msra.mxu0 %v2324
  %3045 = vmatpush.msra.mxu0 %v2323
  %3046 = vmatpush.msra.mxu0 %v2322
  %3047 = vmatpush.msra.mxu0 %v2321
  %3048 = vmatpush.msra.mxu0 %v2320
  %3049 = vmatpush.msra.mxu0 %v2319
  %3050 = vmatpush.msra.mxu0 %v2318
  %3051 = vmatpush.msra.mxu0 %v2317
  %3052 = vmatpush.msra.mxu0 %v2316
  %3053 = vmatpush.msra.mxu0 %v2315
  %3054 = vmatpush.msra.mxu0 %v2314
  %3055 = vmatmul.f32.gmra.mxu0 %v1693
  %v3056 = vpop.f32.mrf.mxu0
  %v3057 = vadd.f32 %v2848, %v3056
  %3058 = vmatmul.f32.gmra.mxu0 %v1702
  %v3059 = vpop.f32.mrf.mxu0
  %v3060 = vadd.f32 %v2851, %v3059
  %3061 = vmatmul.f32.gmra.mxu0 %v1711
  %v3062 = vpop.f32.mrf.mxu0
  %v3063 = vadd.f32 %v2854, %v3062
  %3064 = vmatmul.f32.gmra.mxu0 %v1720
  %v3065 = vpop.f32.mrf.mxu0
  %v3066 = vadd.f32 %v2857, %v3065
  %3067 = vmatmul.f32.gmra.mxu0 %v1729
  %v3068 = vpop.f32.mrf.mxu0
  %v3069 = vadd.f32 %v2860, %v3068
  %3070 = vmatmul.f32.gmra.mxu0 %v1738
  %v3071 = vpop.f32.mrf.mxu0
  %v3072 = vadd.f32 %v2863, %v3071
  %3073 = vmatmul.f32.gmra.mxu0 %v1747
  %v3074 = vpop.f32.mrf.mxu0
  %v3075 = vadd.f32 %v2866, %v3074
  %3076 = vmatmul.f32.gmra.mxu0 %v1756
  %v3077 = vpop.f32.mrf.mxu0
  %v3078 = vadd.f32 %v2869, %v3077
  %3079 = vmatmul.f32.gmra.mxu0 %v1765
  %v3080 = vpop.f32.mrf.mxu0
  %v3081 = vadd.f32 %v2872, %v3080
  %3082 = vmatmul.f32.gmra.mxu0 %v1774
  %v3083 = vpop.f32.mrf.mxu0
  %v3084 = vadd.f32 %v2875, %v3083
  %3085 = vmatmul.f32.gmra.mxu0 %v1783
  %v3086 = vpop.f32.mrf.mxu0
  %v3087 = vadd.f32 %v2878, %v3086
  %3088 = vmatmul.f32.gmra.mxu0 %v1792
  %v3089 = vpop.f32.mrf.mxu0
  %v3090 = vadd.f32 %v2881, %v3089
  %3091 = vmatmul.f32.gmra.mxu0 %v1801
  %v3092 = vpop.f32.mrf.mxu0
  %v3093 = vadd.f32 %v2884, %v3092
  %3094 = vmatmul.f32.gmra.mxu0 %v1810
  %v3095 = vpop.f32.mrf.mxu0
  %v3096 = vadd.f32 %v2887, %v3095
  %3097 = vmatmul.f32.gmra.mxu0 %v1819
  %v3098 = vpop.f32.mrf.mxu0
  %v3099 = vadd.f32 %v2890, %v3098
  %3100 = vmatmul.f32.gmra.mxu0 %v1828
  %v3101 = vpop.f32.mrf.mxu0
  %v3102 = vadd.f32 %v2893, %v3101
  %3103 = vmatmul.f32.gmra.mxu0 %v1837
  %v3104 = vpop.f32.mrf.mxu0
  %v3105 = vadd.f32 %v2896, %v3104
  %3106 = vmatmul.f32.gmra.mxu0 %v1846
  %v3107 = vpop.f32.mrf.mxu0
  %v3108 = vadd.f32 %v2899, %v3107
  %3109 = vmatmul.f32.gmra.mxu0 %v1855
  %v3110 = vpop.f32.mrf.mxu0
  %v3111 = vadd.f32 %v2902, %v3110
  %3112 = vmatmul.f32.gmra.mxu0 %v1864
  %v3113 = vpop.f32.mrf.mxu0
  %v3114 = vadd.f32 %v2905, %v3113
  %3115 = vmatmul.f32.gmra.mxu0 %v1873
  %v3116 = vpop.f32.mrf.mxu0
  %v3117 = vadd.f32 %v2908, %v3116
  %3118 = vmatmul.f32.gmra.mxu0 %v1882
  %v3119 = vpop.f32.mrf.mxu0
  %v3120 = vadd.f32 %v2911, %v3119
  %3121 = vmatmul.f32.gmra.mxu0 %v1891
  %v3122 = vpop.f32.mrf.mxu0
  %v3123 = vadd.f32 %v2914, %v3122
  %3124 = vmatmul.f32.gmra.mxu0 %v1900
  %v3125 = vpop.f32.mrf.mxu0
  %v3126 = vadd.f32 %v2917, %v3125
  %3127 = vmatmul.f32.gmra.mxu0 %v1909
  %v3128 = vpop.f32.mrf.mxu0
  %v3129 = vadd.f32 %v2920, %v3128
  %3130 = vmatmul.f32.gmra.mxu0 %v1918
  %v3131 = vpop.f32.mrf.mxu0
  %v3132 = vadd.f32 %v2923, %v3131
  %3133 = vmatmul.f32.gmra.mxu0 %v1927
  %v3134 = vpop.f32.mrf.mxu0
  %v3135 = vadd.f32 %v2926, %v3134
  %3136 = vmatmul.f32.gmra.mxu0 %v1936
  %v3137 = vpop.f32.mrf.mxu0
  %v3138 = vadd.f32 %v2929, %v3137
  %3139 = vmatmul.f32.gmra.mxu0 %v1945
  %v3140 = vpop.f32.mrf.mxu0
  %v3141 = vadd.f32 %v2932, %v3140
  %3142 = vmatmul.f32.gmra.mxu0 %v1954
  %v3143 = vpop.f32.mrf.mxu0
  %v3144 = vadd.f32 %v2935, %v3143
  %3145 = vmatmul.f32.gmra.mxu0 %v1963
  %v3146 = vpop.f32.mrf.mxu0
  %v3147 = vadd.f32 %v2938, %v3146
  %3148 = vmatmul.f32.gmra.mxu0 %v1972
  %v3149 = vpop.f32.mrf.mxu0
  %v3150 = vadd.f32 %v2941, %v3149
  %3151 = vmatmul.f32.gmra.mxu0 %v1981
  %v3152 = vpop.f32.mrf.mxu0
  %v3153 = vadd.f32 %v2944, %v3152
  %3154 = vmatmul.f32.gmra.mxu0 %v1990
  %v3155 = vpop.f32.mrf.mxu0
  %v3156 = vadd.f32 %v2947, %v3155
  %3157 = vmatmul.f32.gmra.mxu0 %v1999
  %v3158 = vpop.f32.mrf.mxu0
  %v3159 = vadd.f32 %v2950, %v3158
  %3160 = vmatmul.f32.gmra.mxu0 %v2008
  %v3161 = vpop.f32.mrf.mxu0
  %v3162 = vadd.f32 %v2953, %v3161
  %3163 = vmatmul.f32.gmra.mxu0 %v2017
  %v3164 = vpop.f32.mrf.mxu0
  %v3165 = vadd.f32 %v2956, %v3164
  %3166 = vmatmul.f32.gmra.mxu0 %v2026
  %v3167 = vpop.f32.mrf.mxu0
  %v3168 = vadd.f32 %v2959, %v3167
  %3169 = vmatmul.f32.gmra.mxu0 %v2035
  %v3170 = vpop.f32.mrf.mxu0
  %v3171 = vadd.f32 %v2962, %v3170
  %3172 = vmatmul.f32.gmra.mxu0 %v2044
  %v3173 = vpop.f32.mrf.mxu0
  %v3174 = vadd.f32 %v2965, %v3173
  %3175 = vmatmul.f32.gmra.mxu0 %v2053
  %v3176 = vpop.f32.mrf.mxu0
  %v3177 = vadd.f32 %v2968, %v3176
  %3178 = vmatmul.f32.gmra.mxu0 %v2062
  %v3179 = vpop.f32.mrf.mxu0
  %v3180 = vadd.f32 %v2971, %v3179
  %3181 = vmatmul.f32.gmra.mxu0 %v2071
  %v3182 = vpop.f32.mrf.mxu0
  %v3183 = vadd.f32 %v2974, %v3182
  %3184 = vmatmul.f32.gmra.mxu0 %v2080
  %v3185 = vpop.f32.mrf.mxu0
  %v3186 = vadd.f32 %v2977, %v3185
  %3187 = vmatmul.f32.gmra.mxu0 %v2089
  %v3188 = vpop.f32.mrf.mxu0
  %v3189 = vadd.f32 %v2980, %v3188
  %3190 = vmatmul.f32.gmra.mxu0 %v2098
  %v3191 = vpop.f32.mrf.mxu0
  %v3192 = vadd.f32 %v2983, %v3191
  %3193 = vmatmul.f32.gmra.mxu0 %v2107
  %v3194 = vpop.f32.mrf.mxu0
  %v3195 = vadd.f32 %v2986, %v3194
  %3196 = vmatmul.f32.gmra.mxu0 %v2116
  %v3197 = vpop.f32.mrf.mxu0
  %v3198 = vadd.f32 %v2989, %v3197
  %3199 = vmatmul.f32.gmra.mxu0 %v2125
  %v3200 = vpop.f32.mrf.mxu0
  %v3201 = vadd.f32 %v2992, %v3200
  %3202 = vmatmul.f32.gmra.mxu0 %v2134
  %v3203 = vpop.f32.mrf.mxu0
  %v3204 = vadd.f32 %v2995, %v3203
  %3205 = vmatmul.f32.gmra.mxu0 %v2143
  %v3206 = vpop.f32.mrf.mxu0
  %v3207 = vadd.f32 %v2998, %v3206
  %3208 = vmatmul.f32.gmra.mxu0 %v2152
  %v3209 = vpop.f32.mrf.mxu0
  %v3210 = vadd.f32 %v3001, %v3209
  %3211 = vmatmul.f32.gmra.mxu0 %v2161
  %v3212 = vpop.f32.mrf.mxu0
  %v3213 = vadd.f32 %v3004, %v3212
  %3214 = vmatmul.f32.gmra.mxu0 %v2170
  %v3215 = vpop.f32.mrf.mxu0
  %v3216 = vadd.f32 %v3007, %v3215
  %3217 = vmatmul.f32.gmra.mxu0 %v2179
  %v3218 = vpop.f32.mrf.mxu0
  %v3219 = vadd.f32 %v3010, %v3218
  %3220 = vmatmul.f32.gmra.mxu0 %v2188
  %v3221 = vpop.f32.mrf.mxu0
  %v3222 = vadd.f32 %v3013, %v3221
  %3223 = vmatmul.f32.gmra.mxu0 %v2197
  %v3224 = vpop.f32.mrf.mxu0
  %v3225 = vadd.f32 %v3016, %v3224
  %3226 = vmatmul.f32.gmra.mxu0 %v2206
  %v3227 = vpop.f32.mrf.mxu0
  %v3228 = vadd.f32 %v3019, %v3227
  %3229 = vmatmul.f32.gmra.mxu0 %v2215
  %v3230 = vpop.f32.mrf.mxu0
  %v3231 = vadd.f32 %v3022, %v3230
  %3232 = vmatmul.f32.gmra.mxu0 %v2224
  %v3233 = vpop.f32.mrf.mxu0
  %v3234 = vadd.f32 %v3025, %v3233
  %3235 = vmatmul.f32.gmra.mxu0 %v2233
  %v3236 = vpop.f32.mrf.mxu0
  %v3237 = vadd.f32 %v3028, %v3236
  %3238 = vmatmul.f32.gmra.mxu0 %v2242
  %v3239 = vpop.f32.mrf.mxu0
  %v3240 = vadd.f32 %v3031, %v3239
  %3241 = vmatmul.f32.gmra.mxu0 %v2251
  %v3242 = vpop.f32.mrf.mxu0
  %v3243 = vadd.f32 %v3034, %v3242
  %3244 = vmatmul.f32.gmra.mxu0 %v2260
  %v3245 = vpop.f32.mrf.mxu0
  %v3246 = vadd.f32 %v3037, %v3245
  %3247 = vdwg.mxu0
  %3248 = vmatpush.msra.mxu0 %v2345
  %3249 = vmatpush.msra.mxu0 %v2344
  %3250 = vmatpush.msra.mxu0 %v2343
  %3251 = vmatpush.msra.mxu0 %v2342
  %3252 = vmatpush.msra.mxu0 %v2341
  %3253 = vmatpush.msra.mxu0 %v2340
  %3254 = vmatpush.msra.mxu0 %v2339
  %3255 = vmatpush.msra.mxu0 %v2338
  %3256 = vmatpush.msra.mxu0 %v2337
  %3257 = vmatpush.msra.mxu0 %v2336
  %3258 = vmatpush.msra.mxu0 %v2335
  %3259 = vmatpush.msra.mxu0 %v2334
  %3260 = vmatpush.msra.mxu0 %v2333
  %3261 = vmatpush.msra.mxu0 %v2332
  %3262 = vmatpush.msra.mxu0 %v2331
  %3263 = vmatpush.msra.mxu0 %v2330
  %3264 = vmatmul.f32.gmra.mxu0 %v1694
  %v3265 = vpop.f32.mrf.mxu0
  %v3266 = vadd.f32 %v3057, %v3265
  %3267 = vmatmul.f32.gmra.mxu0 %v1703
  %v3268 = vpop.f32.mrf.mxu0
  %v3269 = vadd.f32 %v3060, %v3268
  %3270 = vmatmul.f32.gmra.mxu0 %v1712
  %v3271 = vpop.f32.mrf.mxu0
  %v3272 = vadd.f32 %v3063, %v3271
  %3273 = vmatmul.f32.gmra.mxu0 %v1721
  %v3274 = vpop.f32.mrf.mxu0
  %v3275 = vadd.f32 %v3066, %v3274
  %3276 = vmatmul.f32.gmra.mxu0 %v1730
  %v3277 = vpop.f32.mrf.mxu0
  %v3278 = vadd.f32 %v3069, %v3277
  %3279 = vmatmul.f32.gmra.mxu0 %v1739
  %v3280 = vpop.f32.mrf.mxu0
  %v3281 = vadd.f32 %v3072, %v3280
  %3282 = vmatmul.f32.gmra.mxu0 %v1748
  %v3283 = vpop.f32.mrf.mxu0
  %v3284 = vadd.f32 %v3075, %v3283
  %3285 = vmatmul.f32.gmra.mxu0 %v1757
  %v3286 = vpop.f32.mrf.mxu0
  %v3287 = vadd.f32 %v3078, %v3286
  %3288 = vmatmul.f32.gmra.mxu0 %v1766
  %v3289 = vpop.f32.mrf.mxu0
  %v3290 = vadd.f32 %v3081, %v3289
  %3291 = vmatmul.f32.gmra.mxu0 %v1775
  %v3292 = vpop.f32.mrf.mxu0
  %v3293 = vadd.f32 %v3084, %v3292
  %3294 = vmatmul.f32.gmra.mxu0 %v1784
  %v3295 = vpop.f32.mrf.mxu0
  %v3296 = vadd.f32 %v3087, %v3295
  %3297 = vmatmul.f32.gmra.mxu0 %v1793
  %v3298 = vpop.f32.mrf.mxu0
  %v3299 = vadd.f32 %v3090, %v3298
  %3300 = vmatmul.f32.gmra.mxu0 %v1802
  %v3301 = vpop.f32.mrf.mxu0
  %v3302 = vadd.f32 %v3093, %v3301
  %3303 = vmatmul.f32.gmra.mxu0 %v1811
  %v3304 = vpop.f32.mrf.mxu0
  %v3305 = vadd.f32 %v3096, %v3304
  %3306 = vmatmul.f32.gmra.mxu0 %v1820
  %v3307 = vpop.f32.mrf.mxu0
  %v3308 = vadd.f32 %v3099, %v3307
  %3309 = vmatmul.f32.gmra.mxu0 %v1829
  %v3310 = vpop.f32.mrf.mxu0
  %v3311 = vadd.f32 %v3102, %v3310
  %3312 = vmatmul.f32.gmra.mxu0 %v1838
  %v3313 = vpop.f32.mrf.mxu0
  %v3314 = vadd.f32 %v3105, %v3313
  %3315 = vmatmul.f32.gmra.mxu0 %v1847
  %v3316 = vpop.f32.mrf.mxu0
  %v3317 = vadd.f32 %v3108, %v3316
  %3318 = vmatmul.f32.gmra.mxu0 %v1856
  %v3319 = vpop.f32.mrf.mxu0
  %v3320 = vadd.f32 %v3111, %v3319
  %3321 = vmatmul.f32.gmra.mxu0 %v1865
  %v3322 = vpop.f32.mrf.mxu0
  %v3323 = vadd.f32 %v3114, %v3322
  %3324 = vmatmul.f32.gmra.mxu0 %v1874
  %v3325 = vpop.f32.mrf.mxu0
  %v3326 = vadd.f32 %v3117, %v3325
  %3327 = vmatmul.f32.gmra.mxu0 %v1883
  %v3328 = vpop.f32.mrf.mxu0
  %v3329 = vadd.f32 %v3120, %v3328
  %3330 = vmatmul.f32.gmra.mxu0 %v1892
  %v3331 = vpop.f32.mrf.mxu0
  %v3332 = vadd.f32 %v3123, %v3331
  %3333 = vmatmul.f32.gmra.mxu0 %v1901
  %v3334 = vpop.f32.mrf.mxu0
  %v3335 = vadd.f32 %v3126, %v3334
  %3336 = vmatmul.f32.gmra.mxu0 %v1910
  %v3337 = vpop.f32.mrf.mxu0
  %v3338 = vadd.f32 %v3129, %v3337
  %3339 = vmatmul.f32.gmra.mxu0 %v1919
  %v3340 = vpop.f32.mrf.mxu0
  %v3341 = vadd.f32 %v3132, %v3340
  %3342 = vmatmul.f32.gmra.mxu0 %v1928
  %v3343 = vpop.f32.mrf.mxu0
  %v3344 = vadd.f32 %v3135, %v3343
  %3345 = vmatmul.f32.gmra.mxu0 %v1937
  %v3346 = vpop.f32.mrf.mxu0
  %v3347 = vadd.f32 %v3138, %v3346
  %3348 = vmatmul.f32.gmra.mxu0 %v1946
  %v3349 = vpop.f32.mrf.mxu0
  %v3350 = vadd.f32 %v3141, %v3349
  %3351 = vmatmul.f32.gmra.mxu0 %v1955
  %v3352 = vpop.f32.mrf.mxu0
  %v3353 = vadd.f32 %v3144, %v3352
  %3354 = vmatmul.f32.gmra.mxu0 %v1964
  %v3355 = vpop.f32.mrf.mxu0
  %v3356 = vadd.f32 %v3147, %v3355
  %3357 = vmatmul.f32.gmra.mxu0 %v1973
  %v3358 = vpop.f32.mrf.mxu0
  %v3359 = vadd.f32 %v3150, %v3358
  %3360 = vmatmul.f32.gmra.mxu0 %v1982
  %v3361 = vpop.f32.mrf.mxu0
  %v3362 = vadd.f32 %v3153, %v3361
  %3363 = vmatmul.f32.gmra.mxu0 %v1991
  %v3364 = vpop.f32.mrf.mxu0
  %v3365 = vadd.f32 %v3156, %v3364
  %3366 = vmatmul.f32.gmra.mxu0 %v2000
  %v3367 = vpop.f32.mrf.mxu0
  %v3368 = vadd.f32 %v3159, %v3367
  %3369 = vmatmul.f32.gmra.mxu0 %v2009
  %v3370 = vpop.f32.mrf.mxu0
  %v3371 = vadd.f32 %v3162, %v3370
  %3372 = vmatmul.f32.gmra.mxu0 %v2018
  %v3373 = vpop.f32.mrf.mxu0
  %v3374 = vadd.f32 %v3165, %v3373
  %3375 = vmatmul.f32.gmra.mxu0 %v2027
  %v3376 = vpop.f32.mrf.mxu0
  %v3377 = vadd.f32 %v3168, %v3376
  %3378 = vmatmul.f32.gmra.mxu0 %v2036
  %v3379 = vpop.f32.mrf.mxu0
  %v3380 = vadd.f32 %v3171, %v3379
  %3381 = vmatmul.f32.gmra.mxu0 %v2045
  %v3382 = vpop.f32.mrf.mxu0
  %v3383 = vadd.f32 %v3174, %v3382
  %3384 = vmatmul.f32.gmra.mxu0 %v2054
  %v3385 = vpop.f32.mrf.mxu0
  %v3386 = vadd.f32 %v3177, %v3385
  %3387 = vmatmul.f32.gmra.mxu0 %v2063
  %v3388 = vpop.f32.mrf.mxu0
  %v3389 = vadd.f32 %v3180, %v3388
  %3390 = vmatmul.f32.gmra.mxu0 %v2072
  %v3391 = vpop.f32.mrf.mxu0
  %v3392 = vadd.f32 %v3183, %v3391
  %3393 = vmatmul.f32.gmra.mxu0 %v2081
  %v3394 = vpop.f32.mrf.mxu0
  %v3395 = vadd.f32 %v3186, %v3394
  %3396 = vmatmul.f32.gmra.mxu0 %v2090
  %v3397 = vpop.f32.mrf.mxu0
  %v3398 = vadd.f32 %v3189, %v3397
  %3399 = vmatmul.f32.gmra.mxu0 %v2099
  %v3400 = vpop.f32.mrf.mxu0
  %v3401 = vadd.f32 %v3192, %v3400
  %3402 = vmatmul.f32.gmra.mxu0 %v2108
  %v3403 = vpop.f32.mrf.mxu0
  %v3404 = vadd.f32 %v3195, %v3403
  %3405 = vmatmul.f32.gmra.mxu0 %v2117
  %v3406 = vpop.f32.mrf.mxu0
  %v3407 = vadd.f32 %v3198, %v3406
  %3408 = vmatmul.f32.gmra.mxu0 %v2126
  %v3409 = vpop.f32.mrf.mxu0
  %v3410 = vadd.f32 %v3201, %v3409
  %3411 = vmatmul.f32.gmra.mxu0 %v2135
  %v3412 = vpop.f32.mrf.mxu0
  %v3413 = vadd.f32 %v3204, %v3412
  %3414 = vmatmul.f32.gmra.mxu0 %v2144
  %v3415 = vpop.f32.mrf.mxu0
  %v3416 = vadd.f32 %v3207, %v3415
  %3417 = vmatmul.f32.gmra.mxu0 %v2153
  %v3418 = vpop.f32.mrf.mxu0
  %v3419 = vadd.f32 %v3210, %v3418
  %3420 = vmatmul.f32.gmra.mxu0 %v2162
  %v3421 = vpop.f32.mrf.mxu0
  %v3422 = vadd.f32 %v3213, %v3421
  %3423 = vmatmul.f32.gmra.mxu0 %v2171
  %v3424 = vpop.f32.mrf.mxu0
  %v3425 = vadd.f32 %v3216, %v3424
  %3426 = vmatmul.f32.gmra.mxu0 %v2180
  %v3427 = vpop.f32.mrf.mxu0
  %v3428 = vadd.f32 %v3219, %v3427
  %3429 = vmatmul.f32.gmra.mxu0 %v2189
  %v3430 = vpop.f32.mrf.mxu0
  %v3431 = vadd.f32 %v3222, %v3430
  %3432 = vmatmul.f32.gmra.mxu0 %v2198
  %v3433 = vpop.f32.mrf.mxu0
  %v3434 = vadd.f32 %v3225, %v3433
  %3435 = vmatmul.f32.gmra.mxu0 %v2207
  %v3436 = vpop.f32.mrf.mxu0
  %v3437 = vadd.f32 %v3228, %v3436
  %3438 = vmatmul.f32.gmra.mxu0 %v2216
  %v3439 = vpop.f32.mrf.mxu0
  %v3440 = vadd.f32 %v3231, %v3439
  %3441 = vmatmul.f32.gmra.mxu0 %v2225
  %v3442 = vpop.f32.mrf.mxu0
  %v3443 = vadd.f32 %v3234, %v3442
  %3444 = vmatmul.f32.gmra.mxu0 %v2234
  %v3445 = vpop.f32.mrf.mxu0
  %v3446 = vadd.f32 %v3237, %v3445
  %3447 = vmatmul.f32.gmra.mxu0 %v2243
  %v3448 = vpop.f32.mrf.mxu0
  %v3449 = vadd.f32 %v3240, %v3448
  %3450 = vmatmul.f32.gmra.mxu0 %v2252
  %v3451 = vpop.f32.mrf.mxu0
  %v3452 = vadd.f32 %v3243, %v3451
  %3453 = vmatmul.f32.gmra.mxu0 %v2261
  %v3454 = vpop.f32.mrf.mxu0
  %v3455 = vadd.f32 %v3246, %v3454
  %3456 = vdwg.mxu0
  %3457 = vmatpush.msra.mxu0 %v2361
  %3458 = vmatpush.msra.mxu0 %v2360
  %3459 = vmatpush.msra.mxu0 %v2359
  %3460 = vmatpush.msra.mxu0 %v2358
  %3461 = vmatpush.msra.mxu0 %v2357
  %3462 = vmatpush.msra.mxu0 %v2356
  %3463 = vmatpush.msra.mxu0 %v2355
  %3464 = vmatpush.msra.mxu0 %v2354
  %3465 = vmatpush.msra.mxu0 %v2353
  %3466 = vmatpush.msra.mxu0 %v2352
  %3467 = vmatpush.msra.mxu0 %v2351
  %3468 = vmatpush.msra.mxu0 %v2350
  %3469 = vmatpush.msra.mxu0 %v2349
  %3470 = vmatpush.msra.mxu0 %v2348
  %3471 = vmatpush.msra.mxu0 %v2347
  %3472 = vmatpush.msra.mxu0 %v2346
  %3473 = vmatmul.f32.gmra.mxu0 %v1695
  %v3474 = vpop.f32.mrf.mxu0
  %v3475 = vadd.f32 %v3266, %v3474
  %3476 = vmatmul.f32.gmra.mxu0 %v1704
  %v3477 = vpop.f32.mrf.mxu0
  %v3478 = vadd.f32 %v3269, %v3477
  %3479 = vmatmul.f32.gmra.mxu0 %v1713
  %v3480 = vpop.f32.mrf.mxu0
  %v3481 = vadd.f32 %v3272, %v3480
  %3482 = vmatmul.f32.gmra.mxu0 %v1722
  %v3483 = vpop.f32.mrf.mxu0
  %v3484 = vadd.f32 %v3275, %v3483
  %3485 = vmatmul.f32.gmra.mxu0 %v1731
  %v3486 = vpop.f32.mrf.mxu0
  %v3487 = vadd.f32 %v3278, %v3486
  %3488 = vmatmul.f32.gmra.mxu0 %v1740
  %v3489 = vpop.f32.mrf.mxu0
  %v3490 = vadd.f32 %v3281, %v3489
  %3491 = vmatmul.f32.gmra.mxu0 %v1749
  %v3492 = vpop.f32.mrf.mxu0
  %v3493 = vadd.f32 %v3284, %v3492
  %3494 = vmatmul.f32.gmra.mxu0 %v1758
  %v3495 = vpop.f32.mrf.mxu0
  %v3496 = vadd.f32 %v3287, %v3495
  %3497 = vmatmul.f32.gmra.mxu0 %v1767
  %v3498 = vpop.f32.mrf.mxu0
  %v3499 = vadd.f32 %v3290, %v3498
  %3500 = vmatmul.f32.gmra.mxu0 %v1776
  %v3501 = vpop.f32.mrf.mxu0
  %v3502 = vadd.f32 %v3293, %v3501
  %3503 = vmatmul.f32.gmra.mxu0 %v1785
  %v3504 = vpop.f32.mrf.mxu0
  %v3505 = vadd.f32 %v3296, %v3504
  %3506 = vmatmul.f32.gmra.mxu0 %v1794
  %v3507 = vpop.f32.mrf.mxu0
  %v3508 = vadd.f32 %v3299, %v3507
  %3509 = vmatmul.f32.gmra.mxu0 %v1803
  %v3510 = vpop.f32.mrf.mxu0
  %v3511 = vadd.f32 %v3302, %v3510
  %3512 = vmatmul.f32.gmra.mxu0 %v1812
  %v3513 = vpop.f32.mrf.mxu0
  %v3514 = vadd.f32 %v3305, %v3513
  %3515 = vmatmul.f32.gmra.mxu0 %v1821
  %v3516 = vpop.f32.mrf.mxu0
  %v3517 = vadd.f32 %v3308, %v3516
  %3518 = vmatmul.f32.gmra.mxu0 %v1830
  %v3519 = vpop.f32.mrf.mxu0
  %v3520 = vadd.f32 %v3311, %v3519
  %3521 = vmatmul.f32.gmra.mxu0 %v1839
  %v3522 = vpop.f32.mrf.mxu0
  %v3523 = vadd.f32 %v3314, %v3522
  %3524 = vmatmul.f32.gmra.mxu0 %v1848
  %v3525 = vpop.f32.mrf.mxu0
  %v3526 = vadd.f32 %v3317, %v3525
  %3527 = vmatmul.f32.gmra.mxu0 %v1857
  %v3528 = vpop.f32.mrf.mxu0
  %v3529 = vadd.f32 %v3320, %v3528
  %3530 = vmatmul.f32.gmra.mxu0 %v1866
  %v3531 = vpop.f32.mrf.mxu0
  %v3532 = vadd.f32 %v3323, %v3531
  %3533 = vmatmul.f32.gmra.mxu0 %v1875
  %v3534 = vpop.f32.mrf.mxu0
  %v3535 = vadd.f32 %v3326, %v3534
  %3536 = vmatmul.f32.gmra.mxu0 %v1884
  %v3537 = vpop.f32.mrf.mxu0
  %v3538 = vadd.f32 %v3329, %v3537
  %3539 = vmatmul.f32.gmra.mxu0 %v1893
  %v3540 = vpop.f32.mrf.mxu0
  %v3541 = vadd.f32 %v3332, %v3540
  %3542 = vmatmul.f32.gmra.mxu0 %v1902
  %v3543 = vpop.f32.mrf.mxu0
  %v3544 = vadd.f32 %v3335, %v3543
  %3545 = vmatmul.f32.gmra.mxu0 %v1911
  %v3546 = vpop.f32.mrf.mxu0
  %v3547 = vadd.f32 %v3338, %v3546
  %3548 = vmatmul.f32.gmra.mxu0 %v1920
  %v3549 = vpop.f32.mrf.mxu0
  %v3550 = vadd.f32 %v3341, %v3549
  %3551 = vmatmul.f32.gmra.mxu0 %v1929
  %v3552 = vpop.f32.mrf.mxu0
  %v3553 = vadd.f32 %v3344, %v3552
  %3554 = vmatmul.f32.gmra.mxu0 %v1938
  %v3555 = vpop.f32.mrf.mxu0
  %v3556 = vadd.f32 %v3347, %v3555
  %3557 = vmatmul.f32.gmra.mxu0 %v1947
  %v3558 = vpop.f32.mrf.mxu0
  %v3559 = vadd.f32 %v3350, %v3558
  %3560 = vmatmul.f32.gmra.mxu0 %v1956
  %v3561 = vpop.f32.mrf.mxu0
  %v3562 = vadd.f32 %v3353, %v3561
  %3563 = vmatmul.f32.gmra.mxu0 %v1965
  %v3564 = vpop.f32.mrf.mxu0
  %v3565 = vadd.f32 %v3356, %v3564
  %3566 = vmatmul.f32.gmra.mxu0 %v1974
  %v3567 = vpop.f32.mrf.mxu0
  %v3568 = vadd.f32 %v3359, %v3567
  %3569 = vmatmul.f32.gmra.mxu0 %v1983
  %v3570 = vpop.f32.mrf.mxu0
  %v3571 = vadd.f32 %v3362, %v3570
  %3572 = vmatmul.f32.gmra.mxu0 %v1992
  %v3573 = vpop.f32.mrf.mxu0
  %v3574 = vadd.f32 %v3365, %v3573
  %3575 = vmatmul.f32.gmra.mxu0 %v2001
  %v3576 = vpop.f32.mrf.mxu0
  %v3577 = vadd.f32 %v3368, %v3576
  %3578 = vmatmul.f32.gmra.mxu0 %v2010
  %v3579 = vpop.f32.mrf.mxu0
  %v3580 = vadd.f32 %v3371, %v3579
  %3581 = vmatmul.f32.gmra.mxu0 %v2019
  %v3582 = vpop.f32.mrf.mxu0
  %v3583 = vadd.f32 %v3374, %v3582
  %3584 = vmatmul.f32.gmra.mxu0 %v2028
  %v3585 = vpop.f32.mrf.mxu0
  %v3586 = vadd.f32 %v3377, %v3585
  %3587 = vmatmul.f32.gmra.mxu0 %v2037
  %v3588 = vpop.f32.mrf.mxu0
  %v3589 = vadd.f32 %v3380, %v3588
  %3590 = vmatmul.f32.gmra.mxu0 %v2046
  %v3591 = vpop.f32.mrf.mxu0
  %v3592 = vadd.f32 %v3383, %v3591
  %3593 = vmatmul.f32.gmra.mxu0 %v2055
  %v3594 = vpop.f32.mrf.mxu0
  %v3595 = vadd.f32 %v3386, %v3594
  %3596 = vmatmul.f32.gmra.mxu0 %v2064
  %v3597 = vpop.f32.mrf.mxu0
  %v3598 = vadd.f32 %v3389, %v3597
  %3599 = vmatmul.f32.gmra.mxu0 %v2073
  %v3600 = vpop.f32.mrf.mxu0
  %v3601 = vadd.f32 %v3392, %v3600
  %3602 = vmatmul.f32.gmra.mxu0 %v2082
  %v3603 = vpop.f32.mrf.mxu0
  %v3604 = vadd.f32 %v3395, %v3603
  %3605 = vmatmul.f32.gmra.mxu0 %v2091
  %v3606 = vpop.f32.mrf.mxu0
  %v3607 = vadd.f32 %v3398, %v3606
  %3608 = vmatmul.f32.gmra.mxu0 %v2100
  %v3609 = vpop.f32.mrf.mxu0
  %v3610 = vadd.f32 %v3401, %v3609
  %3611 = vmatmul.f32.gmra.mxu0 %v2109
  %v3612 = vpop.f32.mrf.mxu0
  %v3613 = vadd.f32 %v3404, %v3612
  %3614 = vmatmul.f32.gmra.mxu0 %v2118
  %v3615 = vpop.f32.mrf.mxu0
  %v3616 = vadd.f32 %v3407, %v3615
  %3617 = vmatmul.f32.gmra.mxu0 %v2127
  %v3618 = vpop.f32.mrf.mxu0
  %v3619 = vadd.f32 %v3410, %v3618
  %3620 = vmatmul.f32.gmra.mxu0 %v2136
  %v3621 = vpop.f32.mrf.mxu0
  %v3622 = vadd.f32 %v3413, %v3621
  %3623 = vmatmul.f32.gmra.mxu0 %v2145
  %v3624 = vpop.f32.mrf.mxu0
  %v3625 = vadd.f32 %v3416, %v3624
  %3626 = vmatmul.f32.gmra.mxu0 %v2154
  %v3627 = vpop.f32.mrf.mxu0
  %v3628 = vadd.f32 %v3419, %v3627
  %3629 = vmatmul.f32.gmra.mxu0 %v2163
  %v3630 = vpop.f32.mrf.mxu0
  %v3631 = vadd.f32 %v3422, %v3630
  %3632 = vmatmul.f32.gmra.mxu0 %v2172
  %v3633 = vpop.f32.mrf.mxu0
  %v3634 = vadd.f32 %v3425, %v3633
  %3635 = vmatmul.f32.gmra.mxu0 %v2181
  %v3636 = vpop.f32.mrf.mxu0
  %v3637 = vadd.f32 %v3428, %v3636
  %3638 = vmatmul.f32.gmra.mxu0 %v2190
  %v3639 = vpop.f32.mrf.mxu0
  %v3640 = vadd.f32 %v3431, %v3639
  %3641 = vmatmul.f32.gmra.mxu0 %v2199
  %v3642 = vpop.f32.mrf.mxu0
  %v3643 = vadd.f32 %v3434, %v3642
  %3644 = vmatmul.f32.gmra.mxu0 %v2208
  %v3645 = vpop.f32.mrf.mxu0
  %v3646 = vadd.f32 %v3437, %v3645
  %3647 = vmatmul.f32.gmra.mxu0 %v2217
  %v3648 = vpop.f32.mrf.mxu0
  %v3649 = vadd.f32 %v3440, %v3648
  %3650 = vmatmul.f32.gmra.mxu0 %v2226
  %v3651 = vpop.f32.mrf.mxu0
  %v3652 = vadd.f32 %v3443, %v3651
  %3653 = vmatmul.f32.gmra.mxu0 %v2235
  %v3654 = vpop.f32.mrf.mxu0
  %v3655 = vadd.f32 %v3446, %v3654
  %3656 = vmatmul.f32.gmra.mxu0 %v2244
  %v3657 = vpop.f32.mrf.mxu0
  %v3658 = vadd.f32 %v3449, %v3657
  %3659 = vmatmul.f32.gmra.mxu0 %v2253
  %v3660 = vpop.f32.mrf.mxu0
  %v3661 = vadd.f32 %v3452, %v3660
  %3662 = vmatmul.f32.gmra.mxu0 %v2262
  %v3663 = vpop.f32.mrf.mxu0
  %v3664 = vadd.f32 %v3455, %v3663
  %3665 = vdwg.mxu0
  %3666 = vmatpush.msra.mxu0 %v2377
  %3667 = vmatpush.msra.mxu0 %v2376
  %3668 = vmatpush.msra.mxu0 %v2375
  %3669 = vmatpush.msra.mxu0 %v2374
  %3670 = vmatpush.msra.mxu0 %v2373
  %3671 = vmatpush.msra.mxu0 %v2372
  %3672 = vmatpush.msra.mxu0 %v2371
  %3673 = vmatpush.msra.mxu0 %v2370
  %3674 = vmatpush.msra.mxu0 %v2369
  %3675 = vmatpush.msra.mxu0 %v2368
  %3676 = vmatpush.msra.mxu0 %v2367
  %3677 = vmatpush.msra.mxu0 %v2366
  %3678 = vmatpush.msra.mxu0 %v2365
  %3679 = vmatpush.msra.mxu0 %v2364
  %3680 = vmatpush.msra.mxu0 %v2363
  %3681 = vmatpush.msra.mxu0 %v2362
  %3682 = vmatmul.f32.gmra.mxu0 %v1696
  %v3683 = vpop.f32.mrf.mxu0
  %v3684 = vadd.f32 %v3475, %v3683
  %3685 = vmatmul.f32.gmra.mxu0 %v1705
  %v3686 = vpop.f32.mrf.mxu0
  %v3687 = vadd.f32 %v3478, %v3686
  %3688 = vmatmul.f32.gmra.mxu0 %v1714
  %v3689 = vpop.f32.mrf.mxu0
  %v3690 = vadd.f32 %v3481, %v3689
  %3691 = vmatmul.f32.gmra.mxu0 %v1723
  %v3692 = vpop.f32.mrf.mxu0
  %v3693 = vadd.f32 %v3484, %v3692
  %3694 = vmatmul.f32.gmra.mxu0 %v1732
  %v3695 = vpop.f32.mrf.mxu0
  %v3696 = vadd.f32 %v3487, %v3695
  %3697 = vmatmul.f32.gmra.mxu0 %v1741
  %v3698 = vpop.f32.mrf.mxu0
  %v3699 = vadd.f32 %v3490, %v3698
  %3700 = vmatmul.f32.gmra.mxu0 %v1750
  %v3701 = vpop.f32.mrf.mxu0
  %v3702 = vadd.f32 %v3493, %v3701
  %3703 = vmatmul.f32.gmra.mxu0 %v1759
  %v3704 = vpop.f32.mrf.mxu0
  %v3705 = vadd.f32 %v3496, %v3704
  %3706 = vmatmul.f32.gmra.mxu0 %v1768
  %v3707 = vpop.f32.mrf.mxu0
  %v3708 = vadd.f32 %v3499, %v3707
  %3709 = vmatmul.f32.gmra.mxu0 %v1777
  %v3710 = vpop.f32.mrf.mxu0
  %v3711 = vadd.f32 %v3502, %v3710
  %3712 = vmatmul.f32.gmra.mxu0 %v1786
  %v3713 = vpop.f32.mrf.mxu0
  %v3714 = vadd.f32 %v3505, %v3713
  %3715 = vmatmul.f32.gmra.mxu0 %v1795
  %v3716 = vpop.f32.mrf.mxu0
  %v3717 = vadd.f32 %v3508, %v3716
  %3718 = vmatmul.f32.gmra.mxu0 %v1804
  %v3719 = vpop.f32.mrf.mxu0
  %v3720 = vadd.f32 %v3511, %v3719
  %3721 = vmatmul.f32.gmra.mxu0 %v1813
  %v3722 = vpop.f32.mrf.mxu0
  %v3723 = vadd.f32 %v3514, %v3722
  %3724 = vmatmul.f32.gmra.mxu0 %v1822
  %v3725 = vpop.f32.mrf.mxu0
  %v3726 = vadd.f32 %v3517, %v3725
  %3727 = vmatmul.f32.gmra.mxu0 %v1831
  %v3728 = vpop.f32.mrf.mxu0
  %v3729 = vadd.f32 %v3520, %v3728
  %3730 = vmatmul.f32.gmra.mxu0 %v1840
  %v3731 = vpop.f32.mrf.mxu0
  %v3732 = vadd.f32 %v3523, %v3731
  %3733 = vmatmul.f32.gmra.mxu0 %v1849
  %v3734 = vpop.f32.mrf.mxu0
  %v3735 = vadd.f32 %v3526, %v3734
  %3736 = vmatmul.f32.gmra.mxu0 %v1858
  %v3737 = vpop.f32.mrf.mxu0
  %v3738 = vadd.f32 %v3529, %v3737
  %3739 = vmatmul.f32.gmra.mxu0 %v1867
  %v3740 = vpop.f32.mrf.mxu0
  %v3741 = vadd.f32 %v3532, %v3740
  %3742 = vmatmul.f32.gmra.mxu0 %v1876
  %v3743 = vpop.f32.mrf.mxu0
  %v3744 = vadd.f32 %v3535, %v3743
  %3745 = vmatmul.f32.gmra.mxu0 %v1885
  %v3746 = vpop.f32.mrf.mxu0
  %v3747 = vadd.f32 %v3538, %v3746
  %3748 = vmatmul.f32.gmra.mxu0 %v1894
  %v3749 = vpop.f32.mrf.mxu0
  %v3750 = vadd.f32 %v3541, %v3749
  %3751 = vmatmul.f32.gmra.mxu0 %v1903
  %v3752 = vpop.f32.mrf.mxu0
  %v3753 = vadd.f32 %v3544, %v3752
  %3754 = vmatmul.f32.gmra.mxu0 %v1912
  %v3755 = vpop.f32.mrf.mxu0
  %v3756 = vadd.f32 %v3547, %v3755
  %3757 = vmatmul.f32.gmra.mxu0 %v1921
  %v3758 = vpop.f32.mrf.mxu0
  %v3759 = vadd.f32 %v3550, %v3758
  %3760 = vmatmul.f32.gmra.mxu0 %v1930
  %v3761 = vpop.f32.mrf.mxu0
  %v3762 = vadd.f32 %v3553, %v3761
  %3763 = vmatmul.f32.gmra.mxu0 %v1939
  %v3764 = vpop.f32.mrf.mxu0
  %v3765 = vadd.f32 %v3556, %v3764
  %3766 = vmatmul.f32.gmra.mxu0 %v1948
  %v3767 = vpop.f32.mrf.mxu0
  %v3768 = vadd.f32 %v3559, %v3767
  %3769 = vmatmul.f32.gmra.mxu0 %v1957
  %v3770 = vpop.f32.mrf.mxu0
  %v3771 = vadd.f32 %v3562, %v3770
  %3772 = vmatmul.f32.gmra.mxu0 %v1966
  %v3773 = vpop.f32.mrf.mxu0
  %v3774 = vadd.f32 %v3565, %v3773
  %3775 = vmatmul.f32.gmra.mxu0 %v1975
  %v3776 = vpop.f32.mrf.mxu0
  %v3777 = vadd.f32 %v3568, %v3776
  %3778 = vmatmul.f32.gmra.mxu0 %v1984
  %v3779 = vpop.f32.mrf.mxu0
  %v3780 = vadd.f32 %v3571, %v3779
  %3781 = vmatmul.f32.gmra.mxu0 %v1993
  %v3782 = vpop.f32.mrf.mxu0
  %v3783 = vadd.f32 %v3574, %v3782
  %3784 = vmatmul.f32.gmra.mxu0 %v2002
  %v3785 = vpop.f32.mrf.mxu0
  %v3786 = vadd.f32 %v3577, %v3785
  %3787 = vmatmul.f32.gmra.mxu0 %v2011
  %v3788 = vpop.f32.mrf.mxu0
  %v3789 = vadd.f32 %v3580, %v3788
  %3790 = vmatmul.f32.gmra.mxu0 %v2020
  %v3791 = vpop.f32.mrf.mxu0
  %v3792 = vadd.f32 %v3583, %v3791
  %3793 = vmatmul.f32.gmra.mxu0 %v2029
  %v3794 = vpop.f32.mrf.mxu0
  %v3795 = vadd.f32 %v3586, %v3794
  %3796 = vmatmul.f32.gmra.mxu0 %v2038
  %v3797 = vpop.f32.mrf.mxu0
  %v3798 = vadd.f32 %v3589, %v3797
  %3799 = vmatmul.f32.gmra.mxu0 %v2047
  %v3800 = vpop.f32.mrf.mxu0
  %v3801 = vadd.f32 %v3592, %v3800
  %3802 = vmatmul.f32.gmra.mxu0 %v2056
  %v3803 = vpop.f32.mrf.mxu0
  %v3804 = vadd.f32 %v3595, %v3803
  %3805 = vmatmul.f32.gmra.mxu0 %v2065
  %v3806 = vpop.f32.mrf.mxu0
  %v3807 = vadd.f32 %v3598, %v3806
  %3808 = vmatmul.f32.gmra.mxu0 %v2074
  %v3809 = vpop.f32.mrf.mxu0
  %v3810 = vadd.f32 %v3601, %v3809
  %3811 = vmatmul.f32.gmra.mxu0 %v2083
  %v3812 = vpop.f32.mrf.mxu0
  %v3813 = vadd.f32 %v3604, %v3812
  %3814 = vmatmul.f32.gmra.mxu0 %v2092
  %v3815 = vpop.f32.mrf.mxu0
  %v3816 = vadd.f32 %v3607, %v3815
  %3817 = vmatmul.f32.gmra.mxu0 %v2101
  %v3818 = vpop.f32.mrf.mxu0
  %v3819 = vadd.f32 %v3610, %v3818
  %3820 = vmatmul.f32.gmra.mxu0 %v2110
  %v3821 = vpop.f32.mrf.mxu0
  %v3822 = vadd.f32 %v3613, %v3821
  %3823 = vmatmul.f32.gmra.mxu0 %v2119
  %v3824 = vpop.f32.mrf.mxu0
  %v3825 = vadd.f32 %v3616, %v3824
  %3826 = vmatmul.f32.gmra.mxu0 %v2128
  %v3827 = vpop.f32.mrf.mxu0
  %v3828 = vadd.f32 %v3619, %v3827
  %3829 = vmatmul.f32.gmra.mxu0 %v2137
  %v3830 = vpop.f32.mrf.mxu0
  %v3831 = vadd.f32 %v3622, %v3830
  %3832 = vmatmul.f32.gmra.mxu0 %v2146
  %v3833 = vpop.f32.mrf.mxu0
  %v3834 = vadd.f32 %v3625, %v3833
  %3835 = vmatmul.f32.gmra.mxu0 %v2155
  %v3836 = vpop.f32.mrf.mxu0
  %v3837 = vadd.f32 %v3628, %v3836
  %3838 = vmatmul.f32.gmra.mxu0 %v2164
  %v3839 = vpop.f32.mrf.mxu0
  %v3840 = vadd.f32 %v3631, %v3839
  %3841 = vmatmul.f32.gmra.mxu0 %v2173
  %v3842 = vpop.f32.mrf.mxu0
  %v3843 = vadd.f32 %v3634, %v3842
  %3844 = vmatmul.f32.gmra.mxu0 %v2182
  %v3845 = vpop.f32.mrf.mxu0
  %v3846 = vadd.f32 %v3637, %v3845
  %3847 = vmatmul.f32.gmra.mxu0 %v2191
  %v3848 = vpop.f32.mrf.mxu0
  %v3849 = vadd.f32 %v3640, %v3848
  %3850 = vmatmul.f32.gmra.mxu0 %v2200
  %v3851 = vpop.f32.mrf.mxu0
  %v3852 = vadd.f32 %v3643, %v3851
  %3853 = vmatmul.f32.gmra.mxu0 %v2209
  %v3854 = vpop.f32.mrf.mxu0
  %v3855 = vadd.f32 %v3646, %v3854
  %3856 = vmatmul.f32.gmra.mxu0 %v2218
  %v3857 = vpop.f32.mrf.mxu0
  %v3858 = vadd.f32 %v3649, %v3857
  %3859 = vmatmul.f32.gmra.mxu0 %v2227
  %v3860 = vpop.f32.mrf.mxu0
  %v3861 = vadd.f32 %v3652, %v3860
  %3862 = vmatmul.f32.gmra.mxu0 %v2236
  %v3863 = vpop.f32.mrf.mxu0
  %v3864 = vadd.f32 %v3655, %v3863
  %3865 = vmatmul.f32.gmra.mxu0 %v2245
  %v3866 = vpop.f32.mrf.mxu0
  %v3867 = vadd.f32 %v3658, %v3866
  %3868 = vmatmul.f32.gmra.mxu0 %v2254
  %v3869 = vpop.f32.mrf.mxu0
  %v3870 = vadd.f32 %v3661, %v3869
  %3871 = vmatmul.f32.gmra.mxu0 %v2263
  %v3872 = vpop.f32.mrf.mxu0
  %v3873 = vadd.f32 %v3664, %v3872
  %3874 = vdwg.mxu0
  %3875 = vmatpush.msra.mxu0 %v2393
  %3876 = vmatpush.msra.mxu0 %v2392
  %3877 = vmatpush.msra.mxu0 %v2391
  %3878 = vmatpush.msra.mxu0 %v2390
  %3879 = vmatpush.msra.mxu0 %v2389
  %3880 = vmatpush.msra.mxu0 %v2388
  %3881 = vmatpush.msra.mxu0 %v2387
  %3882 = vmatpush.msra.mxu0 %v2386
  %3883 = vmatpush.msra.mxu0 %v2385
  %3884 = vmatpush.msra.mxu0 %v2384
  %3885 = vmatpush.msra.mxu0 %v2383
  %3886 = vmatpush.msra.mxu0 %v2382
  %3887 = vmatpush.msra.mxu0 %v2381
  %3888 = vmatpush.msra.mxu0 %v2380
  %3889 = vmatpush.msra.mxu0 %v2379
  %3890 = vmatpush.msra.mxu0 %v2378
  %3891 = vmatmul.f32.gmra.mxu0 %v1697
  %v3892 = vpop.f32.mrf.mxu0
  %v3893 = vadd.f32 %v3684, %v3892
  %3894 = vmatmul.f32.gmra.mxu0 %v1706
  %v3895 = vpop.f32.mrf.mxu0
  %v3896 = vadd.f32 %v3687, %v3895
  %3897 = vmatmul.f32.gmra.mxu0 %v1715
  %v3898 = vpop.f32.mrf.mxu0
  %v3899 = vadd.f32 %v3690, %v3898
  %3900 = vmatmul.f32.gmra.mxu0 %v1724
  %v3901 = vpop.f32.mrf.mxu0
  %v3902 = vadd.f32 %v3693, %v3901
  %3903 = vmatmul.f32.gmra.mxu0 %v1733
  %v3904 = vpop.f32.mrf.mxu0
  %v3905 = vadd.f32 %v3696, %v3904
  %3906 = vmatmul.f32.gmra.mxu0 %v1742
  %v3907 = vpop.f32.mrf.mxu0
  %v3908 = vadd.f32 %v3699, %v3907
  %3909 = vmatmul.f32.gmra.mxu0 %v1751
  %v3910 = vpop.f32.mrf.mxu0
  %v3911 = vadd.f32 %v3702, %v3910
  %3912 = vmatmul.f32.gmra.mxu0 %v1760
  %v3913 = vpop.f32.mrf.mxu0
  %v3914 = vadd.f32 %v3705, %v3913
  %3915 = vmatmul.f32.gmra.mxu0 %v1769
  %v3916 = vpop.f32.mrf.mxu0
  %v3917 = vadd.f32 %v3708, %v3916
  %3918 = vmatmul.f32.gmra.mxu0 %v1778
  %v3919 = vpop.f32.mrf.mxu0
  %v3920 = vadd.f32 %v3711, %v3919
  %3921 = vmatmul.f32.gmra.mxu0 %v1787
  %v3922 = vpop.f32.mrf.mxu0
  %v3923 = vadd.f32 %v3714, %v3922
  %3924 = vmatmul.f32.gmra.mxu0 %v1796
  %v3925 = vpop.f32.mrf.mxu0
  %v3926 = vadd.f32 %v3717, %v3925
  %3927 = vmatmul.f32.gmra.mxu0 %v1805
  %v3928 = vpop.f32.mrf.mxu0
  %v3929 = vadd.f32 %v3720, %v3928
  %3930 = vmatmul.f32.gmra.mxu0 %v1814
  %v3931 = vpop.f32.mrf.mxu0
  %v3932 = vadd.f32 %v3723, %v3931
  %3933 = vmatmul.f32.gmra.mxu0 %v1823
  %v3934 = vpop.f32.mrf.mxu0
  %v3935 = vadd.f32 %v3726, %v3934
  %3936 = vmatmul.f32.gmra.mxu0 %v1832
  %v3937 = vpop.f32.mrf.mxu0
  %v3938 = vadd.f32 %v3729, %v3937
  %3939 = vmatmul.f32.gmra.mxu0 %v1841
  %v3940 = vpop.f32.mrf.mxu0
  %v3941 = vadd.f32 %v3732, %v3940
  %3942 = vmatmul.f32.gmra.mxu0 %v1850
  %v3943 = vpop.f32.mrf.mxu0
  %v3944 = vadd.f32 %v3735, %v3943
  %3945 = vmatmul.f32.gmra.mxu0 %v1859
  %v3946 = vpop.f32.mrf.mxu0
  %v3947 = vadd.f32 %v3738, %v3946
  %3948 = vmatmul.f32.gmra.mxu0 %v1868
  %v3949 = vpop.f32.mrf.mxu0
  %v3950 = vadd.f32 %v3741, %v3949
  %3951 = vmatmul.f32.gmra.mxu0 %v1877
  %v3952 = vpop.f32.mrf.mxu0
  %v3953 = vadd.f32 %v3744, %v3952
  %3954 = vmatmul.f32.gmra.mxu0 %v1886
  %v3955 = vpop.f32.mrf.mxu0
  %v3956 = vadd.f32 %v3747, %v3955
  %3957 = vmatmul.f32.gmra.mxu0 %v1895
  %v3958 = vpop.f32.mrf.mxu0
  %v3959 = vadd.f32 %v3750, %v3958
  %3960 = vmatmul.f32.gmra.mxu0 %v1904
  %v3961 = vpop.f32.mrf.mxu0
  %v3962 = vadd.f32 %v3753, %v3961
  %3963 = vmatmul.f32.gmra.mxu0 %v1913
  %v3964 = vpop.f32.mrf.mxu0
  %v3965 = vadd.f32 %v3756, %v3964
  %3966 = vmatmul.f32.gmra.mxu0 %v1922
  %v3967 = vpop.f32.mrf.mxu0
  %v3968 = vadd.f32 %v3759, %v3967
  %3969 = vmatmul.f32.gmra.mxu0 %v1931
  %v3970 = vpop.f32.mrf.mxu0
  %v3971 = vadd.f32 %v3762, %v3970
  %3972 = vmatmul.f32.gmra.mxu0 %v1940
  %v3973 = vpop.f32.mrf.mxu0
  %v3974 = vadd.f32 %v3765, %v3973
  %3975 = vmatmul.f32.gmra.mxu0 %v1949
  %v3976 = vpop.f32.mrf.mxu0
  %v3977 = vadd.f32 %v3768, %v3976
  %3978 = vmatmul.f32.gmra.mxu0 %v1958
  %v3979 = vpop.f32.mrf.mxu0
  %v3980 = vadd.f32 %v3771, %v3979
  %3981 = vmatmul.f32.gmra.mxu0 %v1967
  %v3982 = vpop.f32.mrf.mxu0
  %v3983 = vadd.f32 %v3774, %v3982
  %3984 = vmatmul.f32.gmra.mxu0 %v1976
  %v3985 = vpop.f32.mrf.mxu0
  %v3986 = vadd.f32 %v3777, %v3985
  %3987 = vmatmul.f32.gmra.mxu0 %v1985
  %v3988 = vpop.f32.mrf.mxu0
  %v3989 = vadd.f32 %v3780, %v3988
  %3990 = vmatmul.f32.gmra.mxu0 %v1994
  %v3991 = vpop.f32.mrf.mxu0
  %v3992 = vadd.f32 %v3783, %v3991
  %3993 = vmatmul.f32.gmra.mxu0 %v2003
  %v3994 = vpop.f32.mrf.mxu0
  %v3995 = vadd.f32 %v3786, %v3994
  %3996 = vmatmul.f32.gmra.mxu0 %v2012
  %v3997 = vpop.f32.mrf.mxu0
  %v3998 = vadd.f32 %v3789, %v3997
  %3999 = vmatmul.f32.gmra.mxu0 %v2021
  %v4000 = vpop.f32.mrf.mxu0
  %v4001 = vadd.f32 %v3792, %v4000
  %4002 = vmatmul.f32.gmra.mxu0 %v2030
  %v4003 = vpop.f32.mrf.mxu0
  %v4004 = vadd.f32 %v3795, %v4003
  %4005 = vmatmul.f32.gmra.mxu0 %v2039
  %v4006 = vpop.f32.mrf.mxu0
  %v4007 = vadd.f32 %v3798, %v4006
  %4008 = vmatmul.f32.gmra.mxu0 %v2048
  %v4009 = vpop.f32.mrf.mxu0
  %v4010 = vadd.f32 %v3801, %v4009
  %4011 = vmatmul.f32.gmra.mxu0 %v2057
  %v4012 = vpop.f32.mrf.mxu0
  %v4013 = vadd.f32 %v3804, %v4012
  %4014 = vmatmul.f32.gmra.mxu0 %v2066
  %v4015 = vpop.f32.mrf.mxu0
  %v4016 = vadd.f32 %v3807, %v4015
  %4017 = vmatmul.f32.gmra.mxu0 %v2075
  %v4018 = vpop.f32.mrf.mxu0
  %v4019 = vadd.f32 %v3810, %v4018
  %4020 = vmatmul.f32.gmra.mxu0 %v2084
  %v4021 = vpop.f32.mrf.mxu0
  %v4022 = vadd.f32 %v3813, %v4021
  %4023 = vmatmul.f32.gmra.mxu0 %v2093
  %v4024 = vpop.f32.mrf.mxu0
  %v4025 = vadd.f32 %v3816, %v4024
  %4026 = vmatmul.f32.gmra.mxu0 %v2102
  %v4027 = vpop.f32.mrf.mxu0
  %v4028 = vadd.f32 %v3819, %v4027
  %4029 = vmatmul.f32.gmra.mxu0 %v2111
  %v4030 = vpop.f32.mrf.mxu0
  %v4031 = vadd.f32 %v3822, %v4030
  %4032 = vmatmul.f32.gmra.mxu0 %v2120
  %v4033 = vpop.f32.mrf.mxu0
  %v4034 = vadd.f32 %v3825, %v4033
  %4035 = vmatmul.f32.gmra.mxu0 %v2129
  %v4036 = vpop.f32.mrf.mxu0
  %v4037 = vadd.f32 %v3828, %v4036
  %4038 = vmatmul.f32.gmra.mxu0 %v2138
  %v4039 = vpop.f32.mrf.mxu0
  %v4040 = vadd.f32 %v3831, %v4039
  %4041 = vmatmul.f32.gmra.mxu0 %v2147
  %v4042 = vpop.f32.mrf.mxu0
  %v4043 = vadd.f32 %v3834, %v4042
  %4044 = vmatmul.f32.gmra.mxu0 %v2156
  %v4045 = vpop.f32.mrf.mxu0
  %v4046 = vadd.f32 %v3837, %v4045
  %4047 = vmatmul.f32.gmra.mxu0 %v2165
  %v4048 = vpop.f32.mrf.mxu0
  %v4049 = vadd.f32 %v3840, %v4048
  %4050 = vmatmul.f32.gmra.mxu0 %v2174
  %v4051 = vpop.f32.mrf.mxu0
  %v4052 = vadd.f32 %v3843, %v4051
  %4053 = vmatmul.f32.gmra.mxu0 %v2183
  %v4054 = vpop.f32.mrf.mxu0
  %v4055 = vadd.f32 %v3846, %v4054
  %4056 = vmatmul.f32.gmra.mxu0 %v2192
  %v4057 = vpop.f32.mrf.mxu0
  %v4058 = vadd.f32 %v3849, %v4057
  %4059 = vmatmul.f32.gmra.mxu0 %v2201
  %v4060 = vpop.f32.mrf.mxu0
  %v4061 = vadd.f32 %v3852, %v4060
  %4062 = vmatmul.f32.gmra.mxu0 %v2210
  %v4063 = vpop.f32.mrf.mxu0
  %v4064 = vadd.f32 %v3855, %v4063
  %4065 = vmatmul.f32.gmra.mxu0 %v2219
  %v4066 = vpop.f32.mrf.mxu0
  %v4067 = vadd.f32 %v3858, %v4066
  %4068 = vmatmul.f32.gmra.mxu0 %v2228
  %v4069 = vpop.f32.mrf.mxu0
  %v4070 = vadd.f32 %v3861, %v4069
  %4071 = vmatmul.f32.gmra.mxu0 %v2237
  %v4072 = vpop.f32.mrf.mxu0
  %v4073 = vadd.f32 %v3864, %v4072
  %4074 = vmatmul.f32.gmra.mxu0 %v2246
  %v4075 = vpop.f32.mrf.mxu0
  %v4076 = vadd.f32 %v3867, %v4075
  %4077 = vmatmul.f32.gmra.mxu0 %v2255
  %v4078 = vpop.f32.mrf.mxu0
  %v4079 = vadd.f32 %v3870, %v4078
  %4080 = vmatmul.f32.gmra.mxu0 %v2264
  %v4081 = vpop.f32.mrf.mxu0
  %v4082 = vadd.f32 %v3873, %v4081
  %4083 = vdwg.mxu0
  %4084 = vmatpush.msra.mxu0 %v2409
  %4085 = vmatpush.msra.mxu0 %v2408
  %4086 = vmatpush.msra.mxu0 %v2407
  %4087 = vmatpush.msra.mxu0 %v2406
  %4088 = vmatpush.msra.mxu0 %v2405
  %4089 = vmatpush.msra.mxu0 %v2404
  %4090 = vmatpush.msra.mxu0 %v2403
  %4091 = vmatpush.msra.mxu0 %v2402
  %4092 = vmatpush.msra.mxu0 %v2401
  %4093 = vmatpush.msra.mxu0 %v2400
  %4094 = vmatpush.msra.mxu0 %v2399
  %4095 = vmatpush.msra.mxu0 %v2398
  %4096 = vmatpush.msra.mxu0 %v2397
  %4097 = vmatpush.msra.mxu0 %v2396
  %4098 = vmatpush.msra.mxu0 %v2395
  %4099 = vmatpush.msra.mxu0 %v2394
  %4100 = vmatmul.f32.gmra.mxu0 %v1698
  %v4101 = vpop.f32.mrf.mxu0
  %v4102 = vadd.f32 %v3893, %v4101
  %4103 = vmatmul.f32.gmra.mxu0 %v1707
  %v4104 = vpop.f32.mrf.mxu0
  %v4105 = vadd.f32 %v3896, %v4104
  %4106 = vmatmul.f32.gmra.mxu0 %v1716
  %v4107 = vpop.f32.mrf.mxu0
  %v4108 = vadd.f32 %v3899, %v4107
  %4109 = vmatmul.f32.gmra.mxu0 %v1725
  %v4110 = vpop.f32.mrf.mxu0
  %v4111 = vadd.f32 %v3902, %v4110
  %4112 = vmatmul.f32.gmra.mxu0 %v1734
  %v4113 = vpop.f32.mrf.mxu0
  %v4114 = vadd.f32 %v3905, %v4113
  %4115 = vmatmul.f32.gmra.mxu0 %v1743
  %v4116 = vpop.f32.mrf.mxu0
  %v4117 = vadd.f32 %v3908, %v4116
  %4118 = vmatmul.f32.gmra.mxu0 %v1752
  %v4119 = vpop.f32.mrf.mxu0
  %v4120 = vadd.f32 %v3911, %v4119
  %4121 = vmatmul.f32.gmra.mxu0 %v1761
  %v4122 = vpop.f32.mrf.mxu0
  %v4123 = vadd.f32 %v3914, %v4122
  %4124 = vmatmul.f32.gmra.mxu0 %v1770
  %v4125 = vpop.f32.mrf.mxu0
  %v4126 = vadd.f32 %v3917, %v4125
  %4127 = vmatmul.f32.gmra.mxu0 %v1779
  %v4128 = vpop.f32.mrf.mxu0
  %v4129 = vadd.f32 %v3920, %v4128
  %4130 = vmatmul.f32.gmra.mxu0 %v1788
  %v4131 = vpop.f32.mrf.mxu0
  %v4132 = vadd.f32 %v3923, %v4131
  %4133 = vmatmul.f32.gmra.mxu0 %v1797
  %v4134 = vpop.f32.mrf.mxu0
  %v4135 = vadd.f32 %v3926, %v4134
  %4136 = vmatmul.f32.gmra.mxu0 %v1806
  %v4137 = vpop.f32.mrf.mxu0
  %v4138 = vadd.f32 %v3929, %v4137
  %4139 = vmatmul.f32.gmra.mxu0 %v1815
  %v4140 = vpop.f32.mrf.mxu0
  %v4141 = vadd.f32 %v3932, %v4140
  %4142 = vmatmul.f32.gmra.mxu0 %v1824
  %v4143 = vpop.f32.mrf.mxu0
  %v4144 = vadd.f32 %v3935, %v4143
  %4145 = vmatmul.f32.gmra.mxu0 %v1833
  %v4146 = vpop.f32.mrf.mxu0
  %v4147 = vadd.f32 %v3938, %v4146
  %4148 = vmatmul.f32.gmra.mxu0 %v1842
  %v4149 = vpop.f32.mrf.mxu0
  %v4150 = vadd.f32 %v3941, %v4149
  %4151 = vmatmul.f32.gmra.mxu0 %v1851
  %v4152 = vpop.f32.mrf.mxu0
  %v4153 = vadd.f32 %v3944, %v4152
  %4154 = vmatmul.f32.gmra.mxu0 %v1860
  %v4155 = vpop.f32.mrf.mxu0
  %v4156 = vadd.f32 %v3947, %v4155
  %4157 = vmatmul.f32.gmra.mxu0 %v1869
  %v4158 = vpop.f32.mrf.mxu0
  %v4159 = vadd.f32 %v3950, %v4158
  %4160 = vmatmul.f32.gmra.mxu0 %v1878
  %v4161 = vpop.f32.mrf.mxu0
  %v4162 = vadd.f32 %v3953, %v4161
  %4163 = vmatmul.f32.gmra.mxu0 %v1887
  %v4164 = vpop.f32.mrf.mxu0
  %v4165 = vadd.f32 %v3956, %v4164
  %4166 = vmatmul.f32.gmra.mxu0 %v1896
  %v4167 = vpop.f32.mrf.mxu0
  %v4168 = vadd.f32 %v3959, %v4167
  %4169 = vmatmul.f32.gmra.mxu0 %v1905
  %v4170 = vpop.f32.mrf.mxu0
  %v4171 = vadd.f32 %v3962, %v4170
  %4172 = vmatmul.f32.gmra.mxu0 %v1914
  %v4173 = vpop.f32.mrf.mxu0
  %v4174 = vadd.f32 %v3965, %v4173
  %4175 = vmatmul.f32.gmra.mxu0 %v1923
  %v4176 = vpop.f32.mrf.mxu0
  %v4177 = vadd.f32 %v3968, %v4176
  %4178 = vmatmul.f32.gmra.mxu0 %v1932
  %v4179 = vpop.f32.mrf.mxu0
  %v4180 = vadd.f32 %v3971, %v4179
  %4181 = vmatmul.f32.gmra.mxu0 %v1941
  %v4182 = vpop.f32.mrf.mxu0
  %v4183 = vadd.f32 %v3974, %v4182
  %4184 = vmatmul.f32.gmra.mxu0 %v1950
  %v4185 = vpop.f32.mrf.mxu0
  %v4186 = vadd.f32 %v3977, %v4185
  %4187 = vmatmul.f32.gmra.mxu0 %v1959
  %v4188 = vpop.f32.mrf.mxu0
  %v4189 = vadd.f32 %v3980, %v4188
  %4190 = vmatmul.f32.gmra.mxu0 %v1968
  %v4191 = vpop.f32.mrf.mxu0
  %v4192 = vadd.f32 %v3983, %v4191
  %4193 = vmatmul.f32.gmra.mxu0 %v1977
  %v4194 = vpop.f32.mrf.mxu0
  %v4195 = vadd.f32 %v3986, %v4194
  %4196 = vmatmul.f32.gmra.mxu0 %v1986
  %v4197 = vpop.f32.mrf.mxu0
  %v4198 = vadd.f32 %v3989, %v4197
  %4199 = vmatmul.f32.gmra.mxu0 %v1995
  %v4200 = vpop.f32.mrf.mxu0
  %v4201 = vadd.f32 %v3992, %v4200
  %4202 = vmatmul.f32.gmra.mxu0 %v2004
  %v4203 = vpop.f32.mrf.mxu0
  %v4204 = vadd.f32 %v3995, %v4203
  %4205 = vmatmul.f32.gmra.mxu0 %v2013
  %v4206 = vpop.f32.mrf.mxu0
  %v4207 = vadd.f32 %v3998, %v4206
  %4208 = vmatmul.f32.gmra.mxu0 %v2022
  %v4209 = vpop.f32.mrf.mxu0
  %v4210 = vadd.f32 %v4001, %v4209
  %4211 = vmatmul.f32.gmra.mxu0 %v2031
  %v4212 = vpop.f32.mrf.mxu0
  %v4213 = vadd.f32 %v4004, %v4212
  %4214 = vmatmul.f32.gmra.mxu0 %v2040
  %v4215 = vpop.f32.mrf.mxu0
  %v4216 = vadd.f32 %v4007, %v4215
  %4217 = vmatmul.f32.gmra.mxu0 %v2049
  %v4218 = vpop.f32.mrf.mxu0
  %v4219 = vadd.f32 %v4010, %v4218
  %4220 = vmatmul.f32.gmra.mxu0 %v2058
  %v4221 = vpop.f32.mrf.mxu0
  %v4222 = vadd.f32 %v4013, %v4221
  %4223 = vmatmul.f32.gmra.mxu0 %v2067
  %v4224 = vpop.f32.mrf.mxu0
  %v4225 = vadd.f32 %v4016, %v4224
  %4226 = vmatmul.f32.gmra.mxu0 %v2076
  %v4227 = vpop.f32.mrf.mxu0
  %v4228 = vadd.f32 %v4019, %v4227
  %4229 = vmatmul.f32.gmra.mxu0 %v2085
  %v4230 = vpop.f32.mrf.mxu0
  %v4231 = vadd.f32 %v4022, %v4230
  %4232 = vmatmul.f32.gmra.mxu0 %v2094
  %v4233 = vpop.f32.mrf.mxu0
  %v4234 = vadd.f32 %v4025, %v4233
  %4235 = vmatmul.f32.gmra.mxu0 %v2103
  %v4236 = vpop.f32.mrf.mxu0
  %v4237 = vadd.f32 %v4028, %v4236
  %4238 = vmatmul.f32.gmra.mxu0 %v2112
  %v4239 = vpop.f32.mrf.mxu0
  %v4240 = vadd.f32 %v4031, %v4239
  %4241 = vmatmul.f32.gmra.mxu0 %v2121
  %v4242 = vpop.f32.mrf.mxu0
  %v4243 = vadd.f32 %v4034, %v4242
  %4244 = vmatmul.f32.gmra.mxu0 %v2130
  %v4245 = vpop.f32.mrf.mxu0
  %v4246 = vadd.f32 %v4037, %v4245
  %4247 = vmatmul.f32.gmra.mxu0 %v2139
  %v4248 = vpop.f32.mrf.mxu0
  %v4249 = vadd.f32 %v4040, %v4248
  %4250 = vmatmul.f32.gmra.mxu0 %v2148
  %v4251 = vpop.f32.mrf.mxu0
  %v4252 = vadd.f32 %v4043, %v4251
  %4253 = vmatmul.f32.gmra.mxu0 %v2157
  %v4254 = vpop.f32.mrf.mxu0
  %v4255 = vadd.f32 %v4046, %v4254
  %4256 = vmatmul.f32.gmra.mxu0 %v2166
  %v4257 = vpop.f32.mrf.mxu0
  %v4258 = vadd.f32 %v4049, %v4257
  %4259 = vmatmul.f32.gmra.mxu0 %v2175
  %v4260 = vpop.f32.mrf.mxu0
  %v4261 = vadd.f32 %v4052, %v4260
  %4262 = vmatmul.f32.gmra.mxu0 %v2184
  %v4263 = vpop.f32.mrf.mxu0
  %v4264 = vadd.f32 %v4055, %v4263
  %4265 = vmatmul.f32.gmra.mxu0 %v2193
  %v4266 = vpop.f32.mrf.mxu0
  %v4267 = vadd.f32 %v4058, %v4266
  %4268 = vmatmul.f32.gmra.mxu0 %v2202
  %v4269 = vpop.f32.mrf.mxu0
  %v4270 = vadd.f32 %v4061, %v4269
  %4271 = vmatmul.f32.gmra.mxu0 %v2211
  %v4272 = vpop.f32.mrf.mxu0
  %v4273 = vadd.f32 %v4064, %v4272
  %4274 = vmatmul.f32.gmra.mxu0 %v2220
  %v4275 = vpop.f32.mrf.mxu0
  %v4276 = vadd.f32 %v4067, %v4275
  %4277 = vmatmul.f32.gmra.mxu0 %v2229
  %v4278 = vpop.f32.mrf.mxu0
  %v4279 = vadd.f32 %v4070, %v4278
  %4280 = vmatmul.f32.gmra.mxu0 %v2238
  %v4281 = vpop.f32.mrf.mxu0
  %v4282 = vadd.f32 %v4073, %v4281
  %4283 = vmatmul.f32.gmra.mxu0 %v2247
  %v4284 = vpop.f32.mrf.mxu0
  %v4285 = vadd.f32 %v4076, %v4284
  %4286 = vmatmul.f32.gmra.mxu0 %v2256
  %v4287 = vpop.f32.mrf.mxu0
  %v4288 = vadd.f32 %v4079, %v4287
  %4289 = vmatmul.f32.gmra.mxu0 %v2265
  %v4290 = vpop.f32.mrf.mxu0
  %v4291 = vadd.f32 %v4082, %v4290
  %4292 = vdwg.mxu0
  %4293 = vst [vmem:[%s4] sm:$0xff] %v4102
  %4294 = vst [vmem:[%s4 + $0x8] sm:$0xff] %v4105
  %4295 = vst [vmem:[%s4 + $0x10] sm:$0xff] %v4108
  %4296 = vst [vmem:[%s4 + $0x18] sm:$0xff] %v4111
  %4297 = vst [vmem:[%s4 + $0x20] sm:$0xff] %v4114
  %4298 = vst [vmem:[%s4 + $0x28] sm:$0xff] %v4117
  %4299 = vst [vmem:[%s4 + $0x30] sm:$0xff] %v4120
  %4300 = vst [vmem:[%s4 + $0x38] sm:$0xff] %v4123
  %4301 = vst [vmem:[%s4 + $0x40] sm:$0xff] %v4126
  %4302 = vst [vmem:[%s4 + $0x48] sm:$0xff] %v4129
  %4303 = vst [vmem:[%s4 + $0x50] sm:$0xff] %v4132
  %4304 = vst [vmem:[%s4 + $0x58] sm:$0xff] %v4135
  %4305 = vst [vmem:[%s4 + $0x60] sm:$0xff] %v4138
  %4306 = vst [vmem:[%s4 + $0x68] sm:$0xff] %v4141
  %4307 = vst [vmem:[%s4 + $0x70] sm:$0xff] %v4144
  %4308 = vst [vmem:[%s4 + $0x78] sm:$0xff] %v4147
  %4309 = vst [vmem:[%s4 + $0x80] sm:$0xff] %v4150
  %4310 = vst [vmem:[%s4 + $0x88] sm:$0xff] %v4153
  %4311 = vst [vmem:[%s4 + $0x90] sm:$0xff] %v4156
  %4312 = vst [vmem:[%s4 + $0x98] sm:$0xff] %v4159
  %4313 = vst [vmem:[%s4 + $0xa0] sm:$0xff] %v4162
  %4314 = vst [vmem:[%s4 + $0xa8] sm:$0xff] %v4165
  %4315 = vst [vmem:[%s4 + $0xb0] sm:$0xff] %v4168
  %4316 = vst [vmem:[%s4 + $0xb8] sm:$0xff] %v4171
  %4317 = vst [vmem:[%s4 + $0xc0] sm:$0xff] %v4174
  %4318 = vst [vmem:[%s4 + $0xc8] sm:$0xff] %v4177
  %4319 = vst [vmem:[%s4 + $0xd0] sm:$0xff] %v4180
  %4320 = vst [vmem:[%s4 + $0xd8] sm:$0xff] %v4183
  %4321 = vst [vmem:[%s4 + $0xe0] sm:$0xff] %v4186
  %4322 = vst [vmem:[%s4 + $0xe8] sm:$0xff] %v4189
  %4323 = vst [vmem:[%s4 + $0xf0] sm:$0xff] %v4192
  %4324 = vst [vmem:[%s4 + $0xf8] sm:$0xff] %v4195
  %4325 = vst [vmem:[%s4 + $0x100] sm:$0xff] %v4198
  %4326 = vst [vmem:[%s4 + $0x108] sm:$0xff] %v4201
  %4327 = vst [vmem:[%s4 + $0x110] sm:$0xff] %v4204
  %4328 = vst [vmem:[%s4 + $0x118] sm:$0xff] %v4207
  %4329 = vst [vmem:[%s4 + $0x120] sm:$0xff] %v4210
  %4330 = vst [vmem:[%s4 + $0x128] sm:$0xff] %v4213
  %4331 = vst [vmem:[%s4 + $0x130] sm:$0xff] %v4216
  %4332 = vst [vmem:[%s4 + $0x138] sm:$0xff] %v4219
  %4333 = vst [vmem:[%s4 + $0x140] sm:$0xff] %v4222
  %4334 = vst [vmem:[%s4 + $0x148] sm:$0xff] %v4225
  %4335 = vst [vmem:[%s4 + $0x150] sm:$0xff] %v4228
  %4336 = vst [vmem:[%s4 + $0x158] sm:$0xff] %v4231
  %4337 = vst [vmem:[%s4 + $0x160] sm:$0xff] %v4234
  %4338 = vst [vmem:[%s4 + $0x168] sm:$0xff] %v4237
  %4339 = vst [vmem:[%s4 + $0x170] sm:$0xff] %v4240
  %4340 = vst [vmem:[%s4 + $0x178] sm:$0xff] %v4243
  %4341 = vst [vmem:[%s4 + $0x180] sm:$0xff] %v4246
  %4342 = vst [vmem:[%s4 + $0x188] sm:$0xff] %v4249
  %4343 = vst [vmem:[%s4 + $0x190] sm:$0xff] %v4252
  %4344 = vst [vmem:[%s4 + $0x198] sm:$0xff] %v4255
  %4345 = vst [vmem:[%s4 + $0x1a0] sm:$0xff] %v4258
  %4346 = vst [vmem:[%s4 + $0x1a8] sm:$0xff] %v4261
  %4347 = vst [vmem:[%s4 + $0x1b0] sm:$0xff] %v4264
  %4348 = vst [vmem:[%s4 + $0x1b8] sm:$0xff] %v4267
  %4349 = vst [vmem:[%s4 + $0x1c0] sm:$0xff] %v4270
  %4350 = vst [vmem:[%s4 + $0x1c8] sm:$0xff] %v4273
  %4351 = vst [vmem:[%s4 + $0x1d0] sm:$0xff] %v4276
  %4352 = vst [vmem:[%s4 + $0x1d8] sm:$0xff] %v4279
  %4353 = vst [vmem:[%s4 + $0x1e0] sm:$0xff] %v4282
  %4354 = vst [vmem:[%s4 + $0x1e8] sm:$0xff] %v4285
  %4355 = vst [vmem:[%s4 + $0x1f0] sm:$0xff] %v4288
  %4356 = vst [vmem:[%s4 + $0x1f8] sm:$0xff] %v4291
  %v4357 = vadd.f32 %v4102, %v4105
  %v4358 = vadd.f32 %v4357, %v4108
  %v4359 = vadd.f32 %v4358, %v4111
  %v4360 = vadd.f32 %v4359, %v4114
  %v4361 = vadd.f32 %v4360, %v4117
  %v4362 = vadd.f32 %v4361, %v4120
  %v4363 = vadd.f32 %v4362, %v4123
  %v4364 = vadd.f32 %v4363, %v4126
  %v4365 = vadd.f32 %v4364, %v4129
  %v4366 = vadd.f32 %v4365, %v4132
  %v4367 = vadd.f32 %v4366, %v4135
  %v4368 = vadd.f32 %v4367, %v4138
  %v4369 = vadd.f32 %v4368, %v4141
  %v4370 = vadd.f32 %v4369, %v4144
  %v4371 = vadd.f32 %v4370, %v4147
  %v4372 = vadd.f32 %v4371, %v4150
  %v4373 = vadd.f32 %v4372, %v4153
  %v4374 = vadd.f32 %v4373, %v4156
  %v4375 = vadd.f32 %v4374, %v4159
  %v4376 = vadd.f32 %v4375, %v4162
  %v4377 = vadd.f32 %v4376, %v4165
  %v4378 = vadd.f32 %v4377, %v4168
  %v4379 = vadd.f32 %v4378, %v4171
  %v4380 = vadd.f32 %v4379, %v4174
  %v4381 = vadd.f32 %v4380, %v4177
  %v4382 = vadd.f32 %v4381, %v4180
  %v4383 = vadd.f32 %v4382, %v4183
  %v4384 = vadd.f32 %v4383, %v4186
  %v4385 = vadd.f32 %v4384, %v4189
  %v4386 = vadd.f32 %v4385, %v4192
  %v4387 = vadd.f32 %v4386, %v4195
  %v4388 = vadd.f32 %v4387, %v4198
  %v4389 = vadd.f32 %v4388, %v4201
  %v4390 = vadd.f32 %v4389, %v4204
  %v4391 = vadd.f32 %v4390, %v4207
  %v4392 = vadd.f32 %v4391, %v4210
  %v4393 = vadd.f32 %v4392, %v4213
  %v4394 = vadd.f32 %v4393, %v4216
  %v4395 = vadd.f32 %v4394, %v4219
  %v4396 = vadd.f32 %v4395, %v4222
  %v4397 = vadd.f32 %v4396, %v4225
  %v4398 = vadd.f32 %v4397, %v4228
  %v4399 = vadd.f32 %v4398, %v4231
  %v4400 = vadd.f32 %v4399, %v4234
  %v4401 = vadd.f32 %v4400, %v4237
  %v4402 = vadd.f32 %v4401, %v4240
  %v4403 = vadd.f32 %v4402, %v4243
  %v4404 = vadd.f32 %v4403, %v4246
  %v4405 = vadd.f32 %v4404, %v4249
  %v4406 = vadd.f32 %v4405, %v4252
  %v4407 = vadd.f32 %v4406, %v4255
  %v4408 = vadd.f32 %v4407, %v4258
  %v4409 = vadd.f32 %v4408, %v4261
  %v4410 = vadd.f32 %v4409, %v4264
  %v4411 = vadd.f32 %v4410, %v4267
  %v4412 = vadd.f32 %v4411, %v4270
  %v4413 = vadd.f32 %v4412, %v4273
  %v4414 = vadd.f32 %v4413, %v4276
  %v4415 = vadd.f32 %v4414, %v4279
  %v4416 = vadd.f32 %v4415, %v4282
  %v4417 = vadd.f32 %v4416, %v4285
  %v4418 = vadd.f32 %v4417, %v4288
  %v4419 = vadd.f32 %v4418, %v4291
  %v4420 = vrot.slane %v4419, 4
  %v4421 = vadd.f32 %v4419, %v4420
  %v4422 = vrot.slane %v4421, 2
  %v4423 = vadd.f32 %v4421, %v4422
  %v4424 = vrot.slane %v4423, 1
  %v4425 = vadd.f32 %v4423, %v4424
  %v4426 = vmul.f32 %v4425, 0.001953125
  %v4427 = vsub.f32 %v4102, %v4426
  %v4428 = vsub.f32 %v4105, %v4426
  %v4429 = vsub.f32 %v4108, %v4426
  %v4430 = vsub.f32 %v4111, %v4426
  %v4431 = vsub.f32 %v4114, %v4426
  %v4432 = vsub.f32 %v4117, %v4426
  %v4433 = vsub.f32 %v4120, %v4426
  %v4434 = vsub.f32 %v4123, %v4426
  %v4435 = vsub.f32 %v4126, %v4426
  %v4436 = vsub.f32 %v4129, %v4426
  %v4437 = vsub.f32 %v4132, %v4426
  %v4438 = vsub.f32 %v4135, %v4426
  %v4439 = vsub.f32 %v4138, %v4426
  %v4440 = vsub.f32 %v4141, %v4426
  %v4441 = vsub.f32 %v4144, %v4426
  %v4442 = vsub.f32 %v4147, %v4426
  %v4443 = vsub.f32 %v4150, %v4426
  %v4444 = vsub.f32 %v4153, %v4426
  %v4445 = vsub.f32 %v4156, %v4426
  %v4446 = vsub.f32 %v4159, %v4426
  %v4447 = vsub.f32 %v4162, %v4426
  %v4448 = vsub.f32 %v4165, %v4426
  %v4449 = vsub.f32 %v4168, %v4426
  %v4450 = vsub.f32 %v4171, %v4426
  %v4451 = vsub.f32 %v4174, %v4426
  %v4452 = vsub.f32 %v4177, %v4426
  %v4453 = vsub.f32 %v4180, %v4426
  %v4454 = vsub.f32 %v4183, %v4426
  %v4455 = vsub.f32 %v4186, %v4426
  %v4456 = vsub.f32 %v4189, %v4426
  %v4457 = vsub.f32 %v4192, %v4426
  %v4458 = vsub.f32 %v4195, %v4426
  %v4459 = vsub.f32 %v4198, %v4426
  %v4460 = vsub.f32 %v4201, %v4426
  %v4461 = vsub.f32 %v4204, %v4426
  %v4462 = vsub.f32 %v4207, %v4426
  %v4463 = vsub.f32 %v4210, %v4426
  %v4464 = vsub.f32 %v4213, %v4426
  %v4465 = vsub.f32 %v4216, %v4426
  %v4466 = vsub.f32 %v4219, %v4426
  %v4467 = vsub.f32 %v4222, %v4426
  %v4468 = vsub.f32 %v4225, %v4426
  %v4469 = vsub.f32 %v4228, %v4426
  %v4470 = vsub.f32 %v4231, %v4426
  %v4471 = vsub.f32 %v4234, %v4426
  %v4472 = vsub.f32 %v4237, %v4426
  %v4473 = vsub.f32 %v4240, %v4426
  %v4474 = vsub.f32 %v4243, %v4426
  %v4475 = vsub.f32 %v4246, %v4426
  %v4476 = vsub.f32 %v4249, %v4426
  %v4477 = vsub.f32 %v4252, %v4426
  %v4478 = vsub.f32 %v4255, %v4426
  %v4479 = vsub.f32 %v4258, %v4426
  %v4480 = vsub.f32 %v4261, %v4426
  %v4481 = vsub.f32 %v4264, %v4426
  %v4482 = vsub.f32 %v4267, %v4426
  %v4483 = vsub.f32 %v4270, %v4426
  %v4484 = vsub.f32 %v4273, %v4426
  %v4485 = vsub.f32 %v4276, %v4426
  %v4486 = vsub.f32 %v4279, %v4426
  %v4487 = vsub.f32 %v4282, %v4426
  %v4488 = vsub.f32 %v4285, %v4426
  %v4489 = vsub.f32 %v4288, %v4426
  %v4490 = vsub.f32 %v4291, %v4426
  %v4491 = vmul.f32 %v4427, %v4427
  %v4492 = vmul.f32 %v4428, %v4428
  %v4493 = vmul.f32 %v4429, %v4429
  %v4494 = vmul.f32 %v4430, %v4430
  %v4495 = vmul.f32 %v4431, %v4431
  %v4496 = vmul.f32 %v4432, %v4432
  %v4497 = vmul.f32 %v4433, %v4433
  %v4498 = vmul.f32 %v4434, %v4434
  %v4499 = vmul.f32 %v4435, %v4435
  %v4500 = vmul.f32 %v4436, %v4436
  %v4501 = vmul.f32 %v4437, %v4437
  %v4502 = vmul.f32 %v4438, %v4438
  %v4503 = vmul.f32 %v4439, %v4439
  %v4504 = vmul.f32 %v4440, %v4440
  %v4505 = vmul.f32 %v4441, %v4441
  %v4506 = vmul.f32 %v4442, %v4442
  %v4507 = vmul.f32 %v4443, %v4443
  %v4508 = vmul.f32 %v4444, %v4444
  %v4509 = vmul.f32 %v4445, %v4445
  %v4510 = vmul.f32 %v4446, %v4446
  %v4511 = vmul.f32 %v4447, %v4447
  %v4512 = vmul.f32 %v4448, %v4448
  %v4513 = vmul.f32 %v4449, %v4449
  %v4514 = vmul.f32 %v4450, %v4450
  %v4515 = vmul.f32 %v4451, %v4451
  %v4516 = vmul.f32 %v4452, %v4452
  %v4517 = vmul.f32 %v4453, %v4453
  %v4518 = vmul.f32 %v4454, %v4454
  %v4519 = vmul.f32 %v4455, %v4455
  %v4520 = vmul.f32 %v4456, %v4456
  %v4521 = vmul.f32 %v4457, %v4457
  %v4522 = vmul.f32 %v4458, %v4458
  %v4523 = vmul.f32 %v4459, %v4459
  %v4524 = vmul.f32 %v4460, %v4460
  %v4525 = vmul.f32 %v4461, %v4461
  %v4526 = vmul.f32 %v4462, %v4462
  %v4527 = vmul.f32 %v4463, %v4463
  %v4528 = vmul.f32 %v4464, %v4464
  %v4529 = vmul.f32 %v4465, %v4465
  %v4530 = vmul.f32 %v4466, %v4466
  %v4531 = vmul.f32 %v4467, %v4467
  %v4532 = vmul.f32 %v4468, %v4468
  %v4533 = vmul.f32 %v4469, %v4469
  %v4534 = vmul.f32 %v4470, %v4470
  %v4535 = vmul.f32 %v4471, %v4471
  %v4536 = vmul.f32 %v4472, %v4472
  %v4537 = vmul.f32 %v4473, %v4473
  %v4538 = vmul.f32 %v4474, %v4474
  %v4539 = vmul.f32 %v4475, %v4475
  %v4540 = vmul.f32 %v4476, %v4476
  %v4541 = vmul.f32 %v4477, %v4477
  %v4542 = vmul.f32 %v4478, %v4478
  %v4543 = vmul.f32 %v4479, %v4479
  %v4544 = vmul.f32 %v4480, %v4480
  %v4545 = vmul.f32 %v4481, %v4481
  %v4546 = vmul.f32 %v4482, %v4482
  %v4547 = vmul.f32 %v4483, %v4483
  %v4548 = vmul.f32 %v4484, %v4484
  %v4549 = vmul.f32 %v4485, %v4485
  %v4550 = vmul.f32 %v4486, %v4486
  %v4551 = vmul.f32 %v4487, %v4487
  %v4552 = vmul.f32 %v4488, %v4488
  %v4553 = vmul.f32 %v4489, %v4489
  %v4554 = vmul.f32 %v4490, %v4490
  %v4555 = vadd.f32 %v4491, %v4492
  %v4556 = vadd.f32 %v4555, %v4493
  %v4557 = vadd.f32 %v4556, %v4494
  %v4558 = vadd.f32 %v4557, %v4495
  %v4559 = vadd.f32 %v4558, %v4496
  %v4560 = vadd.f32 %v4559, %v4497
  %v4561 = vadd.f32 %v4560, %v4498
  %v4562 = vadd.f32 %v4561, %v4499
  %v4563 = vadd.f32 %v4562, %v4500
  %v4564 = vadd.f32 %v4563, %v4501
  %v4565 = vadd.f32 %v4564, %v4502
  %v4566 = vadd.f32 %v4565, %v4503
  %v4567 = vadd.f32 %v4566, %v4504
  %v4568 = vadd.f32 %v4567, %v4505
  %v4569 = vadd.f32 %v4568, %v4506
  %v4570 = vadd.f32 %v4569, %v4507
  %v4571 = vadd.f32 %v4570, %v4508
  %v4572 = vadd.f32 %v4571, %v4509
  %v4573 = vadd.f32 %v4572, %v4510
  %v4574 = vadd.f32 %v4573, %v4511
  %v4575 = vadd.f32 %v4574, %v4512
  %v4576 = vadd.f32 %v4575, %v4513
  %v4577 = vadd.f32 %v4576, %v4514
  %v4578 = vadd.f32 %v4577, %v4515
  %v4579 = vadd.f32 %v4578, %v4516
  %v4580 = vadd.f32 %v4579, %v4517
  %v4581 = vadd.f32 %v4580, %v4518
  %v4582 = vadd.f32 %v4581, %v4519
  %v4583 = vadd.f32 %v4582, %v4520
  %v4584 = vadd.f32 %v4583, %v4521
  %v4585 = vadd.f32 %v4584, %v4522
  %v4586 = vadd.f32 %v4585, %v4523
  %v4587 = vadd.f32 %v4586, %v4524
  %v4588 = vadd.f32 %v4587, %v4525
  %v4589 = vadd.f32 %v4588, %v4526
  %v4590 = vadd.f32 %v4589, %v4527
  %v4591 = vadd.f32 %v4590, %v4528
  %v4592 = vadd.f32 %v4591, %v4529
  %v4593 = vadd.f32 %v4592, %v4530
  %v4594 = vadd.f32 %v4593, %v4531
  %v4595 = vadd.f32 %v4594, %v4532
  %v4596 = vadd.f32 %v4595, %v4533
  %v4597 = vadd.f32 %v4596, %v4534
  %v4598 = vadd.f32 %v4597, %v4535
  %v4599 = vadd.f32 %v4598, %v4536
  %v4600 = vadd.f32 %v4599, %v4537
  %v4601 = vadd.f32 %v4600, %v4538
  %v4602 = vadd.f32 %v4601, %v4539
  %v4603 = vadd.f32 %v4602, %v4540
  %v4604 = vadd.f32 %v4603, %v4541
  %v4605 = vadd.f32 %v4604, %v4542
  %v4606 = vadd.f32 %v4605, %v4543
  %v4607 = vadd.f32 %v4606, %v4544
  %v4608 = vadd.f32 %v4607, %v4545
  %v4609 = vadd.f32 %v4608, %v4546
  %v4610 = vadd.f32 %v4609, %v4547
  %v4611 = vadd.f32 %v4610, %v4548
  %v4612 = vadd.f32 %v4611, %v4549
  %v4613 = vadd.f32 %v4612, %v4550
  %v4614 = vadd.f32 %v4613, %v4551
  %v4615 = vadd.f32 %v4614, %v4552
  %v4616 = vadd.f32 %v4615, %v4553
  %v4617 = vadd.f32 %v4616, %v4554
  %v4618 = vrot.slane %v4617, 4
  %v4619 = vadd.f32 %v4617, %v4618
  %v4620 = vrot.slane %v4619, 2
  %v4621 = vadd.f32 %v4619, %v4620
  %v4622 = vrot.slane %v4621, 1
  %v4623 = vadd.f32 %v4621, %v4622
  %s4624 = scvt.s32.f32 0
  %s4625 = smul.f32 %s4624, 512.0
  %s4626 = sadd.f32 %s4625, 512.0
  %v4627 = vld [vmem:[%s5] sm:$0x1]
  %v4628 = vsub.f32 %v4426, %v4627
  %v4629 = vstv %s4626
  %v4630 = vrcp.pop %v4629
  %v4631 = vmul.f32 %v4629, %v4630
  %v4632 = vsub.f32 1.0, %v4631
  %v4633 = vmul.f32 %v4630, %v4632
  %v4634 = vadd.f32 %v4630, %v4633
  %vm4635 = vweird.f32 %v4629
  %vm4636 = vweird.f32 %v4630
  %vm4637 = vmor %vm4635, %vm4636
  %v4638 = vsel %vm4637, %v4630, %v4634
  %v4639 = vand.u32 2147483647, %v4629
  %vm4640 = vcmp.eq.f32.partialorder %v4639, 8.507059e+37
  %v4641 = vand.u32 %v4629, 2147483648
  %v4642 = vor.u32 1.1754944e-38, %v4641
  %v4643 = vsel %vm4640, %v4642, %v4638
  %s4644 = vtos %v4643
  %s4645 = smul.f32 512.0, %s4644
  %v4646 = vstv %s4645
  %v4647 = vmul.f32 %v4628, %v4646
  %v4648 = vadd.f32 %v4627, %v4647
  %4649 = vst [vmem:[%s5] sm:$0x1] %v4648
  %v4650 = vld [vmem:[%s5 + $0x1] sm:$0x1]
  %v4651 = vmul.f32 %v4628, %v4628
  %s4652 = smul.f32 %s4625, %s4645
  %v4653 = vstv %s4652
  %v4654 = vmul.f32 %v4651, %v4653
  %v4655 = vadd.f32 %v4623, %v4654
  %v4656 = vadd.f32 %v4650, %v4655
  %4657 = vst [vmem:[%s5 + $0x1] sm:$0x1] %v4656
  // Predicated region
  $region22: #{forward.4} parent=0 // pred_check
    _
  $region23: #{forward.4} parent=0 // pred_check_branch
    %4659 = sbr.rel (0) target = $region25
  $region24: #{forward.4} parent=0 // pred_region
    _
  $region25: #{forward.4} parent=0 // pred_fallthru
    _
  // Predicated region
  $region26: #{forward.4} parent=0 // pred_check
    _
  $region27: #{forward.4} parent=0 // pred_check_branch
    %4661 = sbr.rel (0) target = $region29
  $region28: #{forward.4} parent=0 // pred_region
    _
  $region29: #{forward.4} parent=0 // pred_fallthru
    _
  // Predicated region
  $region30: #{forward.4} parent=0 // pred_check
    _
  $region31: #{forward.4} parent=0 // pred_check_branch
    %4663 = sbr.rel (0) target = $region33
  $region32: #{forward.4} parent=0 // pred_region
    _
  $region33: #{forward.4} parent=0 // pred_fallthru
    _
  // Predicated region
  $region34: #{forward.4} parent=0 // pred_check
    _
  $region35: #{forward.4} parent=0 // pred_check_branch
    %4665 = sbr.rel (0) target = $region37
  $region36: #{forward.4} parent=0 // pred_region
    _
  $region37: #{forward.4} parent=0 // pred_fallthru
    _

</llo_original>
